<compile_context>
chip_gen: v5e
topology: v5e:2x2
jax: 0.10.0
libtpu: 0.0.40
codegen_flags: <defaults>
</compile_context>

<pallas_src>
import jax
import jax.numpy as jnp
from jax.experimental import pallas as pl
from jax.experimental.pallas import tpu as pltpu


# ------------------------------ kernel helpers ------------------------------ #

def _mish(y):
    # mish(y) = y * tanh(softplus(y)); torch softplus threshold=20.
    # tanh(log1p(e^y)) == ((1+e^y)^2 - 1) / ((1+e^y)^2 + 1)  -> one exp + one divide.
    e = jnp.exp(y)
    u = (1.0 + e) * (1.0 + e)
    return jnp.where(y > 20.0, y, y * ((u - 1.0) / (u + 1.0)))


# ------------------------------ Pallas kernels ------------------------------ #

def _stage12_kernel(x_ref, w1_ref, b1_ref, w2_ref, sc2_ref, sh2_ref, o_ref):
    # per batch: znorm over time -> conv1 + bias + Mish -> conv2 -> folded BN1
    x = x_ref[0]                                   # (T, n_chs), time on sublanes
    T = x.shape[0]
    mean = jnp.mean(x, axis=0, keepdims=True)
    d = x - mean
    var = jnp.sum(d * d, axis=0, keepdims=True) / (T - 1)   # unbiased, as torch .std()
    xz = d * jax.lax.rsqrt(var + 1e-12)            # eps guards zero-variance traces

    kw1 = w1_ref.shape[0]
    kw2 = w2_ref.shape[0]
    n2 = o_ref.shape[1]                            # 5 * P2 (pool-truncated width)
    n1 = n2 + kw2 - 1                              # conv1 rows actually needed

    acc1 = b1_ref[...]                             # (1, C1), broadcasts over rows
    for j in range(kw1):                           # conv1 as shifted matmuls
        acc1 = acc1 + jnp.dot(xz[j:j + n1, :], w1_ref[j],
                              preferred_element_type=jnp.float32)
    a1 = _mish(acc1)

    acc2 = jnp.zeros((n2, w2_ref.shape[2]), jnp.float32)
    for j in range(kw2):                           # conv2 as shifted matmuls
        acc2 = acc2 + jnp.dot(a1[j:j + n2, :], w2_ref[j],
                              preferred_element_type=jnp.float32)
    o_ref[0] = acc2 * sc2_ref[...] + sh2_ref[...]  # folded BN1 (eval)


def _pool_mish_kernel(x_ref, o_ref):
    # MaxPool over the window axis (on sublanes) + Mish; output lane-dense over C
    v = x_ref[0]                                   # (P, g, C)
    m = v[:, 0, :]
    for k in range(1, v.shape[1]):
        m = jnp.maximum(m, v[:, k, :])
    o_ref[0] = _mish(m)


def _matmul_affine_kernel(p_ref, w_ref, sc_ref, sh_ref, o_ref):
    # conv3-as-matmul on one M tile, fused BN2 affine
    y = jnp.dot(p_ref[...], w_ref[...], preferred_element_type=jnp.float32)
    o_ref[...] = y * sc_ref[...] + sh_ref[...]


def _pool33_conv4_kernel(x_ref, w4_ref, sc4_ref, sh4_ref, o_ref):
    # MaxPool(3,3) + Mish, then conv4(1,5) as shifted matmuls + folded BN3
    v = x_ref[0]                                   # (3, Wp3, 3, C)
    hm = jnp.maximum(jnp.maximum(v[0], v[1]), v[2])                     # (Wp3, 3, C)
    wm = jnp.maximum(jnp.maximum(hm[:, 0, :], hm[:, 1, :]), hm[:, 2, :])  # (Wp3, C)
    a = _mish(wm)

    n4 = o_ref.shape[1]                            # 2 * P4 (pool-truncated width)
    acc = jnp.zeros((n4, w4_ref.shape[2]), jnp.float32)
    for j in range(w4_ref.shape[0]):
        acc = acc + jnp.dot(a[j:j + n4, :], w4_ref[j],
                            preferred_element_type=jnp.float32)
    o_ref[0] = acc * sc4_ref[...] + sh4_ref[...]


def _fc_head_kernel(x_ref, w1_ref, b1_ref, w2_ref, b2_ref, w3_ref, b3_ref, o_ref):
    # Linear -> Mish -> Linear -> Mish -> Linear   (Dropout = identity at inference)
    h = _mish(jnp.dot(x_ref[...], w1_ref[...],
                      preferred_element_type=jnp.float32) + b1_ref[...])
    h = _mish(jnp.dot(h, w2_ref[...],
                      preferred_element_type=jnp.float32) + b2_ref[...])
    o_ref[...] = jnp.dot(h, w3_ref[...],
                         preferred_element_type=jnp.float32) + b3_ref[...]


# ------------------------------ pallas_call wrappers ------------------------- #

_VMEM_LIMIT = 32 * 1024 * 1024        # safe scoped limit on v5e/v6e/v7x; blocks are tiny
_VMEM = pl.BlockSpec(memory_space=pltpu.MemorySpace.VMEM)


def _cp(*sem):
    return pltpu.CompilerParams(dimension_semantics=sem,
                                vmem_limit_bytes=_VMEM_LIMIT)


def stage12(xt, w1t, b1, w2t, sc2, sh2, n2):
    B, T, n_chs = xt.shape
    c1 = w1t.shape[2]
    return pl.pallas_call(
        _stage12_kernel,
        out_shape=jax.ShapeDtypeStruct((B, n2, c1), jnp.float32),
        grid=(B,),
        in_specs=[
            pl.BlockSpec((1, T, n_chs), lambda b: (b, 0, 0)),
            pl.BlockSpec(w1t.shape, lambda b: (0, 0, 0)),
            pl.BlockSpec((1, c1), lambda b: (0, 0)),
            pl.BlockSpec(w2t.shape, lambda b: (0, 0, 0)),
            pl.BlockSpec((1, c1), lambda b: (0, 0)),
            pl.BlockSpec((1, c1), lambda b: (0, 0)),
        ],
        out_specs=pl.BlockSpec((1, n2, c1), lambda b: (b, 0, 0)),
        compiler_params=_cp("parallel"),
    )(xt, w1t, b1, w2t, sc2, sh2)


def pool_mish(x):
    # x: (N, P, g, C) -> (N, P, C); pool window g lives on the sublane axis
    N, P, g, C = x.shape
    return pl.pallas_call(
        _pool_mish_kernel,
        out_shape=jax.ShapeDtypeStruct((N, P, C), jnp.float32),
        grid=(N,),
        in_specs=[pl.BlockSpec((1, P, g, C), lambda n: (n, 0, 0, 0))],
        out_specs=pl.BlockSpec((1, P, C), lambda n: (n, 0, 0)),
        compiler_params=_cp("parallel"),
    )(x)


def conv3_matmul(patches, w, sc, sh, tm=512):
    M, K = patches.shape
    N = w.shape[1]
    tm = min(tm, 8 * pl.cdiv(M, 8))
    return pl.pallas_call(
        _matmul_affine_kernel,
        out_shape=jax.ShapeDtypeStruct((M, N), jnp.float32),
        grid=(pl.cdiv(M, tm),),
        in_specs=[
            pl.BlockSpec((tm, K), lambda i: (i, 0)),
            pl.BlockSpec((K, N), lambda i: (0, 0)),      # weight block stays resident
            pl.BlockSpec((1, N), lambda i: (0, 0)),
            pl.BlockSpec((1, N), lambda i: (0, 0)),
        ],
        out_specs=pl.BlockSpec((tm, N), lambda i: (i, 0)),
        compiler_params=_cp("parallel"),
    )(patches, w, sc, sh)


def pool33_conv4(x5, w4t, sc4, sh4, n4):
    # x5: (B*Hp3, 3, Wp3, 3, C)   ->   (B*Hp3, n4, C)
    N = x5.shape[0]
    C = x5.shape[-1]
    return pl.pallas_call(
        _pool33_conv4_kernel,
        out_shape=jax.ShapeDtypeStruct((N, n4, C), jnp.float32),
        grid=(N,),
        in_specs=[
            pl.BlockSpec((1,) + x5.shape[1:], lambda n: (n, 0, 0, 0, 0)),
            pl.BlockSpec(w4t.shape, lambda n: (0, 0, 0)),
            pl.BlockSpec((1, C), lambda n: (0, 0)),
            pl.BlockSpec((1, C), lambda n: (0, 0)),
        ],
        out_specs=pl.BlockSpec((1, n4, C), lambda n: (n, 0, 0)),
        compiler_params=_cp("parallel"),
    )(x5, w4t, sc4, sh4)


def fc_head(x, w1, b1, w2, b2, w3, b3):
    # All three FC weights fit comfortably in VMEM (a few MB at full model size).
    # TODO(synk): for much larger n_fc_in, K-tile fc1 with an accumulator scratch to
    #             stream the weight through a pipelined grid.
    B = x.shape[0]
    return pl.pallas_call(
        _fc_head_kernel,
        out_shape=jax.ShapeDtypeStruct((B, w3.shape[1]), jnp.float32),
        in_specs=[_VMEM] * 7,
        out_specs=_VMEM,
        compiler_params=pltpu.CompilerParams(vmem_limit_bytes=_VMEM_LIMIT),
    )(x, w1, b1.reshape(1, -1), w2, b2.reshape(1, -1), w3, b3.reshape(1, -1))


# --------------------------------- forward ---------------------------------- #

def mnet_forward(x, params):
    # x: (B, n_chs, T) float32
    B, n_chs, T = x.shape
    assert T > 1, "znorm needs more than one time sample (unbiased std)"

    c1 = params["w1"].shape[0]     # 40
    c3 = params["w3"].shape[0]     # 50

    # fold BatchNorm(eval) + conv bias into per-channel scale/shift
    def fold(bn, bias):
        gamma, beta, rmean, rvar = bn
        s = gamma * jax.lax.rsqrt(rvar + 1e-5)
        return s.reshape(1, -1), ((bias - rmean) * s + beta).reshape(1, -1)

    sc2, sh2 = fold(params["bn1"], params["b2"])
    sc3, sh3 = fold(params["bn2"], params["b3"])
    sc4, sh4 = fold(params["bn3"], params["b4"])

    # tap-major weights for the in-kernel shifted-matmul 1-D convs
    w1t = jnp.transpose(params["w1"][:, 0], (2, 1, 0))        # (4, n_chs, 40)
    w2t = jnp.transpose(params["w2"][:, :, 0], (2, 1, 0))     # (4, 40, 40)
    w4t = jnp.transpose(params["w4"][:, :, 0], (2, 1, 0))     # (5, 50, 50)
    w3m = params["w3"].reshape(c3, -1).T                      # (96, 50), (di,dj) order

    # geometry of the conv/pool chain
    kw1, kw2 = params["w1"].shape[3], params["w2"].shape[3]
    kh3, kw3 = params["w3"].shape[2], params["w3"].shape[3]
    kw4 = params["w4"].shape[3]
    W1 = T - kw1 + 1
    P2 = (W1 - kw2 + 1) // 5                                  # after MaxPool(1,5)
    H3 = c1 - kh3 + 1                                         # 33
    W3 = P2 - kw3 + 1
    Hp3, Wp3 = H3 // 3, W3 // 3                               # after MaxPool(3,3)
    P4 = (Wp3 - kw4 + 1) // 2                                 # after MaxPool(1,2)
    W3t = 3 * Wp3

    # K_a: znorm + conv1 + Mish + conv2 + BN1   (time-major / channel-last)
    xt = jnp.transpose(x, (0, 2, 1))                          # (B, T, n_chs), tiny
    a2 = stage12(xt, w1t, params["b1"].reshape(1, c1), w2t, sc2, sh2, 5 * P2)

    # K_b: MaxPool(1,5) + Mish  (free reshape exposes the window on sublanes)
    a2p = pool_mish(a2.reshape(B, P2, 5, c1))                 # (B, P2, 40)

    # conv3 is the only true 2-D conv (Cin=1): im2col in XLA, rows ordered (b, i, t).
    # TODO(synk): the patch build could be moved in-kernel to drop this HBM pass.
    a2T = jnp.transpose(a2p, (0, 2, 1))                       # (B, 40, P2), small
    cols = [a2T[:, di:di + H3, dj:dj + W3t]
            for di in range(kh3) for dj in range(kw3)]
    patches = jnp.stack(cols, axis=-1).reshape(B * H3 * W3t, kh3 * kw3)

    # K_c: conv3 matmul + BN2   (M-tiled, weight resident)
    y3 = conv3_matmul(patches, w3m, sc3, sh3)                 # (B*33*W3t, 50)

    # K_d: MaxPool(3,3) + Mish + conv4 + BN3  (free reshape exposes the 3x3 windows)
    y3 = y3.reshape(B * Hp3, 3, Wp3, 3, c3)
    y4 = pool33_conv4(y3, w4t, sc4, sh4, 2 * P4)              # (B*11, 2*P4, 50)

    # K_e: MaxPool(1,2) + Mish
    y4p = pool_mish(y4.reshape(B * Hp3, P4, 2, c3))           # (B*11, P4, 50)

    # flatten channel-last, and permute fc1 rows so this equals torch's NCHW
    # x.reshape(len(x), -1) ordering (no activation transpose needed)
    act = y4p.reshape(B, Hp3 * P4 * c3)
    i_idx = jnp.arange(Hp3)[:, None, None]
    t_idx = jnp.arange(P4)[None, :, None]
    c_idx = jnp.arange(c3)[None, None, :]
    torch_pos = ((c_idx * Hp3 + i_idx) * P4 + t_idx).reshape(-1)
    fc1_w = params["fc1_w"][torch_pos]

    # K_f: fused FC head (diagnosis logits)
    return fc_head(act, fc1_w, params["fc1_b"], params["fc2_w"],
                   params["fc2_b"], params["fc3_w"], params["fc3_b"])


# --------------------------- deterministic params --------------------------- #

def init_params(key, n_chs, n_fc_in, n_fc1, n_fc2, n_classes):
    ks = jax.random.split(key, 24)

    def nrm(k, shape, s=0.1):
        return (jax.random.normal(k, shape) * s).astype(jnp.float32)

    def bn(k, c):
        k1, k2, k3, k4 = jax.random.split(k, 4)
        gamma = 1.0 + nrm(k1, (c,))
        beta = nrm(k2, (c,))
        rmean = nrm(k3, (c,))
        rvar = 1.0 + jnp.abs(nrm(k4, (c,)))
        return (gamma, beta, rmean, rvar)

    p = {}
    p["w1"] = nrm(ks[0], (40, 1, n_chs, 4)); p["b1"] = nrm(ks[1], (40,))
    p["w2"] = nrm(ks[2], (40, 40, 1, 4));    p["b2"] = nrm(ks[3], (40,))
    p["w3"] = nrm(ks[4], (50, 1, 8, 12));    p["b3"] = nrm(ks[5], (50,))
    p["w4"] = nrm(ks[6], (50, 50, 1, 5));    p["b4"] = nrm(ks[7], (50,))
    p["bn1"] = bn(ks[8], 40)
    p["bn2"] = bn(ks[9], 50)
    p["bn3"] = bn(ks[10], 50)
    # FC weights stored as (in, out) (semantically equal to torch (out,in).T)
    p["fc1_w"] = nrm(ks[11], (n_fc_in, n_fc1), 0.05); p["fc1_b"] = nrm(ks[12], (n_fc1,))
    p["fc2_w"] = nrm(ks[13], (n_fc1, n_fc2), 0.05);   p["fc2_b"] = nrm(ks[14], (n_fc2,))
    p["fc3_w"] = nrm(ks[15], (n_fc2, n_classes), 0.05); p["fc3_b"] = nrm(ks[16], (n_classes,))
    return p


# ---------------------------------- main ------------------------------------ #

if __name__ == "__main__":
    # small but shape-consistent config (original: n_chs=19, T=1000 -> fc_in=15950)
    B, N_CHS, T = 2, 19, 200
    DISEASE_TYPES = ["HV", "AD", "DLB", "NPH"]
    N_CLASSES = len(DISEASE_TYPES)
    N_FC1, N_FC2 = 64, 32

    # derive flattened FC input size from the conv/pool chain
    w_after_conv2 = T - 3 - 3
    w_after_pool1 = w_after_conv2 // 5
    h_after_conv3, w_after_conv3 = 40 - 8 + 1, w_after_pool1 - 12 + 1
    h_after_pool2, w_after_pool2 = h_after_conv3 // 3, w_after_conv3 // 3
    w_after_conv4 = w_after_pool2 - 5 + 1
    w_after_pool3 = w_after_conv4 // 2
    N_FC_IN = 50 * h_after_pool2 * w_after_pool3

    key = jax.random.PRNGKey(0)
    kx, kp = jax.random.split(key)
    x = jax.random.normal(kx, (B, N_CHS, T), dtype=jnp.float32)
    params = init_params(kp, N_CHS, N_FC_IN, N_FC1, N_FC2, N_CLASSES)

    out = jax.jit(mnet_forward)(x, params)
    out = jax.block_until_ready(out)
    assert out.shape == (B, N_CLASSES), out.shape
    assert bool(jnp.all(jnp.isfinite(out)))
    print("KERNEL_OK")
</pallas_src>

<mosaic_0001>
module attributes {stable_mosaic.version = 11 : i64} {
  func.func @_stage12_kernel(%arg0: i32, %arg1: memref<1x200x19xf32, #tpu.memory_space<vmem>>, %arg2: memref<4x19x40xf32, #tpu.memory_space<vmem>>, %arg3: memref<1x40xf32, #tpu.memory_space<vmem>>, %arg4: memref<4x40x40xf32, #tpu.memory_space<vmem>>, %arg5: memref<1x40xf32, #tpu.memory_space<vmem>>, %arg6: memref<1x40xf32, #tpu.memory_space<vmem>>, %arg7: memref<1x190x40xf32, #tpu.memory_space<vmem>>) attributes {dimension_semantics = [#tpu.dimension_semantics<parallel>], iteration_bounds = array<i64: 2>, scalar_prefetch = 0 : i64, scratch_operands = 0 : i64, tpu.core_type = #tpu.core_type<tc>, window_params = [{transform_indices = @transform_0, window_bounds = array<i64: 1, 200, 19>}, {pipeline_mode = #tpu.pipeline_mode<synchronous>, transform_indices = @transform_1, window_bounds = array<i64: 4, 19, 40>}, {pipeline_mode = #tpu.pipeline_mode<synchronous>, transform_indices = @transform_2, window_bounds = array<i64: 1, 40>}, {pipeline_mode = #tpu.pipeline_mode<synchronous>, transform_indices = @transform_3, window_bounds = array<i64: 4, 40, 40>}, {pipeline_mode = #tpu.pipeline_mode<synchronous>, transform_indices = @transform_4, window_bounds = array<i64: 1, 40>}, {pipeline_mode = #tpu.pipeline_mode<synchronous>, transform_indices = @transform_5, window_bounds = array<i64: 1, 40>}, {transform_indices = @transform_6, window_bounds = array<i64: 1, 190, 40>}]} {
    %c0 = arith.constant 0 : index
    %c0_0 = arith.constant 0 : index
    %c0_1 = arith.constant 0 : index
    %0 = vector.load %arg1[%c0, %c0_0, %c0_1] : memref<1x200x19xf32, #tpu.memory_space<vmem>>, vector<1x200x19xf32>
    %1 = vector.shape_cast %0 : vector<1x200x19xf32> to vector<200x19xf32>
    %cst = arith.constant dense<0.000000e+00> : vector<19xf32>
    %2 = vector.multi_reduction <add>, %1, %cst [0] : vector<200x19xf32> to vector<19xf32>
    %3 = vector.shape_cast %2 : vector<19xf32> to vector<1x19xf32>
    %cst_2 = arith.constant 2.000000e+02 : f32
    %4 = vector.broadcast %cst_2 : f32 to vector<1x19xf32>
    %5 = arith.divf %3, %4 : vector<1x19xf32>
    %6 = vector.broadcast %5 : vector<1x19xf32> to vector<200x19xf32>
    %7 = arith.subf %1, %6 : vector<200x19xf32>
    %8 = arith.mulf %7, %7 : vector<200x19xf32>
    %cst_3 = arith.constant dense<0.000000e+00> : vector<19xf32>
    %9 = vector.multi_reduction <add>, %8, %cst_3 [0] : vector<200x19xf32> to vector<19xf32>
    %10 = vector.shape_cast %9 : vector<19xf32> to vector<1x19xf32>
    %cst_4 = arith.constant 1.990000e+02 : f32
    %11 = vector.broadcast %cst_4 : f32 to vector<1x19xf32>
    %12 = arith.divf %10, %11 : vector<1x19xf32>
    %cst_5 = arith.constant 9.99999996E-13 : f32
    %13 = vector.broadcast %cst_5 : f32 to vector<1x19xf32>
    %14 = arith.addf %12, %13 : vector<1x19xf32>
    %15 = math.rsqrt %14 : vector<1x19xf32>
    %16 = vector.broadcast %15 : vector<1x19xf32> to vector<200x19xf32>
    %17 = arith.mulf %7, %16 : vector<200x19xf32>
    %c0_6 = arith.constant 0 : index
    %c0_7 = arith.constant 0 : index
    %18 = vector.load %arg3[%c0_6, %c0_7] : memref<1x40xf32, #tpu.memory_space<vmem>>, vector<1x40xf32>
    %19 = vector.extract_strided_slice %17 {offsets = [0, 0], sizes = [193, 19], strides = [1, 1]} : vector<200x19xf32> to vector<193x19xf32>
    %c0_8 = arith.constant 0 : index
    %c0_9 = arith.constant 0 : index
    %c0_10 = arith.constant 0 : index
    %20 = vector.load %arg2[%c0_8, %c0_9, %c0_10] : memref<4x19x40xf32, #tpu.memory_space<vmem>>, vector<1x19x40xf32>
    %21 = vector.shape_cast %20 : vector<1x19x40xf32> to vector<19x40xf32>
    %cst_11 = arith.constant dense<0.000000e+00> : vector<193x40xf32>
    %22 = tpu.matmul %19, %21, %cst_11 {dimension_numbers = #tpu.dot_dimension_numbers<[1], [0], [0], [1], [0, 0, 1, 1], [], []>} : vector<193x19xf32>, vector<19x40xf32>, vector<193x40xf32> -> vector<193x40xf32>
    %23 = vector.broadcast %18 : vector<1x40xf32> to vector<193x40xf32>
    %24 = arith.addf %23, %22 : vector<193x40xf32>
    %25 = vector.extract_strided_slice %17 {offsets = [1, 0], sizes = [193, 19], strides = [1, 1]} : vector<200x19xf32> to vector<193x19xf32>
    %c1 = arith.constant 1 : index
    %c0_12 = arith.constant 0 : index
    %c0_13 = arith.constant 0 : index
    %26 = vector.load %arg2[%c1, %c0_12, %c0_13] : memref<4x19x40xf32, #tpu.memory_space<vmem>>, vector<1x19x40xf32>
    %27 = vector.shape_cast %26 : vector<1x19x40xf32> to vector<19x40xf32>
    %cst_14 = arith.constant dense<0.000000e+00> : vector<193x40xf32>
    %28 = tpu.matmul %25, %27, %cst_14 {dimension_numbers = #tpu.dot_dimension_numbers<[1], [0], [0], [1], [0, 0, 1, 1], [], []>} : vector<193x19xf32>, vector<19x40xf32>, vector<193x40xf32> -> vector<193x40xf32>
    %29 = arith.addf %24, %28 : vector<193x40xf32>
    %30 = vector.extract_strided_slice %17 {offsets = [2, 0], sizes = [193, 19], strides = [1, 1]} : vector<200x19xf32> to vector<193x19xf32>
    %c2 = arith.constant 2 : index
    %c0_15 = arith.constant 0 : index
    %c0_16 = arith.constant 0 : index
    %31 = vector.load %arg2[%c2, %c0_15, %c0_16] : memref<4x19x40xf32, #tpu.memory_space<vmem>>, vector<1x19x40xf32>
    %32 = vector.shape_cast %31 : vector<1x19x40xf32> to vector<19x40xf32>
    %cst_17 = arith.constant dense<0.000000e+00> : vector<193x40xf32>
    %33 = tpu.matmul %30, %32, %cst_17 {dimension_numbers = #tpu.dot_dimension_numbers<[1], [0], [0], [1], [0, 0, 1, 1], [], []>} : vector<193x19xf32>, vector<19x40xf32>, vector<193x40xf32> -> vector<193x40xf32>
    %34 = arith.addf %29, %33 : vector<193x40xf32>
    %35 = vector.extract_strided_slice %17 {offsets = [3, 0], sizes = [193, 19], strides = [1, 1]} : vector<200x19xf32> to vector<193x19xf32>
    %c3 = arith.constant 3 : index
    %c0_18 = arith.constant 0 : index
    %c0_19 = arith.constant 0 : index
    %36 = vector.load %arg2[%c3, %c0_18, %c0_19] : memref<4x19x40xf32, #tpu.memory_space<vmem>>, vector<1x19x40xf32>
    %37 = vector.shape_cast %36 : vector<1x19x40xf32> to vector<19x40xf32>
    %cst_20 = arith.constant dense<0.000000e+00> : vector<193x40xf32>
    %38 = tpu.matmul %35, %37, %cst_20 {dimension_numbers = #tpu.dot_dimension_numbers<[1], [0], [0], [1], [0, 0, 1, 1], [], []>} : vector<193x19xf32>, vector<19x40xf32>, vector<193x40xf32> -> vector<193x40xf32>
    %39 = arith.addf %34, %38 : vector<193x40xf32>
    %40 = math.exp %39 : vector<193x40xf32>
    %cst_21 = arith.constant 1.000000e+00 : f32
    %41 = vector.broadcast %cst_21 : f32 to vector<193x40xf32>
    %42 = arith.addf %41, %40 : vector<193x40xf32>
    %cst_22 = arith.constant 1.000000e+00 : f32
    %43 = vector.broadcast %cst_22 : f32 to vector<193x40xf32>
    %44 = arith.addf %43, %40 : vector<193x40xf32>
    %45 = arith.mulf %42, %44 : vector<193x40xf32>
    %cst_23 = arith.constant 2.000000e+01 : f32
    %46 = vector.broadcast %cst_23 : f32 to vector<193x40xf32>
    %47 = arith.cmpf ogt, %39, %46 : vector<193x40xf32>
    %cst_24 = arith.constant 1.000000e+00 : f32
    %48 = vector.broadcast %cst_24 : f32 to vector<193x40xf32>
    %49 = arith.subf %45, %48 : vector<193x40xf32>
    %cst_25 = arith.constant 1.000000e+00 : f32
    %50 = vector.broadcast %cst_25 : f32 to vector<193x40xf32>
    %51 = arith.addf %45, %50 : vector<193x40xf32>
    %52 = arith.divf %49, %51 : vector<193x40xf32>
    %53 = arith.mulf %39, %52 : vector<193x40xf32>
    %54 = arith.select %47, %39, %53 : vector<193x40xi1>, vector<193x40xf32>
    %cst_26 = arith.constant 0.000000e+00 : f32
    %55 = vector.broadcast %cst_26 : f32 to vector<190x40xf32>
    %56 = vector.extract_strided_slice %54 {offsets = [0, 0], sizes = [190, 40], strides = [1, 1]} : vector<193x40xf32> to vector<190x40xf32>
    %c0_27 = arith.constant 0 : index
    %c0_28 = arith.constant 0 : index
    %c0_29 = arith.constant 0 : index
    %57 = vector.load %arg4[%c0_27, %c0_28, %c0_29] : memref<4x40x40xf32, #tpu.memory_space<vmem>>, vector<1x40x40xf32>
    %58 = vector.shape_cast %57 : vector<1x40x40xf32> to vector<40x40xf32>
    %cst_30 = arith.constant dense<0.000000e+00> : vector<190x40xf32>
    %59 = tpu.matmul %56, %58, %cst_30 {dimension_numbers = #tpu.dot_dimension_numbers<[1], [0], [0], [1], [0, 0, 1, 1], [], []>} : vector<190x40xf32>, vector<40x40xf32>, vector<190x40xf32> -> vector<190x40xf32>
    %60 = arith.addf %55, %59 : vector<190x40xf32>
    %61 = vector.extract_strided_slice %54 {offsets = [1, 0], sizes = [190, 40], strides = [1, 1]} : vector<193x40xf32> to vector<190x40xf32>
    %c1_31 = arith.constant 1 : index
    %c0_32 = arith.constant 0 : index
    %c0_33 = arith.constant 0 : index
    %62 = vector.load %arg4[%c1_31, %c0_32, %c0_33] : memref<4x40x40xf32, #tpu.memory_space<vmem>>, vector<1x40x40xf32>
    %63 = vector.shape_cast %62 : vector<1x40x40xf32> to vector<40x40xf32>
    %cst_34 = arith.constant dense<0.000000e+00> : vector<190x40xf32>
    %64 = tpu.matmul %61, %63, %cst_34 {dimension_numbers = #tpu.dot_dimension_numbers<[1], [0], [0], [1], [0, 0, 1, 1], [], []>} : vector<190x40xf32>, vector<40x40xf32>, vector<190x40xf32> -> vector<190x40xf32>
    %65 = arith.addf %60, %64 : vector<190x40xf32>
    %66 = vector.extract_strided_slice %54 {offsets = [2, 0], sizes = [190, 40], strides = [1, 1]} : vector<193x40xf32> to vector<190x40xf32>
    %c2_35 = arith.constant 2 : index
    %c0_36 = arith.constant 0 : index
    %c0_37 = arith.constant 0 : index
    %67 = vector.load %arg4[%c2_35, %c0_36, %c0_37] : memref<4x40x40xf32, #tpu.memory_space<vmem>>, vector<1x40x40xf32>
    %68 = vector.shape_cast %67 : vector<1x40x40xf32> to vector<40x40xf32>
    %cst_38 = arith.constant dense<0.000000e+00> : vector<190x40xf32>
    %69 = tpu.matmul %66, %68, %cst_38 {dimension_numbers = #tpu.dot_dimension_numbers<[1], [0], [0], [1], [0, 0, 1, 1], [], []>} : vector<190x40xf32>, vector<40x40xf32>, vector<190x40xf32> -> vector<190x40xf32>
    %70 = arith.addf %65, %69 : vector<190x40xf32>
    %71 = vector.extract_strided_slice %54 {offsets = [3, 0], sizes = [190, 40], strides = [1, 1]} : vector<193x40xf32> to vector<190x40xf32>
    %c3_39 = arith.constant 3 : index
    %c0_40 = arith.constant 0 : index
    %c0_41 = arith.constant 0 : index
    %72 = vector.load %arg4[%c3_39, %c0_40, %c0_41] : memref<4x40x40xf32, #tpu.memory_space<vmem>>, vector<1x40x40xf32>
    %73 = vector.shape_cast %72 : vector<1x40x40xf32> to vector<40x40xf32>
    %cst_42 = arith.constant dense<0.000000e+00> : vector<190x40xf32>
    %74 = tpu.matmul %71, %73, %cst_42 {dimension_numbers = #tpu.dot_dimension_numbers<[1], [0], [0], [1], [0, 0, 1, 1], [], []>} : vector<190x40xf32>, vector<40x40xf32>, vector<190x40xf32> -> vector<190x40xf32>
    %75 = arith.addf %70, %74 : vector<190x40xf32>
    %c0_43 = arith.constant 0 : index
    %c0_44 = arith.constant 0 : index
    %76 = vector.load %arg5[%c0_43, %c0_44] : memref<1x40xf32, #tpu.memory_space<vmem>>, vector<1x40xf32>
    %77 = vector.broadcast %76 : vector<1x40xf32> to vector<190x40xf32>
    %78 = arith.mulf %75, %77 : vector<190x40xf32>
    %c0_45 = arith.constant 0 : index
    %c0_46 = arith.constant 0 : index
    %79 = vector.load %arg6[%c0_45, %c0_46] : memref<1x40xf32, #tpu.memory_space<vmem>>, vector<1x40xf32>
    %80 = vector.broadcast %79 : vector<1x40xf32> to vector<190x40xf32>
    %81 = arith.addf %78, %80 : vector<190x40xf32>
    %c0_47 = arith.constant 0 : index
    %c0_48 = arith.constant 0 : index
    %c0_49 = arith.constant 0 : index
    %82 = vector.load %arg7[%c0_47, %c0_48, %c0_49] : memref<1x190x40xf32, #tpu.memory_space<vmem>>, vector<1x190x40xf32>
    %83 = vector.shape_cast %82 : vector<1x190x40xf32> to vector<190x40xf32>
    %84 = vector.shape_cast %81 : vector<190x40xf32> to vector<1x190x40xf32>
    tpu.vector_store %arg7[%c0_47, %c0_48, %c0_49], %84 {strides = array<i32>} : memref<1x190x40xf32, #tpu.memory_space<vmem>>, vector<1x190x40xf32>,
    return
  }
  func.func @transform_0(%arg0: i32) -> (i32, i32, i32) {
    %c0_i32 = arith.constant 0 : i32
    %c0_i32_0 = arith.constant 0 : i32
    %c0_i32_1 = arith.constant 0 : i32
    return %arg0, %c0_i32, %c0_i32_0 : i32, i32, i32
  }
  func.func @transform_1(%arg0: i32) -> (i32, i32, i32) {
    %c0_i32 = arith.constant 0 : i32
    %c0_i32_0 = arith.constant 0 : i32
    %c0_i32_1 = arith.constant 0 : i32
    %c0_i32_2 = arith.constant 0 : i32
    return %c0_i32, %c0_i32_0, %c0_i32_1 : i32, i32, i32
  }
  func.func @transform_2(%arg0: i32) -> (i32, i32) {
    %c0_i32 = arith.constant 0 : i32
    %c0_i32_0 = arith.constant 0 : i32
    %c0_i32_1 = arith.constant 0 : i32
    return %c0_i32, %c0_i32_0 : i32, i32
  }
  func.func @transform_3(%arg0: i32) -> (i32, i32, i32) {
    %c0_i32 = arith.constant 0 : i32
    %c0_i32_0 = arith.constant 0 : i32
    %c0_i32_1 = arith.constant 0 : i32
    %c0_i32_2 = arith.constant 0 : i32
    return %c0_i32, %c0_i32_0, %c0_i32_1 : i32, i32, i32
  }
  func.func @transform_4(%arg0: i32) -> (i32, i32) {
    %c0_i32 = arith.constant 0 : i32
    %c0_i32_0 = arith.constant 0 : i32
    %c0_i32_1 = arith.constant 0 : i32
    return %c0_i32, %c0_i32_0 : i32, i32
  }
  func.func @transform_5(%arg0: i32) -> (i32, i32) {
    %c0_i32 = arith.constant 0 : i32
    %c0_i32_0 = arith.constant 0 : i32
    %c0_i32_1 = arith.constant 0 : i32
    return %c0_i32, %c0_i32_0 : i32, i32
  }
  func.func @transform_6(%arg0: i32) -> (i32, i32, i32) {
    %c0_i32 = arith.constant 0 : i32
    %c0_i32_0 = arith.constant 0 : i32
    %c0_i32_1 = arith.constant 0 : i32
    return %arg0, %c0_i32, %c0_i32_0 : i32, i32, i32
  }
}

module attributes {stable_mosaic.version = 11 : i64} {
  func.func @_pool_mish_kernel(%arg0: i32, %arg1: memref<1x38x5x40xf32, #tpu.memory_space<vmem>>, %arg2: memref<1x38x40xf32, #tpu.memory_space<vmem>>) attributes {dimension_semantics = [#tpu.dimension_semantics<parallel>], iteration_bounds = array<i64: 2>, scalar_prefetch = 0 : i64, scratch_operands = 0 : i64, tpu.core_type = #tpu.core_type<tc>, window_params = [{transform_indices = @transform_0, window_bounds = array<i64: 1, 38, 5, 40>}, {transform_indices = @transform_1, window_bounds = array<i64: 1, 38, 40>}]} {
    %c0 = arith.constant 0 : index
    %c0_0 = arith.constant 0 : index
    %c0_1 = arith.constant 0 : index
    %c0_2 = arith.constant 0 : index
    %0 = vector.load %arg1[%c0, %c0_0, %c0_1, %c0_2] : memref<1x38x5x40xf32, #tpu.memory_space<vmem>>, vector<1x38x5x40xf32>
    %1 = vector.shape_cast %0 : vector<1x38x5x40xf32> to vector<38x5x40xf32>
    %2 = vector.extract_strided_slice %1 {offsets = [0, 0, 0], sizes = [38, 1, 40], strides = [1, 1, 1]} : vector<38x5x40xf32> to vector<38x1x40xf32>
    %3 = vector.shape_cast %2 : vector<38x1x40xf32> to vector<38x40xf32>
    %4 = vector.extract_strided_slice %1 {offsets = [0, 1, 0], sizes = [38, 1, 40], strides = [1, 1, 1]} : vector<38x5x40xf32> to vector<38x1x40xf32>
    %5 = vector.shape_cast %4 : vector<38x1x40xf32> to vector<38x40xf32>
    %6 = arith.maximumf %3, %5 : vector<38x40xf32>
    %7 = vector.extract_strided_slice %1 {offsets = [0, 2, 0], sizes = [38, 1, 40], strides = [1, 1, 1]} : vector<38x5x40xf32> to vector<38x1x40xf32>
    %8 = vector.shape_cast %7 : vector<38x1x40xf32> to vector<38x40xf32>
    %9 = arith.maximumf %6, %8 : vector<38x40xf32>
    %10 = vector.extract_strided_slice %1 {offsets = [0, 3, 0], sizes = [38, 1, 40], strides = [1, 1, 1]} : vector<38x5x40xf32> to vector<38x1x40xf32>
    %11 = vector.shape_cast %10 : vector<38x1x40xf32> to vector<38x40xf32>
    %12 = arith.maximumf %9, %11 : vector<38x40xf32>
    %13 = vector.extract_strided_slice %1 {offsets = [0, 4, 0], sizes = [38, 1, 40], strides = [1, 1, 1]} : vector<38x5x40xf32> to vector<38x1x40xf32>
    %14 = vector.shape_cast %13 : vector<38x1x40xf32> to vector<38x40xf32>
    %15 = arith.maximumf %12, %14 : vector<38x40xf32>
    %16 = math.exp %15 : vector<38x40xf32>
    %cst = arith.constant 1.000000e+00 : f32
    %17 = vector.broadcast %cst : f32 to vector<38x40xf32>
    %18 = arith.addf %17, %16 : vector<38x40xf32>
    %cst_3 = arith.constant 1.000000e+00 : f32
    %19 = vector.broadcast %cst_3 : f32 to vector<38x40xf32>
    %20 = arith.addf %19, %16 : vector<38x40xf32>
    %21 = arith.mulf %18, %20 : vector<38x40xf32>
    %cst_4 = arith.constant 2.000000e+01 : f32
    %22 = vector.broadcast %cst_4 : f32 to vector<38x40xf32>
    %23 = arith.cmpf ogt, %15, %22 : vector<38x40xf32>
    %cst_5 = arith.constant 1.000000e+00 : f32
    %24 = vector.broadcast %cst_5 : f32 to vector<38x40xf32>
    %25 = arith.subf %21, %24 : vector<38x40xf32>
    %cst_6 = arith.constant 1.000000e+00 : f32
    %26 = vector.broadcast %cst_6 : f32 to vector<38x40xf32>
    %27 = arith.addf %21, %26 : vector<38x40xf32>
    %28 = arith.divf %25, %27 : vector<38x40xf32>
    %29 = arith.mulf %15, %28 : vector<38x40xf32>
    %30 = arith.select %23, %15, %29 : vector<38x40xi1>, vector<38x40xf32>
    %c0_7 = arith.constant 0 : index
    %c0_8 = arith.constant 0 : index
    %c0_9 = arith.constant 0 : index
    %31 = vector.load %arg2[%c0_7, %c0_8, %c0_9] : memref<1x38x40xf32, #tpu.memory_space<vmem>>, vector<1x38x40xf32>
    %32 = vector.shape_cast %31 : vector<1x38x40xf32> to vector<38x40xf32>
    %33 = vector.shape_cast %30 : vector<38x40xf32> to vector<1x38x40xf32>
    tpu.vector_store %arg2[%c0_7, %c0_8, %c0_9], %33 {strides = array<i32>} : memref<1x38x40xf32, #tpu.memory_space<vmem>>, vector<1x38x40xf32>,
    return
  }
  func.func @transform_0(%arg0: i32) -> (i32, i32, i32, i32) {
    %c0_i32 = arith.constant 0 : i32
    %c0_i32_0 = arith.constant 0 : i32
    %c0_i32_1 = arith.constant 0 : i32
    %c0_i32_2 = arith.constant 0 : i32
    return %arg0, %c0_i32, %c0_i32_0, %c0_i32_1 : i32, i32, i32, i32
  }
  func.func @transform_1(%arg0: i32) -> (i32, i32, i32) {
    %c0_i32 = arith.constant 0 : i32
    %c0_i32_0 = arith.constant 0 : i32
    %c0_i32_1 = arith.constant 0 : i32
    return %arg0, %c0_i32, %c0_i32_0 : i32, i32, i32
  }
}

module attributes {stable_mosaic.version = 11 : i64} {
  func.func @_matmul_affine_kernel(%arg0: i32, %arg1: memref<512x96xf32, #tpu.memory_space<vmem>>, %arg2: memref<96x50xf32, #tpu.memory_space<vmem>>, %arg3: memref<1x50xf32, #tpu.memory_space<vmem>>, %arg4: memref<1x50xf32, #tpu.memory_space<vmem>>, %arg5: memref<512x50xf32, #tpu.memory_space<vmem>>) attributes {dimension_semantics = [#tpu.dimension_semantics<parallel>], iteration_bounds = array<i64: 4>, scalar_prefetch = 0 : i64, scratch_operands = 0 : i64, tpu.core_type = #tpu.core_type<tc>, window_params = [{transform_indices = @transform_0, window_bounds = array<i64: 512, 96>}, {pipeline_mode = #tpu.pipeline_mode<synchronous>, transform_indices = @transform_1, window_bounds = array<i64: 96, 50>}, {pipeline_mode = #tpu.pipeline_mode<synchronous>, transform_indices = @transform_2, window_bounds = array<i64: 1, 50>}, {pipeline_mode = #tpu.pipeline_mode<synchronous>, transform_indices = @transform_3, window_bounds = array<i64: 1, 50>}, {transform_indices = @transform_4, window_bounds = array<i64: 512, 50>}]} {
    %c0 = arith.constant 0 : index
    %c0_0 = arith.constant 0 : index
    %0 = vector.load %arg1[%c0, %c0_0] : memref<512x96xf32, #tpu.memory_space<vmem>>, vector<512x96xf32>
    %c0_1 = arith.constant 0 : index
    %c0_2 = arith.constant 0 : index
    %1 = vector.load %arg2[%c0_1, %c0_2] : memref<96x50xf32, #tpu.memory_space<vmem>>, vector<96x50xf32>
    %cst = arith.constant dense<0.000000e+00> : vector<512x50xf32>
    %2 = tpu.matmul %0, %1, %cst {dimension_numbers = #tpu.dot_dimension_numbers<[1], [0], [0], [1], [0, 0, 1, 1], [], []>} : vector<512x96xf32>, vector<96x50xf32>, vector<512x50xf32> -> vector<512x50xf32>
    %c0_3 = arith.constant 0 : index
    %c0_4 = arith.constant 0 : index
    %3 = vector.load %arg3[%c0_3, %c0_4] : memref<1x50xf32, #tpu.memory_space<vmem>>, vector<1x50xf32>
    %4 = vector.broadcast %3 : vector<1x50xf32> to vector<512x50xf32>
    %5 = arith.mulf %2, %4 : vector<512x50xf32>
    %c0_5 = arith.constant 0 : index
    %c0_6 = arith.constant 0 : index
    %6 = vector.load %arg4[%c0_5, %c0_6] : memref<1x50xf32, #tpu.memory_space<vmem>>, vector<1x50xf32>
    %7 = vector.broadcast %6 : vector<1x50xf32> to vector<512x50xf32>
    %8 = arith.addf %5, %7 : vector<512x50xf32>
    %c0_7 = arith.constant 0 : index
    %c0_8 = arith.constant 0 : index
    %9 = vector.load %arg5[%c0_7, %c0_8] : memref<512x50xf32, #tpu.memory_space<vmem>>, vector<512x50xf32>
    tpu.vector_store %arg5[%c0_7, %c0_8], %8 {strides = array<i32>} : memref<512x50xf32, #tpu.memory_space<vmem>>, vector<512x50xf32>,
    return
  }
  func.func @transform_0(%arg0: i32) -> (i32, i32) {
    %c0_i32 = arith.constant 0 : i32
    %c0_i32_0 = arith.constant 0 : i32
    return %arg0, %c0_i32 : i32, i32
  }
  func.func @transform_1(%arg0: i32) -> (i32, i32) {
    %c0_i32 = arith.constant 0 : i32
    %c0_i32_0 = arith.constant 0 : i32
    %c0_i32_1 = arith.constant 0 : i32
    return %c0_i32, %c0_i32_0 : i32, i32
  }
  func.func @transform_2(%arg0: i32) -> (i32, i32) {
    %c0_i32 = arith.constant 0 : i32
    %c0_i32_0 = arith.constant 0 : i32
    %c0_i32_1 = arith.constant 0 : i32
    return %c0_i32, %c0_i32_0 : i32, i32
  }
  func.func @transform_3(%arg0: i32) -> (i32, i32) {
    %c0_i32 = arith.constant 0 : i32
    %c0_i32_0 = arith.constant 0 : i32
    %c0_i32_1 = arith.constant 0 : i32
    return %c0_i32, %c0_i32_0 : i32, i32
  }
  func.func @transform_4(%arg0: i32) -> (i32, i32) {
    %c0_i32 = arith.constant 0 : i32
    %c0_i32_0 = arith.constant 0 : i32
    return %arg0, %c0_i32 : i32, i32
  }
}

module attributes {stable_mosaic.version = 11 : i64} {
  func.func @_pool33_conv4_kernel(%arg0: i32, %arg1: memref<1x3x9x3x50xf32, #tpu.memory_space<vmem>>, %arg2: memref<5x50x50xf32, #tpu.memory_space<vmem>>, %arg3: memref<1x50xf32, #tpu.memory_space<vmem>>, %arg4: memref<1x50xf32, #tpu.memory_space<vmem>>, %arg5: memref<1x4x50xf32, #tpu.memory_space<vmem>>) attributes {dimension_semantics = [#tpu.dimension_semantics<parallel>], iteration_bounds = array<i64: 22>, scalar_prefetch = 0 : i64, scratch_operands = 0 : i64, tpu.core_type = #tpu.core_type<tc>, window_params = [{transform_indices = @transform_0, window_bounds = array<i64: 1, 3, 9, 3, 50>}, {pipeline_mode = #tpu.pipeline_mode<synchronous>, transform_indices = @transform_1, window_bounds = array<i64: 5, 50, 50>}, {pipeline_mode = #tpu.pipeline_mode<synchronous>, transform_indices = @transform_2, window_bounds = array<i64: 1, 50>}, {pipeline_mode = #tpu.pipeline_mode<synchronous>, transform_indices = @transform_3, window_bounds = array<i64: 1, 50>}, {transform_indices = @transform_4, window_bounds = array<i64: 1, 4, 50>}]} {
    %c0 = arith.constant 0 : index
    %c0_0 = arith.constant 0 : index
    %c0_1 = arith.constant 0 : index
    %c0_2 = arith.constant 0 : index
    %c0_3 = arith.constant 0 : index
    %0 = vector.load %arg1[%c0, %c0_0, %c0_1, %c0_2, %c0_3] : memref<1x3x9x3x50xf32, #tpu.memory_space<vmem>>, vector<1x3x9x3x50xf32>
    %1 = vector.shape_cast %0 : vector<1x3x9x3x50xf32> to vector<3x9x3x50xf32>
    %2 = vector.extract_strided_slice %1 {offsets = [0, 0, 0, 0], sizes = [1, 9, 3, 50], strides = [1, 1, 1, 1]} : vector<3x9x3x50xf32> to vector<1x9x3x50xf32>
    %3 = vector.shape_cast %2 : vector<1x9x3x50xf32> to vector<9x3x50xf32>
    %4 = vector.extract_strided_slice %1 {offsets = [1, 0, 0, 0], sizes = [1, 9, 3, 50], strides = [1, 1, 1, 1]} : vector<3x9x3x50xf32> to vector<1x9x3x50xf32>
    %5 = vector.shape_cast %4 : vector<1x9x3x50xf32> to vector<9x3x50xf32>
    %6 = arith.maximumf %3, %5 : vector<9x3x50xf32>
    %7 = vector.extract_strided_slice %1 {offsets = [2, 0, 0, 0], sizes = [1, 9, 3, 50], strides = [1, 1, 1, 1]} : vector<3x9x3x50xf32> to vector<1x9x3x50xf32>
    %8 = vector.shape_cast %7 : vector<1x9x3x50xf32> to vector<9x3x50xf32>
    %9 = arith.maximumf %6, %8 : vector<9x3x50xf32>
    %10 = vector.extract_strided_slice %9 {offsets = [0, 0, 0], sizes = [9, 1, 50], strides = [1, 1, 1]} : vector<9x3x50xf32> to vector<9x1x50xf32>
    %11 = vector.shape_cast %10 : vector<9x1x50xf32> to vector<9x50xf32>
    %12 = vector.extract_strided_slice %9 {offsets = [0, 1, 0], sizes = [9, 1, 50], strides = [1, 1, 1]} : vector<9x3x50xf32> to vector<9x1x50xf32>
    %13 = vector.shape_cast %12 : vector<9x1x50xf32> to vector<9x50xf32>
    %14 = arith.maximumf %11, %13 : vector<9x50xf32>
    %15 = vector.extract_strided_slice %9 {offsets = [0, 2, 0], sizes = [9, 1, 50], strides = [1, 1, 1]} : vector<9x3x50xf32> to vector<9x1x50xf32>
    %16 = vector.shape_cast %15 : vector<9x1x50xf32> to vector<9x50xf32>
    %17 = arith.maximumf %14, %16 : vector<9x50xf32>
    %18 = math.exp %17 : vector<9x50xf32>
    %cst = arith.constant 1.000000e+00 : f32
    %19 = vector.broadcast %cst : f32 to vector<9x50xf32>
    %20 = arith.addf %19, %18 : vector<9x50xf32>
    %cst_4 = arith.constant 1.000000e+00 : f32
    %21 = vector.broadcast %cst_4 : f32 to vector<9x50xf32>
    %22 = arith.addf %21, %18 : vector<9x50xf32>
    %23 = arith.mulf %20, %22 : vector<9x50xf32>
    %cst_5 = arith.constant 2.000000e+01 : f32
    %24 = vector.broadcast %cst_5 : f32 to vector<9x50xf32>
    %25 = arith.cmpf ogt, %17, %24 : vector<9x50xf32>
    %cst_6 = arith.constant 1.000000e+00 : f32
    %26 = vector.broadcast %cst_6 : f32 to vector<9x50xf32>
    %27 = arith.subf %23, %26 : vector<9x50xf32>
    %cst_7 = arith.constant 1.000000e+00 : f32
    %28 = vector.broadcast %cst_7 : f32 to vector<9x50xf32>
    %29 = arith.addf %23, %28 : vector<9x50xf32>
    %30 = arith.divf %27, %29 : vector<9x50xf32>
    %31 = arith.mulf %17, %30 : vector<9x50xf32>
    %32 = arith.select %25, %17, %31 : vector<9x50xi1>, vector<9x50xf32>
    %cst_8 = arith.constant 0.000000e+00 : f32
    %33 = vector.broadcast %cst_8 : f32 to vector<4x50xf32>
    %34 = vector.extract_strided_slice %32 {offsets = [0, 0], sizes = [4, 50], strides = [1, 1]} : vector<9x50xf32> to vector<4x50xf32>
    %c0_9 = arith.constant 0 : index
    %c0_10 = arith.constant 0 : index
    %c0_11 = arith.constant 0 : index
    %35 = vector.load %arg2[%c0_9, %c0_10, %c0_11] : memref<5x50x50xf32, #tpu.memory_space<vmem>>, vector<1x50x50xf32>
    %36 = vector.shape_cast %35 : vector<1x50x50xf32> to vector<50x50xf32>
    %cst_12 = arith.constant dense<0.000000e+00> : vector<4x50xf32>
    %37 = tpu.matmul %34, %36, %cst_12 {dimension_numbers = #tpu.dot_dimension_numbers<[1], [0], [0], [1], [0, 0, 1, 1], [], []>} : vector<4x50xf32>, vector<50x50xf32>, vector<4x50xf32> -> vector<4x50xf32>
    %38 = arith.addf %33, %37 : vector<4x50xf32>
    %39 = vector.extract_strided_slice %32 {offsets = [1, 0], sizes = [4, 50], strides = [1, 1]} : vector<9x50xf32> to vector<4x50xf32>
    %c1 = arith.constant 1 : index
    %c0_13 = arith.constant 0 : index
    %c0_14 = arith.constant 0 : index
    %40 = vector.load %arg2[%c1, %c0_13, %c0_14] : memref<5x50x50xf32, #tpu.memory_space<vmem>>, vector<1x50x50xf32>
    %41 = vector.shape_cast %40 : vector<1x50x50xf32> to vector<50x50xf32>
    %cst_15 = arith.constant dense<0.000000e+00> : vector<4x50xf32>
    %42 = tpu.matmul %39, %41, %cst_15 {dimension_numbers = #tpu.dot_dimension_numbers<[1], [0], [0], [1], [0, 0, 1, 1], [], []>} : vector<4x50xf32>, vector<50x50xf32>, vector<4x50xf32> -> vector<4x50xf32>
    %43 = arith.addf %38, %42 : vector<4x50xf32>
    %44 = vector.extract_strided_slice %32 {offsets = [2, 0], sizes = [4, 50], strides = [1, 1]} : vector<9x50xf32> to vector<4x50xf32>
    %c2 = arith.constant 2 : index
    %c0_16 = arith.constant 0 : index
    %c0_17 = arith.constant 0 : index
    %45 = vector.load %arg2[%c2, %c0_16, %c0_17] : memref<5x50x50xf32, #tpu.memory_space<vmem>>, vector<1x50x50xf32>
    %46 = vector.shape_cast %45 : vector<1x50x50xf32> to vector<50x50xf32>
    %cst_18 = arith.constant dense<0.000000e+00> : vector<4x50xf32>
    %47 = tpu.matmul %44, %46, %cst_18 {dimension_numbers = #tpu.dot_dimension_numbers<[1], [0], [0], [1], [0, 0, 1, 1], [], []>} : vector<4x50xf32>, vector<50x50xf32>, vector<4x50xf32> -> vector<4x50xf32>
    %48 = arith.addf %43, %47 : vector<4x50xf32>
    %49 = vector.extract_strided_slice %32 {offsets = [3, 0], sizes = [4, 50], strides = [1, 1]} : vector<9x50xf32> to vector<4x50xf32>
    %c3 = arith.constant 3 : index
    %c0_19 = arith.constant 0 : index
    %c0_20 = arith.constant 0 : index
    %50 = vector.load %arg2[%c3, %c0_19, %c0_20] : memref<5x50x50xf32, #tpu.memory_space<vmem>>, vector<1x50x50xf32>
    %51 = vector.shape_cast %50 : vector<1x50x50xf32> to vector<50x50xf32>
    %cst_21 = arith.constant dense<0.000000e+00> : vector<4x50xf32>
    %52 = tpu.matmul %49, %51, %cst_21 {dimension_numbers = #tpu.dot_dimension_numbers<[1], [0], [0], [1], [0, 0, 1, 1], [], []>} : vector<4x50xf32>, vector<50x50xf32>, vector<4x50xf32> -> vector<4x50xf32>
    %53 = arith.addf %48, %52 : vector<4x50xf32>
    %54 = vector.extract_strided_slice %32 {offsets = [4, 0], sizes = [4, 50], strides = [1, 1]} : vector<9x50xf32> to vector<4x50xf32>
    %c4 = arith.constant 4 : index
    %c0_22 = arith.constant 0 : index
    %c0_23 = arith.constant 0 : index
    %55 = vector.load %arg2[%c4, %c0_22, %c0_23] : memref<5x50x50xf32, #tpu.memory_space<vmem>>, vector<1x50x50xf32>
    %56 = vector.shape_cast %55 : vector<1x50x50xf32> to vector<50x50xf32>
    %cst_24 = arith.constant dense<0.000000e+00> : vector<4x50xf32>
    %57 = tpu.matmul %54, %56, %cst_24 {dimension_numbers = #tpu.dot_dimension_numbers<[1], [0], [0], [1], [0, 0, 1, 1], [], []>} : vector<4x50xf32>, vector<50x50xf32>, vector<4x50xf32> -> vector<4x50xf32>
    %58 = arith.addf %53, %57 : vector<4x50xf32>
    %c0_25 = arith.constant 0 : index
    %c0_26 = arith.constant 0 : index
    %59 = vector.load %arg3[%c0_25, %c0_26] : memref<1x50xf32, #tpu.memory_space<vmem>>, vector<1x50xf32>
    %60 = vector.broadcast %59 : vector<1x50xf32> to vector<4x50xf32>
    %61 = arith.mulf %58, %60 : vector<4x50xf32>
    %c0_27 = arith.constant 0 : index
    %c0_28 = arith.constant 0 : index
    %62 = vector.load %arg4[%c0_27, %c0_28] : memref<1x50xf32, #tpu.memory_space<vmem>>, vector<1x50xf32>
    %63 = vector.broadcast %62 : vector<1x50xf32> to vector<4x50xf32>
    %64 = arith.addf %61, %63 : vector<4x50xf32>
    %c0_29 = arith.constant 0 : index
    %c0_30 = arith.constant 0 : index
    %c0_31 = arith.constant 0 : index
    %65 = vector.load %arg5[%c0_29, %c0_30, %c0_31] : memref<1x4x50xf32, #tpu.memory_space<vmem>>, vector<1x4x50xf32>
    %66 = vector.shape_cast %65 : vector<1x4x50xf32> to vector<4x50xf32>
    %67 = vector.shape_cast %64 : vector<4x50xf32> to vector<1x4x50xf32>
    tpu.vector_store %arg5[%c0_29, %c0_30, %c0_31], %67 {strides = array<i32>} : memref<1x4x50xf32, #tpu.memory_space<vmem>>, vector<1x4x50xf32>,
    return
  }
  func.func @transform_0(%arg0: i32) -> (i32, i32, i32, i32, i32) {
    %c0_i32 = arith.constant 0 : i32
    %c0_i32_0 = arith.constant 0 : i32
    %c0_i32_1 = arith.constant 0 : i32
    %c0_i32_2 = arith.constant 0 : i32
    %c0_i32_3 = arith.constant 0 : i32
    return %arg0, %c0_i32, %c0_i32_0, %c0_i32_1, %c0_i32_2 : i32, i32, i32, i32, i32
  }
  func.func @transform_1(%arg0: i32) -> (i32, i32, i32) {
    %c0_i32 = arith.constant 0 : i32
    %c0_i32_0 = arith.constant 0 : i32
    %c0_i32_1 = arith.constant 0 : i32
    %c0_i32_2 = arith.constant 0 : i32
    return %c0_i32, %c0_i32_0, %c0_i32_1 : i32, i32, i32
  }
  func.func @transform_2(%arg0: i32) -> (i32, i32) {
    %c0_i32 = arith.constant 0 : i32
    %c0_i32_0 = arith.constant 0 : i32
    %c0_i32_1 = arith.constant 0 : i32
    return %c0_i32, %c0_i32_0 : i32, i32
  }
  func.func @transform_3(%arg0: i32) -> (i32, i32) {
    %c0_i32 = arith.constant 0 : i32
    %c0_i32_0 = arith.constant 0 : i32
    %c0_i32_1 = arith.constant 0 : i32
    return %c0_i32, %c0_i32_0 : i32, i32
  }
  func.func @transform_4(%arg0: i32) -> (i32, i32, i32) {
    %c0_i32 = arith.constant 0 : i32
    %c0_i32_0 = arith.constant 0 : i32
    %c0_i32_1 = arith.constant 0 : i32
    return %arg0, %c0_i32, %c0_i32_0 : i32, i32, i32
  }
}

module attributes {stable_mosaic.version = 11 : i64} {
  func.func @_pool_mish_kernel(%arg0: i32, %arg1: memref<1x2x2x50xf32, #tpu.memory_space<vmem>>, %arg2: memref<1x2x50xf32, #tpu.memory_space<vmem>>) attributes {dimension_semantics = [#tpu.dimension_semantics<parallel>], iteration_bounds = array<i64: 22>, scalar_prefetch = 0 : i64, scratch_operands = 0 : i64, tpu.core_type = #tpu.core_type<tc>, window_params = [{transform_indices = @transform_0, window_bounds = array<i64: 1, 2, 2, 50>}, {transform_indices = @transform_1, window_bounds = array<i64: 1, 2, 50>}]} {
    %c0 = arith.constant 0 : index
    %c0_0 = arith.constant 0 : index
    %c0_1 = arith.constant 0 : index
    %c0_2 = arith.constant 0 : index
    %0 = vector.load %arg1[%c0, %c0_0, %c0_1, %c0_2] : memref<1x2x2x50xf32, #tpu.memory_space<vmem>>, vector<1x2x2x50xf32>
    %1 = vector.shape_cast %0 : vector<1x2x2x50xf32> to vector<2x2x50xf32>
    %2 = vector.extract_strided_slice %1 {offsets = [0, 0, 0], sizes = [2, 1, 50], strides = [1, 1, 1]} : vector<2x2x50xf32> to vector<2x1x50xf32>
    %3 = vector.shape_cast %2 : vector<2x1x50xf32> to vector<2x50xf32>
    %4 = vector.extract_strided_slice %1 {offsets = [0, 1, 0], sizes = [2, 1, 50], strides = [1, 1, 1]} : vector<2x2x50xf32> to vector<2x1x50xf32>
    %5 = vector.shape_cast %4 : vector<2x1x50xf32> to vector<2x50xf32>
    %6 = arith.maximumf %3, %5 : vector<2x50xf32>
    %7 = math.exp %6 : vector<2x50xf32>
    %cst = arith.constant 1.000000e+00 : f32
    %8 = vector.broadcast %cst : f32 to vector<2x50xf32>
    %9 = arith.addf %8, %7 : vector<2x50xf32>
    %cst_3 = arith.constant 1.000000e+00 : f32
    %10 = vector.broadcast %cst_3 : f32 to vector<2x50xf32>
    %11 = arith.addf %10, %7 : vector<2x50xf32>
    %12 = arith.mulf %9, %11 : vector<2x50xf32>
    %cst_4 = arith.constant 2.000000e+01 : f32
    %13 = vector.broadcast %cst_4 : f32 to vector<2x50xf32>
    %14 = arith.cmpf ogt, %6, %13 : vector<2x50xf32>
    %cst_5 = arith.constant 1.000000e+00 : f32
    %15 = vector.broadcast %cst_5 : f32 to vector<2x50xf32>
    %16 = arith.subf %12, %15 : vector<2x50xf32>
    %cst_6 = arith.constant 1.000000e+00 : f32
    %17 = vector.broadcast %cst_6 : f32 to vector<2x50xf32>
    %18 = arith.addf %12, %17 : vector<2x50xf32>
    %19 = arith.divf %16, %18 : vector<2x50xf32>
    %20 = arith.mulf %6, %19 : vector<2x50xf32>
    %21 = arith.select %14, %6, %20 : vector<2x50xi1>, vector<2x50xf32>
    %c0_7 = arith.constant 0 : index
    %c0_8 = arith.constant 0 : index
    %c0_9 = arith.constant 0 : index
    %22 = vector.load %arg2[%c0_7, %c0_8, %c0_9] : memref<1x2x50xf32, #tpu.memory_space<vmem>>, vector<1x2x50xf32>
    %23 = vector.shape_cast %22 : vector<1x2x50xf32> to vector<2x50xf32>
    %24 = vector.shape_cast %21 : vector<2x50xf32> to vector<1x2x50xf32>
    tpu.vector_store %arg2[%c0_7, %c0_8, %c0_9], %24 {strides = array<i32>} : memref<1x2x50xf32, #tpu.memory_space<vmem>>, vector<1x2x50xf32>,
    return
  }
  func.func @transform_0(%arg0: i32) -> (i32, i32, i32, i32) {
    %c0_i32 = arith.constant 0 : i32
    %c0_i32_0 = arith.constant 0 : i32
    %c0_i32_1 = arith.constant 0 : i32
    %c0_i32_2 = arith.constant 0 : i32
    return %arg0, %c0_i32, %c0_i32_0, %c0_i32_1 : i32, i32, i32, i32
  }
  func.func @transform_1(%arg0: i32) -> (i32, i32, i32) {
    %c0_i32 = arith.constant 0 : i32
    %c0_i32_0 = arith.constant 0 : i32
    %c0_i32_1 = arith.constant 0 : i32
    return %arg0, %c0_i32, %c0_i32_0 : i32, i32, i32
  }
}

module attributes {stable_mosaic.version = 11 : i64} {
  func.func @_fc_head_kernel(%arg0: memref<2x1100xf32, #tpu.memory_space<vmem>>, %arg1: memref<1100x64xf32, #tpu.memory_space<vmem>>, %arg2: memref<1x64xf32, #tpu.memory_space<vmem>>, %arg3: memref<64x32xf32, #tpu.memory_space<vmem>>, %arg4: memref<1x32xf32, #tpu.memory_space<vmem>>, %arg5: memref<32x4xf32, #tpu.memory_space<vmem>>, %arg6: memref<1x4xf32, #tpu.memory_space<vmem>>, %arg7: memref<2x4xf32, #tpu.memory_space<vmem>>) attributes {dimension_semantics = [], scalar_prefetch = 0 : i64, scratch_operands = 0 : i64, tpu.core_type = #tpu.core_type<tc>} {
    %c0 = arith.constant 0 : index
    %c0_0 = arith.constant 0 : index
    %0 = vector.load %arg0[%c0, %c0_0] : memref<2x1100xf32, #tpu.memory_space<vmem>>, vector<2x1100xf32>
    %c0_1 = arith.constant 0 : index
    %c0_2 = arith.constant 0 : index
    %1 = vector.load %arg1[%c0_1, %c0_2] : memref<1100x64xf32, #tpu.memory_space<vmem>>, vector<1100x64xf32>
    %cst = arith.constant dense<0.000000e+00> : vector<2x64xf32>
    %2 = tpu.matmul %0, %1, %cst {dimension_numbers = #tpu.dot_dimension_numbers<[1], [0], [0], [1], [0, 0, 1, 1], [], []>} : vector<2x1100xf32>, vector<1100x64xf32>, vector<2x64xf32> -> vector<2x64xf32>
    %c0_3 = arith.constant 0 : index
    %c0_4 = arith.constant 0 : index
    %3 = vector.load %arg2[%c0_3, %c0_4] : memref<1x64xf32, #tpu.memory_space<vmem>>, vector<1x64xf32>
    %4 = vector.broadcast %3 : vector<1x64xf32> to vector<2x64xf32>
    %5 = arith.addf %2, %4 : vector<2x64xf32>
    %6 = math.exp %5 : vector<2x64xf32>
    %cst_5 = arith.constant 1.000000e+00 : f32
    %7 = vector.broadcast %cst_5 : f32 to vector<2x64xf32>
    %8 = arith.addf %7, %6 : vector<2x64xf32>
    %cst_6 = arith.constant 1.000000e+00 : f32
    %9 = vector.broadcast %cst_6 : f32 to vector<2x64xf32>
    %10 = arith.addf %9, %6 : vector<2x64xf32>
    %11 = arith.mulf %8, %10 : vector<2x64xf32>
    %cst_7 = arith.constant 2.000000e+01 : f32
    %12 = vector.broadcast %cst_7 : f32 to vector<2x64xf32>
    %13 = arith.cmpf ogt, %5, %12 : vector<2x64xf32>
    %cst_8 = arith.constant 1.000000e+00 : f32
    %14 = vector.broadcast %cst_8 : f32 to vector<2x64xf32>
    %15 = arith.subf %11, %14 : vector<2x64xf32>
    %cst_9 = arith.constant 1.000000e+00 : f32
    %16 = vector.broadcast %cst_9 : f32 to vector<2x64xf32>
    %17 = arith.addf %11, %16 : vector<2x64xf32>
    %18 = arith.divf %15, %17 : vector<2x64xf32>
    %19 = arith.mulf %5, %18 : vector<2x64xf32>
    %20 = arith.select %13, %5, %19 : vector<2x64xi1>, vector<2x64xf32>
    %c0_10 = arith.constant 0 : index
    %c0_11 = arith.constant 0 : index
    %21 = vector.load %arg3[%c0_10, %c0_11] : memref<64x32xf32, #tpu.memory_space<vmem>>, vector<64x32xf32>
    %cst_12 = arith.constant dense<0.000000e+00> : vector<2x32xf32>
    %22 = tpu.matmul %20, %21, %cst_12 {dimension_numbers = #tpu.dot_dimension_numbers<[1], [0], [0], [1], [0, 0, 1, 1], [], []>} : vector<2x64xf32>, vector<64x32xf32>, vector<2x32xf32> -> vector<2x32xf32>
    %c0_13 = arith.constant 0 : index
    %c0_14 = arith.constant 0 : index
    %23 = vector.load %arg4[%c0_13, %c0_14] : memref<1x32xf32, #tpu.memory_space<vmem>>, vector<1x32xf32>
    %24 = vector.broadcast %23 : vector<1x32xf32> to vector<2x32xf32>
    %25 = arith.addf %22, %24 : vector<2x32xf32>
    %26 = math.exp %25 : vector<2x32xf32>
    %cst_15 = arith.constant 1.000000e+00 : f32
    %27 = vector.broadcast %cst_15 : f32 to vector<2x32xf32>
    %28 = arith.addf %27, %26 : vector<2x32xf32>
    %cst_16 = arith.constant 1.000000e+00 : f32
    %29 = vector.broadcast %cst_16 : f32 to vector<2x32xf32>
    %30 = arith.addf %29, %26 : vector<2x32xf32>
    %31 = arith.mulf %28, %30 : vector<2x32xf32>
    %cst_17 = arith.constant 2.000000e+01 : f32
    %32 = vector.broadcast %cst_17 : f32 to vector<2x32xf32>
    %33 = arith.cmpf ogt, %25, %32 : vector<2x32xf32>
    %cst_18 = arith.constant 1.000000e+00 : f32
    %34 = vector.broadcast %cst_18 : f32 to vector<2x32xf32>
    %35 = arith.subf %31, %34 : vector<2x32xf32>
    %cst_19 = arith.constant 1.000000e+00 : f32
    %36 = vector.broadcast %cst_19 : f32 to vector<2x32xf32>
    %37 = arith.addf %31, %36 : vector<2x32xf32>
    %38 = arith.divf %35, %37 : vector<2x32xf32>
    %39 = arith.mulf %25, %38 : vector<2x32xf32>
    %40 = arith.select %33, %25, %39 : vector<2x32xi1>, vector<2x32xf32>
    %c0_20 = arith.constant 0 : index
    %c0_21 = arith.constant 0 : index
    %41 = vector.load %arg5[%c0_20, %c0_21] : memref<32x4xf32, #tpu.memory_space<vmem>>, vector<32x4xf32>
    %cst_22 = arith.constant dense<0.000000e+00> : vector<2x4xf32>
    %42 = tpu.matmul %40, %41, %cst_22 {dimension_numbers = #tpu.dot_dimension_numbers<[1], [0], [0], [1], [0, 0, 1, 1], [], []>} : vector<2x32xf32>, vector<32x4xf32>, vector<2x4xf32> -> vector<2x4xf32>
    %c0_23 = arith.constant 0 : index
    %c0_24 = arith.constant 0 : index
    %43 = vector.load %arg6[%c0_23, %c0_24] : memref<1x4xf32, #tpu.memory_space<vmem>>, vector<1x4xf32>
    %44 = vector.broadcast %43 : vector<1x4xf32> to vector<2x4xf32>
    %45 = arith.addf %42, %44 : vector<2x4xf32>
    %c0_25 = arith.constant 0 : index
    %c0_26 = arith.constant 0 : index
    %46 = vector.load %arg7[%c0_25, %c0_26] : memref<2x4xf32, #tpu.memory_space<vmem>>, vector<2x4xf32>
    tpu.vector_store %arg7[%c0_25, %c0_26], %45 {strides = array<i32>} : memref<2x4xf32, #tpu.memory_space<vmem>>, vector<2x4xf32>,
    return
  }
}

</mosaic_0001>

<llo_original>
// kernel: mnet_forward.7
$region0: #{mnet_forward.7}
  #allocation0 [shape = 'u32[]', space=smem, size = 0x4, offset = 0x4, fixed_abs, tag = 'smem constant byte address 0x4 - core index']
  #allocation1 [shape = 'u32[72,128]{1,0:T(1,128)}', space=vmem, size = 0x9000, scoped, tag = 'internal scratch']
  %s0 = inlined_call_operand.vmem [shape: f32[2,38,5,40], index: 0, kind: input, shape index: {}]
  %s1 = inlined_call_operand.vmem [shape: f32[2,38,40], index: 1, kind: output, shape index: {}]
  %s2 = sld [smem:[#allocation0]]
  $region37: #{mnet_forward.7} parent=0
    _
  %s4 = ssub.s32 1, %s2
  %s5 = scalar_select 0, %s4, %s2
  loop: start=0, step=1, limit=4
  $region2: #{mnet_forward.7} parent=0 // loop_pre_header
    _
  $region3: #{mnet_forward.7} parent=0 // loop_header
    %s7 = sphi 0, %s11
    %p8 = scmp.ge.s32.totalorder %s7, 4
    %s17 = sphi 0, %s19
    %s20 = sphi 0, %s17
    %s21 = sphi 0, %s20
    %s37 = sphi 0, %s21
    %s43 = sphi 0, %s45
    %s46 = sphi 0, %s43
    %s47 = sphi 0, %s46
    %s63 = sphi 0, %s47
  $region4: #{mnet_forward.7} parent=0 // loop_header_branch
    %10 = sbr.rel (%p8) target = $region8
  $region5: #{mnet_forward.7} parent=0 // loop_body
    %s12 = ssub.s32 %s7, 1
    %s13 = ssub.s32 %s7, 2
    %s14 = sadd.s32 %s7, 1
    %s15 = ssub.s32 %s7, %s14
    %p16 = scmp.eq.s32.totalorder %s15, 0
    %s18 = sadd.s32 %s17, 1
    %s19 = scalar_select %p16, %s17, %s18
    %p22 = pneg %p16
    %p23 = scmp.eq.s32.totalorder %s7, 1
    %p24 = por %p22, %p23
    %p25 = scmp.ne.s32.totalorder %s17, %s20
    %p26 = scmp.eq.s32.totalorder %s7, 0
    %p27 = por %p25, %p26
    %p28 = scmp.ne.s32.totalorder %s17, %s20
    %p29 = scmp.eq.s32.totalorder %s12, 1
    %p30 = por %p28, %p29
    %p31 = scmp.ne.s32.totalorder %s20, %s21
    %p32 = scmp.eq.s32.totalorder %s12, 0
    %p33 = por %p31, %p32
    %p34 = scmp.ne.s32.totalorder %s20, %s21
    %p35 = scmp.eq.s32.totalorder %s13, 1
    %p36 = por %p34, %p35
    %p38 = scmp.ne.s32.totalorder %s21, %s37
    %p39 = scmp.eq.s32.totalorder %s13, 0
    %p40 = por %p38, %p39
    %s41 = ssub.s32 %s7, %s14
    %p42 = scmp.eq.s32.totalorder %s41, 0
    %s44 = sadd.s32 %s43, 1
    %s45 = scalar_select %p42, %s43, %s44
    %p48 = pneg %p42
    %p49 = scmp.eq.s32.totalorder %s7, 1
    %p50 = por %p48, %p49
    %p51 = scmp.ne.s32.totalorder %s43, %s46
    %p52 = scmp.eq.s32.totalorder %s7, 0
    %p53 = por %p51, %p52
    %p54 = scmp.ne.s32.totalorder %s43, %s46
    %p55 = scmp.eq.s32.totalorder %s12, 1
    %p56 = por %p54, %p55
    %p57 = scmp.ne.s32.totalorder %s46, %s47
    %p58 = scmp.eq.s32.totalorder %s12, 0
    %p59 = por %p57, %p58
    %p60 = scmp.ne.s32.totalorder %s46, %s47
    %p61 = scmp.eq.s32.totalorder %s13, 1
    %p62 = por %p60, %p61
    %p64 = scmp.ne.s32.totalorder %s47, %s63
    %p65 = scmp.eq.s32.totalorder %s13, 0
    %p66 = por %p64, %p65
    %p67 = scmp.le.s32.totalorder 1, %s7
    %p68 = scmp.lt.s32.totalorder %s7, 3
    %p69 = pnand %p67, %p68
    %p70 = pneg %p69
    // Predicated region
    $region9: #{mnet_forward.7} parent=5 // pred_check
      _
    $region10: #{mnet_forward.7} parent=5 // pred_check_branch
      %72 = sbr.rel (%p69) target = $region12
    $region11: #{mnet_forward.7} parent=5 // pred_region
      %s73 = ssub.s32 %s7, 1
    $region12: #{mnet_forward.7} parent=5 // pred_fallthru
      _
    %p74 = scmp.lt.s32.totalorder %s7, 2
    // Predicated region
    $region13: #{mnet_forward.7} parent=5 // pred_check
      %p75 = pneg %p74
    $region14: #{mnet_forward.7} parent=5 // pred_check_branch
      %77 = sbr.rel (%p75) target = $region16
    $region15: #{mnet_forward.7} parent=5 // pred_region
      // Predicated region
      $region17: #{mnet_forward.7} parent=15 // pred_check
        %p78 = pneg %p27
      $region18: #{mnet_forward.7} parent=15 // pred_check_branch
        %80 = sbr.rel (%p78) target = $region20
      $region19: #{mnet_forward.7} parent=15 // pred_region
        %p81 = scmp.lt.s32.totalorder %s7, 1
        %s82 = scalar_select %p81, %s7, 1
        %s83 = smul.addr %s82, 38
        %s84 = smul.addr %s83, 8
        %s85 = scalar_lea.vmem %s0, %s84
      $region20: #{mnet_forward.7} parent=15 // pred_fallthru
        _
    $region16: #{mnet_forward.7} parent=5 // pred_fallthru
      _
    %p86 = scmp.le.s32.totalorder 1, %s7
    %p87 = scmp.lt.s32.totalorder %s7, 3
    %p88 = pnand %p86, %p87
    %p89 = pneg %p88
    // Predicated region
    $region21: #{mnet_forward.7} parent=5 // pred_check
      _
    $region22: #{mnet_forward.7} parent=5 // pred_check_branch
      %91 = sbr.rel (%p88) target = $region24
    $region23: #{mnet_forward.7} parent=5 // pred_region
      %s92 = ssub.s32 %s7, 1
      %p93 = scmp.lt.s32.totalorder %s12, 1
      %s94 = scalar_select %p93, %s12, 1
      %s95 = smul.addr %s94, 38
      %s96 = smul.addr %s95, 8
      %s97 = scalar_lea.vmem %s0, %s96
      %p98 = pneg %p33
      %p99 = pneg %p30
      %p100 = pneg %p59
      %p101 = pneg %p56
      %p102 = scmp.lt.s32.totalorder %s12, 1
      %s103 = scalar_select %p102, %s12, 1
      %s104 = smul.addr %s103, 5
      %s105 = smul.addr %s104, 8
      %s106 = scalar_lea.vmem %s1, %s105
      %p107 = scmp.lt.s32.totalorder %s12, 1
      %s108 = scalar_select %p107, %s12, 1
      %s109 = smul.addr %s108, 38
      %s110 = smul.addr %s109, 8
      %s111 = scalar_lea.vmem %s0, %s110
      %p112 = scmp.lt.s32.totalorder %s12, 1
      %s113 = scalar_select %p112, %s12, 1
      %s114 = smul.addr %s113, 5
      %s115 = smul.addr %s114, 8
      %s116 = scalar_lea.vmem %s1, %s115
      %v117 = vld [vmem:[%s111] sm:$0x1f]
      %v118 = vld [vmem:[%s111 + $0x8] sm:$0x1f]
      %v119 = vld [vmem:[%s111 + $0x10] sm:$0x1f]
      %v120 = vld [vmem:[%s111 + $0x18] sm:$0x1f]
      %v121 = vld [vmem:[%s111 + $0x20] sm:$0x1f]
      %v122 = vld [vmem:[%s111 + $0x28] sm:$0x1f]
      %v123 = vld [vmem:[%s111 + $0x30] sm:$0x1f]
      %v124 = vld [vmem:[%s111 + $0x38] sm:$0x1f]
      %v125 = vld [vmem:[%s111 + $0x40] sm:$0x1f]
      %v126 = vld [vmem:[%s111 + $0x48] sm:$0x1f]
      %v127 = vld [vmem:[%s111 + $0x50] sm:$0x1f]
      %v128 = vld [vmem:[%s111 + $0x58] sm:$0x1f]
      %v129 = vld [vmem:[%s111 + $0x60] sm:$0x1f]
      %v130 = vld [vmem:[%s111 + $0x68] sm:$0x1f]
      %v131 = vld [vmem:[%s111 + $0x70] sm:$0x1f]
      %v132 = vld [vmem:[%s111 + $0x78] sm:$0x1f]
      %v133 = vld [vmem:[%s111 + $0x80] sm:$0x1f]
      %v134 = vld [vmem:[%s111 + $0x88] sm:$0x1f]
      %v135 = vld [vmem:[%s111 + $0x90] sm:$0x1f]
      %v136 = vld [vmem:[%s111 + $0x98] sm:$0x1f]
      %v137 = vld [vmem:[%s111 + $0xa0] sm:$0x1f]
      %v138 = vld [vmem:[%s111 + $0xa8] sm:$0x1f]
      %v139 = vld [vmem:[%s111 + $0xb0] sm:$0x1f]
      %v140 = vld [vmem:[%s111 + $0xb8] sm:$0x1f]
      %v141 = vld [vmem:[%s111 + $0xc0] sm:$0x1f]
      %v142 = vld [vmem:[%s111 + $0xc8] sm:$0x1f]
      %v143 = vld [vmem:[%s111 + $0xd0] sm:$0x1f]
      %v144 = vld [vmem:[%s111 + $0xd8] sm:$0x1f]
      %v145 = vld [vmem:[%s111 + $0xe0] sm:$0x1f]
      %v146 = vld [vmem:[%s111 + $0xe8] sm:$0x1f]
      %v147 = vld [vmem:[%s111 + $0xf0] sm:$0x1f]
      %v148 = vld [vmem:[%s111 + $0xf8] sm:$0x1f]
      %v149 = vld [vmem:[%s111 + $0x100] sm:$0x1f]
      %v150 = vld [vmem:[%s111 + $0x108] sm:$0x1f]
      %v151 = vld [vmem:[%s111 + $0x110] sm:$0x1f]
      %v152 = vld [vmem:[%s111 + $0x118] sm:$0x1f]
      %v153 = vld [vmem:[%s111 + $0x120] sm:$0x1f]
      %v154 = vld [vmem:[%s111 + $0x128] sm:$0x1f]
      %v193 = vrot.slane %v117, 1
      %v194 = vrot.slane %v118, 1
      %v195 = vrot.slane %v119, 1
      %v196 = vrot.slane %v120, 1
      %v197 = vrot.slane %v121, 1
      %v198 = vrot.slane %v122, 1
      %v199 = vrot.slane %v123, 1
      %v200 = vrot.slane %v124, 1
      %v201 = vrot.slane %v125, 1
      %v202 = vrot.slane %v126, 1
      %v203 = vrot.slane %v127, 1
      %v204 = vrot.slane %v128, 1
      %v205 = vrot.slane %v129, 1
      %v206 = vrot.slane %v130, 1
      %v207 = vrot.slane %v131, 1
      %v208 = vrot.slane %v132, 1
      %v209 = vrot.slane %v133, 1
      %v210 = vrot.slane %v134, 1
      %v211 = vrot.slane %v135, 1
      %v212 = vrot.slane %v136, 1
      %v213 = vrot.slane %v137, 1
      %v214 = vrot.slane %v138, 1
      %v215 = vrot.slane %v139, 1
      %v216 = vrot.slane %v140, 1
      %v217 = vrot.slane %v141, 1
      %v218 = vrot.slane %v142, 1
      %v219 = vrot.slane %v143, 1
      %v220 = vrot.slane %v144, 1
      %v221 = vrot.slane %v145, 1
      %v222 = vrot.slane %v146, 1
      %v223 = vrot.slane %v147, 1
      %v224 = vrot.slane %v148, 1
      %v225 = vrot.slane %v149, 1
      %v226 = vrot.slane %v150, 1
      %v227 = vrot.slane %v151, 1
      %v228 = vrot.slane %v152, 1
      %v229 = vrot.slane %v153, 1
      %v230 = vrot.slane %v154, 1
      %v269 = vmax.f32 %v117, %v193
      %v270 = vmax.f32 %v118, %v194
      %v271 = vmax.f32 %v119, %v195
      %v272 = vmax.f32 %v120, %v196
      %v273 = vmax.f32 %v121, %v197
      %v274 = vmax.f32 %v122, %v198
      %v275 = vmax.f32 %v123, %v199
      %v276 = vmax.f32 %v124, %v200
      %v277 = vmax.f32 %v125, %v201
      %v278 = vmax.f32 %v126, %v202
      %v279 = vmax.f32 %v127, %v203
      %v280 = vmax.f32 %v128, %v204
      %v281 = vmax.f32 %v129, %v205
      %v282 = vmax.f32 %v130, %v206
      %v283 = vmax.f32 %v131, %v207
      %v284 = vmax.f32 %v132, %v208
      %v285 = vmax.f32 %v133, %v209
      %v286 = vmax.f32 %v134, %v210
      %v287 = vmax.f32 %v135, %v211
      %v288 = vmax.f32 %v136, %v212
      %v289 = vmax.f32 %v137, %v213
      %v290 = vmax.f32 %v138, %v214
      %v291 = vmax.f32 %v139, %v215
      %v292 = vmax.f32 %v140, %v216
      %v293 = vmax.f32 %v141, %v217
      %v294 = vmax.f32 %v142, %v218
      %v295 = vmax.f32 %v143, %v219
      %v296 = vmax.f32 %v144, %v220
      %v297 = vmax.f32 %v145, %v221
      %v298 = vmax.f32 %v146, %v222
      %v299 = vmax.f32 %v147, %v223
      %v300 = vmax.f32 %v148, %v224
      %v301 = vmax.f32 %v149, %v225
      %v302 = vmax.f32 %v150, %v226
      %v303 = vmax.f32 %v151, %v227
      %v304 = vmax.f32 %v152, %v228
      %v305 = vmax.f32 %v153, %v229
      %v306 = vmax.f32 %v154, %v230
      %v307 = vrot.slane %v117, 2
      %v308 = vrot.slane %v118, 2
      %v309 = vrot.slane %v119, 2
      %v310 = vrot.slane %v120, 2
      %v311 = vrot.slane %v121, 2
      %v312 = vrot.slane %v122, 2
      %v313 = vrot.slane %v123, 2
      %v314 = vrot.slane %v124, 2
      %v315 = vrot.slane %v125, 2
      %v316 = vrot.slane %v126, 2
      %v317 = vrot.slane %v127, 2
      %v318 = vrot.slane %v128, 2
      %v319 = vrot.slane %v129, 2
      %v320 = vrot.slane %v130, 2
      %v321 = vrot.slane %v131, 2
      %v322 = vrot.slane %v132, 2
      %v323 = vrot.slane %v133, 2
      %v324 = vrot.slane %v134, 2
      %v325 = vrot.slane %v135, 2
      %v326 = vrot.slane %v136, 2
      %v327 = vrot.slane %v137, 2
      %v328 = vrot.slane %v138, 2
      %v329 = vrot.slane %v139, 2
      %v330 = vrot.slane %v140, 2
      %v331 = vrot.slane %v141, 2
      %v332 = vrot.slane %v142, 2
      %v333 = vrot.slane %v143, 2
      %v334 = vrot.slane %v144, 2
      %v335 = vrot.slane %v145, 2
      %v336 = vrot.slane %v146, 2
      %v337 = vrot.slane %v147, 2
      %v338 = vrot.slane %v148, 2
      %v339 = vrot.slane %v149, 2
      %v340 = vrot.slane %v150, 2
      %v341 = vrot.slane %v151, 2
      %v342 = vrot.slane %v152, 2
      %v343 = vrot.slane %v153, 2
      %v344 = vrot.slane %v154, 2
      %v383 = vmax.f32 %v269, %v307
      %v384 = vmax.f32 %v270, %v308
      %v385 = vmax.f32 %v271, %v309
      %v386 = vmax.f32 %v272, %v310
      %v387 = vmax.f32 %v273, %v311
      %v388 = vmax.f32 %v274, %v312
      %v389 = vmax.f32 %v275, %v313
      %v390 = vmax.f32 %v276, %v314
      %v391 = vmax.f32 %v277, %v315
      %v392 = vmax.f32 %v278, %v316
      %v393 = vmax.f32 %v279, %v317
      %v394 = vmax.f32 %v280, %v318
      %v395 = vmax.f32 %v281, %v319
      %v396 = vmax.f32 %v282, %v320
      %v397 = vmax.f32 %v283, %v321
      %v398 = vmax.f32 %v284, %v322
      %v399 = vmax.f32 %v285, %v323
      %v400 = vmax.f32 %v286, %v324
      %v401 = vmax.f32 %v287, %v325
      %v402 = vmax.f32 %v288, %v326
      %v403 = vmax.f32 %v289, %v327
      %v404 = vmax.f32 %v290, %v328
      %v405 = vmax.f32 %v291, %v329
      %v406 = vmax.f32 %v292, %v330
      %v407 = vmax.f32 %v293, %v331
      %v408 = vmax.f32 %v294, %v332
      %v409 = vmax.f32 %v295, %v333
      %v410 = vmax.f32 %v296, %v334
      %v411 = vmax.f32 %v297, %v335
      %v412 = vmax.f32 %v298, %v336
      %v413 = vmax.f32 %v299, %v337
      %v414 = vmax.f32 %v300, %v338
      %v415 = vmax.f32 %v301, %v339
      %v416 = vmax.f32 %v302, %v340
      %v417 = vmax.f32 %v303, %v341
      %v418 = vmax.f32 %v304, %v342
      %v419 = vmax.f32 %v305, %v343
      %v420 = vmax.f32 %v306, %v344
      %v421 = vrot.slane %v117, 3
      %v422 = vrot.slane %v118, 3
      %v423 = vrot.slane %v119, 3
      %v424 = vrot.slane %v120, 3
      %v425 = vrot.slane %v121, 3
      %v426 = vrot.slane %v122, 3
      %v427 = vrot.slane %v123, 3
      %v428 = vrot.slane %v124, 3
      %v429 = vrot.slane %v125, 3
      %v430 = vrot.slane %v126, 3
      %v431 = vrot.slane %v127, 3
      %v432 = vrot.slane %v128, 3
      %v433 = vrot.slane %v129, 3
      %v434 = vrot.slane %v130, 3
      %v435 = vrot.slane %v131, 3
      %v436 = vrot.slane %v132, 3
      %v437 = vrot.slane %v133, 3
      %v438 = vrot.slane %v134, 3
      %v439 = vrot.slane %v135, 3
      %v440 = vrot.slane %v136, 3
      %v441 = vrot.slane %v137, 3
      %v442 = vrot.slane %v138, 3
      %v443 = vrot.slane %v139, 3
      %v444 = vrot.slane %v140, 3
      %v445 = vrot.slane %v141, 3
      %v446 = vrot.slane %v142, 3
      %v447 = vrot.slane %v143, 3
      %v448 = vrot.slane %v144, 3
      %v449 = vrot.slane %v145, 3
      %v450 = vrot.slane %v146, 3
      %v451 = vrot.slane %v147, 3
      %v452 = vrot.slane %v148, 3
      %v453 = vrot.slane %v149, 3
      %v454 = vrot.slane %v150, 3
      %v455 = vrot.slane %v151, 3
      %v456 = vrot.slane %v152, 3
      %v457 = vrot.slane %v153, 3
      %v458 = vrot.slane %v154, 3
      %v497 = vmax.f32 %v383, %v421
      %v498 = vmax.f32 %v384, %v422
      %v499 = vmax.f32 %v385, %v423
      %v500 = vmax.f32 %v386, %v424
      %v501 = vmax.f32 %v387, %v425
      %v502 = vmax.f32 %v388, %v426
      %v503 = vmax.f32 %v389, %v427
      %v504 = vmax.f32 %v390, %v428
      %v505 = vmax.f32 %v391, %v429
      %v506 = vmax.f32 %v392, %v430
      %v507 = vmax.f32 %v393, %v431
      %v508 = vmax.f32 %v394, %v432
      %v509 = vmax.f32 %v395, %v433
      %v510 = vmax.f32 %v396, %v434
      %v511 = vmax.f32 %v397, %v435
      %v512 = vmax.f32 %v398, %v436
      %v513 = vmax.f32 %v399, %v437
      %v514 = vmax.f32 %v400, %v438
      %v515 = vmax.f32 %v401, %v439
      %v516 = vmax.f32 %v402, %v440
      %v517 = vmax.f32 %v403, %v441
      %v518 = vmax.f32 %v404, %v442
      %v519 = vmax.f32 %v405, %v443
      %v520 = vmax.f32 %v406, %v444
      %v521 = vmax.f32 %v407, %v445
      %v522 = vmax.f32 %v408, %v446
      %v523 = vmax.f32 %v409, %v447
      %v524 = vmax.f32 %v410, %v448
      %v525 = vmax.f32 %v411, %v449
      %v526 = vmax.f32 %v412, %v450
      %v527 = vmax.f32 %v413, %v451
      %v528 = vmax.f32 %v414, %v452
      %v529 = vmax.f32 %v415, %v453
      %v530 = vmax.f32 %v416, %v454
      %v531 = vmax.f32 %v417, %v455
      %v532 = vmax.f32 %v418, %v456
      %v533 = vmax.f32 %v419, %v457
      %v534 = vmax.f32 %v420, %v458
      %v535 = vrot.slane %v117, 4
      %v536 = vrot.slane %v118, 4
      %v537 = vrot.slane %v119, 4
      %v538 = vrot.slane %v120, 4
      %v539 = vrot.slane %v121, 4
      %v540 = vrot.slane %v122, 4
      %v541 = vrot.slane %v123, 4
      %v542 = vrot.slane %v124, 4
      %v543 = vrot.slane %v125, 4
      %v544 = vrot.slane %v126, 4
      %v545 = vrot.slane %v127, 4
      %v546 = vrot.slane %v128, 4
      %v547 = vrot.slane %v129, 4
      %v548 = vrot.slane %v130, 4
      %v549 = vrot.slane %v131, 4
      %v550 = vrot.slane %v132, 4
      %v551 = vrot.slane %v133, 4
      %v552 = vrot.slane %v134, 4
      %v553 = vrot.slane %v135, 4
      %v554 = vrot.slane %v136, 4
      %v555 = vrot.slane %v137, 4
      %v556 = vrot.slane %v138, 4
      %v557 = vrot.slane %v139, 4
      %v558 = vrot.slane %v140, 4
      %v559 = vrot.slane %v141, 4
      %v560 = vrot.slane %v142, 4
      %v561 = vrot.slane %v143, 4
      %v562 = vrot.slane %v144, 4
      %v563 = vrot.slane %v145, 4
      %v564 = vrot.slane %v146, 4
      %v565 = vrot.slane %v147, 4
      %v566 = vrot.slane %v148, 4
      %v567 = vrot.slane %v149, 4
      %v568 = vrot.slane %v150, 4
      %v569 = vrot.slane %v151, 4
      %v570 = vrot.slane %v152, 4
      %v571 = vrot.slane %v153, 4
      %v572 = vrot.slane %v154, 4
      %v611 = vmax.f32 %v497, %v535
      %v612 = vmax.f32 %v498, %v536
      %v613 = vmax.f32 %v499, %v537
      %v614 = vmax.f32 %v500, %v538
      %v615 = vmax.f32 %v501, %v539
      %v616 = vmax.f32 %v502, %v540
      %v617 = vmax.f32 %v503, %v541
      %v618 = vmax.f32 %v504, %v542
      %v619 = vmax.f32 %v505, %v543
      %v620 = vmax.f32 %v506, %v544
      %v621 = vmax.f32 %v507, %v545
      %v622 = vmax.f32 %v508, %v546
      %v623 = vmax.f32 %v509, %v547
      %v624 = vmax.f32 %v510, %v548
      %v625 = vmax.f32 %v511, %v549
      %v626 = vmax.f32 %v512, %v550
      %v627 = vmax.f32 %v513, %v551
      %v628 = vmax.f32 %v514, %v552
      %v629 = vmax.f32 %v515, %v553
      %v630 = vmax.f32 %v516, %v554
      %v631 = vmax.f32 %v517, %v555
      %v632 = vmax.f32 %v518, %v556
      %v633 = vmax.f32 %v519, %v557
      %v634 = vmax.f32 %v520, %v558
      %v635 = vmax.f32 %v521, %v559
      %v636 = vmax.f32 %v522, %v560
      %v637 = vmax.f32 %v523, %v561
      %v638 = vmax.f32 %v524, %v562
      %v639 = vmax.f32 %v525, %v563
      %v640 = vmax.f32 %v526, %v564
      %v641 = vmax.f32 %v527, %v565
      %v642 = vmax.f32 %v528, %v566
      %v643 = vmax.f32 %v529, %v567
      %v644 = vmax.f32 %v530, %v568
      %v645 = vmax.f32 %v531, %v569
      %v646 = vmax.f32 %v532, %v570
      %v647 = vmax.f32 %v533, %v571
      %v648 = vmax.f32 %v534, %v572
      %v649 = vmul.f32 %v611, 1.442695
      %v650 = vpow.pop %v649
      %v651 = vmul.f32 %v612, 1.442695
      %v652 = vpow.pop %v651
      %v653 = vmul.f32 %v613, 1.442695
      %v654 = vpow.pop %v653
      %v655 = vmul.f32 %v614, 1.442695
      %v656 = vpow.pop %v655
      %v657 = vmul.f32 %v615, 1.442695
      %v658 = vpow.pop %v657
      %v659 = vmul.f32 %v616, 1.442695
      %v660 = vpow.pop %v659
      %v661 = vmul.f32 %v617, 1.442695
      %v662 = vpow.pop %v661
      %v663 = vmul.f32 %v618, 1.442695
      %v664 = vpow.pop %v663
      %v665 = vmul.f32 %v619, 1.442695
      %v666 = vpow.pop %v665
      %v667 = vmul.f32 %v620, 1.442695
      %v668 = vpow.pop %v667
      %v669 = vmul.f32 %v621, 1.442695
      %v670 = vpow.pop %v669
      %v671 = vmul.f32 %v622, 1.442695
      %v672 = vpow.pop %v671
      %v673 = vmul.f32 %v623, 1.442695
      %v674 = vpow.pop %v673
      %v675 = vmul.f32 %v624, 1.442695
      %v676 = vpow.pop %v675
      %v677 = vmul.f32 %v625, 1.442695
      %v678 = vpow.pop %v677
      %v679 = vmul.f32 %v626, 1.442695
      %v680 = vpow.pop %v679
      %v681 = vmul.f32 %v627, 1.442695
      %v682 = vpow.pop %v681
      %v683 = vmul.f32 %v628, 1.442695
      %v684 = vpow.pop %v683
      %v685 = vmul.f32 %v629, 1.442695
      %v686 = vpow.pop %v685
      %v687 = vmul.f32 %v630, 1.442695
      %v688 = vpow.pop %v687
      %v689 = vmul.f32 %v631, 1.442695
      %v690 = vpow.pop %v689
      %v691 = vmul.f32 %v632, 1.442695
      %v692 = vpow.pop %v691
      %v693 = vmul.f32 %v633, 1.442695
      %v694 = vpow.pop %v693
      %v695 = vmul.f32 %v634, 1.442695
      %v696 = vpow.pop %v695
      %v697 = vmul.f32 %v635, 1.442695
      %v698 = vpow.pop %v697
      %v699 = vmul.f32 %v636, 1.442695
      %v700 = vpow.pop %v699
      %v701 = vmul.f32 %v637, 1.442695
      %v702 = vpow.pop %v701
      %v703 = vmul.f32 %v638, 1.442695
      %v704 = vpow.pop %v703
      %v705 = vmul.f32 %v639, 1.442695
      %v706 = vpow.pop %v705
      %v707 = vmul.f32 %v640, 1.442695
      %v708 = vpow.pop %v707
      %v709 = vmul.f32 %v641, 1.442695
      %v710 = vpow.pop %v709
      %v711 = vmul.f32 %v642, 1.442695
      %v712 = vpow.pop %v711
      %v713 = vmul.f32 %v643, 1.442695
      %v714 = vpow.pop %v713
      %v715 = vmul.f32 %v644, 1.442695
      %v716 = vpow.pop %v715
      %v717 = vmul.f32 %v645, 1.442695
      %v718 = vpow.pop %v717
      %v719 = vmul.f32 %v646, 1.442695
      %v720 = vpow.pop %v719
      %v721 = vmul.f32 %v647, 1.442695
      %v722 = vpow.pop %v721
      %v723 = vmul.f32 %v648, 1.442695
      %v724 = vpow.pop %v723
      %v725 = vadd.f32 %v650, 1.0
      %v726 = vadd.f32 %v652, 1.0
      %v727 = vadd.f32 %v654, 1.0
      %v728 = vadd.f32 %v656, 1.0
      %v729 = vadd.f32 %v658, 1.0
      %v730 = vadd.f32 %v660, 1.0
      %v731 = vadd.f32 %v662, 1.0
      %v732 = vadd.f32 %v664, 1.0
      %v733 = vadd.f32 %v666, 1.0
      %v734 = vadd.f32 %v668, 1.0
      %v735 = vadd.f32 %v670, 1.0
      %v736 = vadd.f32 %v672, 1.0
      %v737 = vadd.f32 %v674, 1.0
      %v738 = vadd.f32 %v676, 1.0
      %v739 = vadd.f32 %v678, 1.0
      %v740 = vadd.f32 %v680, 1.0
      %v741 = vadd.f32 %v682, 1.0
      %v742 = vadd.f32 %v684, 1.0
      %v743 = vadd.f32 %v686, 1.0
      %v744 = vadd.f32 %v688, 1.0
      %v745 = vadd.f32 %v690, 1.0
      %v746 = vadd.f32 %v692, 1.0
      %v747 = vadd.f32 %v694, 1.0
      %v748 = vadd.f32 %v696, 1.0
      %v749 = vadd.f32 %v698, 1.0
      %v750 = vadd.f32 %v700, 1.0
      %v751 = vadd.f32 %v702, 1.0
      %v752 = vadd.f32 %v704, 1.0
      %v753 = vadd.f32 %v706, 1.0
      %v754 = vadd.f32 %v708, 1.0
      %v755 = vadd.f32 %v710, 1.0
      %v756 = vadd.f32 %v712, 1.0
      %v757 = vadd.f32 %v714, 1.0
      %v758 = vadd.f32 %v716, 1.0
      %v759 = vadd.f32 %v718, 1.0
      %v760 = vadd.f32 %v720, 1.0
      %v761 = vadd.f32 %v722, 1.0
      %v762 = vadd.f32 %v724, 1.0
      %v763 = vmul.f32 %v725, %v725
      %v764 = vmul.f32 %v726, %v726
      %v765 = vmul.f32 %v727, %v727
      %v766 = vmul.f32 %v728, %v728
      %v767 = vmul.f32 %v729, %v729
      %v768 = vmul.f32 %v730, %v730
      %v769 = vmul.f32 %v731, %v731
      %v770 = vmul.f32 %v732, %v732
      %v771 = vmul.f32 %v733, %v733
      %v772 = vmul.f32 %v734, %v734
      %v773 = vmul.f32 %v735, %v735
      %v774 = vmul.f32 %v736, %v736
      %v775 = vmul.f32 %v737, %v737
      %v776 = vmul.f32 %v738, %v738
      %v777 = vmul.f32 %v739, %v739
      %v778 = vmul.f32 %v740, %v740
      %v779 = vmul.f32 %v741, %v741
      %v780 = vmul.f32 %v742, %v742
      %v781 = vmul.f32 %v743, %v743
      %v782 = vmul.f32 %v744, %v744
      %v783 = vmul.f32 %v745, %v745
      %v784 = vmul.f32 %v746, %v746
      %v785 = vmul.f32 %v747, %v747
      %v786 = vmul.f32 %v748, %v748
      %v787 = vmul.f32 %v749, %v749
      %v788 = vmul.f32 %v750, %v750
      %v789 = vmul.f32 %v751, %v751
      %v790 = vmul.f32 %v752, %v752
      %v791 = vmul.f32 %v753, %v753
      %v792 = vmul.f32 %v754, %v754
      %v793 = vmul.f32 %v755, %v755
      %v794 = vmul.f32 %v756, %v756
      %v795 = vmul.f32 %v757, %v757
      %v796 = vmul.f32 %v758, %v758
      %v797 = vmul.f32 %v759, %v759
      %v798 = vmul.f32 %v760, %v760
      %v799 = vmul.f32 %v761, %v761
      %v800 = vmul.f32 %v762, %v762
      %vm801 = vcmp.gt.f32.partialorder %v611, 20.0
      %vm802 = vcmp.gt.f32.partialorder %v612, 20.0
      %vm803 = vcmp.gt.f32.partialorder %v613, 20.0
      %vm804 = vcmp.gt.f32.partialorder %v614, 20.0
      %vm805 = vcmp.gt.f32.partialorder %v615, 20.0
      %vm806 = vcmp.gt.f32.partialorder %v616, 20.0
      %vm807 = vcmp.gt.f32.partialorder %v617, 20.0
      %vm808 = vcmp.gt.f32.partialorder %v618, 20.0
      %vm809 = vcmp.gt.f32.partialorder %v619, 20.0
      %vm810 = vcmp.gt.f32.partialorder %v620, 20.0
      %vm811 = vcmp.gt.f32.partialorder %v621, 20.0
      %vm812 = vcmp.gt.f32.partialorder %v622, 20.0
      %vm813 = vcmp.gt.f32.partialorder %v623, 20.0
      %vm814 = vcmp.gt.f32.partialorder %v624, 20.0
      %vm815 = vcmp.gt.f32.partialorder %v625, 20.0
      %vm816 = vcmp.gt.f32.partialorder %v626, 20.0
      %vm817 = vcmp.gt.f32.partialorder %v627, 20.0
      %vm818 = vcmp.gt.f32.partialorder %v628, 20.0
      %vm819 = vcmp.gt.f32.partialorder %v629, 20.0
      %vm820 = vcmp.gt.f32.partialorder %v630, 20.0
      %vm821 = vcmp.gt.f32.partialorder %v631, 20.0
      %vm822 = vcmp.gt.f32.partialorder %v632, 20.0
      %vm823 = vcmp.gt.f32.partialorder %v633, 20.0
      %vm824 = vcmp.gt.f32.partialorder %v634, 20.0
      %vm825 = vcmp.gt.f32.partialorder %v635, 20.0
      %vm826 = vcmp.gt.f32.partialorder %v636, 20.0
      %vm827 = vcmp.gt.f32.partialorder %v637, 20.0
      %vm828 = vcmp.gt.f32.partialorder %v638, 20.0
      %vm829 = vcmp.gt.f32.partialorder %v639, 20.0
      %vm830 = vcmp.gt.f32.partialorder %v640, 20.0
      %vm831 = vcmp.gt.f32.partialorder %v641, 20.0
      %vm832 = vcmp.gt.f32.partialorder %v642, 20.0
      %vm833 = vcmp.gt.f32.partialorder %v643, 20.0
      %vm834 = vcmp.gt.f32.partialorder %v644, 20.0
      %vm835 = vcmp.gt.f32.partialorder %v645, 20.0
      %vm836 = vcmp.gt.f32.partialorder %v646, 20.0
      %vm837 = vcmp.gt.f32.partialorder %v647, 20.0
      %vm838 = vcmp.gt.f32.partialorder %v648, 20.0
      %v839 = vsub.f32 %v763, 1.0
      %v840 = vsub.f32 %v764, 1.0
      %v841 = vsub.f32 %v765, 1.0
      %v842 = vsub.f32 %v766, 1.0
      %v843 = vsub.f32 %v767, 1.0
      %v844 = vsub.f32 %v768, 1.0
      %v845 = vsub.f32 %v769, 1.0
      %v846 = vsub.f32 %v770, 1.0
      %v847 = vsub.f32 %v771, 1.0
      %v848 = vsub.f32 %v772, 1.0
      %v849 = vsub.f32 %v773, 1.0
      %v850 = vsub.f32 %v774, 1.0
      %v851 = vsub.f32 %v775, 1.0
      %v852 = vsub.f32 %v776, 1.0
      %v853 = vsub.f32 %v777, 1.0
      %v854 = vsub.f32 %v778, 1.0
      %v855 = vsub.f32 %v779, 1.0
      %v856 = vsub.f32 %v780, 1.0
      %v857 = vsub.f32 %v781, 1.0
      %v858 = vsub.f32 %v782, 1.0
      %v859 = vsub.f32 %v783, 1.0
      %v860 = vsub.f32 %v784, 1.0
      %v861 = vsub.f32 %v785, 1.0
      %v862 = vsub.f32 %v786, 1.0
      %v863 = vsub.f32 %v787, 1.0
      %v864 = vsub.f32 %v788, 1.0
      %v865 = vsub.f32 %v789, 1.0
      %v866 = vsub.f32 %v790, 1.0
      %v867 = vsub.f32 %v791, 1.0
      %v868 = vsub.f32 %v792, 1.0
      %v869 = vsub.f32 %v793, 1.0
      %v870 = vsub.f32 %v794, 1.0
      %v871 = vsub.f32 %v795, 1.0
      %v872 = vsub.f32 %v796, 1.0
      %v873 = vsub.f32 %v797, 1.0
      %v874 = vsub.f32 %v798, 1.0
      %v875 = vsub.f32 %v799, 1.0
      %v876 = vsub.f32 %v800, 1.0
      %v877 = vadd.f32 %v763, 1.0
      %v878 = vadd.f32 %v764, 1.0
      %v879 = vadd.f32 %v765, 1.0
      %v880 = vadd.f32 %v766, 1.0
      %v881 = vadd.f32 %v767, 1.0
      %v882 = vadd.f32 %v768, 1.0
      %v883 = vadd.f32 %v769, 1.0
      %v884 = vadd.f32 %v770, 1.0
      %v885 = vadd.f32 %v771, 1.0
      %v886 = vadd.f32 %v772, 1.0
      %v887 = vadd.f32 %v773, 1.0
      %v888 = vadd.f32 %v774, 1.0
      %v889 = vadd.f32 %v775, 1.0
      %v890 = vadd.f32 %v776, 1.0
      %v891 = vadd.f32 %v777, 1.0
      %v892 = vadd.f32 %v778, 1.0
      %v893 = vadd.f32 %v779, 1.0
      %v894 = vadd.f32 %v780, 1.0
      %v895 = vadd.f32 %v781, 1.0
      %v896 = vadd.f32 %v782, 1.0
      %v897 = vadd.f32 %v783, 1.0
      %v898 = vadd.f32 %v784, 1.0
      %v899 = vadd.f32 %v785, 1.0
      %v900 = vadd.f32 %v786, 1.0
      %v901 = vadd.f32 %v787, 1.0
      %v902 = vadd.f32 %v788, 1.0
      %v903 = vadd.f32 %v789, 1.0
      %v904 = vadd.f32 %v790, 1.0
      %v905 = vadd.f32 %v791, 1.0
      %v906 = vadd.f32 %v792, 1.0
      %v907 = vadd.f32 %v793, 1.0
      %v908 = vadd.f32 %v794, 1.0
      %v909 = vadd.f32 %v795, 1.0
      %v910 = vadd.f32 %v796, 1.0
      %v911 = vadd.f32 %v797, 1.0
      %v912 = vadd.f32 %v798, 1.0
      %v913 = vadd.f32 %v799, 1.0
      %v914 = vadd.f32 %v800, 1.0
      %v915 = vrcp.pop %v877
      %v916 = vmul.f32 %v877, %v915
      %v917 = vsub.f32 1.0, %v916
      %v918 = vmul.f32 %v915, %v917
      %v919 = vadd.f32 %v915, %v918
      %vm920 = vweird.f32 %v877
      %vm921 = vweird.f32 %v915
      %vm922 = vmor %vm920, %vm921
      %v923 = vsel %vm922, %v915, %v919
      %v924 = vand.u32 2147483647, %v877
      %vm925 = vcmp.eq.f32.partialorder %v924, 8.507059e+37
      %v926 = vand.u32 %v877, 2147483648
      %v927 = vor.u32 1.1754944e-38, %v926
      %v928 = vsel %vm925, %v927, %v923
      %v929 = vmul.f32 %v839, %v928
      %v930 = vrcp.pop %v878
      %v931 = vmul.f32 %v878, %v930
      %v932 = vsub.f32 1.0, %v931
      %v933 = vmul.f32 %v930, %v932
      %v934 = vadd.f32 %v930, %v933
      %vm935 = vweird.f32 %v878
      %vm936 = vweird.f32 %v930
      %vm937 = vmor %vm935, %vm936
      %v938 = vsel %vm937, %v930, %v934
      %v939 = vand.u32 2147483647, %v878
      %vm940 = vcmp.eq.f32.partialorder %v939, 8.507059e+37
      %v941 = vand.u32 %v878, 2147483648
      %v942 = vor.u32 1.1754944e-38, %v941
      %v943 = vsel %vm940, %v942, %v938
      %v944 = vmul.f32 %v840, %v943
      %v945 = vrcp.pop %v879
      %v946 = vmul.f32 %v879, %v945
      %v947 = vsub.f32 1.0, %v946
      %v948 = vmul.f32 %v945, %v947
      %v949 = vadd.f32 %v945, %v948
      %vm950 = vweird.f32 %v879
      %vm951 = vweird.f32 %v945
      %vm952 = vmor %vm950, %vm951
      %v953 = vsel %vm952, %v945, %v949
      %v954 = vand.u32 2147483647, %v879
      %vm955 = vcmp.eq.f32.partialorder %v954, 8.507059e+37
      %v956 = vand.u32 %v879, 2147483648
      %v957 = vor.u32 1.1754944e-38, %v956
      %v958 = vsel %vm955, %v957, %v953
      %v959 = vmul.f32 %v841, %v958
      %v960 = vrcp.pop %v880
      %v961 = vmul.f32 %v880, %v960
      %v962 = vsub.f32 1.0, %v961
      %v963 = vmul.f32 %v960, %v962
      %v964 = vadd.f32 %v960, %v963
      %vm965 = vweird.f32 %v880
      %vm966 = vweird.f32 %v960
      %vm967 = vmor %vm965, %vm966
      %v968 = vsel %vm967, %v960, %v964
      %v969 = vand.u32 2147483647, %v880
      %vm970 = vcmp.eq.f32.partialorder %v969, 8.507059e+37
      %v971 = vand.u32 %v880, 2147483648
      %v972 = vor.u32 1.1754944e-38, %v971
      %v973 = vsel %vm970, %v972, %v968
      %v974 = vmul.f32 %v842, %v973
      %v975 = vrcp.pop %v881
      %v976 = vmul.f32 %v881, %v975
      %v977 = vsub.f32 1.0, %v976
      %v978 = vmul.f32 %v975, %v977
      %v979 = vadd.f32 %v975, %v978
      %vm980 = vweird.f32 %v881
      %vm981 = vweird.f32 %v975
      %vm982 = vmor %vm980, %vm981
      %v983 = vsel %vm982, %v975, %v979
      %v984 = vand.u32 2147483647, %v881
      %vm985 = vcmp.eq.f32.partialorder %v984, 8.507059e+37
      %v986 = vand.u32 %v881, 2147483648
      %v987 = vor.u32 1.1754944e-38, %v986
      %v988 = vsel %vm985, %v987, %v983
      %v989 = vmul.f32 %v843, %v988
      %v990 = vrcp.pop %v882
      %v991 = vmul.f32 %v882, %v990
      %v992 = vsub.f32 1.0, %v991
      %v993 = vmul.f32 %v990, %v992
      %v994 = vadd.f32 %v990, %v993
      %vm995 = vweird.f32 %v882
      %vm996 = vweird.f32 %v990
      %vm997 = vmor %vm995, %vm996
      %v998 = vsel %vm997, %v990, %v994
      %v999 = vand.u32 2147483647, %v882
      %vm1000 = vcmp.eq.f32.partialorder %v999, 8.507059e+37
      %v1001 = vand.u32 %v882, 2147483648
      %v1002 = vor.u32 1.1754944e-38, %v1001
      %v1003 = vsel %vm1000, %v1002, %v998
      %v1004 = vmul.f32 %v844, %v1003
      %v1005 = vrcp.pop %v883
      %v1006 = vmul.f32 %v883, %v1005
      %v1007 = vsub.f32 1.0, %v1006
      %v1008 = vmul.f32 %v1005, %v1007
      %v1009 = vadd.f32 %v1005, %v1008
      %vm1010 = vweird.f32 %v883
      %vm1011 = vweird.f32 %v1005
      %vm1012 = vmor %vm1010, %vm1011
      %v1013 = vsel %vm1012, %v1005, %v1009
      %v1014 = vand.u32 2147483647, %v883
      %vm1015 = vcmp.eq.f32.partialorder %v1014, 8.507059e+37
      %v1016 = vand.u32 %v883, 2147483648
      %v1017 = vor.u32 1.1754944e-38, %v1016
      %v1018 = vsel %vm1015, %v1017, %v1013
      %v1019 = vmul.f32 %v845, %v1018
      %v1020 = vrcp.pop %v884
      %v1021 = vmul.f32 %v884, %v1020
      %v1022 = vsub.f32 1.0, %v1021
      %v1023 = vmul.f32 %v1020, %v1022
      %v1024 = vadd.f32 %v1020, %v1023
      %vm1025 = vweird.f32 %v884
      %vm1026 = vweird.f32 %v1020
      %vm1027 = vmor %vm1025, %vm1026
      %v1028 = vsel %vm1027, %v1020, %v1024
      %v1029 = vand.u32 2147483647, %v884
      %vm1030 = vcmp.eq.f32.partialorder %v1029, 8.507059e+37
      %v1031 = vand.u32 %v884, 2147483648
      %v1032 = vor.u32 1.1754944e-38, %v1031
      %v1033 = vsel %vm1030, %v1032, %v1028
      %v1034 = vmul.f32 %v846, %v1033
      %v1035 = vrcp.pop %v885
      %v1036 = vmul.f32 %v885, %v1035
      %v1037 = vsub.f32 1.0, %v1036
      %v1038 = vmul.f32 %v1035, %v1037
      %v1039 = vadd.f32 %v1035, %v1038
      %vm1040 = vweird.f32 %v885
      %vm1041 = vweird.f32 %v1035
      %vm1042 = vmor %vm1040, %vm1041
      %v1043 = vsel %vm1042, %v1035, %v1039
      %v1044 = vand.u32 2147483647, %v885
      %vm1045 = vcmp.eq.f32.partialorder %v1044, 8.507059e+37
      %v1046 = vand.u32 %v885, 2147483648
      %v1047 = vor.u32 1.1754944e-38, %v1046
      %v1048 = vsel %vm1045, %v1047, %v1043
      %v1049 = vmul.f32 %v847, %v1048
      %v1050 = vrcp.pop %v886
      %v1051 = vmul.f32 %v886, %v1050
      %v1052 = vsub.f32 1.0, %v1051
      %v1053 = vmul.f32 %v1050, %v1052
      %v1054 = vadd.f32 %v1050, %v1053
      %vm1055 = vweird.f32 %v886
      %vm1056 = vweird.f32 %v1050
      %vm1057 = vmor %vm1055, %vm1056
      %v1058 = vsel %vm1057, %v1050, %v1054
      %v1059 = vand.u32 2147483647, %v886
      %vm1060 = vcmp.eq.f32.partialorder %v1059, 8.507059e+37
      %v1061 = vand.u32 %v886, 2147483648
      %v1062 = vor.u32 1.1754944e-38, %v1061
      %v1063 = vsel %vm1060, %v1062, %v1058
      %v1064 = vmul.f32 %v848, %v1063
      %v1065 = vrcp.pop %v887
      %v1066 = vmul.f32 %v887, %v1065
      %v1067 = vsub.f32 1.0, %v1066
      %v1068 = vmul.f32 %v1065, %v1067
      %v1069 = vadd.f32 %v1065, %v1068
      %vm1070 = vweird.f32 %v887
      %vm1071 = vweird.f32 %v1065
      %vm1072 = vmor %vm1070, %vm1071
      %v1073 = vsel %vm1072, %v1065, %v1069
      %v1074 = vand.u32 2147483647, %v887
      %vm1075 = vcmp.eq.f32.partialorder %v1074, 8.507059e+37
      %v1076 = vand.u32 %v887, 2147483648
      %v1077 = vor.u32 1.1754944e-38, %v1076
      %v1078 = vsel %vm1075, %v1077, %v1073
      %v1079 = vmul.f32 %v849, %v1078
      %v1080 = vrcp.pop %v888
      %v1081 = vmul.f32 %v888, %v1080
      %v1082 = vsub.f32 1.0, %v1081
      %v1083 = vmul.f32 %v1080, %v1082
      %v1084 = vadd.f32 %v1080, %v1083
      %vm1085 = vweird.f32 %v888
      %vm1086 = vweird.f32 %v1080
      %vm1087 = vmor %vm1085, %vm1086
      %v1088 = vsel %vm1087, %v1080, %v1084
      %v1089 = vand.u32 2147483647, %v888
      %vm1090 = vcmp.eq.f32.partialorder %v1089, 8.507059e+37
      %v1091 = vand.u32 %v888, 2147483648
      %v1092 = vor.u32 1.1754944e-38, %v1091
      %v1093 = vsel %vm1090, %v1092, %v1088
      %v1094 = vmul.f32 %v850, %v1093
      %v1095 = vrcp.pop %v889
      %v1096 = vmul.f32 %v889, %v1095
      %v1097 = vsub.f32 1.0, %v1096
      %v1098 = vmul.f32 %v1095, %v1097
      %v1099 = vadd.f32 %v1095, %v1098
      %vm1100 = vweird.f32 %v889
      %vm1101 = vweird.f32 %v1095
      %vm1102 = vmor %vm1100, %vm1101
      %v1103 = vsel %vm1102, %v1095, %v1099
      %v1104 = vand.u32 2147483647, %v889
      %vm1105 = vcmp.eq.f32.partialorder %v1104, 8.507059e+37
      %v1106 = vand.u32 %v889, 2147483648
      %v1107 = vor.u32 1.1754944e-38, %v1106
      %v1108 = vsel %vm1105, %v1107, %v1103
      %v1109 = vmul.f32 %v851, %v1108
      %v1110 = vrcp.pop %v890
      %v1111 = vmul.f32 %v890, %v1110
      %v1112 = vsub.f32 1.0, %v1111
      %v1113 = vmul.f32 %v1110, %v1112
      %v1114 = vadd.f32 %v1110, %v1113
      %vm1115 = vweird.f32 %v890
      %vm1116 = vweird.f32 %v1110
      %vm1117 = vmor %vm1115, %vm1116
      %v1118 = vsel %vm1117, %v1110, %v1114
      %v1119 = vand.u32 2147483647, %v890
      %vm1120 = vcmp.eq.f32.partialorder %v1119, 8.507059e+37
      %v1121 = vand.u32 %v890, 2147483648
      %v1122 = vor.u32 1.1754944e-38, %v1121
      %v1123 = vsel %vm1120, %v1122, %v1118
      %v1124 = vmul.f32 %v852, %v1123
      %v1125 = vrcp.pop %v891
      %v1126 = vmul.f32 %v891, %v1125
      %v1127 = vsub.f32 1.0, %v1126
      %v1128 = vmul.f32 %v1125, %v1127
      %v1129 = vadd.f32 %v1125, %v1128
      %vm1130 = vweird.f32 %v891
      %vm1131 = vweird.f32 %v1125
      %vm1132 = vmor %vm1130, %vm1131
      %v1133 = vsel %vm1132, %v1125, %v1129
      %v1134 = vand.u32 2147483647, %v891
      %vm1135 = vcmp.eq.f32.partialorder %v1134, 8.507059e+37
      %v1136 = vand.u32 %v891, 2147483648
      %v1137 = vor.u32 1.1754944e-38, %v1136
      %v1138 = vsel %vm1135, %v1137, %v1133
      %v1139 = vmul.f32 %v853, %v1138
      %v1140 = vrcp.pop %v892
      %v1141 = vmul.f32 %v892, %v1140
      %v1142 = vsub.f32 1.0, %v1141
      %v1143 = vmul.f32 %v1140, %v1142
      %v1144 = vadd.f32 %v1140, %v1143
      %vm1145 = vweird.f32 %v892
      %vm1146 = vweird.f32 %v1140
      %vm1147 = vmor %vm1145, %vm1146
      %v1148 = vsel %vm1147, %v1140, %v1144
      %v1149 = vand.u32 2147483647, %v892
      %vm1150 = vcmp.eq.f32.partialorder %v1149, 8.507059e+37
      %v1151 = vand.u32 %v892, 2147483648
      %v1152 = vor.u32 1.1754944e-38, %v1151
      %v1153 = vsel %vm1150, %v1152, %v1148
      %v1154 = vmul.f32 %v854, %v1153
      %v1155 = vrcp.pop %v893
      %v1156 = vmul.f32 %v893, %v1155
      %v1157 = vsub.f32 1.0, %v1156
      %v1158 = vmul.f32 %v1155, %v1157
      %v1159 = vadd.f32 %v1155, %v1158
      %vm1160 = vweird.f32 %v893
      %vm1161 = vweird.f32 %v1155
      %vm1162 = vmor %vm1160, %vm1161
      %v1163 = vsel %vm1162, %v1155, %v1159
      %v1164 = vand.u32 2147483647, %v893
      %vm1165 = vcmp.eq.f32.partialorder %v1164, 8.507059e+37
      %v1166 = vand.u32 %v893, 2147483648
      %v1167 = vor.u32 1.1754944e-38, %v1166
      %v1168 = vsel %vm1165, %v1167, %v1163
      %v1169 = vmul.f32 %v855, %v1168
      %v1170 = vrcp.pop %v894
      %v1171 = vmul.f32 %v894, %v1170
      %v1172 = vsub.f32 1.0, %v1171
      %v1173 = vmul.f32 %v1170, %v1172
      %v1174 = vadd.f32 %v1170, %v1173
      %vm1175 = vweird.f32 %v894
      %vm1176 = vweird.f32 %v1170
      %vm1177 = vmor %vm1175, %vm1176
      %v1178 = vsel %vm1177, %v1170, %v1174
      %v1179 = vand.u32 2147483647, %v894
      %vm1180 = vcmp.eq.f32.partialorder %v1179, 8.507059e+37
      %v1181 = vand.u32 %v894, 2147483648
      %v1182 = vor.u32 1.1754944e-38, %v1181
      %v1183 = vsel %vm1180, %v1182, %v1178
      %v1184 = vmul.f32 %v856, %v1183
      %v1185 = vrcp.pop %v895
      %v1186 = vmul.f32 %v895, %v1185
      %v1187 = vsub.f32 1.0, %v1186
      %v1188 = vmul.f32 %v1185, %v1187
      %v1189 = vadd.f32 %v1185, %v1188
      %vm1190 = vweird.f32 %v895
      %vm1191 = vweird.f32 %v1185
      %vm1192 = vmor %vm1190, %vm1191
      %v1193 = vsel %vm1192, %v1185, %v1189
      %v1194 = vand.u32 2147483647, %v895
      %vm1195 = vcmp.eq.f32.partialorder %v1194, 8.507059e+37
      %v1196 = vand.u32 %v895, 2147483648
      %v1197 = vor.u32 1.1754944e-38, %v1196
      %v1198 = vsel %vm1195, %v1197, %v1193
      %v1199 = vmul.f32 %v857, %v1198
      %v1200 = vrcp.pop %v896
      %v1201 = vmul.f32 %v896, %v1200
      %v1202 = vsub.f32 1.0, %v1201
      %v1203 = vmul.f32 %v1200, %v1202
      %v1204 = vadd.f32 %v1200, %v1203
      %vm1205 = vweird.f32 %v896
      %vm1206 = vweird.f32 %v1200
      %vm1207 = vmor %vm1205, %vm1206
      %v1208 = vsel %vm1207, %v1200, %v1204
      %v1209 = vand.u32 2147483647, %v896
      %vm1210 = vcmp.eq.f32.partialorder %v1209, 8.507059e+37
      %v1211 = vand.u32 %v896, 2147483648
      %v1212 = vor.u32 1.1754944e-38, %v1211
      %v1213 = vsel %vm1210, %v1212, %v1208
      %v1214 = vmul.f32 %v858, %v1213
      %v1215 = vrcp.pop %v897
      %v1216 = vmul.f32 %v897, %v1215
      %v1217 = vsub.f32 1.0, %v1216
      %v1218 = vmul.f32 %v1215, %v1217
      %v1219 = vadd.f32 %v1215, %v1218
      %vm1220 = vweird.f32 %v897
      %vm1221 = vweird.f32 %v1215
      %vm1222 = vmor %vm1220, %vm1221
      %v1223 = vsel %vm1222, %v1215, %v1219
      %v1224 = vand.u32 2147483647, %v897
      %vm1225 = vcmp.eq.f32.partialorder %v1224, 8.507059e+37
      %v1226 = vand.u32 %v897, 2147483648
      %v1227 = vor.u32 1.1754944e-38, %v1226
      %v1228 = vsel %vm1225, %v1227, %v1223
      %v1229 = vmul.f32 %v859, %v1228
      %v1230 = vrcp.pop %v898
      %v1231 = vmul.f32 %v898, %v1230
      %v1232 = vsub.f32 1.0, %v1231
      %v1233 = vmul.f32 %v1230, %v1232
      %v1234 = vadd.f32 %v1230, %v1233
      %vm1235 = vweird.f32 %v898
      %vm1236 = vweird.f32 %v1230
      %vm1237 = vmor %vm1235, %vm1236
      %v1238 = vsel %vm1237, %v1230, %v1234
      %v1239 = vand.u32 2147483647, %v898
      %vm1240 = vcmp.eq.f32.partialorder %v1239, 8.507059e+37
      %v1241 = vand.u32 %v898, 2147483648
      %v1242 = vor.u32 1.1754944e-38, %v1241
      %v1243 = vsel %vm1240, %v1242, %v1238
      %v1244 = vmul.f32 %v860, %v1243
      %v1245 = vrcp.pop %v899
      %v1246 = vmul.f32 %v899, %v1245
      %v1247 = vsub.f32 1.0, %v1246
      %v1248 = vmul.f32 %v1245, %v1247
      %v1249 = vadd.f32 %v1245, %v1248
      %vm1250 = vweird.f32 %v899
      %vm1251 = vweird.f32 %v1245
      %vm1252 = vmor %vm1250, %vm1251
      %v1253 = vsel %vm1252, %v1245, %v1249
      %v1254 = vand.u32 2147483647, %v899
      %vm1255 = vcmp.eq.f32.partialorder %v1254, 8.507059e+37
      %v1256 = vand.u32 %v899, 2147483648
      %v1257 = vor.u32 1.1754944e-38, %v1256
      %v1258 = vsel %vm1255, %v1257, %v1253
      %v1259 = vmul.f32 %v861, %v1258
      %v1260 = vrcp.pop %v900
      %v1261 = vmul.f32 %v900, %v1260
      %v1262 = vsub.f32 1.0, %v1261
      %v1263 = vmul.f32 %v1260, %v1262
      %v1264 = vadd.f32 %v1260, %v1263
      %vm1265 = vweird.f32 %v900
      %vm1266 = vweird.f32 %v1260
      %vm1267 = vmor %vm1265, %vm1266
      %v1268 = vsel %vm1267, %v1260, %v1264
      %v1269 = vand.u32 2147483647, %v900
      %vm1270 = vcmp.eq.f32.partialorder %v1269, 8.507059e+37
      %v1271 = vand.u32 %v900, 2147483648
      %v1272 = vor.u32 1.1754944e-38, %v1271
      %v1273 = vsel %vm1270, %v1272, %v1268
      %v1274 = vmul.f32 %v862, %v1273
      %v1275 = vrcp.pop %v901
      %v1276 = vmul.f32 %v901, %v1275
      %v1277 = vsub.f32 1.0, %v1276
      %v1278 = vmul.f32 %v1275, %v1277
      %v1279 = vadd.f32 %v1275, %v1278
      %vm1280 = vweird.f32 %v901
      %vm1281 = vweird.f32 %v1275
      %vm1282 = vmor %vm1280, %vm1281
      %v1283 = vsel %vm1282, %v1275, %v1279
      %v1284 = vand.u32 2147483647, %v901
      %vm1285 = vcmp.eq.f32.partialorder %v1284, 8.507059e+37
      %v1286 = vand.u32 %v901, 2147483648
      %v1287 = vor.u32 1.1754944e-38, %v1286
      %v1288 = vsel %vm1285, %v1287, %v1283
      %v1289 = vmul.f32 %v863, %v1288
      %v1290 = vrcp.pop %v902
      %v1291 = vmul.f32 %v902, %v1290
      %v1292 = vsub.f32 1.0, %v1291
      %v1293 = vmul.f32 %v1290, %v1292
      %v1294 = vadd.f32 %v1290, %v1293
      %vm1295 = vweird.f32 %v902
      %vm1296 = vweird.f32 %v1290
      %vm1297 = vmor %vm1295, %vm1296
      %v1298 = vsel %vm1297, %v1290, %v1294
      %v1299 = vand.u32 2147483647, %v902
      %vm1300 = vcmp.eq.f32.partialorder %v1299, 8.507059e+37
      %v1301 = vand.u32 %v902, 2147483648
      %v1302 = vor.u32 1.1754944e-38, %v1301
      %v1303 = vsel %vm1300, %v1302, %v1298
      %v1304 = vmul.f32 %v864, %v1303
      %v1305 = vrcp.pop %v903
      %v1306 = vmul.f32 %v903, %v1305
      %v1307 = vsub.f32 1.0, %v1306
      %v1308 = vmul.f32 %v1305, %v1307
      %v1309 = vadd.f32 %v1305, %v1308
      %vm1310 = vweird.f32 %v903
      %vm1311 = vweird.f32 %v1305
      %vm1312 = vmor %vm1310, %vm1311
      %v1313 = vsel %vm1312, %v1305, %v1309
      %v1314 = vand.u32 2147483647, %v903
      %vm1315 = vcmp.eq.f32.partialorder %v1314, 8.507059e+37
      %v1316 = vand.u32 %v903, 2147483648
      %v1317 = vor.u32 1.1754944e-38, %v1316
      %v1318 = vsel %vm1315, %v1317, %v1313
      %v1319 = vmul.f32 %v865, %v1318
      %v1320 = vrcp.pop %v904
      %v1321 = vmul.f32 %v904, %v1320
      %v1322 = vsub.f32 1.0, %v1321
      %v1323 = vmul.f32 %v1320, %v1322
      %v1324 = vadd.f32 %v1320, %v1323
      %vm1325 = vweird.f32 %v904
      %vm1326 = vweird.f32 %v1320
      %vm1327 = vmor %vm1325, %vm1326
      %v1328 = vsel %vm1327, %v1320, %v1324
      %v1329 = vand.u32 2147483647, %v904
      %vm1330 = vcmp.eq.f32.partialorder %v1329, 8.507059e+37
      %v1331 = vand.u32 %v904, 2147483648
      %v1332 = vor.u32 1.1754944e-38, %v1331
      %v1333 = vsel %vm1330, %v1332, %v1328
      %v1334 = vmul.f32 %v866, %v1333
      %v1335 = vrcp.pop %v905
      %v1336 = vmul.f32 %v905, %v1335
      %v1337 = vsub.f32 1.0, %v1336
      %v1338 = vmul.f32 %v1335, %v1337
      %v1339 = vadd.f32 %v1335, %v1338
      %vm1340 = vweird.f32 %v905
      %vm1341 = vweird.f32 %v1335
      %vm1342 = vmor %vm1340, %vm1341
      %v1343 = vsel %vm1342, %v1335, %v1339
      %v1344 = vand.u32 2147483647, %v905
      %vm1345 = vcmp.eq.f32.partialorder %v1344, 8.507059e+37
      %v1346 = vand.u32 %v905, 2147483648
      %v1347 = vor.u32 1.1754944e-38, %v1346
      %v1348 = vsel %vm1345, %v1347, %v1343
      %v1349 = vmul.f32 %v867, %v1348
      %v1350 = vrcp.pop %v906
      %v1351 = vmul.f32 %v906, %v1350
      %v1352 = vsub.f32 1.0, %v1351
      %v1353 = vmul.f32 %v1350, %v1352
      %v1354 = vadd.f32 %v1350, %v1353
      %vm1355 = vweird.f32 %v906
      %vm1356 = vweird.f32 %v1350
      %vm1357 = vmor %vm1355, %vm1356
      %v1358 = vsel %vm1357, %v1350, %v1354
      %v1359 = vand.u32 2147483647, %v906
      %vm1360 = vcmp.eq.f32.partialorder %v1359, 8.507059e+37
      %v1361 = vand.u32 %v906, 2147483648
      %v1362 = vor.u32 1.1754944e-38, %v1361
      %v1363 = vsel %vm1360, %v1362, %v1358
      %v1364 = vmul.f32 %v868, %v1363
      %v1365 = vrcp.pop %v907
      %v1366 = vmul.f32 %v907, %v1365
      %v1367 = vsub.f32 1.0, %v1366
      %v1368 = vmul.f32 %v1365, %v1367
      %v1369 = vadd.f32 %v1365, %v1368
      %vm1370 = vweird.f32 %v907
      %vm1371 = vweird.f32 %v1365
      %vm1372 = vmor %vm1370, %vm1371
      %v1373 = vsel %vm1372, %v1365, %v1369
      %v1374 = vand.u32 2147483647, %v907
      %vm1375 = vcmp.eq.f32.partialorder %v1374, 8.507059e+37
      %v1376 = vand.u32 %v907, 2147483648
      %v1377 = vor.u32 1.1754944e-38, %v1376
      %v1378 = vsel %vm1375, %v1377, %v1373
      %v1379 = vmul.f32 %v869, %v1378
      %v1380 = vrcp.pop %v908
      %v1381 = vmul.f32 %v908, %v1380
      %v1382 = vsub.f32 1.0, %v1381
      %v1383 = vmul.f32 %v1380, %v1382
      %v1384 = vadd.f32 %v1380, %v1383
      %vm1385 = vweird.f32 %v908
      %vm1386 = vweird.f32 %v1380
      %vm1387 = vmor %vm1385, %vm1386
      %v1388 = vsel %vm1387, %v1380, %v1384
      %v1389 = vand.u32 2147483647, %v908
      %vm1390 = vcmp.eq.f32.partialorder %v1389, 8.507059e+37
      %v1391 = vand.u32 %v908, 2147483648
      %v1392 = vor.u32 1.1754944e-38, %v1391
      %v1393 = vsel %vm1390, %v1392, %v1388
      %v1394 = vmul.f32 %v870, %v1393
      %v1395 = vrcp.pop %v909
      %v1396 = vmul.f32 %v909, %v1395
      %v1397 = vsub.f32 1.0, %v1396
      %v1398 = vmul.f32 %v1395, %v1397
      %v1399 = vadd.f32 %v1395, %v1398
      %vm1400 = vweird.f32 %v909
      %vm1401 = vweird.f32 %v1395
      %vm1402 = vmor %vm1400, %vm1401
      %v1403 = vsel %vm1402, %v1395, %v1399
      %v1404 = vand.u32 2147483647, %v909
      %vm1405 = vcmp.eq.f32.partialorder %v1404, 8.507059e+37
      %v1406 = vand.u32 %v909, 2147483648
      %v1407 = vor.u32 1.1754944e-38, %v1406
      %v1408 = vsel %vm1405, %v1407, %v1403
      %v1409 = vmul.f32 %v871, %v1408
      %v1410 = vrcp.pop %v910
      %v1411 = vmul.f32 %v910, %v1410
      %v1412 = vsub.f32 1.0, %v1411
      %v1413 = vmul.f32 %v1410, %v1412
      %v1414 = vadd.f32 %v1410, %v1413
      %vm1415 = vweird.f32 %v910
      %vm1416 = vweird.f32 %v1410
      %vm1417 = vmor %vm1415, %vm1416
      %v1418 = vsel %vm1417, %v1410, %v1414
      %v1419 = vand.u32 2147483647, %v910
      %vm1420 = vcmp.eq.f32.partialorder %v1419, 8.507059e+37
      %v1421 = vand.u32 %v910, 2147483648
      %v1422 = vor.u32 1.1754944e-38, %v1421
      %v1423 = vsel %vm1420, %v1422, %v1418
      %v1424 = vmul.f32 %v872, %v1423
      %v1425 = vrcp.pop %v911
      %v1426 = vmul.f32 %v911, %v1425
      %v1427 = vsub.f32 1.0, %v1426
      %v1428 = vmul.f32 %v1425, %v1427
      %v1429 = vadd.f32 %v1425, %v1428
      %vm1430 = vweird.f32 %v911
      %vm1431 = vweird.f32 %v1425
      %vm1432 = vmor %vm1430, %vm1431
      %v1433 = vsel %vm1432, %v1425, %v1429
      %v1434 = vand.u32 2147483647, %v911
      %vm1435 = vcmp.eq.f32.partialorder %v1434, 8.507059e+37
      %v1436 = vand.u32 %v911, 2147483648
      %v1437 = vor.u32 1.1754944e-38, %v1436
      %v1438 = vsel %vm1435, %v1437, %v1433
      %v1439 = vmul.f32 %v873, %v1438
      %v1440 = vrcp.pop %v912
      %v1441 = vmul.f32 %v912, %v1440
      %v1442 = vsub.f32 1.0, %v1441
      %v1443 = vmul.f32 %v1440, %v1442
      %v1444 = vadd.f32 %v1440, %v1443
      %vm1445 = vweird.f32 %v912
      %vm1446 = vweird.f32 %v1440
      %vm1447 = vmor %vm1445, %vm1446
      %v1448 = vsel %vm1447, %v1440, %v1444
      %v1449 = vand.u32 2147483647, %v912
      %vm1450 = vcmp.eq.f32.partialorder %v1449, 8.507059e+37
      %v1451 = vand.u32 %v912, 2147483648
      %v1452 = vor.u32 1.1754944e-38, %v1451
      %v1453 = vsel %vm1450, %v1452, %v1448
      %v1454 = vmul.f32 %v874, %v1453
      %v1455 = vrcp.pop %v913
      %v1456 = vmul.f32 %v913, %v1455
      %v1457 = vsub.f32 1.0, %v1456
      %v1458 = vmul.f32 %v1455, %v1457
      %v1459 = vadd.f32 %v1455, %v1458
      %vm1460 = vweird.f32 %v913
      %vm1461 = vweird.f32 %v1455
      %vm1462 = vmor %vm1460, %vm1461
      %v1463 = vsel %vm1462, %v1455, %v1459
      %v1464 = vand.u32 2147483647, %v913
      %vm1465 = vcmp.eq.f32.partialorder %v1464, 8.507059e+37
      %v1466 = vand.u32 %v913, 2147483648
      %v1467 = vor.u32 1.1754944e-38, %v1466
      %v1468 = vsel %vm1465, %v1467, %v1463
      %v1469 = vmul.f32 %v875, %v1468
      %v1470 = vrcp.pop %v914
      %v1471 = vmul.f32 %v914, %v1470
      %v1472 = vsub.f32 1.0, %v1471
      %v1473 = vmul.f32 %v1470, %v1472
      %v1474 = vadd.f32 %v1470, %v1473
      %vm1475 = vweird.f32 %v914
      %vm1476 = vweird.f32 %v1470
      %vm1477 = vmor %vm1475, %vm1476
      %v1478 = vsel %vm1477, %v1470, %v1474
      %v1479 = vand.u32 2147483647, %v914
      %vm1480 = vcmp.eq.f32.partialorder %v1479, 8.507059e+37
      %v1481 = vand.u32 %v914, 2147483648
      %v1482 = vor.u32 1.1754944e-38, %v1481
      %v1483 = vsel %vm1480, %v1482, %v1478
      %v1484 = vmul.f32 %v876, %v1483
      %v1485 = vmul.f32 %v611, %v929
      %v1486 = vmul.f32 %v612, %v944
      %v1487 = vmul.f32 %v613, %v959
      %v1488 = vmul.f32 %v614, %v974
      %v1489 = vmul.f32 %v615, %v989
      %v1490 = vmul.f32 %v616, %v1004
      %v1491 = vmul.f32 %v617, %v1019
      %v1492 = vmul.f32 %v618, %v1034
      %v1493 = vmul.f32 %v619, %v1049
      %v1494 = vmul.f32 %v620, %v1064
      %v1495 = vmul.f32 %v621, %v1079
      %v1496 = vmul.f32 %v622, %v1094
      %v1497 = vmul.f32 %v623, %v1109
      %v1498 = vmul.f32 %v624, %v1124
      %v1499 = vmul.f32 %v625, %v1139
      %v1500 = vmul.f32 %v626, %v1154
      %v1501 = vmul.f32 %v627, %v1169
      %v1502 = vmul.f32 %v628, %v1184
      %v1503 = vmul.f32 %v629, %v1199
      %v1504 = vmul.f32 %v630, %v1214
      %v1505 = vmul.f32 %v631, %v1229
      %v1506 = vmul.f32 %v632, %v1244
      %v1507 = vmul.f32 %v633, %v1259
      %v1508 = vmul.f32 %v634, %v1274
      %v1509 = vmul.f32 %v635, %v1289
      %v1510 = vmul.f32 %v636, %v1304
      %v1511 = vmul.f32 %v637, %v1319
      %v1512 = vmul.f32 %v638, %v1334
      %v1513 = vmul.f32 %v639, %v1349
      %v1514 = vmul.f32 %v640, %v1364
      %v1515 = vmul.f32 %v641, %v1379
      %v1516 = vmul.f32 %v642, %v1394
      %v1517 = vmul.f32 %v643, %v1409
      %v1518 = vmul.f32 %v644, %v1424
      %v1519 = vmul.f32 %v645, %v1439
      %v1520 = vmul.f32 %v646, %v1454
      %v1521 = vmul.f32 %v647, %v1469
      %v1522 = vmul.f32 %v648, %v1484
      %v1523 = vsel %vm801, %v611, %v1485
      %v1524 = vsel %vm802, %v612, %v1486
      %v1525 = vsel %vm803, %v613, %v1487
      %v1526 = vsel %vm804, %v614, %v1488
      %v1527 = vsel %vm805, %v615, %v1489
      %v1528 = vsel %vm806, %v616, %v1490
      %v1529 = vsel %vm807, %v617, %v1491
      %v1530 = vsel %vm808, %v618, %v1492
      %v1531 = vsel %vm809, %v619, %v1493
      %v1532 = vsel %vm810, %v620, %v1494
      %v1533 = vsel %vm811, %v621, %v1495
      %v1534 = vsel %vm812, %v622, %v1496
      %v1535 = vsel %vm813, %v623, %v1497
      %v1536 = vsel %vm814, %v624, %v1498
      %v1537 = vsel %vm815, %v625, %v1499
      %v1538 = vsel %vm816, %v626, %v1500
      %v1539 = vsel %vm817, %v627, %v1501
      %v1540 = vsel %vm818, %v628, %v1502
      %v1541 = vsel %vm819, %v629, %v1503
      %v1542 = vsel %vm820, %v630, %v1504
      %v1543 = vsel %vm821, %v631, %v1505
      %v1544 = vsel %vm822, %v632, %v1506
      %v1545 = vsel %vm823, %v633, %v1507
      %v1546 = vsel %vm824, %v634, %v1508
      %v1547 = vsel %vm825, %v635, %v1509
      %v1548 = vsel %vm826, %v636, %v1510
      %v1549 = vsel %vm827, %v637, %v1511
      %v1550 = vsel %vm828, %v638, %v1512
      %v1551 = vsel %vm829, %v639, %v1513
      %v1552 = vsel %vm830, %v640, %v1514
      %v1553 = vsel %vm831, %v641, %v1515
      %v1554 = vsel %vm832, %v642, %v1516
      %v1555 = vsel %vm833, %v643, %v1517
      %v1556 = vsel %vm834, %v644, %v1518
      %v1557 = vsel %vm835, %v645, %v1519
      %v1558 = vsel %vm836, %v646, %v1520
      %v1559 = vsel %vm837, %v647, %v1521
      %v1560 = vsel %vm838, %v648, %v1522
      %v1599 = vrot.slane %v1524, 7
      %vm1600 = vcmask 1041409
      %v1601 = vsel %vm1600, %v1599, %v1523
      %v1602 = vrot.slane %v1525, 6
      %vm1603 = vcmask 1042434
      %v1604 = vsel %vm1603, %v1602, %v1601
      %v1605 = vrot.slane %v1526, 5
      %vm1606 = vcmask 1043459
      %v1607 = vsel %vm1606, %v1605, %v1604
      %v1608 = vrot.slane %v1527, 4
      %vm1609 = vcmask 1044484
      %v1610 = vsel %vm1609, %v1608, %v1607
      %v1611 = vrot.slane %v1528, 3
      %vm1612 = vcmask 1045509
      %v1613 = vsel %vm1612, %v1611, %v1610
      %v1614 = vrot.slane %v1529, 2
      %vm1615 = vcmask 1046534
      %v1616 = vsel %vm1615, %v1614, %v1613
      %v1617 = vrot.slane %v1530, 1
      %vm1618 = vcmask 1047559
      %v1619 = vsel %vm1618, %v1617, %v1616
      %v1620 = vrot.slane %v1532, 7
      %v1621 = vsel %vm1600, %v1620, %v1531
      %v1622 = vrot.slane %v1533, 6
      %v1623 = vsel %vm1603, %v1622, %v1621
      %v1624 = vrot.slane %v1534, 5
      %v1625 = vsel %vm1606, %v1624, %v1623
      %v1626 = vrot.slane %v1535, 4
      %v1627 = vsel %vm1609, %v1626, %v1625
      %v1628 = vrot.slane %v1536, 3
      %v1629 = vsel %vm1612, %v1628, %v1627
      %v1630 = vrot.slane %v1537, 2
      %v1631 = vsel %vm1615, %v1630, %v1629
      %v1632 = vrot.slane %v1538, 1
      %v1633 = vsel %vm1618, %v1632, %v1631
      %v1634 = vrot.slane %v1540, 7
      %v1635 = vsel %vm1600, %v1634, %v1539
      %v1636 = vrot.slane %v1541, 6
      %v1637 = vsel %vm1603, %v1636, %v1635
      %v1638 = vrot.slane %v1542, 5
      %v1639 = vsel %vm1606, %v1638, %v1637
      %v1640 = vrot.slane %v1543, 4
      %v1641 = vsel %vm1609, %v1640, %v1639
      %v1642 = vrot.slane %v1544, 3
      %v1643 = vsel %vm1612, %v1642, %v1641
      %v1644 = vrot.slane %v1545, 2
      %v1645 = vsel %vm1615, %v1644, %v1643
      %v1646 = vrot.slane %v1546, 1
      %v1647 = vsel %vm1618, %v1646, %v1645
      %v1648 = vrot.slane %v1548, 7
      %v1649 = vsel %vm1600, %v1648, %v1547
      %v1650 = vrot.slane %v1549, 6
      %v1651 = vsel %vm1603, %v1650, %v1649
      %v1652 = vrot.slane %v1550, 5
      %v1653 = vsel %vm1606, %v1652, %v1651
      %v1654 = vrot.slane %v1551, 4
      %v1655 = vsel %vm1609, %v1654, %v1653
      %v1656 = vrot.slane %v1552, 3
      %v1657 = vsel %vm1612, %v1656, %v1655
      %v1658 = vrot.slane %v1553, 2
      %v1659 = vsel %vm1615, %v1658, %v1657
      %v1660 = vrot.slane %v1554, 1
      %v1661 = vsel %vm1618, %v1660, %v1659
      %v1662 = vrot.slane %v1556, 7
      %v1663 = vsel %vm1600, %v1662, %v1555
      %v1664 = vrot.slane %v1557, 6
      %v1665 = vsel %vm1603, %v1664, %v1663
      %v1666 = vrot.slane %v1558, 5
      %v1667 = vsel %vm1606, %v1666, %v1665
      %v1668 = vrot.slane %v1559, 4
      %v1669 = vsel %vm1609, %v1668, %v1667
      %v1670 = vrot.slane %v1560, 3
      %v1671 = vsel %vm1612, %v1670, %v1669
      %vm1677 = vcmask 326656
      %1678 = vst.msk [vmem:[%s116] sm:$0xff] %vm1677, %v1619
      %1679 = vst.msk [vmem:[%s116 + $0x8] sm:$0xff] %vm1677, %v1633
      %1680 = vst.msk [vmem:[%s116 + $0x10] sm:$0xff] %vm1677, %v1647
      %1681 = vst.msk [vmem:[%s116 + $0x18] sm:$0xff] %vm1677, %v1661
      %vm1682 = vcmask 324608
      %1683 = vst.msk [vmem:[%s116 + $0x20] sm:$0x3f] %vm1682, %v1671
      %p1684 = scmp.lt.s32.totalorder %s12, 1
      %s1685 = scalar_select %p1684, %s12, 1
      %s1686 = smul.addr %s1685, 5
      %s1687 = smul.addr %s1686, 8
      %s1688 = scalar_lea.vmem %s1, %s1687
      // Predicated region
      $region25: #{mnet_forward.7} parent=23 // pred_check
        %p1689 = pneg %p56
      $region26: #{mnet_forward.7} parent=23 // pred_check_branch
        %1691 = sbr.rel (%p1689) target = $region28
      $region27: #{mnet_forward.7} parent=23 // pred_region
        _
      $region28: #{mnet_forward.7} parent=23 // pred_fallthru
        _
    $region24: #{mnet_forward.7} parent=5 // pred_fallthru
      _
    %p1692 = scmp.le.s32.totalorder 2, %s7
    // Predicated region
    $region29: #{mnet_forward.7} parent=5 // pred_check
      %p1693 = pneg %p1692
    $region30: #{mnet_forward.7} parent=5 // pred_check_branch
      %1695 = sbr.rel (%p1693) target = $region32
    $region31: #{mnet_forward.7} parent=5 // pred_region
      %s1696 = ssub.s32 %s7, 2
      // Predicated region
      $region33: #{mnet_forward.7} parent=31 // pred_check
        %p1697 = pneg %p62
      $region34: #{mnet_forward.7} parent=31 // pred_check_branch
        %1699 = sbr.rel (%p1697) target = $region36
      $region35: #{mnet_forward.7} parent=31 // pred_region
        %p1700 = scmp.lt.s32.totalorder %s13, 1
        %s1701 = scalar_select %p1700, %s13, 1
        %s1702 = smul.addr %s1701, 5
        %s1703 = smul.addr %s1702, 8
        %s1704 = scalar_lea.vmem %s1, %s1703
      $region36: #{mnet_forward.7} parent=31 // pred_fallthru
        _
    $region32: #{mnet_forward.7} parent=5 // pred_fallthru
      _
  $region6: #{mnet_forward.7} parent=0 // loop_footer
    %s11 = sadd.s32 1, %s7
  $region7: #{mnet_forward.7} parent=0 // loop_footer_branch
    %6 = sbr.rel target = $region3
  $region8: #{mnet_forward.7} parent=0 // loop_exit
    _

// kernel: mnet_forward.6
$region0: #{mnet_forward.6}
  #allocation0 [shape = 'u32[]', space=smem, size = 0x4, offset = 0x4, fixed_abs, tag = 'smem constant byte address 0x4 - core index']
  #allocation1 [shape = 'u32[72,128]{1,0:T(1,128)}', space=vmem, size = 0x9000, scoped, tag = 'internal scratch']
  %s0 = inlined_call_operand.vmem [shape: f32[2,200,19], index: 0, kind: input, shape index: {}]
  %s1 = inlined_call_operand.vmem [shape: f32[4,19,40], index: 1, kind: input, shape index: {}]
  %s2 = inlined_call_operand.hbm [shape: f32[1,40], index: 2, kind: input, shape index: {}]
  %s3 = inlined_call_operand.vmem [shape: f32[4,40,40], index: 3, kind: input, shape index: {}]
  %s4 = inlined_call_operand.vmem [shape: f32[1,40], index: 4, kind: input, shape index: {}]
  %s5 = inlined_call_operand.vmem [shape: f32[1,40], index: 5, kind: input, shape index: {}]
  %s6 = inlined_call_operand.vmem [shape: f32[2,190,40], index: 6, kind: output, shape index: {}]
  %s7 = sld [smem:[#allocation0]]
  $region61: #{mnet_forward.6} parent=0
    _
  %s9 = ssub.s32 1, %s7
  %s10 = scalar_select 0, %s9, %s7
  $region1: #{mnet_forward.6} parent=0
    #allocation2 [shape = 'u8[512]{0}', space=vmem, size = 0x400, scoped, tag = 'input window, operand 2, single buffered']
    #allocation3 [shape = 's32[2]{0}', space=sflag, size = 0x8, scoped, tag = 'scoped memory for mnet_forward.6']
    %11 = vsyncpa [#allocation3], 0
    loop: start=0, step=1, limit=4
    $region2: #{mnet_forward.6} parent=1 // loop_pre_header
      _
    $region3: #{mnet_forward.6} parent=1 // loop_header
      %s13 = sphi 0, %s17
      %p14 = scmp.ge.s32.totalorder %s13, 4
      %s23 = sphi 0, %s25
      %s26 = sphi 0, %s23
      %s27 = sphi 0, %s26
      %s43 = sphi 0, %s27
      %s47 = sphi 0, %s47
      %s49 = sphi 0, %s47
      %s50 = sphi 0, %s49
      %s64 = sphi 0, %s50
      %s68 = sphi 0, %s68
      %s70 = sphi 0, %s68
      %s71 = sphi 0, %s70
      %s85 = sphi 0, %s71
      %s89 = sphi 0, %s89
      %s91 = sphi 0, %s89
      %s92 = sphi 0, %s91
      %s106 = sphi 0, %s92
      %s110 = sphi 0, %s110
      %s112 = sphi 0, %s110
      %s113 = sphi 0, %s112
      %s127 = sphi 0, %s113
      %s131 = sphi 0, %s131
      %s133 = sphi 0, %s131
      %s134 = sphi 0, %s133
      %s148 = sphi 0, %s134
      %s154 = sphi 0, %s156
      %s157 = sphi 0, %s154
      %s158 = sphi 0, %s157
      %s174 = sphi 0, %s158
    $region4: #{mnet_forward.6} parent=1 // loop_header_branch
      %16 = sbr.rel (%p14) target = $region8
    $region5: #{mnet_forward.6} parent=1 // loop_body
      %s18 = ssub.s32 %s13, 1
      %s19 = ssub.s32 %s13, 2
      %s20 = sadd.s32 %s13, 1
      %s21 = ssub.s32 %s13, %s20
      %p22 = scmp.eq.s32.totalorder %s21, 0
      %s24 = sadd.s32 %s23, 1
      %s25 = scalar_select %p22, %s23, %s24
      %p28 = pneg %p22
      %p29 = scmp.eq.s32.totalorder %s13, 1
      %p30 = por %p28, %p29
      %p31 = scmp.ne.s32.totalorder %s23, %s26
      %p32 = scmp.eq.s32.totalorder %s13, 0
      %p33 = por %p31, %p32
      %p34 = scmp.ne.s32.totalorder %s23, %s26
      %p35 = scmp.eq.s32.totalorder %s18, 1
      %p36 = por %p34, %p35
      %p37 = scmp.ne.s32.totalorder %s26, %s27
      %p38 = scmp.eq.s32.totalorder %s18, 0
      %p39 = por %p37, %p38
      %p40 = scmp.ne.s32.totalorder %s26, %s27
      %p41 = scmp.eq.s32.totalorder %s19, 1
      %p42 = por %p40, %p41
      %p44 = scmp.ne.s32.totalorder %s27, %s43
      %p45 = scmp.eq.s32.totalorder %s19, 0
      %p46 = por %p44, %p45
      %s48 = sadd.s32 %s47, 1
      %p51 = scmp.eq.s32.totalorder %s13, 1
      %p52 = scmp.ne.s32.totalorder %s47, %s49
      %p53 = scmp.eq.s32.totalorder %s13, 0
      %p54 = por %p52, %p53
      %p55 = scmp.ne.s32.totalorder %s47, %s49
      %p56 = scmp.eq.s32.totalorder %s18, 1
      %p57 = por %p55, %p56
      %p58 = scmp.ne.s32.totalorder %s49, %s50
      %p59 = scmp.eq.s32.totalorder %s18, 0
      %p60 = por %p58, %p59
      %p61 = scmp.ne.s32.totalorder %s49, %s50
      %p62 = scmp.eq.s32.totalorder %s19, 1
      %p63 = por %p61, %p62
      %p65 = scmp.ne.s32.totalorder %s50, %s64
      %p66 = scmp.eq.s32.totalorder %s19, 0
      %p67 = por %p65, %p66
      %s69 = sadd.s32 %s68, 1
      %p72 = scmp.eq.s32.totalorder %s13, 1
      %p73 = scmp.ne.s32.totalorder %s68, %s70
      %p74 = scmp.eq.s32.totalorder %s13, 0
      %p75 = por %p73, %p74
      %p76 = scmp.ne.s32.totalorder %s68, %s70
      %p77 = scmp.eq.s32.totalorder %s18, 1
      %p78 = por %p76, %p77
      %p79 = scmp.ne.s32.totalorder %s70, %s71
      %p80 = scmp.eq.s32.totalorder %s18, 0
      %p81 = por %p79, %p80
      %p82 = scmp.ne.s32.totalorder %s70, %s71
      %p83 = scmp.eq.s32.totalorder %s19, 1
      %p84 = por %p82, %p83
      %p86 = scmp.ne.s32.totalorder %s71, %s85
      %p87 = scmp.eq.s32.totalorder %s19, 0
      %p88 = por %p86, %p87
      %s90 = sadd.s32 %s89, 1
      %p93 = scmp.eq.s32.totalorder %s13, 1
      %p94 = scmp.ne.s32.totalorder %s89, %s91
      %p95 = scmp.eq.s32.totalorder %s13, 0
      %p96 = por %p94, %p95
      %p97 = scmp.ne.s32.totalorder %s89, %s91
      %p98 = scmp.eq.s32.totalorder %s18, 1
      %p99 = por %p97, %p98
      %p100 = scmp.ne.s32.totalorder %s91, %s92
      %p101 = scmp.eq.s32.totalorder %s18, 0
      %p102 = por %p100, %p101
      %p103 = scmp.ne.s32.totalorder %s91, %s92
      %p104 = scmp.eq.s32.totalorder %s19, 1
      %p105 = por %p103, %p104
      %p107 = scmp.ne.s32.totalorder %s92, %s106
      %p108 = scmp.eq.s32.totalorder %s19, 0
      %p109 = por %p107, %p108
      %s111 = sadd.s32 %s110, 1
      %p114 = scmp.eq.s32.totalorder %s13, 1
      %p115 = scmp.ne.s32.totalorder %s110, %s112
      %p116 = scmp.eq.s32.totalorder %s13, 0
      %p117 = por %p115, %p116
      %p118 = scmp.ne.s32.totalorder %s110, %s112
      %p119 = scmp.eq.s32.totalorder %s18, 1
      %p120 = por %p118, %p119
      %p121 = scmp.ne.s32.totalorder %s112, %s113
      %p122 = scmp.eq.s32.totalorder %s18, 0
      %p123 = por %p121, %p122
      %p124 = scmp.ne.s32.totalorder %s112, %s113
      %p125 = scmp.eq.s32.totalorder %s19, 1
      %p126 = por %p124, %p125
      %p128 = scmp.ne.s32.totalorder %s113, %s127
      %p129 = scmp.eq.s32.totalorder %s19, 0
      %p130 = por %p128, %p129
      %s132 = sadd.s32 %s131, 1
      %p135 = scmp.eq.s32.totalorder %s13, 1
      %p136 = scmp.ne.s32.totalorder %s131, %s133
      %p137 = scmp.eq.s32.totalorder %s13, 0
      %p138 = por %p136, %p137
      %p139 = scmp.ne.s32.totalorder %s131, %s133
      %p140 = scmp.eq.s32.totalorder %s18, 1
      %p141 = por %p139, %p140
      %p142 = scmp.ne.s32.totalorder %s133, %s134
      %p143 = scmp.eq.s32.totalorder %s18, 0
      %p144 = por %p142, %p143
      %p145 = scmp.ne.s32.totalorder %s133, %s134
      %p146 = scmp.eq.s32.totalorder %s19, 1
      %p147 = por %p145, %p146
      %p149 = scmp.ne.s32.totalorder %s134, %s148
      %p150 = scmp.eq.s32.totalorder %s19, 0
      %p151 = por %p149, %p150
      %s152 = ssub.s32 %s13, %s20
      %p153 = scmp.eq.s32.totalorder %s152, 0
      %s155 = sadd.s32 %s154, 1
      %s156 = scalar_select %p153, %s154, %s155
      %p159 = pneg %p153
      %p160 = scmp.eq.s32.totalorder %s13, 1
      %p161 = por %p159, %p160
      %p162 = scmp.ne.s32.totalorder %s154, %s157
      %p163 = scmp.eq.s32.totalorder %s13, 0
      %p164 = por %p162, %p163
      %p165 = scmp.ne.s32.totalorder %s154, %s157
      %p166 = scmp.eq.s32.totalorder %s18, 1
      %p167 = por %p165, %p166
      %p168 = scmp.ne.s32.totalorder %s157, %s158
      %p169 = scmp.eq.s32.totalorder %s18, 0
      %p170 = por %p168, %p169
      %p171 = scmp.ne.s32.totalorder %s157, %s158
      %p172 = scmp.eq.s32.totalorder %s19, 1
      %p173 = por %p171, %p172
      %p175 = scmp.ne.s32.totalorder %s158, %s174
      %p176 = scmp.eq.s32.totalorder %s19, 0
      %p177 = por %p175, %p176
      %p178 = scmp.le.s32.totalorder 1, %s13
      %p179 = scmp.lt.s32.totalorder %s13, 3
      %p180 = pnand %p178, %p179
      %p181 = pneg %p180
      // Predicated region
      $region9: #{mnet_forward.6} parent=5 // pred_check
        _
      $region10: #{mnet_forward.6} parent=5 // pred_check_branch
        %183 = sbr.rel (%p180) target = $region12
      $region11: #{mnet_forward.6} parent=5 // pred_region
        %s184 = ssub.s32 %s13, 1
        // Predicated region
        $region13: #{mnet_forward.6} parent=11 // pred_check
          %p185 = pneg %p60
        $region14: #{mnet_forward.6} parent=11 // pred_check_branch
          %187 = sbr.rel (%p185) target = $region16
        $region15: #{mnet_forward.6} parent=11 // pred_region
          _
        $region16: #{mnet_forward.6} parent=11 // pred_fallthru
          _
        // Predicated region
        $region17: #{mnet_forward.6} parent=11 // pred_check
          %p188 = pneg %p81
        $region18: #{mnet_forward.6} parent=11 // pred_check_branch
          %190 = sbr.rel (%p188) target = $region20
        $region19: #{mnet_forward.6} parent=11 // pred_region
          %192 = vsyncadd [#allocation3], 0
          %s194 = sshll.u32 %s2, 4
          %s195 = int_to_ptr.hbm [resolvable:$true] %s194
          %s196 = sshll.u32 [#allocation2], 4
          %s197 = int_to_ptr.vmem [resolvable:$true] %s196
          %199 = dma.hbm_to_vmem [thread:$0]  %s195, 16, %s197, [#allocation3]
        $region20: #{mnet_forward.6} parent=11 // pred_fallthru
          _
        // Predicated region
        $region21: #{mnet_forward.6} parent=11 // pred_check
          %p200 = pneg %p102
        $region22: #{mnet_forward.6} parent=11 // pred_check_branch
          %202 = sbr.rel (%p200) target = $region24
        $region23: #{mnet_forward.6} parent=11 // pred_region
          _
        $region24: #{mnet_forward.6} parent=11 // pred_fallthru
          _
        // Predicated region
        $region25: #{mnet_forward.6} parent=11 // pred_check
          %p203 = pneg %p123
        $region26: #{mnet_forward.6} parent=11 // pred_check_branch
          %205 = sbr.rel (%p203) target = $region28
        $region27: #{mnet_forward.6} parent=11 // pred_region
          _
        $region28: #{mnet_forward.6} parent=11 // pred_fallthru
          _
        // Predicated region
        $region29: #{mnet_forward.6} parent=11 // pred_check
          %p206 = pneg %p144
        $region30: #{mnet_forward.6} parent=11 // pred_check_branch
          %208 = sbr.rel (%p206) target = $region32
        $region31: #{mnet_forward.6} parent=11 // pred_region
          _
        $region32: #{mnet_forward.6} parent=11 // pred_fallthru
          _
      $region12: #{mnet_forward.6} parent=5 // pred_fallthru
        _
      %p209 = scmp.lt.s32.totalorder %s13, 2
      // Predicated region
      $region33: #{mnet_forward.6} parent=5 // pred_check
        %p210 = pneg %p209
      $region34: #{mnet_forward.6} parent=5 // pred_check_branch
        %212 = sbr.rel (%p210) target = $region36
      $region35: #{mnet_forward.6} parent=5 // pred_region
        // Predicated region
        $region37: #{mnet_forward.6} parent=35 // pred_check
          %p213 = pneg %p33
        $region38: #{mnet_forward.6} parent=35 // pred_check_branch
          %215 = sbr.rel (%p213) target = $region40
        $region39: #{mnet_forward.6} parent=35 // pred_region
          %p216 = scmp.lt.s32.totalorder %s13, 1
          %s217 = scalar_select %p216, %s13, 1
          %s218 = smul.addr %s217, 25
          %s219 = smul.addr %s218, 8
          %s220 = scalar_lea.vmem %s0, %s219
        $region40: #{mnet_forward.6} parent=35 // pred_fallthru
          _
      $region36: #{mnet_forward.6} parent=5 // pred_fallthru
        _
      %p221 = scmp.le.s32.totalorder 1, %s13
      %p222 = scmp.lt.s32.totalorder %s13, 3
      %p223 = pnand %p221, %p222
      %p224 = pneg %p223
      // Predicated region
      $region41: #{mnet_forward.6} parent=5 // pred_check
        _
      $region42: #{mnet_forward.6} parent=5 // pred_check_branch
        %226 = sbr.rel (%p223) target = $region44
      $region43: #{mnet_forward.6} parent=5 // pred_region
        %s227 = ssub.s32 %s13, 1
        // Predicated region
        $region45: #{mnet_forward.6} parent=43 // pred_check
          %p228 = pneg %p81
        $region46: #{mnet_forward.6} parent=43 // pred_check_branch
          %230 = sbr.rel (%p228) target = $region48
        $region47: #{mnet_forward.6} parent=43 // pred_region
          %232 = dma.done [#allocation3], 16
        $region48: #{mnet_forward.6} parent=43 // pred_fallthru
          _
        %p233 = scmp.lt.s32.totalorder %s18, 1
        %s234 = scalar_select %p233, %s18, 1
        %s235 = smul.addr %s234, 25
        %s236 = smul.addr %s235, 8
        %s237 = scalar_lea.vmem %s0, %s236
        %p238 = pneg %p39
        %p239 = pneg %p36
        %p240 = pneg %p60
        %p241 = pneg %p57
        %p242 = pneg %p81
        %p243 = pneg %p78
        %p244 = pneg %p102
        %p245 = pneg %p99
        %p246 = pneg %p123
        %p247 = pneg %p120
        %p248 = pneg %p144
        %p249 = pneg %p141
        %p250 = pneg %p170
        %p251 = pneg %p167
        %p252 = scmp.lt.s32.totalorder %s18, 1
        %s253 = scalar_select %p252, %s18, 1
        %s254 = smul.addr %s253, 24
        %s255 = smul.addr %s254, 8
        %s256 = scalar_lea.vmem %s6, %s255
        %p257 = scmp.lt.s32.totalorder %s18, 1
        %s258 = scalar_select %p257, %s18, 1
        %s259 = smul.addr %s258, 25
        %s260 = smul.addr %s259, 8
        %s261 = scalar_lea.vmem %s0, %s260
        %p262 = scmp.lt.s32.totalorder %s18, 1
        %s263 = scalar_select %p262, %s18, 1
        %s264 = smul.addr %s263, 24
        %s265 = smul.addr %s264, 8
        %s266 = scalar_lea.vmem %s6, %s265
        %v267 = vld [vmem:[%s261] sm:$0xff]
        %v268 = vld [vmem:[%s261 + $0x8] sm:$0xff]
        %v269 = vld [vmem:[%s261 + $0x10] sm:$0xff]
        %v270 = vld [vmem:[%s261 + $0x18] sm:$0xff]
        %v271 = vld [vmem:[%s261 + $0x20] sm:$0xff]
        %v272 = vld [vmem:[%s261 + $0x28] sm:$0xff]
        %v273 = vld [vmem:[%s261 + $0x30] sm:$0xff]
        %v274 = vld [vmem:[%s261 + $0x38] sm:$0xff]
        %v275 = vld [vmem:[%s261 + $0x40] sm:$0xff]
        %v276 = vld [vmem:[%s261 + $0x48] sm:$0xff]
        %v277 = vld [vmem:[%s261 + $0x50] sm:$0xff]
        %v278 = vld [vmem:[%s261 + $0x58] sm:$0xff]
        %v279 = vld [vmem:[%s261 + $0x60] sm:$0xff]
        %v280 = vld [vmem:[%s261 + $0x68] sm:$0xff]
        %v281 = vld [vmem:[%s261 + $0x70] sm:$0xff]
        %v282 = vld [vmem:[%s261 + $0x78] sm:$0xff]
        %v283 = vld [vmem:[%s261 + $0x80] sm:$0xff]
        %v284 = vld [vmem:[%s261 + $0x88] sm:$0xff]
        %v285 = vld [vmem:[%s261 + $0x90] sm:$0xff]
        %v286 = vld [vmem:[%s261 + $0x98] sm:$0xff]
        %v287 = vld [vmem:[%s261 + $0xa0] sm:$0xff]
        %v288 = vld [vmem:[%s261 + $0xa8] sm:$0xff]
        %v289 = vld [vmem:[%s261 + $0xb0] sm:$0xff]
        %v290 = vld [vmem:[%s261 + $0xb8] sm:$0xff]
        %v291 = vld [vmem:[%s261 + $0xc0] sm:$0xff]
        %vm292 = vcmask 154624
        %v293 = vsel %vm292, %v267, 0.0
        %v294 = vsel %vm292, %v268, 0.0
        %v295 = vadd.f32 %v293, %v294
        %v296 = vsel %vm292, %v269, 0.0
        %v297 = vadd.f32 %v295, %v296
        %v298 = vsel %vm292, %v270, 0.0
        %v299 = vadd.f32 %v297, %v298
        %v300 = vsel %vm292, %v271, 0.0
        %v301 = vadd.f32 %v299, %v300
        %v302 = vsel %vm292, %v272, 0.0
        %v303 = vadd.f32 %v301, %v302
        %v304 = vsel %vm292, %v273, 0.0
        %v305 = vadd.f32 %v303, %v304
        %v306 = vsel %vm292, %v274, 0.0
        %v307 = vadd.f32 %v305, %v306
        %v308 = vsel %vm292, %v275, 0.0
        %v309 = vadd.f32 %v307, %v308
        %v310 = vsel %vm292, %v276, 0.0
        %v311 = vadd.f32 %v309, %v310
        %v312 = vsel %vm292, %v277, 0.0
        %v313 = vadd.f32 %v311, %v312
        %v314 = vsel %vm292, %v278, 0.0
        %v315 = vadd.f32 %v313, %v314
        %v316 = vsel %vm292, %v279, 0.0
        %v317 = vadd.f32 %v315, %v316
        %v318 = vsel %vm292, %v280, 0.0
        %v319 = vadd.f32 %v317, %v318
        %v320 = vsel %vm292, %v281, 0.0
        %v321 = vadd.f32 %v319, %v320
        %v322 = vsel %vm292, %v282, 0.0
        %v323 = vadd.f32 %v321, %v322
        %v324 = vsel %vm292, %v283, 0.0
        %v325 = vadd.f32 %v323, %v324
        %v326 = vsel %vm292, %v284, 0.0
        %v327 = vadd.f32 %v325, %v326
        %v328 = vsel %vm292, %v285, 0.0
        %v329 = vadd.f32 %v327, %v328
        %v330 = vsel %vm292, %v286, 0.0
        %v331 = vadd.f32 %v329, %v330
        %v332 = vsel %vm292, %v287, 0.0
        %v333 = vadd.f32 %v331, %v332
        %v334 = vsel %vm292, %v288, 0.0
        %v335 = vadd.f32 %v333, %v334
        %v336 = vsel %vm292, %v289, 0.0
        %v337 = vadd.f32 %v335, %v336
        %v338 = vsel %vm292, %v290, 0.0
        %v339 = vadd.f32 %v337, %v338
        %v340 = vsel %vm292, %v291, 0.0
        %v341 = vadd.f32 %v339, %v340
        %v342 = vrot.slane %v341, 4
        %v343 = vadd.f32 %v341, %v342
        %v344 = vrot.slane %v343, 2
        %v345 = vadd.f32 %v343, %v344
        %v346 = vrot.slane %v345, 1
        %v347 = vadd.f32 %v345, %v346
        %v348 = vrcp.pop 200.0
        %v349 = vmul.f32 200.0, %v348
        %v350 = vsub.f32 1.0, %v349
        %v351 = vmul.f32 %v348, %v350
        %v352 = vadd.f32 %v348, %v351
        %vm353 = vweird.f32 %v348
        %v354 = vsel %vm353, %v348, %v352
        %v355 = vmul.f32 %v347, %v354
        %v356 = vsub.f32 %v267, %v355
        %v357 = vsub.f32 %v268, %v355
        %v358 = vsub.f32 %v269, %v355
        %v359 = vsub.f32 %v270, %v355
        %v360 = vsub.f32 %v271, %v355
        %v361 = vsub.f32 %v272, %v355
        %v362 = vsub.f32 %v273, %v355
        %v363 = vsub.f32 %v274, %v355
        %v364 = vsub.f32 %v275, %v355
        %v365 = vsub.f32 %v276, %v355
        %v366 = vsub.f32 %v277, %v355
        %v367 = vsub.f32 %v278, %v355
        %v368 = vsub.f32 %v279, %v355
        %v369 = vsub.f32 %v280, %v355
        %v370 = vsub.f32 %v281, %v355
        %v371 = vsub.f32 %v282, %v355
        %v372 = vsub.f32 %v283, %v355
        %v373 = vsub.f32 %v284, %v355
        %v374 = vsub.f32 %v285, %v355
        %v375 = vsub.f32 %v286, %v355
        %v376 = vsub.f32 %v287, %v355
        %v377 = vsub.f32 %v288, %v355
        %v378 = vsub.f32 %v289, %v355
        %v379 = vsub.f32 %v290, %v355
        %v380 = vsub.f32 %v291, %v355
        %v381 = vmul.f32 %v356, %v356
        %v382 = vmul.f32 %v357, %v357
        %v383 = vmul.f32 %v358, %v358
        %v384 = vmul.f32 %v359, %v359
        %v385 = vmul.f32 %v360, %v360
        %v386 = vmul.f32 %v361, %v361
        %v387 = vmul.f32 %v362, %v362
        %v388 = vmul.f32 %v363, %v363
        %v389 = vmul.f32 %v364, %v364
        %v390 = vmul.f32 %v365, %v365
        %v391 = vmul.f32 %v366, %v366
        %v392 = vmul.f32 %v367, %v367
        %v393 = vmul.f32 %v368, %v368
        %v394 = vmul.f32 %v369, %v369
        %v395 = vmul.f32 %v370, %v370
        %v396 = vmul.f32 %v371, %v371
        %v397 = vmul.f32 %v372, %v372
        %v398 = vmul.f32 %v373, %v373
        %v399 = vmul.f32 %v374, %v374
        %v400 = vmul.f32 %v375, %v375
        %v401 = vmul.f32 %v376, %v376
        %v402 = vmul.f32 %v377, %v377
        %v403 = vmul.f32 %v378, %v378
        %v404 = vmul.f32 %v379, %v379
        %v405 = vmul.f32 %v380, %v380
        %v406 = vsel %vm292, %v381, 0.0
        %v407 = vsel %vm292, %v382, 0.0
        %v408 = vadd.f32 %v406, %v407
        %v409 = vsel %vm292, %v383, 0.0
        %v410 = vadd.f32 %v408, %v409
        %v411 = vsel %vm292, %v384, 0.0
        %v412 = vadd.f32 %v410, %v411
        %v413 = vsel %vm292, %v385, 0.0
        %v414 = vadd.f32 %v412, %v413
        %v415 = vsel %vm292, %v386, 0.0
        %v416 = vadd.f32 %v414, %v415
        %v417 = vsel %vm292, %v387, 0.0
        %v418 = vadd.f32 %v416, %v417
        %v419 = vsel %vm292, %v388, 0.0
        %v420 = vadd.f32 %v418, %v419
        %v421 = vsel %vm292, %v389, 0.0
        %v422 = vadd.f32 %v420, %v421
        %v423 = vsel %vm292, %v390, 0.0
        %v424 = vadd.f32 %v422, %v423
        %v425 = vsel %vm292, %v391, 0.0
        %v426 = vadd.f32 %v424, %v425
        %v427 = vsel %vm292, %v392, 0.0
        %v428 = vadd.f32 %v426, %v427
        %v429 = vsel %vm292, %v393, 0.0
        %v430 = vadd.f32 %v428, %v429
        %v431 = vsel %vm292, %v394, 0.0
        %v432 = vadd.f32 %v430, %v431
        %v433 = vsel %vm292, %v395, 0.0
        %v434 = vadd.f32 %v432, %v433
        %v435 = vsel %vm292, %v396, 0.0
        %v436 = vadd.f32 %v434, %v435
        %v437 = vsel %vm292, %v397, 0.0
        %v438 = vadd.f32 %v436, %v437
        %v439 = vsel %vm292, %v398, 0.0
        %v440 = vadd.f32 %v438, %v439
        %v441 = vsel %vm292, %v399, 0.0
        %v442 = vadd.f32 %v440, %v441
        %v443 = vsel %vm292, %v400, 0.0
        %v444 = vadd.f32 %v442, %v443
        %v445 = vsel %vm292, %v401, 0.0
        %v446 = vadd.f32 %v444, %v445
        %v447 = vsel %vm292, %v402, 0.0
        %v448 = vadd.f32 %v446, %v447
        %v449 = vsel %vm292, %v403, 0.0
        %v450 = vadd.f32 %v448, %v449
        %v451 = vsel %vm292, %v404, 0.0
        %v452 = vadd.f32 %v450, %v451
        %v453 = vsel %vm292, %v405, 0.0
        %v454 = vadd.f32 %v452, %v453
        %v455 = vrot.slane %v454, 4
        %v456 = vadd.f32 %v454, %v455
        %v457 = vrot.slane %v456, 2
        %v458 = vadd.f32 %v456, %v457
        %v459 = vrot.slane %v458, 1
        %v460 = vadd.f32 %v458, %v459
        %v461 = vrcp.pop 199.0
        %v462 = vmul.f32 199.0, %v461
        %v463 = vsub.f32 1.0, %v462
        %v464 = vmul.f32 %v461, %v463
        %v465 = vadd.f32 %v461, %v464
        %vm466 = vweird.f32 %v461
        %v467 = vsel %vm466, %v461, %v465
        %v468 = vmul.f32 %v460, %v467
        %v469 = vadd.f32 %v468, 1e-12
        %v470 = vrsqrt.pop %v469
        %v471 = vmul.f32 %v470, %v469
        %v472 = vmul.f32 %v471, %v470
        %v473 = vmul.f32 0.5, %v472
        %v474 = vsub.f32 1.5, %v473
        %v475 = vmul.f32 %v470, %v474
        %vm476 = vweird.f32 %v469
        %vm477 = vweird.f32 %v470
        %vm478 = vmor %vm476, %vm477
        %v479 = vsel %vm478, %v470, %v475
        %v480 = vmul.f32 %v356, %v479
        %v481 = vmul.f32 %v357, %v479
        %v482 = vmul.f32 %v358, %v479
        %v483 = vmul.f32 %v359, %v479
        %v484 = vmul.f32 %v360, %v479
        %v485 = vmul.f32 %v361, %v479
        %v486 = vmul.f32 %v362, %v479
        %v487 = vmul.f32 %v363, %v479
        %v488 = vmul.f32 %v364, %v479
        %v489 = vmul.f32 %v365, %v479
        %v490 = vmul.f32 %v366, %v479
        %v491 = vmul.f32 %v367, %v479
        %v492 = vmul.f32 %v368, %v479
        %v493 = vmul.f32 %v369, %v479
        %v494 = vmul.f32 %v370, %v479
        %v495 = vmul.f32 %v371, %v479
        %v496 = vmul.f32 %v372, %v479
        %v497 = vmul.f32 %v373, %v479
        %v498 = vmul.f32 %v374, %v479
        %v499 = vmul.f32 %v375, %v479
        %v500 = vmul.f32 %v376, %v479
        %v501 = vmul.f32 %v377, %v479
        %v502 = vmul.f32 %v378, %v479
        %v503 = vmul.f32 %v379, %v479
        %v504 = vmul.f32 %v380, %v479
        %v505 = vld [vmem:[#allocation2] sm:$0x1]
        %v506 = vld [vmem:[%s1] sm:$0xff]
        %v507 = vld [vmem:[%s1 + $0x8] sm:$0xff]
        %v508 = vld [vmem:[%s1 + $0x10] sm:$0x7]
        %v510 = vsel %vm292, %v480, 0
        %v513 = vsel %vm292, %v481, 0
        %v516 = vsel %vm292, %v482, 0
        %v519 = vsel %vm292, %v483, 0
        %v522 = vsel %vm292, %v484, 0
        %v525 = vsel %vm292, %v485, 0
        %v528 = vsel %vm292, %v486, 0
        %v531 = vsel %vm292, %v487, 0
        %v534 = vsel %vm292, %v488, 0
        %v537 = vsel %vm292, %v489, 0
        %v540 = vsel %vm292, %v490, 0
        %v543 = vsel %vm292, %v491, 0
        %v546 = vsel %vm292, %v492, 0
        %v549 = vsel %vm292, %v493, 0
        %v552 = vsel %vm292, %v494, 0
        %v555 = vsel %vm292, %v495, 0
        %v558 = vsel %vm292, %v496, 0
        %v561 = vsel %vm292, %v497, 0
        %v564 = vsel %vm292, %v498, 0
        %v567 = vsel %vm292, %v499, 0
        %v570 = vsel %vm292, %v500, 0
        %v573 = vsel %vm292, %v501, 0
        %v576 = vsel %vm292, %v502, 0
        %v579 = vsel %vm292, %v503, 0
        %v582 = vsel %vm292, %v504, 0
        %vm584 = vcmask 1042432
        %v586 = vsel %vm584, %v508, 0
        %588 = vmatpush.msra.mxu0 0.0
        %589 = vmatpush.msra.mxu0 0.0
        %590 = vmatpush.msra.mxu0 0.0
        %591 = vmatpush.msra.mxu0 0.0
        %592 = vmatpush.msra.mxu0 0.0
        %593 = vmatpush.msra.mxu0 0.0
        %594 = vmatpush.msra.mxu0 0.0
        %595 = vmatpush.msra.mxu0 0.0
        %596 = vmatpush.msra.mxu0 0.0
        %597 = vmatpush.msra.mxu0 0.0
        %598 = vmatpush.msra.mxu0 0.0
        %599 = vmatpush.msra.mxu0 0.0
        %600 = vmatpush.msra.mxu0 0.0
        %601 = vmatpush.msra.mxu0 %v586
        %602 = vmatpush.msra.mxu0 %v507
        %603 = vmatpush.msra.mxu0 %v506
        %604 = vmatmul.f32.gmra.mxu0 %v510
        %v605 = vpop.f32.mrf.mxu0
        %v606 = vadd.f32 0.0, %v605
        %607 = vmatmul.f32.gmra.mxu0 %v513
        %v608 = vpop.f32.mrf.mxu0
        %v609 = vadd.f32 0.0, %v608
        %610 = vmatmul.f32.gmra.mxu0 %v516
        %v611 = vpop.f32.mrf.mxu0
        %v612 = vadd.f32 0.0, %v611
        %613 = vmatmul.f32.gmra.mxu0 %v519
        %v614 = vpop.f32.mrf.mxu0
        %v615 = vadd.f32 0.0, %v614
        %616 = vmatmul.f32.gmra.mxu0 %v522
        %v617 = vpop.f32.mrf.mxu0
        %v618 = vadd.f32 0.0, %v617
        %619 = vmatmul.f32.gmra.mxu0 %v525
        %v620 = vpop.f32.mrf.mxu0
        %v621 = vadd.f32 0.0, %v620
        %622 = vmatmul.f32.gmra.mxu0 %v528
        %v623 = vpop.f32.mrf.mxu0
        %v624 = vadd.f32 0.0, %v623
        %625 = vmatmul.f32.gmra.mxu0 %v531
        %v626 = vpop.f32.mrf.mxu0
        %v627 = vadd.f32 0.0, %v626
        %628 = vmatmul.f32.gmra.mxu0 %v534
        %v629 = vpop.f32.mrf.mxu0
        %v630 = vadd.f32 0.0, %v629
        %631 = vmatmul.f32.gmra.mxu0 %v537
        %v632 = vpop.f32.mrf.mxu0
        %v633 = vadd.f32 0.0, %v632
        %634 = vmatmul.f32.gmra.mxu0 %v540
        %v635 = vpop.f32.mrf.mxu0
        %v636 = vadd.f32 0.0, %v635
        %637 = vmatmul.f32.gmra.mxu0 %v543
        %v638 = vpop.f32.mrf.mxu0
        %v639 = vadd.f32 0.0, %v638
        %640 = vmatmul.f32.gmra.mxu0 %v546
        %v641 = vpop.f32.mrf.mxu0
        %v642 = vadd.f32 0.0, %v641
        %643 = vmatmul.f32.gmra.mxu0 %v549
        %v644 = vpop.f32.mrf.mxu0
        %v645 = vadd.f32 0.0, %v644
        %646 = vmatmul.f32.gmra.mxu0 %v552
        %v647 = vpop.f32.mrf.mxu0
        %v648 = vadd.f32 0.0, %v647
        %649 = vmatmul.f32.gmra.mxu0 %v555
        %v650 = vpop.f32.mrf.mxu0
        %v651 = vadd.f32 0.0, %v650
        %652 = vmatmul.f32.gmra.mxu0 %v558
        %v653 = vpop.f32.mrf.mxu0
        %v654 = vadd.f32 0.0, %v653
        %655 = vmatmul.f32.gmra.mxu0 %v561
        %v656 = vpop.f32.mrf.mxu0
        %v657 = vadd.f32 0.0, %v656
        %658 = vmatmul.f32.gmra.mxu0 %v564
        %v659 = vpop.f32.mrf.mxu0
        %v660 = vadd.f32 0.0, %v659
        %661 = vmatmul.f32.gmra.mxu0 %v567
        %v662 = vpop.f32.mrf.mxu0
        %v663 = vadd.f32 0.0, %v662
        %664 = vmatmul.f32.gmra.mxu0 %v570
        %v665 = vpop.f32.mrf.mxu0
        %v666 = vadd.f32 0.0, %v665
        %667 = vmatmul.f32.gmra.mxu0 %v573
        %v668 = vpop.f32.mrf.mxu0
        %v669 = vadd.f32 0.0, %v668
        %670 = vmatmul.f32.gmra.mxu0 %v576
        %v671 = vpop.f32.mrf.mxu0
        %v672 = vadd.f32 0.0, %v671
        %673 = vmatmul.f32.gmra.mxu0 %v579
        %v674 = vpop.f32.mrf.mxu0
        %v675 = vadd.f32 0.0, %v674
        %676 = vmatmul.f32.gmra.mxu0 %v582
        %v677 = vpop.f32.mrf.mxu0
        %v678 = vadd.f32 0.0, %v677
        %679 = vdwg.mxu0
        %v681 = vperm.slane %v505, 0
        %v683 = vadd.f32 %v681, %v606
        %v684 = vadd.f32 %v681, %v609
        %v685 = vadd.f32 %v681, %v612
        %v686 = vadd.f32 %v681, %v615
        %v687 = vadd.f32 %v681, %v618
        %v688 = vadd.f32 %v681, %v621
        %v689 = vadd.f32 %v681, %v624
        %v690 = vadd.f32 %v681, %v627
        %v691 = vadd.f32 %v681, %v630
        %v692 = vadd.f32 %v681, %v633
        %v693 = vadd.f32 %v681, %v636
        %v694 = vadd.f32 %v681, %v639
        %v695 = vadd.f32 %v681, %v642
        %v696 = vadd.f32 %v681, %v645
        %v697 = vadd.f32 %v681, %v648
        %v698 = vadd.f32 %v681, %v651
        %v699 = vadd.f32 %v681, %v654
        %v700 = vadd.f32 %v681, %v657
        %v701 = vadd.f32 %v681, %v660
        %v702 = vadd.f32 %v681, %v663
        %v703 = vadd.f32 %v681, %v666
        %v704 = vadd.f32 %v681, %v669
        %v705 = vadd.f32 %v681, %v672
        %v706 = vadd.f32 %v681, %v675
        %v707 = vadd.f32 %v681, %v678
        %s708 = scalar_lea.vmem %s1, 24
        %v709 = vld [vmem:[%s708] sm:$0xff]
        %v710 = vld [vmem:[%s708 + $0x8] sm:$0xff]
        %v711 = vld [vmem:[%s708 + $0x10] sm:$0x7]
        %vm712 = vcmask 1046528
        %v713 = vrot.slane %v480, 1
        %v714 = vrot.slane %v481, 1
        %v715 = vsel %vm712, %v713, %v714
        %v716 = vrot.slane %v482, 1
        %v717 = vsel %vm712, %v714, %v716
        %v718 = vrot.slane %v483, 1
        %v719 = vsel %vm712, %v716, %v718
        %v720 = vrot.slane %v484, 1
        %v721 = vsel %vm712, %v718, %v720
        %v722 = vrot.slane %v485, 1
        %v723 = vsel %vm712, %v720, %v722
        %v724 = vrot.slane %v486, 1
        %v725 = vsel %vm712, %v722, %v724
        %v726 = vrot.slane %v487, 1
        %v727 = vsel %vm712, %v724, %v726
        %v728 = vrot.slane %v488, 1
        %v729 = vsel %vm712, %v726, %v728
        %v730 = vrot.slane %v489, 1
        %v731 = vsel %vm712, %v728, %v730
        %v732 = vrot.slane %v490, 1
        %v733 = vsel %vm712, %v730, %v732
        %v734 = vrot.slane %v491, 1
        %v735 = vsel %vm712, %v732, %v734
        %v736 = vrot.slane %v492, 1
        %v737 = vsel %vm712, %v734, %v736
        %v738 = vrot.slane %v493, 1
        %v739 = vsel %vm712, %v736, %v738
        %v740 = vrot.slane %v494, 1
        %v741 = vsel %vm712, %v738, %v740
        %v742 = vrot.slane %v495, 1
        %v743 = vsel %vm712, %v740, %v742
        %v744 = vrot.slane %v496, 1
        %v745 = vsel %vm712, %v742, %v744
        %v746 = vrot.slane %v497, 1
        %v747 = vsel %vm712, %v744, %v746
        %v748 = vrot.slane %v498, 1
        %v749 = vsel %vm712, %v746, %v748
        %v750 = vrot.slane %v499, 1
        %v751 = vsel %vm712, %v748, %v750
        %v752 = vrot.slane %v500, 1
        %v753 = vsel %vm712, %v750, %v752
        %v754 = vrot.slane %v501, 1
        %v755 = vsel %vm712, %v752, %v754
        %v756 = vrot.slane %v502, 1
        %v757 = vsel %vm712, %v754, %v756
        %v758 = vrot.slane %v503, 1
        %v759 = vsel %vm712, %v756, %v758
        %v760 = vrot.slane %v504, 1
        %v761 = vsel %vm712, %v758, %v760
        %v762 = vsel %vm292, %v715, 0
        %v764 = vsel %vm292, %v717, 0
        %v766 = vsel %vm292, %v719, 0
        %v768 = vsel %vm292, %v721, 0
        %v770 = vsel %vm292, %v723, 0
        %v772 = vsel %vm292, %v725, 0
        %v774 = vsel %vm292, %v727, 0
        %v776 = vsel %vm292, %v729, 0
        %v778 = vsel %vm292, %v731, 0
        %v780 = vsel %vm292, %v733, 0
        %v782 = vsel %vm292, %v735, 0
        %v784 = vsel %vm292, %v737, 0
        %v786 = vsel %vm292, %v739, 0
        %v788 = vsel %vm292, %v741, 0
        %v790 = vsel %vm292, %v743, 0
        %v792 = vsel %vm292, %v745, 0
        %v794 = vsel %vm292, %v747, 0
        %v796 = vsel %vm292, %v749, 0
        %v798 = vsel %vm292, %v751, 0
        %v800 = vsel %vm292, %v753, 0
        %v802 = vsel %vm292, %v755, 0
        %v804 = vsel %vm292, %v757, 0
        %v806 = vsel %vm292, %v759, 0
        %v808 = vsel %vm292, %v761, 0
        %v810 = vsel %vm292, %v760, 0
        %v813 = vsel %vm584, %v711, 0
        %815 = vmatpush.msra.mxu0 0.0
        %816 = vmatpush.msra.mxu0 0.0
        %817 = vmatpush.msra.mxu0 0.0
        %818 = vmatpush.msra.mxu0 0.0
        %819 = vmatpush.msra.mxu0 0.0
        %820 = vmatpush.msra.mxu0 0.0
        %821 = vmatpush.msra.mxu0 0.0
        %822 = vmatpush.msra.mxu0 0.0
        %823 = vmatpush.msra.mxu0 0.0
        %824 = vmatpush.msra.mxu0 0.0
        %825 = vmatpush.msra.mxu0 0.0
        %826 = vmatpush.msra.mxu0 0.0
        %827 = vmatpush.msra.mxu0 0.0
        %828 = vmatpush.msra.mxu0 %v813
        %829 = vmatpush.msra.mxu0 %v710
        %830 = vmatpush.msra.mxu0 %v709
        %831 = vmatmul.f32.gmra.mxu0 %v762
        %v832 = vpop.f32.mrf.mxu0
        %v833 = vadd.f32 0.0, %v832
        %834 = vmatmul.f32.gmra.mxu0 %v764
        %v835 = vpop.f32.mrf.mxu0
        %v836 = vadd.f32 0.0, %v835
        %837 = vmatmul.f32.gmra.mxu0 %v766
        %v838 = vpop.f32.mrf.mxu0
        %v839 = vadd.f32 0.0, %v838
        %840 = vmatmul.f32.gmra.mxu0 %v768
        %v841 = vpop.f32.mrf.mxu0
        %v842 = vadd.f32 0.0, %v841
        %843 = vmatmul.f32.gmra.mxu0 %v770
        %v844 = vpop.f32.mrf.mxu0
        %v845 = vadd.f32 0.0, %v844
        %846 = vmatmul.f32.gmra.mxu0 %v772
        %v847 = vpop.f32.mrf.mxu0
        %v848 = vadd.f32 0.0, %v847
        %849 = vmatmul.f32.gmra.mxu0 %v774
        %v850 = vpop.f32.mrf.mxu0
        %v851 = vadd.f32 0.0, %v850
        %852 = vmatmul.f32.gmra.mxu0 %v776
        %v853 = vpop.f32.mrf.mxu0
        %v854 = vadd.f32 0.0, %v853
        %855 = vmatmul.f32.gmra.mxu0 %v778
        %v856 = vpop.f32.mrf.mxu0
        %v857 = vadd.f32 0.0, %v856
        %858 = vmatmul.f32.gmra.mxu0 %v780
        %v859 = vpop.f32.mrf.mxu0
        %v860 = vadd.f32 0.0, %v859
        %861 = vmatmul.f32.gmra.mxu0 %v782
        %v862 = vpop.f32.mrf.mxu0
        %v863 = vadd.f32 0.0, %v862
        %864 = vmatmul.f32.gmra.mxu0 %v784
        %v865 = vpop.f32.mrf.mxu0
        %v866 = vadd.f32 0.0, %v865
        %867 = vmatmul.f32.gmra.mxu0 %v786
        %v868 = vpop.f32.mrf.mxu0
        %v869 = vadd.f32 0.0, %v868
        %870 = vmatmul.f32.gmra.mxu0 %v788
        %v871 = vpop.f32.mrf.mxu0
        %v872 = vadd.f32 0.0, %v871
        %873 = vmatmul.f32.gmra.mxu0 %v790
        %v874 = vpop.f32.mrf.mxu0
        %v875 = vadd.f32 0.0, %v874
        %876 = vmatmul.f32.gmra.mxu0 %v792
        %v877 = vpop.f32.mrf.mxu0
        %v878 = vadd.f32 0.0, %v877
        %879 = vmatmul.f32.gmra.mxu0 %v794
        %v880 = vpop.f32.mrf.mxu0
        %v881 = vadd.f32 0.0, %v880
        %882 = vmatmul.f32.gmra.mxu0 %v796
        %v883 = vpop.f32.mrf.mxu0
        %v884 = vadd.f32 0.0, %v883
        %885 = vmatmul.f32.gmra.mxu0 %v798
        %v886 = vpop.f32.mrf.mxu0
        %v887 = vadd.f32 0.0, %v886
        %888 = vmatmul.f32.gmra.mxu0 %v800
        %v889 = vpop.f32.mrf.mxu0
        %v890 = vadd.f32 0.0, %v889
        %891 = vmatmul.f32.gmra.mxu0 %v802
        %v892 = vpop.f32.mrf.mxu0
        %v893 = vadd.f32 0.0, %v892
        %894 = vmatmul.f32.gmra.mxu0 %v804
        %v895 = vpop.f32.mrf.mxu0
        %v896 = vadd.f32 0.0, %v895
        %897 = vmatmul.f32.gmra.mxu0 %v806
        %v898 = vpop.f32.mrf.mxu0
        %v899 = vadd.f32 0.0, %v898
        %900 = vmatmul.f32.gmra.mxu0 %v808
        %v901 = vpop.f32.mrf.mxu0
        %v902 = vadd.f32 0.0, %v901
        %903 = vmatmul.f32.gmra.mxu0 %v810
        %v904 = vpop.f32.mrf.mxu0
        %v905 = vadd.f32 0.0, %v904
        %906 = vdwg.mxu0
        %v907 = vadd.f32 %v683, %v833
        %v908 = vadd.f32 %v684, %v836
        %v909 = vadd.f32 %v685, %v839
        %v910 = vadd.f32 %v686, %v842
        %v911 = vadd.f32 %v687, %v845
        %v912 = vadd.f32 %v688, %v848
        %v913 = vadd.f32 %v689, %v851
        %v914 = vadd.f32 %v690, %v854
        %v915 = vadd.f32 %v691, %v857
        %v916 = vadd.f32 %v692, %v860
        %v917 = vadd.f32 %v693, %v863
        %v918 = vadd.f32 %v694, %v866
        %v919 = vadd.f32 %v695, %v869
        %v920 = vadd.f32 %v696, %v872
        %v921 = vadd.f32 %v697, %v875
        %v922 = vadd.f32 %v698, %v878
        %v923 = vadd.f32 %v699, %v881
        %v924 = vadd.f32 %v700, %v884
        %v925 = vadd.f32 %v701, %v887
        %v926 = vadd.f32 %v702, %v890
        %v927 = vadd.f32 %v703, %v893
        %v928 = vadd.f32 %v704, %v896
        %v929 = vadd.f32 %v705, %v899
        %v930 = vadd.f32 %v706, %v902
        %v931 = vadd.f32 %v707, %v905
        %s932 = scalar_lea.vmem %s1, 48
        %v933 = vld [vmem:[%s932] sm:$0xff]
        %v934 = vld [vmem:[%s932 + $0x8] sm:$0xff]
        %v935 = vld [vmem:[%s932 + $0x10] sm:$0x7]
        %vm936 = vcmask 1045504
        %v937 = vrot.slane %v480, 2
        %v938 = vrot.slane %v481, 2
        %v939 = vsel %vm936, %v937, %v938
        %v940 = vrot.slane %v482, 2
        %v941 = vsel %vm936, %v938, %v940
        %v942 = vrot.slane %v483, 2
        %v943 = vsel %vm936, %v940, %v942
        %v944 = vrot.slane %v484, 2
        %v945 = vsel %vm936, %v942, %v944
        %v946 = vrot.slane %v485, 2
        %v947 = vsel %vm936, %v944, %v946
        %v948 = vrot.slane %v486, 2
        %v949 = vsel %vm936, %v946, %v948
        %v950 = vrot.slane %v487, 2
        %v951 = vsel %vm936, %v948, %v950
        %v952 = vrot.slane %v488, 2
        %v953 = vsel %vm936, %v950, %v952
        %v954 = vrot.slane %v489, 2
        %v955 = vsel %vm936, %v952, %v954
        %v956 = vrot.slane %v490, 2
        %v957 = vsel %vm936, %v954, %v956
        %v958 = vrot.slane %v491, 2
        %v959 = vsel %vm936, %v956, %v958
        %v960 = vrot.slane %v492, 2
        %v961 = vsel %vm936, %v958, %v960
        %v962 = vrot.slane %v493, 2
        %v963 = vsel %vm936, %v960, %v962
        %v964 = vrot.slane %v494, 2
        %v965 = vsel %vm936, %v962, %v964
        %v966 = vrot.slane %v495, 2
        %v967 = vsel %vm936, %v964, %v966
        %v968 = vrot.slane %v496, 2
        %v969 = vsel %vm936, %v966, %v968
        %v970 = vrot.slane %v497, 2
        %v971 = vsel %vm936, %v968, %v970
        %v972 = vrot.slane %v498, 2
        %v973 = vsel %vm936, %v970, %v972
        %v974 = vrot.slane %v499, 2
        %v975 = vsel %vm936, %v972, %v974
        %v976 = vrot.slane %v500, 2
        %v977 = vsel %vm936, %v974, %v976
        %v978 = vrot.slane %v501, 2
        %v979 = vsel %vm936, %v976, %v978
        %v980 = vrot.slane %v502, 2
        %v981 = vsel %vm936, %v978, %v980
        %v982 = vrot.slane %v503, 2
        %v983 = vsel %vm936, %v980, %v982
        %v984 = vrot.slane %v504, 2
        %v985 = vsel %vm936, %v982, %v984
        %v986 = vsel %vm292, %v939, 0
        %v988 = vsel %vm292, %v941, 0
        %v990 = vsel %vm292, %v943, 0
        %v992 = vsel %vm292, %v945, 0
        %v994 = vsel %vm292, %v947, 0
        %v996 = vsel %vm292, %v949, 0
        %v998 = vsel %vm292, %v951, 0
        %v1000 = vsel %vm292, %v953, 0
        %v1002 = vsel %vm292, %v955, 0
        %v1004 = vsel %vm292, %v957, 0
        %v1006 = vsel %vm292, %v959, 0
        %v1008 = vsel %vm292, %v961, 0
        %v1010 = vsel %vm292, %v963, 0
        %v1012 = vsel %vm292, %v965, 0
        %v1014 = vsel %vm292, %v967, 0
        %v1016 = vsel %vm292, %v969, 0
        %v1018 = vsel %vm292, %v971, 0
        %v1020 = vsel %vm292, %v973, 0
        %v1022 = vsel %vm292, %v975, 0
        %v1024 = vsel %vm292, %v977, 0
        %v1026 = vsel %vm292, %v979, 0
        %v1028 = vsel %vm292, %v981, 0
        %v1030 = vsel %vm292, %v983, 0
        %v1032 = vsel %vm292, %v985, 0
        %v1034 = vsel %vm292, %v984, 0
        %v1037 = vsel %vm584, %v935, 0
        %1039 = vmatpush.msra.mxu0 0.0
        %1040 = vmatpush.msra.mxu0 0.0
        %1041 = vmatpush.msra.mxu0 0.0
        %1042 = vmatpush.msra.mxu0 0.0
        %1043 = vmatpush.msra.mxu0 0.0
        %1044 = vmatpush.msra.mxu0 0.0
        %1045 = vmatpush.msra.mxu0 0.0
        %1046 = vmatpush.msra.mxu0 0.0
        %1047 = vmatpush.msra.mxu0 0.0
        %1048 = vmatpush.msra.mxu0 0.0
        %1049 = vmatpush.msra.mxu0 0.0
        %1050 = vmatpush.msra.mxu0 0.0
        %1051 = vmatpush.msra.mxu0 0.0
        %1052 = vmatpush.msra.mxu0 %v1037
        %1053 = vmatpush.msra.mxu0 %v934
        %1054 = vmatpush.msra.mxu0 %v933
        %1055 = vmatmul.f32.gmra.mxu0 %v986
        %v1056 = vpop.f32.mrf.mxu0
        %v1057 = vadd.f32 0.0, %v1056
        %1058 = vmatmul.f32.gmra.mxu0 %v988
        %v1059 = vpop.f32.mrf.mxu0
        %v1060 = vadd.f32 0.0, %v1059
        %1061 = vmatmul.f32.gmra.mxu0 %v990
        %v1062 = vpop.f32.mrf.mxu0
        %v1063 = vadd.f32 0.0, %v1062
        %1064 = vmatmul.f32.gmra.mxu0 %v992
        %v1065 = vpop.f32.mrf.mxu0
        %v1066 = vadd.f32 0.0, %v1065
        %1067 = vmatmul.f32.gmra.mxu0 %v994
        %v1068 = vpop.f32.mrf.mxu0
        %v1069 = vadd.f32 0.0, %v1068
        %1070 = vmatmul.f32.gmra.mxu0 %v996
        %v1071 = vpop.f32.mrf.mxu0
        %v1072 = vadd.f32 0.0, %v1071
        %1073 = vmatmul.f32.gmra.mxu0 %v998
        %v1074 = vpop.f32.mrf.mxu0
        %v1075 = vadd.f32 0.0, %v1074
        %1076 = vmatmul.f32.gmra.mxu0 %v1000
        %v1077 = vpop.f32.mrf.mxu0
        %v1078 = vadd.f32 0.0, %v1077
        %1079 = vmatmul.f32.gmra.mxu0 %v1002
        %v1080 = vpop.f32.mrf.mxu0
        %v1081 = vadd.f32 0.0, %v1080
        %1082 = vmatmul.f32.gmra.mxu0 %v1004
        %v1083 = vpop.f32.mrf.mxu0
        %v1084 = vadd.f32 0.0, %v1083
        %1085 = vmatmul.f32.gmra.mxu0 %v1006
        %v1086 = vpop.f32.mrf.mxu0
        %v1087 = vadd.f32 0.0, %v1086
        %1088 = vmatmul.f32.gmra.mxu0 %v1008
        %v1089 = vpop.f32.mrf.mxu0
        %v1090 = vadd.f32 0.0, %v1089
        %1091 = vmatmul.f32.gmra.mxu0 %v1010
        %v1092 = vpop.f32.mrf.mxu0
        %v1093 = vadd.f32 0.0, %v1092
        %1094 = vmatmul.f32.gmra.mxu0 %v1012
        %v1095 = vpop.f32.mrf.mxu0
        %v1096 = vadd.f32 0.0, %v1095
        %1097 = vmatmul.f32.gmra.mxu0 %v1014
        %v1098 = vpop.f32.mrf.mxu0
        %v1099 = vadd.f32 0.0, %v1098
        %1100 = vmatmul.f32.gmra.mxu0 %v1016
        %v1101 = vpop.f32.mrf.mxu0
        %v1102 = vadd.f32 0.0, %v1101
        %1103 = vmatmul.f32.gmra.mxu0 %v1018
        %v1104 = vpop.f32.mrf.mxu0
        %v1105 = vadd.f32 0.0, %v1104
        %1106 = vmatmul.f32.gmra.mxu0 %v1020
        %v1107 = vpop.f32.mrf.mxu0
        %v1108 = vadd.f32 0.0, %v1107
        %1109 = vmatmul.f32.gmra.mxu0 %v1022
        %v1110 = vpop.f32.mrf.mxu0
        %v1111 = vadd.f32 0.0, %v1110
        %1112 = vmatmul.f32.gmra.mxu0 %v1024
        %v1113 = vpop.f32.mrf.mxu0
        %v1114 = vadd.f32 0.0, %v1113
        %1115 = vmatmul.f32.gmra.mxu0 %v1026
        %v1116 = vpop.f32.mrf.mxu0
        %v1117 = vadd.f32 0.0, %v1116
        %1118 = vmatmul.f32.gmra.mxu0 %v1028
        %v1119 = vpop.f32.mrf.mxu0
        %v1120 = vadd.f32 0.0, %v1119
        %1121 = vmatmul.f32.gmra.mxu0 %v1030
        %v1122 = vpop.f32.mrf.mxu0
        %v1123 = vadd.f32 0.0, %v1122
        %1124 = vmatmul.f32.gmra.mxu0 %v1032
        %v1125 = vpop.f32.mrf.mxu0
        %v1126 = vadd.f32 0.0, %v1125
        %1127 = vmatmul.f32.gmra.mxu0 %v1034
        %v1128 = vpop.f32.mrf.mxu0
        %v1129 = vadd.f32 0.0, %v1128
        %1130 = vdwg.mxu0
        %v1131 = vadd.f32 %v907, %v1057
        %v1132 = vadd.f32 %v908, %v1060
        %v1133 = vadd.f32 %v909, %v1063
        %v1134 = vadd.f32 %v910, %v1066
        %v1135 = vadd.f32 %v911, %v1069
        %v1136 = vadd.f32 %v912, %v1072
        %v1137 = vadd.f32 %v913, %v1075
        %v1138 = vadd.f32 %v914, %v1078
        %v1139 = vadd.f32 %v915, %v1081
        %v1140 = vadd.f32 %v916, %v1084
        %v1141 = vadd.f32 %v917, %v1087
        %v1142 = vadd.f32 %v918, %v1090
        %v1143 = vadd.f32 %v919, %v1093
        %v1144 = vadd.f32 %v920, %v1096
        %v1145 = vadd.f32 %v921, %v1099
        %v1146 = vadd.f32 %v922, %v1102
        %v1147 = vadd.f32 %v923, %v1105
        %v1148 = vadd.f32 %v924, %v1108
        %v1149 = vadd.f32 %v925, %v1111
        %v1150 = vadd.f32 %v926, %v1114
        %v1151 = vadd.f32 %v927, %v1117
        %v1152 = vadd.f32 %v928, %v1120
        %v1153 = vadd.f32 %v929, %v1123
        %v1154 = vadd.f32 %v930, %v1126
        %v1155 = vadd.f32 %v931, %v1129
        %s1156 = scalar_lea.vmem %s1, 72
        %v1157 = vld [vmem:[%s1156] sm:$0xff]
        %v1158 = vld [vmem:[%s1156 + $0x8] sm:$0xff]
        %v1159 = vld [vmem:[%s1156 + $0x10] sm:$0x7]
        %vm1160 = vcmask 1044480
        %v1161 = vrot.slane %v480, 3
        %v1162 = vrot.slane %v481, 3
        %v1163 = vsel %vm1160, %v1161, %v1162
        %v1164 = vrot.slane %v482, 3
        %v1165 = vsel %vm1160, %v1162, %v1164
        %v1166 = vrot.slane %v483, 3
        %v1167 = vsel %vm1160, %v1164, %v1166
        %v1168 = vrot.slane %v484, 3
        %v1169 = vsel %vm1160, %v1166, %v1168
        %v1170 = vrot.slane %v485, 3
        %v1171 = vsel %vm1160, %v1168, %v1170
        %v1172 = vrot.slane %v486, 3
        %v1173 = vsel %vm1160, %v1170, %v1172
        %v1174 = vrot.slane %v487, 3
        %v1175 = vsel %vm1160, %v1172, %v1174
        %v1176 = vrot.slane %v488, 3
        %v1177 = vsel %vm1160, %v1174, %v1176
        %v1178 = vrot.slane %v489, 3
        %v1179 = vsel %vm1160, %v1176, %v1178
        %v1180 = vrot.slane %v490, 3
        %v1181 = vsel %vm1160, %v1178, %v1180
        %v1182 = vrot.slane %v491, 3
        %v1183 = vsel %vm1160, %v1180, %v1182
        %v1184 = vrot.slane %v492, 3
        %v1185 = vsel %vm1160, %v1182, %v1184
        %v1186 = vrot.slane %v493, 3
        %v1187 = vsel %vm1160, %v1184, %v1186
        %v1188 = vrot.slane %v494, 3
        %v1189 = vsel %vm1160, %v1186, %v1188
        %v1190 = vrot.slane %v495, 3
        %v1191 = vsel %vm1160, %v1188, %v1190
        %v1192 = vrot.slane %v496, 3
        %v1193 = vsel %vm1160, %v1190, %v1192
        %v1194 = vrot.slane %v497, 3
        %v1195 = vsel %vm1160, %v1192, %v1194
        %v1196 = vrot.slane %v498, 3
        %v1197 = vsel %vm1160, %v1194, %v1196
        %v1198 = vrot.slane %v499, 3
        %v1199 = vsel %vm1160, %v1196, %v1198
        %v1200 = vrot.slane %v500, 3
        %v1201 = vsel %vm1160, %v1198, %v1200
        %v1202 = vrot.slane %v501, 3
        %v1203 = vsel %vm1160, %v1200, %v1202
        %v1204 = vrot.slane %v502, 3
        %v1205 = vsel %vm1160, %v1202, %v1204
        %v1206 = vrot.slane %v503, 3
        %v1207 = vsel %vm1160, %v1204, %v1206
        %v1208 = vrot.slane %v504, 3
        %v1209 = vsel %vm1160, %v1206, %v1208
        %v1210 = vsel %vm292, %v1163, 0
        %v1212 = vsel %vm292, %v1165, 0
        %v1214 = vsel %vm292, %v1167, 0
        %v1216 = vsel %vm292, %v1169, 0
        %v1218 = vsel %vm292, %v1171, 0
        %v1220 = vsel %vm292, %v1173, 0
        %v1222 = vsel %vm292, %v1175, 0
        %v1224 = vsel %vm292, %v1177, 0
        %v1226 = vsel %vm292, %v1179, 0
        %v1228 = vsel %vm292, %v1181, 0
        %v1230 = vsel %vm292, %v1183, 0
        %v1232 = vsel %vm292, %v1185, 0
        %v1234 = vsel %vm292, %v1187, 0
        %v1236 = vsel %vm292, %v1189, 0
        %v1238 = vsel %vm292, %v1191, 0
        %v1240 = vsel %vm292, %v1193, 0
        %v1242 = vsel %vm292, %v1195, 0
        %v1244 = vsel %vm292, %v1197, 0
        %v1246 = vsel %vm292, %v1199, 0
        %v1248 = vsel %vm292, %v1201, 0
        %v1250 = vsel %vm292, %v1203, 0
        %v1252 = vsel %vm292, %v1205, 0
        %v1254 = vsel %vm292, %v1207, 0
        %v1256 = vsel %vm292, %v1209, 0
        %v1258 = vsel %vm292, %v1208, 0
        %v1261 = vsel %vm584, %v1159, 0
        %1263 = vmatpush.msra.mxu0 0.0
        %1264 = vmatpush.msra.mxu0 0.0
        %1265 = vmatpush.msra.mxu0 0.0
        %1266 = vmatpush.msra.mxu0 0.0
        %1267 = vmatpush.msra.mxu0 0.0
        %1268 = vmatpush.msra.mxu0 0.0
        %1269 = vmatpush.msra.mxu0 0.0
        %1270 = vmatpush.msra.mxu0 0.0
        %1271 = vmatpush.msra.mxu0 0.0
        %1272 = vmatpush.msra.mxu0 0.0
        %1273 = vmatpush.msra.mxu0 0.0
        %1274 = vmatpush.msra.mxu0 0.0
        %1275 = vmatpush.msra.mxu0 0.0
        %1276 = vmatpush.msra.mxu0 %v1261
        %1277 = vmatpush.msra.mxu0 %v1158
        %1278 = vmatpush.msra.mxu0 %v1157
        %1279 = vmatmul.f32.gmra.mxu0 %v1210
        %v1280 = vpop.f32.mrf.mxu0
        %v1281 = vadd.f32 0.0, %v1280
        %1282 = vmatmul.f32.gmra.mxu0 %v1212
        %v1283 = vpop.f32.mrf.mxu0
        %v1284 = vadd.f32 0.0, %v1283
        %1285 = vmatmul.f32.gmra.mxu0 %v1214
        %v1286 = vpop.f32.mrf.mxu0
        %v1287 = vadd.f32 0.0, %v1286
        %1288 = vmatmul.f32.gmra.mxu0 %v1216
        %v1289 = vpop.f32.mrf.mxu0
        %v1290 = vadd.f32 0.0, %v1289
        %1291 = vmatmul.f32.gmra.mxu0 %v1218
        %v1292 = vpop.f32.mrf.mxu0
        %v1293 = vadd.f32 0.0, %v1292
        %1294 = vmatmul.f32.gmra.mxu0 %v1220
        %v1295 = vpop.f32.mrf.mxu0
        %v1296 = vadd.f32 0.0, %v1295
        %1297 = vmatmul.f32.gmra.mxu0 %v1222
        %v1298 = vpop.f32.mrf.mxu0
        %v1299 = vadd.f32 0.0, %v1298
        %1300 = vmatmul.f32.gmra.mxu0 %v1224
        %v1301 = vpop.f32.mrf.mxu0
        %v1302 = vadd.f32 0.0, %v1301
        %1303 = vmatmul.f32.gmra.mxu0 %v1226
        %v1304 = vpop.f32.mrf.mxu0
        %v1305 = vadd.f32 0.0, %v1304
        %1306 = vmatmul.f32.gmra.mxu0 %v1228
        %v1307 = vpop.f32.mrf.mxu0
        %v1308 = vadd.f32 0.0, %v1307
        %1309 = vmatmul.f32.gmra.mxu0 %v1230
        %v1310 = vpop.f32.mrf.mxu0
        %v1311 = vadd.f32 0.0, %v1310
        %1312 = vmatmul.f32.gmra.mxu0 %v1232
        %v1313 = vpop.f32.mrf.mxu0
        %v1314 = vadd.f32 0.0, %v1313
        %1315 = vmatmul.f32.gmra.mxu0 %v1234
        %v1316 = vpop.f32.mrf.mxu0
        %v1317 = vadd.f32 0.0, %v1316
        %1318 = vmatmul.f32.gmra.mxu0 %v1236
        %v1319 = vpop.f32.mrf.mxu0
        %v1320 = vadd.f32 0.0, %v1319
        %1321 = vmatmul.f32.gmra.mxu0 %v1238
        %v1322 = vpop.f32.mrf.mxu0
        %v1323 = vadd.f32 0.0, %v1322
        %1324 = vmatmul.f32.gmra.mxu0 %v1240
        %v1325 = vpop.f32.mrf.mxu0
        %v1326 = vadd.f32 0.0, %v1325
        %1327 = vmatmul.f32.gmra.mxu0 %v1242
        %v1328 = vpop.f32.mrf.mxu0
        %v1329 = vadd.f32 0.0, %v1328
        %1330 = vmatmul.f32.gmra.mxu0 %v1244
        %v1331 = vpop.f32.mrf.mxu0
        %v1332 = vadd.f32 0.0, %v1331
        %1333 = vmatmul.f32.gmra.mxu0 %v1246
        %v1334 = vpop.f32.mrf.mxu0
        %v1335 = vadd.f32 0.0, %v1334
        %1336 = vmatmul.f32.gmra.mxu0 %v1248
        %v1337 = vpop.f32.mrf.mxu0
        %v1338 = vadd.f32 0.0, %v1337
        %1339 = vmatmul.f32.gmra.mxu0 %v1250
        %v1340 = vpop.f32.mrf.mxu0
        %v1341 = vadd.f32 0.0, %v1340
        %1342 = vmatmul.f32.gmra.mxu0 %v1252
        %v1343 = vpop.f32.mrf.mxu0
        %v1344 = vadd.f32 0.0, %v1343
        %1345 = vmatmul.f32.gmra.mxu0 %v1254
        %v1346 = vpop.f32.mrf.mxu0
        %v1347 = vadd.f32 0.0, %v1346
        %1348 = vmatmul.f32.gmra.mxu0 %v1256
        %v1349 = vpop.f32.mrf.mxu0
        %v1350 = vadd.f32 0.0, %v1349
        %1351 = vmatmul.f32.gmra.mxu0 %v1258
        %v1352 = vpop.f32.mrf.mxu0
        %v1353 = vadd.f32 0.0, %v1352
        %1354 = vdwg.mxu0
        %v1355 = vadd.f32 %v1131, %v1281
        %v1356 = vadd.f32 %v1132, %v1284
        %v1357 = vadd.f32 %v1133, %v1287
        %v1358 = vadd.f32 %v1134, %v1290
        %v1359 = vadd.f32 %v1135, %v1293
        %v1360 = vadd.f32 %v1136, %v1296
        %v1361 = vadd.f32 %v1137, %v1299
        %v1362 = vadd.f32 %v1138, %v1302
        %v1363 = vadd.f32 %v1139, %v1305
        %v1364 = vadd.f32 %v1140, %v1308
        %v1365 = vadd.f32 %v1141, %v1311
        %v1366 = vadd.f32 %v1142, %v1314
        %v1367 = vadd.f32 %v1143, %v1317
        %v1368 = vadd.f32 %v1144, %v1320
        %v1369 = vadd.f32 %v1145, %v1323
        %v1370 = vadd.f32 %v1146, %v1326
        %v1371 = vadd.f32 %v1147, %v1329
        %v1372 = vadd.f32 %v1148, %v1332
        %v1373 = vadd.f32 %v1149, %v1335
        %v1374 = vadd.f32 %v1150, %v1338
        %v1375 = vadd.f32 %v1151, %v1341
        %v1376 = vadd.f32 %v1152, %v1344
        %v1377 = vadd.f32 %v1153, %v1347
        %v1378 = vadd.f32 %v1154, %v1350
        %v1379 = vadd.f32 %v1155, %v1353
        %v1380 = vmul.f32 %v1355, 1.442695
        %v1381 = vpow.pop %v1380
        %v1382 = vmul.f32 %v1356, 1.442695
        %v1383 = vpow.pop %v1382
        %v1384 = vmul.f32 %v1357, 1.442695
        %v1385 = vpow.pop %v1384
        %v1386 = vmul.f32 %v1358, 1.442695
        %v1387 = vpow.pop %v1386
        %v1388 = vmul.f32 %v1359, 1.442695
        %v1389 = vpow.pop %v1388
        %v1390 = vmul.f32 %v1360, 1.442695
        %v1391 = vpow.pop %v1390
        %v1392 = vmul.f32 %v1361, 1.442695
        %v1393 = vpow.pop %v1392
        %v1394 = vmul.f32 %v1362, 1.442695
        %v1395 = vpow.pop %v1394
        %v1396 = vmul.f32 %v1363, 1.442695
        %v1397 = vpow.pop %v1396
        %v1398 = vmul.f32 %v1364, 1.442695
        %v1399 = vpow.pop %v1398
        %v1400 = vmul.f32 %v1365, 1.442695
        %v1401 = vpow.pop %v1400
        %v1402 = vmul.f32 %v1366, 1.442695
        %v1403 = vpow.pop %v1402
        %v1404 = vmul.f32 %v1367, 1.442695
        %v1405 = vpow.pop %v1404
        %v1406 = vmul.f32 %v1368, 1.442695
        %v1407 = vpow.pop %v1406
        %v1408 = vmul.f32 %v1369, 1.442695
        %v1409 = vpow.pop %v1408
        %v1410 = vmul.f32 %v1370, 1.442695
        %v1411 = vpow.pop %v1410
        %v1412 = vmul.f32 %v1371, 1.442695
        %v1413 = vpow.pop %v1412
        %v1414 = vmul.f32 %v1372, 1.442695
        %v1415 = vpow.pop %v1414
        %v1416 = vmul.f32 %v1373, 1.442695
        %v1417 = vpow.pop %v1416
        %v1418 = vmul.f32 %v1374, 1.442695
        %v1419 = vpow.pop %v1418
        %v1420 = vmul.f32 %v1375, 1.442695
        %v1421 = vpow.pop %v1420
        %v1422 = vmul.f32 %v1376, 1.442695
        %v1423 = vpow.pop %v1422
        %v1424 = vmul.f32 %v1377, 1.442695
        %v1425 = vpow.pop %v1424
        %v1426 = vmul.f32 %v1378, 1.442695
        %v1427 = vpow.pop %v1426
        %v1428 = vmul.f32 %v1379, 1.442695
        %v1429 = vpow.pop %v1428
        %v1430 = vadd.f32 %v1381, 1.0
        %v1431 = vadd.f32 %v1383, 1.0
        %v1432 = vadd.f32 %v1385, 1.0
        %v1433 = vadd.f32 %v1387, 1.0
        %v1434 = vadd.f32 %v1389, 1.0
        %v1435 = vadd.f32 %v1391, 1.0
        %v1436 = vadd.f32 %v1393, 1.0
        %v1437 = vadd.f32 %v1395, 1.0
        %v1438 = vadd.f32 %v1397, 1.0
        %v1439 = vadd.f32 %v1399, 1.0
        %v1440 = vadd.f32 %v1401, 1.0
        %v1441 = vadd.f32 %v1403, 1.0
        %v1442 = vadd.f32 %v1405, 1.0
        %v1443 = vadd.f32 %v1407, 1.0
        %v1444 = vadd.f32 %v1409, 1.0
        %v1445 = vadd.f32 %v1411, 1.0
        %v1446 = vadd.f32 %v1413, 1.0
        %v1447 = vadd.f32 %v1415, 1.0
        %v1448 = vadd.f32 %v1417, 1.0
        %v1449 = vadd.f32 %v1419, 1.0
        %v1450 = vadd.f32 %v1421, 1.0
        %v1451 = vadd.f32 %v1423, 1.0
        %v1452 = vadd.f32 %v1425, 1.0
        %v1453 = vadd.f32 %v1427, 1.0
        %v1454 = vadd.f32 %v1429, 1.0
        %v1455 = vmul.f32 %v1430, %v1430
        %v1456 = vmul.f32 %v1431, %v1431
        %v1457 = vmul.f32 %v1432, %v1432
        %v1458 = vmul.f32 %v1433, %v1433
        %v1459 = vmul.f32 %v1434, %v1434
        %v1460 = vmul.f32 %v1435, %v1435
        %v1461 = vmul.f32 %v1436, %v1436
        %v1462 = vmul.f32 %v1437, %v1437
        %v1463 = vmul.f32 %v1438, %v1438
        %v1464 = vmul.f32 %v1439, %v1439
        %v1465 = vmul.f32 %v1440, %v1440
        %v1466 = vmul.f32 %v1441, %v1441
        %v1467 = vmul.f32 %v1442, %v1442
        %v1468 = vmul.f32 %v1443, %v1443
        %v1469 = vmul.f32 %v1444, %v1444
        %v1470 = vmul.f32 %v1445, %v1445
        %v1471 = vmul.f32 %v1446, %v1446
        %v1472 = vmul.f32 %v1447, %v1447
        %v1473 = vmul.f32 %v1448, %v1448
        %v1474 = vmul.f32 %v1449, %v1449
        %v1475 = vmul.f32 %v1450, %v1450
        %v1476 = vmul.f32 %v1451, %v1451
        %v1477 = vmul.f32 %v1452, %v1452
        %v1478 = vmul.f32 %v1453, %v1453
        %v1479 = vmul.f32 %v1454, %v1454
        %vm1480 = vcmp.gt.f32.partialorder %v1355, 20.0
        %vm1481 = vcmp.gt.f32.partialorder %v1356, 20.0
        %vm1482 = vcmp.gt.f32.partialorder %v1357, 20.0
        %vm1483 = vcmp.gt.f32.partialorder %v1358, 20.0
        %vm1484 = vcmp.gt.f32.partialorder %v1359, 20.0
        %vm1485 = vcmp.gt.f32.partialorder %v1360, 20.0
        %vm1486 = vcmp.gt.f32.partialorder %v1361, 20.0
        %vm1487 = vcmp.gt.f32.partialorder %v1362, 20.0
        %vm1488 = vcmp.gt.f32.partialorder %v1363, 20.0
        %vm1489 = vcmp.gt.f32.partialorder %v1364, 20.0
        %vm1490 = vcmp.gt.f32.partialorder %v1365, 20.0
        %vm1491 = vcmp.gt.f32.partialorder %v1366, 20.0
        %vm1492 = vcmp.gt.f32.partialorder %v1367, 20.0
        %vm1493 = vcmp.gt.f32.partialorder %v1368, 20.0
        %vm1494 = vcmp.gt.f32.partialorder %v1369, 20.0
        %vm1495 = vcmp.gt.f32.partialorder %v1370, 20.0
        %vm1496 = vcmp.gt.f32.partialorder %v1371, 20.0
        %vm1497 = vcmp.gt.f32.partialorder %v1372, 20.0
        %vm1498 = vcmp.gt.f32.partialorder %v1373, 20.0
        %vm1499 = vcmp.gt.f32.partialorder %v1374, 20.0
        %vm1500 = vcmp.gt.f32.partialorder %v1375, 20.0
        %vm1501 = vcmp.gt.f32.partialorder %v1376, 20.0
        %vm1502 = vcmp.gt.f32.partialorder %v1377, 20.0
        %vm1503 = vcmp.gt.f32.partialorder %v1378, 20.0
        %vm1504 = vcmp.gt.f32.partialorder %v1379, 20.0
        %v1505 = vsub.f32 %v1455, 1.0
        %v1506 = vsub.f32 %v1456, 1.0
        %v1507 = vsub.f32 %v1457, 1.0
        %v1508 = vsub.f32 %v1458, 1.0
        %v1509 = vsub.f32 %v1459, 1.0
        %v1510 = vsub.f32 %v1460, 1.0
        %v1511 = vsub.f32 %v1461, 1.0
        %v1512 = vsub.f32 %v1462, 1.0
        %v1513 = vsub.f32 %v1463, 1.0
        %v1514 = vsub.f32 %v1464, 1.0
        %v1515 = vsub.f32 %v1465, 1.0
        %v1516 = vsub.f32 %v1466, 1.0
        %v1517 = vsub.f32 %v1467, 1.0
        %v1518 = vsub.f32 %v1468, 1.0
        %v1519 = vsub.f32 %v1469, 1.0
        %v1520 = vsub.f32 %v1470, 1.0
        %v1521 = vsub.f32 %v1471, 1.0
        %v1522 = vsub.f32 %v1472, 1.0
        %v1523 = vsub.f32 %v1473, 1.0
        %v1524 = vsub.f32 %v1474, 1.0
        %v1525 = vsub.f32 %v1475, 1.0
        %v1526 = vsub.f32 %v1476, 1.0
        %v1527 = vsub.f32 %v1477, 1.0
        %v1528 = vsub.f32 %v1478, 1.0
        %v1529 = vsub.f32 %v1479, 1.0
        %v1530 = vadd.f32 %v1455, 1.0
        %v1531 = vadd.f32 %v1456, 1.0
        %v1532 = vadd.f32 %v1457, 1.0
        %v1533 = vadd.f32 %v1458, 1.0
        %v1534 = vadd.f32 %v1459, 1.0
        %v1535 = vadd.f32 %v1460, 1.0
        %v1536 = vadd.f32 %v1461, 1.0
        %v1537 = vadd.f32 %v1462, 1.0
        %v1538 = vadd.f32 %v1463, 1.0
        %v1539 = vadd.f32 %v1464, 1.0
        %v1540 = vadd.f32 %v1465, 1.0
        %v1541 = vadd.f32 %v1466, 1.0
        %v1542 = vadd.f32 %v1467, 1.0
        %v1543 = vadd.f32 %v1468, 1.0
        %v1544 = vadd.f32 %v1469, 1.0
        %v1545 = vadd.f32 %v1470, 1.0
        %v1546 = vadd.f32 %v1471, 1.0
        %v1547 = vadd.f32 %v1472, 1.0
        %v1548 = vadd.f32 %v1473, 1.0
        %v1549 = vadd.f32 %v1474, 1.0
        %v1550 = vadd.f32 %v1475, 1.0
        %v1551 = vadd.f32 %v1476, 1.0
        %v1552 = vadd.f32 %v1477, 1.0
        %v1553 = vadd.f32 %v1478, 1.0
        %v1554 = vadd.f32 %v1479, 1.0
        %v1555 = vrcp.pop %v1530
        %v1556 = vmul.f32 %v1530, %v1555
        %v1557 = vsub.f32 1.0, %v1556
        %v1558 = vmul.f32 %v1555, %v1557
        %v1559 = vadd.f32 %v1555, %v1558
        %vm1560 = vweird.f32 %v1530
        %vm1561 = vweird.f32 %v1555
        %vm1562 = vmor %vm1560, %vm1561
        %v1563 = vsel %vm1562, %v1555, %v1559
        %v1564 = vand.u32 2147483647, %v1530
        %vm1565 = vcmp.eq.f32.partialorder %v1564, 8.507059e+37
        %v1566 = vand.u32 %v1530, 2147483648
        %v1567 = vor.u32 1.1754944e-38, %v1566
        %v1568 = vsel %vm1565, %v1567, %v1563
        %v1569 = vmul.f32 %v1505, %v1568
        %v1570 = vrcp.pop %v1531
        %v1571 = vmul.f32 %v1531, %v1570
        %v1572 = vsub.f32 1.0, %v1571
        %v1573 = vmul.f32 %v1570, %v1572
        %v1574 = vadd.f32 %v1570, %v1573
        %vm1575 = vweird.f32 %v1531
        %vm1576 = vweird.f32 %v1570
        %vm1577 = vmor %vm1575, %vm1576
        %v1578 = vsel %vm1577, %v1570, %v1574
        %v1579 = vand.u32 2147483647, %v1531
        %vm1580 = vcmp.eq.f32.partialorder %v1579, 8.507059e+37
        %v1581 = vand.u32 %v1531, 2147483648
        %v1582 = vor.u32 1.1754944e-38, %v1581
        %v1583 = vsel %vm1580, %v1582, %v1578
        %v1584 = vmul.f32 %v1506, %v1583
        %v1585 = vrcp.pop %v1532
        %v1586 = vmul.f32 %v1532, %v1585
        %v1587 = vsub.f32 1.0, %v1586
        %v1588 = vmul.f32 %v1585, %v1587
        %v1589 = vadd.f32 %v1585, %v1588
        %vm1590 = vweird.f32 %v1532
        %vm1591 = vweird.f32 %v1585
        %vm1592 = vmor %vm1590, %vm1591
        %v1593 = vsel %vm1592, %v1585, %v1589
        %v1594 = vand.u32 2147483647, %v1532
        %vm1595 = vcmp.eq.f32.partialorder %v1594, 8.507059e+37
        %v1596 = vand.u32 %v1532, 2147483648
        %v1597 = vor.u32 1.1754944e-38, %v1596
        %v1598 = vsel %vm1595, %v1597, %v1593
        %v1599 = vmul.f32 %v1507, %v1598
        %v1600 = vrcp.pop %v1533
        %v1601 = vmul.f32 %v1533, %v1600
        %v1602 = vsub.f32 1.0, %v1601
        %v1603 = vmul.f32 %v1600, %v1602
        %v1604 = vadd.f32 %v1600, %v1603
        %vm1605 = vweird.f32 %v1533
        %vm1606 = vweird.f32 %v1600
        %vm1607 = vmor %vm1605, %vm1606
        %v1608 = vsel %vm1607, %v1600, %v1604
        %v1609 = vand.u32 2147483647, %v1533
        %vm1610 = vcmp.eq.f32.partialorder %v1609, 8.507059e+37
        %v1611 = vand.u32 %v1533, 2147483648
        %v1612 = vor.u32 1.1754944e-38, %v1611
        %v1613 = vsel %vm1610, %v1612, %v1608
        %v1614 = vmul.f32 %v1508, %v1613
        %v1615 = vrcp.pop %v1534
        %v1616 = vmul.f32 %v1534, %v1615
        %v1617 = vsub.f32 1.0, %v1616
        %v1618 = vmul.f32 %v1615, %v1617
        %v1619 = vadd.f32 %v1615, %v1618
        %vm1620 = vweird.f32 %v1534
        %vm1621 = vweird.f32 %v1615
        %vm1622 = vmor %vm1620, %vm1621
        %v1623 = vsel %vm1622, %v1615, %v1619
        %v1624 = vand.u32 2147483647, %v1534
        %vm1625 = vcmp.eq.f32.partialorder %v1624, 8.507059e+37
        %v1626 = vand.u32 %v1534, 2147483648
        %v1627 = vor.u32 1.1754944e-38, %v1626
        %v1628 = vsel %vm1625, %v1627, %v1623
        %v1629 = vmul.f32 %v1509, %v1628
        %v1630 = vrcp.pop %v1535
        %v1631 = vmul.f32 %v1535, %v1630
        %v1632 = vsub.f32 1.0, %v1631
        %v1633 = vmul.f32 %v1630, %v1632
        %v1634 = vadd.f32 %v1630, %v1633
        %vm1635 = vweird.f32 %v1535
        %vm1636 = vweird.f32 %v1630
        %vm1637 = vmor %vm1635, %vm1636
        %v1638 = vsel %vm1637, %v1630, %v1634
        %v1639 = vand.u32 2147483647, %v1535
        %vm1640 = vcmp.eq.f32.partialorder %v1639, 8.507059e+37
        %v1641 = vand.u32 %v1535, 2147483648
        %v1642 = vor.u32 1.1754944e-38, %v1641
        %v1643 = vsel %vm1640, %v1642, %v1638
        %v1644 = vmul.f32 %v1510, %v1643
        %v1645 = vrcp.pop %v1536
        %v1646 = vmul.f32 %v1536, %v1645
        %v1647 = vsub.f32 1.0, %v1646
        %v1648 = vmul.f32 %v1645, %v1647
        %v1649 = vadd.f32 %v1645, %v1648
        %vm1650 = vweird.f32 %v1536
        %vm1651 = vweird.f32 %v1645
        %vm1652 = vmor %vm1650, %vm1651
        %v1653 = vsel %vm1652, %v1645, %v1649
        %v1654 = vand.u32 2147483647, %v1536
        %vm1655 = vcmp.eq.f32.partialorder %v1654, 8.507059e+37
        %v1656 = vand.u32 %v1536, 2147483648
        %v1657 = vor.u32 1.1754944e-38, %v1656
        %v1658 = vsel %vm1655, %v1657, %v1653
        %v1659 = vmul.f32 %v1511, %v1658
        %v1660 = vrcp.pop %v1537
        %v1661 = vmul.f32 %v1537, %v1660
        %v1662 = vsub.f32 1.0, %v1661
        %v1663 = vmul.f32 %v1660, %v1662
        %v1664 = vadd.f32 %v1660, %v1663
        %vm1665 = vweird.f32 %v1537
        %vm1666 = vweird.f32 %v1660
        %vm1667 = vmor %vm1665, %vm1666
        %v1668 = vsel %vm1667, %v1660, %v1664
        %v1669 = vand.u32 2147483647, %v1537
        %vm1670 = vcmp.eq.f32.partialorder %v1669, 8.507059e+37
        %v1671 = vand.u32 %v1537, 2147483648
        %v1672 = vor.u32 1.1754944e-38, %v1671
        %v1673 = vsel %vm1670, %v1672, %v1668
        %v1674 = vmul.f32 %v1512, %v1673
        %v1675 = vrcp.pop %v1538
        %v1676 = vmul.f32 %v1538, %v1675
        %v1677 = vsub.f32 1.0, %v1676
        %v1678 = vmul.f32 %v1675, %v1677
        %v1679 = vadd.f32 %v1675, %v1678
        %vm1680 = vweird.f32 %v1538
        %vm1681 = vweird.f32 %v1675
        %vm1682 = vmor %vm1680, %vm1681
        %v1683 = vsel %vm1682, %v1675, %v1679
        %v1684 = vand.u32 2147483647, %v1538
        %vm1685 = vcmp.eq.f32.partialorder %v1684, 8.507059e+37
        %v1686 = vand.u32 %v1538, 2147483648
        %v1687 = vor.u32 1.1754944e-38, %v1686
        %v1688 = vsel %vm1685, %v1687, %v1683
        %v1689 = vmul.f32 %v1513, %v1688
        %v1690 = vrcp.pop %v1539
        %v1691 = vmul.f32 %v1539, %v1690
        %v1692 = vsub.f32 1.0, %v1691
        %v1693 = vmul.f32 %v1690, %v1692
        %v1694 = vadd.f32 %v1690, %v1693
        %vm1695 = vweird.f32 %v1539
        %vm1696 = vweird.f32 %v1690
        %vm1697 = vmor %vm1695, %vm1696
        %v1698 = vsel %vm1697, %v1690, %v1694
        %v1699 = vand.u32 2147483647, %v1539
        %vm1700 = vcmp.eq.f32.partialorder %v1699, 8.507059e+37
        %v1701 = vand.u32 %v1539, 2147483648
        %v1702 = vor.u32 1.1754944e-38, %v1701
        %v1703 = vsel %vm1700, %v1702, %v1698
        %v1704 = vmul.f32 %v1514, %v1703
        %v1705 = vrcp.pop %v1540
        %v1706 = vmul.f32 %v1540, %v1705
        %v1707 = vsub.f32 1.0, %v1706
        %v1708 = vmul.f32 %v1705, %v1707
        %v1709 = vadd.f32 %v1705, %v1708
        %vm1710 = vweird.f32 %v1540
        %vm1711 = vweird.f32 %v1705
        %vm1712 = vmor %vm1710, %vm1711
        %v1713 = vsel %vm1712, %v1705, %v1709
        %v1714 = vand.u32 2147483647, %v1540
        %vm1715 = vcmp.eq.f32.partialorder %v1714, 8.507059e+37
        %v1716 = vand.u32 %v1540, 2147483648
        %v1717 = vor.u32 1.1754944e-38, %v1716
        %v1718 = vsel %vm1715, %v1717, %v1713
        %v1719 = vmul.f32 %v1515, %v1718
        %v1720 = vrcp.pop %v1541
        %v1721 = vmul.f32 %v1541, %v1720
        %v1722 = vsub.f32 1.0, %v1721
        %v1723 = vmul.f32 %v1720, %v1722
        %v1724 = vadd.f32 %v1720, %v1723
        %vm1725 = vweird.f32 %v1541
        %vm1726 = vweird.f32 %v1720
        %vm1727 = vmor %vm1725, %vm1726
        %v1728 = vsel %vm1727, %v1720, %v1724
        %v1729 = vand.u32 2147483647, %v1541
        %vm1730 = vcmp.eq.f32.partialorder %v1729, 8.507059e+37
        %v1731 = vand.u32 %v1541, 2147483648
        %v1732 = vor.u32 1.1754944e-38, %v1731
        %v1733 = vsel %vm1730, %v1732, %v1728
        %v1734 = vmul.f32 %v1516, %v1733
        %v1735 = vrcp.pop %v1542
        %v1736 = vmul.f32 %v1542, %v1735
        %v1737 = vsub.f32 1.0, %v1736
        %v1738 = vmul.f32 %v1735, %v1737
        %v1739 = vadd.f32 %v1735, %v1738
        %vm1740 = vweird.f32 %v1542
        %vm1741 = vweird.f32 %v1735
        %vm1742 = vmor %vm1740, %vm1741
        %v1743 = vsel %vm1742, %v1735, %v1739
        %v1744 = vand.u32 2147483647, %v1542
        %vm1745 = vcmp.eq.f32.partialorder %v1744, 8.507059e+37
        %v1746 = vand.u32 %v1542, 2147483648
        %v1747 = vor.u32 1.1754944e-38, %v1746
        %v1748 = vsel %vm1745, %v1747, %v1743
        %v1749 = vmul.f32 %v1517, %v1748
        %v1750 = vrcp.pop %v1543
        %v1751 = vmul.f32 %v1543, %v1750
        %v1752 = vsub.f32 1.0, %v1751
        %v1753 = vmul.f32 %v1750, %v1752
        %v1754 = vadd.f32 %v1750, %v1753
        %vm1755 = vweird.f32 %v1543
        %vm1756 = vweird.f32 %v1750
        %vm1757 = vmor %vm1755, %vm1756
        %v1758 = vsel %vm1757, %v1750, %v1754
        %v1759 = vand.u32 2147483647, %v1543
        %vm1760 = vcmp.eq.f32.partialorder %v1759, 8.507059e+37
        %v1761 = vand.u32 %v1543, 2147483648
        %v1762 = vor.u32 1.1754944e-38, %v1761
        %v1763 = vsel %vm1760, %v1762, %v1758
        %v1764 = vmul.f32 %v1518, %v1763
        %v1765 = vrcp.pop %v1544
        %v1766 = vmul.f32 %v1544, %v1765
        %v1767 = vsub.f32 1.0, %v1766
        %v1768 = vmul.f32 %v1765, %v1767
        %v1769 = vadd.f32 %v1765, %v1768
        %vm1770 = vweird.f32 %v1544
        %vm1771 = vweird.f32 %v1765
        %vm1772 = vmor %vm1770, %vm1771
        %v1773 = vsel %vm1772, %v1765, %v1769
        %v1774 = vand.u32 2147483647, %v1544
        %vm1775 = vcmp.eq.f32.partialorder %v1774, 8.507059e+37
        %v1776 = vand.u32 %v1544, 2147483648
        %v1777 = vor.u32 1.1754944e-38, %v1776
        %v1778 = vsel %vm1775, %v1777, %v1773
        %v1779 = vmul.f32 %v1519, %v1778
        %v1780 = vrcp.pop %v1545
        %v1781 = vmul.f32 %v1545, %v1780
        %v1782 = vsub.f32 1.0, %v1781
        %v1783 = vmul.f32 %v1780, %v1782
        %v1784 = vadd.f32 %v1780, %v1783
        %vm1785 = vweird.f32 %v1545
        %vm1786 = vweird.f32 %v1780
        %vm1787 = vmor %vm1785, %vm1786
        %v1788 = vsel %vm1787, %v1780, %v1784
        %v1789 = vand.u32 2147483647, %v1545
        %vm1790 = vcmp.eq.f32.partialorder %v1789, 8.507059e+37
        %v1791 = vand.u32 %v1545, 2147483648
        %v1792 = vor.u32 1.1754944e-38, %v1791
        %v1793 = vsel %vm1790, %v1792, %v1788
        %v1794 = vmul.f32 %v1520, %v1793
        %v1795 = vrcp.pop %v1546
        %v1796 = vmul.f32 %v1546, %v1795
        %v1797 = vsub.f32 1.0, %v1796
        %v1798 = vmul.f32 %v1795, %v1797
        %v1799 = vadd.f32 %v1795, %v1798
        %vm1800 = vweird.f32 %v1546
        %vm1801 = vweird.f32 %v1795
        %vm1802 = vmor %vm1800, %vm1801
        %v1803 = vsel %vm1802, %v1795, %v1799
        %v1804 = vand.u32 2147483647, %v1546
        %vm1805 = vcmp.eq.f32.partialorder %v1804, 8.507059e+37
        %v1806 = vand.u32 %v1546, 2147483648
        %v1807 = vor.u32 1.1754944e-38, %v1806
        %v1808 = vsel %vm1805, %v1807, %v1803
        %v1809 = vmul.f32 %v1521, %v1808
        %v1810 = vrcp.pop %v1547
        %v1811 = vmul.f32 %v1547, %v1810
        %v1812 = vsub.f32 1.0, %v1811
        %v1813 = vmul.f32 %v1810, %v1812
        %v1814 = vadd.f32 %v1810, %v1813
        %vm1815 = vweird.f32 %v1547
        %vm1816 = vweird.f32 %v1810
        %vm1817 = vmor %vm1815, %vm1816
        %v1818 = vsel %vm1817, %v1810, %v1814
        %v1819 = vand.u32 2147483647, %v1547
        %vm1820 = vcmp.eq.f32.partialorder %v1819, 8.507059e+37
        %v1821 = vand.u32 %v1547, 2147483648
        %v1822 = vor.u32 1.1754944e-38, %v1821
        %v1823 = vsel %vm1820, %v1822, %v1818
        %v1824 = vmul.f32 %v1522, %v1823
        %v1825 = vrcp.pop %v1548
        %v1826 = vmul.f32 %v1548, %v1825
        %v1827 = vsub.f32 1.0, %v1826
        %v1828 = vmul.f32 %v1825, %v1827
        %v1829 = vadd.f32 %v1825, %v1828
        %vm1830 = vweird.f32 %v1548
        %vm1831 = vweird.f32 %v1825
        %vm1832 = vmor %vm1830, %vm1831
        %v1833 = vsel %vm1832, %v1825, %v1829
        %v1834 = vand.u32 2147483647, %v1548
        %vm1835 = vcmp.eq.f32.partialorder %v1834, 8.507059e+37
        %v1836 = vand.u32 %v1548, 2147483648
        %v1837 = vor.u32 1.1754944e-38, %v1836
        %v1838 = vsel %vm1835, %v1837, %v1833
        %v1839 = vmul.f32 %v1523, %v1838
        %v1840 = vrcp.pop %v1549
        %v1841 = vmul.f32 %v1549, %v1840
        %v1842 = vsub.f32 1.0, %v1841
        %v1843 = vmul.f32 %v1840, %v1842
        %v1844 = vadd.f32 %v1840, %v1843
        %vm1845 = vweird.f32 %v1549
        %vm1846 = vweird.f32 %v1840
        %vm1847 = vmor %vm1845, %vm1846
        %v1848 = vsel %vm1847, %v1840, %v1844
        %v1849 = vand.u32 2147483647, %v1549
        %vm1850 = vcmp.eq.f32.partialorder %v1849, 8.507059e+37
        %v1851 = vand.u32 %v1549, 2147483648
        %v1852 = vor.u32 1.1754944e-38, %v1851
        %v1853 = vsel %vm1850, %v1852, %v1848
        %v1854 = vmul.f32 %v1524, %v1853
        %v1855 = vrcp.pop %v1550
        %v1856 = vmul.f32 %v1550, %v1855
        %v1857 = vsub.f32 1.0, %v1856
        %v1858 = vmul.f32 %v1855, %v1857
        %v1859 = vadd.f32 %v1855, %v1858
        %vm1860 = vweird.f32 %v1550
        %vm1861 = vweird.f32 %v1855
        %vm1862 = vmor %vm1860, %vm1861
        %v1863 = vsel %vm1862, %v1855, %v1859
        %v1864 = vand.u32 2147483647, %v1550
        %vm1865 = vcmp.eq.f32.partialorder %v1864, 8.507059e+37
        %v1866 = vand.u32 %v1550, 2147483648
        %v1867 = vor.u32 1.1754944e-38, %v1866
        %v1868 = vsel %vm1865, %v1867, %v1863
        %v1869 = vmul.f32 %v1525, %v1868
        %v1870 = vrcp.pop %v1551
        %v1871 = vmul.f32 %v1551, %v1870
        %v1872 = vsub.f32 1.0, %v1871
        %v1873 = vmul.f32 %v1870, %v1872
        %v1874 = vadd.f32 %v1870, %v1873
        %vm1875 = vweird.f32 %v1551
        %vm1876 = vweird.f32 %v1870
        %vm1877 = vmor %vm1875, %vm1876
        %v1878 = vsel %vm1877, %v1870, %v1874
        %v1879 = vand.u32 2147483647, %v1551
        %vm1880 = vcmp.eq.f32.partialorder %v1879, 8.507059e+37
        %v1881 = vand.u32 %v1551, 2147483648
        %v1882 = vor.u32 1.1754944e-38, %v1881
        %v1883 = vsel %vm1880, %v1882, %v1878
        %v1884 = vmul.f32 %v1526, %v1883
        %v1885 = vrcp.pop %v1552
        %v1886 = vmul.f32 %v1552, %v1885
        %v1887 = vsub.f32 1.0, %v1886
        %v1888 = vmul.f32 %v1885, %v1887
        %v1889 = vadd.f32 %v1885, %v1888
        %vm1890 = vweird.f32 %v1552
        %vm1891 = vweird.f32 %v1885
        %vm1892 = vmor %vm1890, %vm1891
        %v1893 = vsel %vm1892, %v1885, %v1889
        %v1894 = vand.u32 2147483647, %v1552
        %vm1895 = vcmp.eq.f32.partialorder %v1894, 8.507059e+37
        %v1896 = vand.u32 %v1552, 2147483648
        %v1897 = vor.u32 1.1754944e-38, %v1896
        %v1898 = vsel %vm1895, %v1897, %v1893
        %v1899 = vmul.f32 %v1527, %v1898
        %v1900 = vrcp.pop %v1553
        %v1901 = vmul.f32 %v1553, %v1900
        %v1902 = vsub.f32 1.0, %v1901
        %v1903 = vmul.f32 %v1900, %v1902
        %v1904 = vadd.f32 %v1900, %v1903
        %vm1905 = vweird.f32 %v1553
        %vm1906 = vweird.f32 %v1900
        %vm1907 = vmor %vm1905, %vm1906
        %v1908 = vsel %vm1907, %v1900, %v1904
        %v1909 = vand.u32 2147483647, %v1553
        %vm1910 = vcmp.eq.f32.partialorder %v1909, 8.507059e+37
        %v1911 = vand.u32 %v1553, 2147483648
        %v1912 = vor.u32 1.1754944e-38, %v1911
        %v1913 = vsel %vm1910, %v1912, %v1908
        %v1914 = vmul.f32 %v1528, %v1913
        %v1915 = vrcp.pop %v1554
        %v1916 = vmul.f32 %v1554, %v1915
        %v1917 = vsub.f32 1.0, %v1916
        %v1918 = vmul.f32 %v1915, %v1917
        %v1919 = vadd.f32 %v1915, %v1918
        %vm1920 = vweird.f32 %v1554
        %vm1921 = vweird.f32 %v1915
        %vm1922 = vmor %vm1920, %vm1921
        %v1923 = vsel %vm1922, %v1915, %v1919
        %v1924 = vand.u32 2147483647, %v1554
        %vm1925 = vcmp.eq.f32.partialorder %v1924, 8.507059e+37
        %v1926 = vand.u32 %v1554, 2147483648
        %v1927 = vor.u32 1.1754944e-38, %v1926
        %v1928 = vsel %vm1925, %v1927, %v1923
        %v1929 = vmul.f32 %v1529, %v1928
        %v1930 = vmul.f32 %v1355, %v1569
        %v1931 = vmul.f32 %v1356, %v1584
        %v1932 = vmul.f32 %v1357, %v1599
        %v1933 = vmul.f32 %v1358, %v1614
        %v1934 = vmul.f32 %v1359, %v1629
        %v1935 = vmul.f32 %v1360, %v1644
        %v1936 = vmul.f32 %v1361, %v1659
        %v1937 = vmul.f32 %v1362, %v1674
        %v1938 = vmul.f32 %v1363, %v1689
        %v1939 = vmul.f32 %v1364, %v1704
        %v1940 = vmul.f32 %v1365, %v1719
        %v1941 = vmul.f32 %v1366, %v1734
        %v1942 = vmul.f32 %v1367, %v1749
        %v1943 = vmul.f32 %v1368, %v1764
        %v1944 = vmul.f32 %v1369, %v1779
        %v1945 = vmul.f32 %v1370, %v1794
        %v1946 = vmul.f32 %v1371, %v1809
        %v1947 = vmul.f32 %v1372, %v1824
        %v1948 = vmul.f32 %v1373, %v1839
        %v1949 = vmul.f32 %v1374, %v1854
        %v1950 = vmul.f32 %v1375, %v1869
        %v1951 = vmul.f32 %v1376, %v1884
        %v1952 = vmul.f32 %v1377, %v1899
        %v1953 = vmul.f32 %v1378, %v1914
        %v1954 = vmul.f32 %v1379, %v1929
        %v1955 = vsel %vm1480, %v1355, %v1930
        %v1956 = vsel %vm1481, %v1356, %v1931
        %v1957 = vsel %vm1482, %v1357, %v1932
        %v1958 = vsel %vm1483, %v1358, %v1933
        %v1959 = vsel %vm1484, %v1359, %v1934
        %v1960 = vsel %vm1485, %v1360, %v1935
        %v1961 = vsel %vm1486, %v1361, %v1936
        %v1962 = vsel %vm1487, %v1362, %v1937
        %v1963 = vsel %vm1488, %v1363, %v1938
        %v1964 = vsel %vm1489, %v1364, %v1939
        %v1965 = vsel %vm1490, %v1365, %v1940
        %v1966 = vsel %vm1491, %v1366, %v1941
        %v1967 = vsel %vm1492, %v1367, %v1942
        %v1968 = vsel %vm1493, %v1368, %v1943
        %v1969 = vsel %vm1494, %v1369, %v1944
        %v1970 = vsel %vm1495, %v1370, %v1945
        %v1971 = vsel %vm1496, %v1371, %v1946
        %v1972 = vsel %vm1497, %v1372, %v1947
        %v1973 = vsel %vm1498, %v1373, %v1948
        %v1974 = vsel %vm1499, %v1374, %v1949
        %v1975 = vsel %vm1500, %v1375, %v1950
        %v1976 = vsel %vm1501, %v1376, %v1951
        %v1977 = vsel %vm1502, %v1377, %v1952
        %v1978 = vsel %vm1503, %v1378, %v1953
        %v1979 = vsel %vm1504, %v1379, %v1954
        %v1980 = vld [vmem:[%s3] sm:$0xff]
        %v1981 = vld [vmem:[%s3 + $0x8] sm:$0xff]
        %v1982 = vld [vmem:[%s3 + $0x10] sm:$0xff]
        %v1983 = vld [vmem:[%s3 + $0x18] sm:$0xff]
        %v1984 = vld [vmem:[%s3 + $0x20] sm:$0xff]
        %s1985 = scalar_lea.vmem %s3, 40
        %v1986 = vld [vmem:[%s1985] sm:$0xff]
        %v1987 = vld [vmem:[%s1985 + $0x8] sm:$0xff]
        %v1988 = vld [vmem:[%s1985 + $0x10] sm:$0xff]
        %v1989 = vld [vmem:[%s1985 + $0x18] sm:$0xff]
        %v1990 = vld [vmem:[%s1985 + $0x20] sm:$0xff]
        %v2015 = vrot.slane %v1955, 1
        %v2016 = vrot.slane %v1956, 1
        %v2017 = vsel %vm712, %v2015, %v2016
        %v2018 = vrot.slane %v1957, 1
        %v2019 = vsel %vm712, %v2016, %v2018
        %v2020 = vrot.slane %v1958, 1
        %v2021 = vsel %vm712, %v2018, %v2020
        %v2022 = vrot.slane %v1959, 1
        %v2023 = vsel %vm712, %v2020, %v2022
        %v2024 = vrot.slane %v1960, 1
        %v2025 = vsel %vm712, %v2022, %v2024
        %v2026 = vrot.slane %v1961, 1
        %v2027 = vsel %vm712, %v2024, %v2026
        %v2028 = vrot.slane %v1962, 1
        %v2029 = vsel %vm712, %v2026, %v2028
        %v2030 = vrot.slane %v1963, 1
        %v2031 = vsel %vm712, %v2028, %v2030
        %v2032 = vrot.slane %v1964, 1
        %v2033 = vsel %vm712, %v2030, %v2032
        %v2034 = vrot.slane %v1965, 1
        %v2035 = vsel %vm712, %v2032, %v2034
        %v2036 = vrot.slane %v1966, 1
        %v2037 = vsel %vm712, %v2034, %v2036
        %v2038 = vrot.slane %v1967, 1
        %v2039 = vsel %vm712, %v2036, %v2038
        %v2040 = vrot.slane %v1968, 1
        %v2041 = vsel %vm712, %v2038, %v2040
        %v2042 = vrot.slane %v1969, 1
        %v2043 = vsel %vm712, %v2040, %v2042
        %v2044 = vrot.slane %v1970, 1
        %v2045 = vsel %vm712, %v2042, %v2044
        %v2046 = vrot.slane %v1971, 1
        %v2047 = vsel %vm712, %v2044, %v2046
        %v2048 = vrot.slane %v1972, 1
        %v2049 = vsel %vm712, %v2046, %v2048
        %v2050 = vrot.slane %v1973, 1
        %v2051 = vsel %vm712, %v2048, %v2050
        %v2052 = vrot.slane %v1974, 1
        %v2053 = vsel %vm712, %v2050, %v2052
        %v2054 = vrot.slane %v1975, 1
        %v2055 = vsel %vm712, %v2052, %v2054
        %v2056 = vrot.slane %v1976, 1
        %v2057 = vsel %vm712, %v2054, %v2056
        %v2058 = vrot.slane %v1977, 1
        %v2059 = vsel %vm712, %v2056, %v2058
        %v2060 = vrot.slane %v1978, 1
        %v2061 = vsel %vm712, %v2058, %v2060
        %vm2062 = vcmask 326656
        %v2063 = vsel %vm2062, %v2017, 0
        %v2065 = vsel %vm2062, %v2019, 0
        %v2067 = vsel %vm2062, %v2021, 0
        %v2069 = vsel %vm2062, %v2023, 0
        %v2071 = vsel %vm2062, %v2025, 0
        %v2073 = vsel %vm2062, %v2027, 0
        %v2075 = vsel %vm2062, %v2029, 0
        %v2077 = vsel %vm2062, %v2031, 0
        %v2079 = vsel %vm2062, %v2033, 0
        %v2081 = vsel %vm2062, %v2035, 0
        %v2083 = vsel %vm2062, %v2037, 0
        %v2085 = vsel %vm2062, %v2039, 0
        %v2087 = vsel %vm2062, %v2041, 0
        %v2089 = vsel %vm2062, %v2043, 0
        %v2091 = vsel %vm2062, %v2045, 0
        %v2093 = vsel %vm2062, %v2047, 0
        %v2095 = vsel %vm2062, %v2049, 0
        %v2097 = vsel %vm2062, %v2051, 0
        %v2099 = vsel %vm2062, %v2053, 0
        %v2101 = vsel %vm2062, %v2055, 0
        %v2103 = vsel %vm2062, %v2057, 0
        %v2105 = vsel %vm2062, %v2059, 0
        %v2107 = vsel %vm2062, %v2061, 0
        %v2109 = vsel %vm2062, %v2060, 0
        %2111 = vmatpush.msra.mxu0 0.0
        %2112 = vmatpush.msra.mxu0 0.0
        %2113 = vmatpush.msra.mxu0 0.0
        %2114 = vmatpush.msra.mxu0 0.0
        %2115 = vmatpush.msra.mxu0 0.0
        %2116 = vmatpush.msra.mxu0 0.0
        %2117 = vmatpush.msra.mxu0 0.0
        %2118 = vmatpush.msra.mxu0 0.0
        %2119 = vmatpush.msra.mxu0 0.0
        %2120 = vmatpush.msra.mxu0 0.0
        %2121 = vmatpush.msra.mxu0 0.0
        %2122 = vmatpush.msra.mxu0 %v1990
        %2123 = vmatpush.msra.mxu0 %v1989
        %2124 = vmatpush.msra.mxu0 %v1988
        %2125 = vmatpush.msra.mxu0 %v1987
        %2126 = vmatpush.msra.mxu0 %v1986
        %2127 = vmatmul.f32.gmra.mxu0 %v2063
        %v2128 = vpop.f32.mrf.mxu0
        %v2129 = vadd.f32 0.0, %v2128
        %2130 = vmatmul.f32.gmra.mxu0 %v2065
        %v2131 = vpop.f32.mrf.mxu0
        %v2132 = vadd.f32 0.0, %v2131
        %2133 = vmatmul.f32.gmra.mxu0 %v2067
        %v2134 = vpop.f32.mrf.mxu0
        %v2135 = vadd.f32 0.0, %v2134
        %2136 = vmatmul.f32.gmra.mxu0 %v2069
        %v2137 = vpop.f32.mrf.mxu0
        %v2138 = vadd.f32 0.0, %v2137
        %2139 = vmatmul.f32.gmra.mxu0 %v2071
        %v2140 = vpop.f32.mrf.mxu0
        %v2141 = vadd.f32 0.0, %v2140
        %2142 = vmatmul.f32.gmra.mxu0 %v2073
        %v2143 = vpop.f32.mrf.mxu0
        %v2144 = vadd.f32 0.0, %v2143
        %2145 = vmatmul.f32.gmra.mxu0 %v2075
        %v2146 = vpop.f32.mrf.mxu0
        %v2147 = vadd.f32 0.0, %v2146
        %2148 = vmatmul.f32.gmra.mxu0 %v2077
        %v2149 = vpop.f32.mrf.mxu0
        %v2150 = vadd.f32 0.0, %v2149
        %2151 = vmatmul.f32.gmra.mxu0 %v2079
        %v2152 = vpop.f32.mrf.mxu0
        %v2153 = vadd.f32 0.0, %v2152
        %2154 = vmatmul.f32.gmra.mxu0 %v2081
        %v2155 = vpop.f32.mrf.mxu0
        %v2156 = vadd.f32 0.0, %v2155
        %2157 = vmatmul.f32.gmra.mxu0 %v2083
        %v2158 = vpop.f32.mrf.mxu0
        %v2159 = vadd.f32 0.0, %v2158
        %2160 = vmatmul.f32.gmra.mxu0 %v2085
        %v2161 = vpop.f32.mrf.mxu0
        %v2162 = vadd.f32 0.0, %v2161
        %2163 = vmatmul.f32.gmra.mxu0 %v2087
        %v2164 = vpop.f32.mrf.mxu0
        %v2165 = vadd.f32 0.0, %v2164
        %2166 = vmatmul.f32.gmra.mxu0 %v2089
        %v2167 = vpop.f32.mrf.mxu0
        %v2168 = vadd.f32 0.0, %v2167
        %2169 = vmatmul.f32.gmra.mxu0 %v2091
        %v2170 = vpop.f32.mrf.mxu0
        %v2171 = vadd.f32 0.0, %v2170
        %2172 = vmatmul.f32.gmra.mxu0 %v2093
        %v2173 = vpop.f32.mrf.mxu0
        %v2174 = vadd.f32 0.0, %v2173
        %2175 = vmatmul.f32.gmra.mxu0 %v2095
        %v2176 = vpop.f32.mrf.mxu0
        %v2177 = vadd.f32 0.0, %v2176
        %2178 = vmatmul.f32.gmra.mxu0 %v2097
        %v2179 = vpop.f32.mrf.mxu0
        %v2180 = vadd.f32 0.0, %v2179
        %2181 = vmatmul.f32.gmra.mxu0 %v2099
        %v2182 = vpop.f32.mrf.mxu0
        %v2183 = vadd.f32 0.0, %v2182
        %2184 = vmatmul.f32.gmra.mxu0 %v2101
        %v2185 = vpop.f32.mrf.mxu0
        %v2186 = vadd.f32 0.0, %v2185
        %2187 = vmatmul.f32.gmra.mxu0 %v2103
        %v2188 = vpop.f32.mrf.mxu0
        %v2189 = vadd.f32 0.0, %v2188
        %2190 = vmatmul.f32.gmra.mxu0 %v2105
        %v2191 = vpop.f32.mrf.mxu0
        %v2192 = vadd.f32 0.0, %v2191
        %2193 = vmatmul.f32.gmra.mxu0 %v2107
        %v2194 = vpop.f32.mrf.mxu0
        %v2195 = vadd.f32 0.0, %v2194
        %2196 = vmatmul.f32.gmra.mxu0 %v2109
        %v2197 = vpop.f32.mrf.mxu0
        %v2198 = vadd.f32 0.0, %v2197
        %2199 = vdwg.mxu0
        %v2200 = vsel %vm2062, %v1955, 0
        %v2202 = vsel %vm2062, %v1956, 0
        %v2204 = vsel %vm2062, %v1957, 0
        %v2206 = vsel %vm2062, %v1958, 0
        %v2208 = vsel %vm2062, %v1959, 0
        %v2210 = vsel %vm2062, %v1960, 0
        %v2212 = vsel %vm2062, %v1961, 0
        %v2214 = vsel %vm2062, %v1962, 0
        %v2216 = vsel %vm2062, %v1963, 0
        %v2218 = vsel %vm2062, %v1964, 0
        %v2220 = vsel %vm2062, %v1965, 0
        %v2222 = vsel %vm2062, %v1966, 0
        %v2224 = vsel %vm2062, %v1967, 0
        %v2226 = vsel %vm2062, %v1968, 0
        %v2228 = vsel %vm2062, %v1969, 0
        %v2230 = vsel %vm2062, %v1970, 0
        %v2232 = vsel %vm2062, %v1971, 0
        %v2234 = vsel %vm2062, %v1972, 0
        %v2236 = vsel %vm2062, %v1973, 0
        %v2238 = vsel %vm2062, %v1974, 0
        %v2240 = vsel %vm2062, %v1975, 0
        %v2242 = vsel %vm2062, %v1976, 0
        %v2244 = vsel %vm2062, %v1977, 0
        %v2246 = vsel %vm2062, %v1978, 0
        %2248 = vmatpush.msra.mxu0 0.0
        %2249 = vmatpush.msra.mxu0 0.0
        %2250 = vmatpush.msra.mxu0 0.0
        %2251 = vmatpush.msra.mxu0 0.0
        %2252 = vmatpush.msra.mxu0 0.0
        %2253 = vmatpush.msra.mxu0 0.0
        %2254 = vmatpush.msra.mxu0 0.0
        %2255 = vmatpush.msra.mxu0 0.0
        %2256 = vmatpush.msra.mxu0 0.0
        %2257 = vmatpush.msra.mxu0 0.0
        %2258 = vmatpush.msra.mxu0 0.0
        %2259 = vmatpush.msra.mxu0 %v1984
        %2260 = vmatpush.msra.mxu0 %v1983
        %2261 = vmatpush.msra.mxu0 %v1982
        %2262 = vmatpush.msra.mxu0 %v1981
        %2263 = vmatpush.msra.mxu0 %v1980
        %2264 = vmatmul.f32.gmra.mxu0 %v2200
        %v2265 = vpop.f32.mrf.mxu0
        %v2266 = vadd.f32 %v2129, %v2265
        %2267 = vmatmul.f32.gmra.mxu0 %v2202
        %v2268 = vpop.f32.mrf.mxu0
        %v2269 = vadd.f32 %v2132, %v2268
        %2270 = vmatmul.f32.gmra.mxu0 %v2204
        %v2271 = vpop.f32.mrf.mxu0
        %v2272 = vadd.f32 %v2135, %v2271
        %2273 = vmatmul.f32.gmra.mxu0 %v2206
        %v2274 = vpop.f32.mrf.mxu0
        %v2275 = vadd.f32 %v2138, %v2274
        %2276 = vmatmul.f32.gmra.mxu0 %v2208
        %v2277 = vpop.f32.mrf.mxu0
        %v2278 = vadd.f32 %v2141, %v2277
        %2279 = vmatmul.f32.gmra.mxu0 %v2210
        %v2280 = vpop.f32.mrf.mxu0
        %v2281 = vadd.f32 %v2144, %v2280
        %2282 = vmatmul.f32.gmra.mxu0 %v2212
        %v2283 = vpop.f32.mrf.mxu0
        %v2284 = vadd.f32 %v2147, %v2283
        %2285 = vmatmul.f32.gmra.mxu0 %v2214
        %v2286 = vpop.f32.mrf.mxu0
        %v2287 = vadd.f32 %v2150, %v2286
        %2288 = vmatmul.f32.gmra.mxu0 %v2216
        %v2289 = vpop.f32.mrf.mxu0
        %v2290 = vadd.f32 %v2153, %v2289
        %2291 = vmatmul.f32.gmra.mxu0 %v2218
        %v2292 = vpop.f32.mrf.mxu0
        %v2293 = vadd.f32 %v2156, %v2292
        %2294 = vmatmul.f32.gmra.mxu0 %v2220
        %v2295 = vpop.f32.mrf.mxu0
        %v2296 = vadd.f32 %v2159, %v2295
        %2297 = vmatmul.f32.gmra.mxu0 %v2222
        %v2298 = vpop.f32.mrf.mxu0
        %v2299 = vadd.f32 %v2162, %v2298
        %2300 = vmatmul.f32.gmra.mxu0 %v2224
        %v2301 = vpop.f32.mrf.mxu0
        %v2302 = vadd.f32 %v2165, %v2301
        %2303 = vmatmul.f32.gmra.mxu0 %v2226
        %v2304 = vpop.f32.mrf.mxu0
        %v2305 = vadd.f32 %v2168, %v2304
        %2306 = vmatmul.f32.gmra.mxu0 %v2228
        %v2307 = vpop.f32.mrf.mxu0
        %v2308 = vadd.f32 %v2171, %v2307
        %2309 = vmatmul.f32.gmra.mxu0 %v2230
        %v2310 = vpop.f32.mrf.mxu0
        %v2311 = vadd.f32 %v2174, %v2310
        %2312 = vmatmul.f32.gmra.mxu0 %v2232
        %v2313 = vpop.f32.mrf.mxu0
        %v2314 = vadd.f32 %v2177, %v2313
        %2315 = vmatmul.f32.gmra.mxu0 %v2234
        %v2316 = vpop.f32.mrf.mxu0
        %v2317 = vadd.f32 %v2180, %v2316
        %2318 = vmatmul.f32.gmra.mxu0 %v2236
        %v2319 = vpop.f32.mrf.mxu0
        %v2320 = vadd.f32 %v2183, %v2319
        %2321 = vmatmul.f32.gmra.mxu0 %v2238
        %v2322 = vpop.f32.mrf.mxu0
        %v2323 = vadd.f32 %v2186, %v2322
        %2324 = vmatmul.f32.gmra.mxu0 %v2240
        %v2325 = vpop.f32.mrf.mxu0
        %v2326 = vadd.f32 %v2189, %v2325
        %2327 = vmatmul.f32.gmra.mxu0 %v2242
        %v2328 = vpop.f32.mrf.mxu0
        %v2329 = vadd.f32 %v2192, %v2328
        %2330 = vmatmul.f32.gmra.mxu0 %v2244
        %v2331 = vpop.f32.mrf.mxu0
        %v2332 = vadd.f32 %v2195, %v2331
        %2333 = vmatmul.f32.gmra.mxu0 %v2246
        %v2334 = vpop.f32.mrf.mxu0
        %v2335 = vadd.f32 %v2198, %v2334
        %2336 = vdwg.mxu0
        %s2337 = scalar_lea.vmem %s3, 80
        %v2338 = vld [vmem:[%s2337] sm:$0xff]
        %v2339 = vld [vmem:[%s2337 + $0x8] sm:$0xff]
        %v2340 = vld [vmem:[%s2337 + $0x10] sm:$0xff]
        %v2341 = vld [vmem:[%s2337 + $0x18] sm:$0xff]
        %v2342 = vld [vmem:[%s2337 + $0x20] sm:$0xff]
        %v2343 = vrot.slane %v1955, 2
        %v2344 = vrot.slane %v1956, 2
        %v2345 = vsel %vm936, %v2343, %v2344
        %v2346 = vrot.slane %v1957, 2
        %v2347 = vsel %vm936, %v2344, %v2346
        %v2348 = vrot.slane %v1958, 2
        %v2349 = vsel %vm936, %v2346, %v2348
        %v2350 = vrot.slane %v1959, 2
        %v2351 = vsel %vm936, %v2348, %v2350
        %v2352 = vrot.slane %v1960, 2
        %v2353 = vsel %vm936, %v2350, %v2352
        %v2354 = vrot.slane %v1961, 2
        %v2355 = vsel %vm936, %v2352, %v2354
        %v2356 = vrot.slane %v1962, 2
        %v2357 = vsel %vm936, %v2354, %v2356
        %v2358 = vrot.slane %v1963, 2
        %v2359 = vsel %vm936, %v2356, %v2358
        %v2360 = vrot.slane %v1964, 2
        %v2361 = vsel %vm936, %v2358, %v2360
        %v2362 = vrot.slane %v1965, 2
        %v2363 = vsel %vm936, %v2360, %v2362
        %v2364 = vrot.slane %v1966, 2
        %v2365 = vsel %vm936, %v2362, %v2364
        %v2366 = vrot.slane %v1967, 2
        %v2367 = vsel %vm936, %v2364, %v2366
        %v2368 = vrot.slane %v1968, 2
        %v2369 = vsel %vm936, %v2366, %v2368
        %v2370 = vrot.slane %v1969, 2
        %v2371 = vsel %vm936, %v2368, %v2370
        %v2372 = vrot.slane %v1970, 2
        %v2373 = vsel %vm936, %v2370, %v2372
        %v2374 = vrot.slane %v1971, 2
        %v2375 = vsel %vm936, %v2372, %v2374
        %v2376 = vrot.slane %v1972, 2
        %v2377 = vsel %vm936, %v2374, %v2376
        %v2378 = vrot.slane %v1973, 2
        %v2379 = vsel %vm936, %v2376, %v2378
        %v2380 = vrot.slane %v1974, 2
        %v2381 = vsel %vm936, %v2378, %v2380
        %v2382 = vrot.slane %v1975, 2
        %v2383 = vsel %vm936, %v2380, %v2382
        %v2384 = vrot.slane %v1976, 2
        %v2385 = vsel %vm936, %v2382, %v2384
        %v2386 = vrot.slane %v1977, 2
        %v2387 = vsel %vm936, %v2384, %v2386
        %v2388 = vrot.slane %v1978, 2
        %v2389 = vsel %vm936, %v2386, %v2388
        %v2390 = vsel %vm2062, %v2345, 0
        %v2392 = vsel %vm2062, %v2347, 0
        %v2394 = vsel %vm2062, %v2349, 0
        %v2396 = vsel %vm2062, %v2351, 0
        %v2398 = vsel %vm2062, %v2353, 0
        %v2400 = vsel %vm2062, %v2355, 0
        %v2402 = vsel %vm2062, %v2357, 0
        %v2404 = vsel %vm2062, %v2359, 0
        %v2406 = vsel %vm2062, %v2361, 0
        %v2408 = vsel %vm2062, %v2363, 0
        %v2410 = vsel %vm2062, %v2365, 0
        %v2412 = vsel %vm2062, %v2367, 0
        %v2414 = vsel %vm2062, %v2369, 0
        %v2416 = vsel %vm2062, %v2371, 0
        %v2418 = vsel %vm2062, %v2373, 0
        %v2420 = vsel %vm2062, %v2375, 0
        %v2422 = vsel %vm2062, %v2377, 0
        %v2424 = vsel %vm2062, %v2379, 0
        %v2426 = vsel %vm2062, %v2381, 0
        %v2428 = vsel %vm2062, %v2383, 0
        %v2430 = vsel %vm2062, %v2385, 0
        %v2432 = vsel %vm2062, %v2387, 0
        %v2434 = vsel %vm2062, %v2389, 0
        %v2436 = vsel %vm2062, %v2388, 0
        %2438 = vmatpush.msra.mxu0 0.0
        %2439 = vmatpush.msra.mxu0 0.0
        %2440 = vmatpush.msra.mxu0 0.0
        %2441 = vmatpush.msra.mxu0 0.0
        %2442 = vmatpush.msra.mxu0 0.0
        %2443 = vmatpush.msra.mxu0 0.0
        %2444 = vmatpush.msra.mxu0 0.0
        %2445 = vmatpush.msra.mxu0 0.0
        %2446 = vmatpush.msra.mxu0 0.0
        %2447 = vmatpush.msra.mxu0 0.0
        %2448 = vmatpush.msra.mxu0 0.0
        %2449 = vmatpush.msra.mxu0 %v2342
        %2450 = vmatpush.msra.mxu0 %v2341
        %2451 = vmatpush.msra.mxu0 %v2340
        %2452 = vmatpush.msra.mxu0 %v2339
        %2453 = vmatpush.msra.mxu0 %v2338
        %2454 = vmatmul.f32.gmra.mxu0 %v2390
        %v2455 = vpop.f32.mrf.mxu0
        %v2456 = vadd.f32 0.0, %v2455
        %2457 = vmatmul.f32.gmra.mxu0 %v2392
        %v2458 = vpop.f32.mrf.mxu0
        %v2459 = vadd.f32 0.0, %v2458
        %2460 = vmatmul.f32.gmra.mxu0 %v2394
        %v2461 = vpop.f32.mrf.mxu0
        %v2462 = vadd.f32 0.0, %v2461
        %2463 = vmatmul.f32.gmra.mxu0 %v2396
        %v2464 = vpop.f32.mrf.mxu0
        %v2465 = vadd.f32 0.0, %v2464
        %2466 = vmatmul.f32.gmra.mxu0 %v2398
        %v2467 = vpop.f32.mrf.mxu0
        %v2468 = vadd.f32 0.0, %v2467
        %2469 = vmatmul.f32.gmra.mxu0 %v2400
        %v2470 = vpop.f32.mrf.mxu0
        %v2471 = vadd.f32 0.0, %v2470
        %2472 = vmatmul.f32.gmra.mxu0 %v2402
        %v2473 = vpop.f32.mrf.mxu0
        %v2474 = vadd.f32 0.0, %v2473
        %2475 = vmatmul.f32.gmra.mxu0 %v2404
        %v2476 = vpop.f32.mrf.mxu0
        %v2477 = vadd.f32 0.0, %v2476
        %2478 = vmatmul.f32.gmra.mxu0 %v2406
        %v2479 = vpop.f32.mrf.mxu0
        %v2480 = vadd.f32 0.0, %v2479
        %2481 = vmatmul.f32.gmra.mxu0 %v2408
        %v2482 = vpop.f32.mrf.mxu0
        %v2483 = vadd.f32 0.0, %v2482
        %2484 = vmatmul.f32.gmra.mxu0 %v2410
        %v2485 = vpop.f32.mrf.mxu0
        %v2486 = vadd.f32 0.0, %v2485
        %2487 = vmatmul.f32.gmra.mxu0 %v2412
        %v2488 = vpop.f32.mrf.mxu0
        %v2489 = vadd.f32 0.0, %v2488
        %2490 = vmatmul.f32.gmra.mxu0 %v2414
        %v2491 = vpop.f32.mrf.mxu0
        %v2492 = vadd.f32 0.0, %v2491
        %2493 = vmatmul.f32.gmra.mxu0 %v2416
        %v2494 = vpop.f32.mrf.mxu0
        %v2495 = vadd.f32 0.0, %v2494
        %2496 = vmatmul.f32.gmra.mxu0 %v2418
        %v2497 = vpop.f32.mrf.mxu0
        %v2498 = vadd.f32 0.0, %v2497
        %2499 = vmatmul.f32.gmra.mxu0 %v2420
        %v2500 = vpop.f32.mrf.mxu0
        %v2501 = vadd.f32 0.0, %v2500
        %2502 = vmatmul.f32.gmra.mxu0 %v2422
        %v2503 = vpop.f32.mrf.mxu0
        %v2504 = vadd.f32 0.0, %v2503
        %2505 = vmatmul.f32.gmra.mxu0 %v2424
        %v2506 = vpop.f32.mrf.mxu0
        %v2507 = vadd.f32 0.0, %v2506
        %2508 = vmatmul.f32.gmra.mxu0 %v2426
        %v2509 = vpop.f32.mrf.mxu0
        %v2510 = vadd.f32 0.0, %v2509
        %2511 = vmatmul.f32.gmra.mxu0 %v2428
        %v2512 = vpop.f32.mrf.mxu0
        %v2513 = vadd.f32 0.0, %v2512
        %2514 = vmatmul.f32.gmra.mxu0 %v2430
        %v2515 = vpop.f32.mrf.mxu0
        %v2516 = vadd.f32 0.0, %v2515
        %2517 = vmatmul.f32.gmra.mxu0 %v2432
        %v2518 = vpop.f32.mrf.mxu0
        %v2519 = vadd.f32 0.0, %v2518
        %2520 = vmatmul.f32.gmra.mxu0 %v2434
        %v2521 = vpop.f32.mrf.mxu0
        %v2522 = vadd.f32 0.0, %v2521
        %2523 = vmatmul.f32.gmra.mxu0 %v2436
        %v2524 = vpop.f32.mrf.mxu0
        %v2525 = vadd.f32 0.0, %v2524
        %2526 = vdwg.mxu0
        %v2527 = vadd.f32 %v2266, %v2456
        %v2528 = vadd.f32 %v2269, %v2459
        %v2529 = vadd.f32 %v2272, %v2462
        %v2530 = vadd.f32 %v2275, %v2465
        %v2531 = vadd.f32 %v2278, %v2468
        %v2532 = vadd.f32 %v2281, %v2471
        %v2533 = vadd.f32 %v2284, %v2474
        %v2534 = vadd.f32 %v2287, %v2477
        %v2535 = vadd.f32 %v2290, %v2480
        %v2536 = vadd.f32 %v2293, %v2483
        %v2537 = vadd.f32 %v2296, %v2486
        %v2538 = vadd.f32 %v2299, %v2489
        %v2539 = vadd.f32 %v2302, %v2492
        %v2540 = vadd.f32 %v2305, %v2495
        %v2541 = vadd.f32 %v2308, %v2498
        %v2542 = vadd.f32 %v2311, %v2501
        %v2543 = vadd.f32 %v2314, %v2504
        %v2544 = vadd.f32 %v2317, %v2507
        %v2545 = vadd.f32 %v2320, %v2510
        %v2546 = vadd.f32 %v2323, %v2513
        %v2547 = vadd.f32 %v2326, %v2516
        %v2548 = vadd.f32 %v2329, %v2519
        %v2549 = vadd.f32 %v2332, %v2522
        %v2550 = vadd.f32 %v2335, %v2525
        %s2551 = scalar_lea.vmem %s3, 120
        %v2552 = vld [vmem:[%s2551] sm:$0xff]
        %v2553 = vld [vmem:[%s2551 + $0x8] sm:$0xff]
        %v2554 = vld [vmem:[%s2551 + $0x10] sm:$0xff]
        %v2555 = vld [vmem:[%s2551 + $0x18] sm:$0xff]
        %v2556 = vld [vmem:[%s2551 + $0x20] sm:$0xff]
        %v2558 = vrot.slane %v1955, 3
        %v2559 = vrot.slane %v1956, 3
        %v2560 = vsel %vm1160, %v2558, %v2559
        %v2561 = vrot.slane %v1957, 3
        %v2562 = vsel %vm1160, %v2559, %v2561
        %v2563 = vrot.slane %v1958, 3
        %v2564 = vsel %vm1160, %v2561, %v2563
        %v2565 = vrot.slane %v1959, 3
        %v2566 = vsel %vm1160, %v2563, %v2565
        %v2567 = vrot.slane %v1960, 3
        %v2568 = vsel %vm1160, %v2565, %v2567
        %v2569 = vrot.slane %v1961, 3
        %v2570 = vsel %vm1160, %v2567, %v2569
        %v2571 = vrot.slane %v1962, 3
        %v2572 = vsel %vm1160, %v2569, %v2571
        %v2573 = vrot.slane %v1963, 3
        %v2574 = vsel %vm1160, %v2571, %v2573
        %v2575 = vrot.slane %v1964, 3
        %v2576 = vsel %vm1160, %v2573, %v2575
        %v2577 = vrot.slane %v1965, 3
        %v2578 = vsel %vm1160, %v2575, %v2577
        %v2579 = vrot.slane %v1966, 3
        %v2580 = vsel %vm1160, %v2577, %v2579
        %v2581 = vrot.slane %v1967, 3
        %v2582 = vsel %vm1160, %v2579, %v2581
        %v2583 = vrot.slane %v1968, 3
        %v2584 = vsel %vm1160, %v2581, %v2583
        %v2585 = vrot.slane %v1969, 3
        %v2586 = vsel %vm1160, %v2583, %v2585
        %v2587 = vrot.slane %v1970, 3
        %v2588 = vsel %vm1160, %v2585, %v2587
        %v2589 = vrot.slane %v1971, 3
        %v2590 = vsel %vm1160, %v2587, %v2589
        %v2591 = vrot.slane %v1972, 3
        %v2592 = vsel %vm1160, %v2589, %v2591
        %v2593 = vrot.slane %v1973, 3
        %v2594 = vsel %vm1160, %v2591, %v2593
        %v2595 = vrot.slane %v1974, 3
        %v2596 = vsel %vm1160, %v2593, %v2595
        %v2597 = vrot.slane %v1975, 3
        %v2598 = vsel %vm1160, %v2595, %v2597
        %v2599 = vrot.slane %v1976, 3
        %v2600 = vsel %vm1160, %v2597, %v2599
        %v2601 = vrot.slane %v1977, 3
        %v2602 = vsel %vm1160, %v2599, %v2601
        %v2603 = vrot.slane %v1978, 3
        %v2604 = vsel %vm1160, %v2601, %v2603
        %v2605 = vrot.slane %v1979, 3
        %v2606 = vsel %vm1160, %v2603, %v2605
        %v2607 = vsel %vm2062, %v2560, 0
        %v2609 = vsel %vm2062, %v2562, 0
        %v2611 = vsel %vm2062, %v2564, 0
        %v2613 = vsel %vm2062, %v2566, 0
        %v2615 = vsel %vm2062, %v2568, 0
        %v2617 = vsel %vm2062, %v2570, 0
        %v2619 = vsel %vm2062, %v2572, 0
        %v2621 = vsel %vm2062, %v2574, 0
        %v2623 = vsel %vm2062, %v2576, 0
        %v2625 = vsel %vm2062, %v2578, 0
        %v2627 = vsel %vm2062, %v2580, 0
        %v2629 = vsel %vm2062, %v2582, 0
        %v2631 = vsel %vm2062, %v2584, 0
        %v2633 = vsel %vm2062, %v2586, 0
        %v2635 = vsel %vm2062, %v2588, 0
        %v2637 = vsel %vm2062, %v2590, 0
        %v2639 = vsel %vm2062, %v2592, 0
        %v2641 = vsel %vm2062, %v2594, 0
        %v2643 = vsel %vm2062, %v2596, 0
        %v2645 = vsel %vm2062, %v2598, 0
        %v2647 = vsel %vm2062, %v2600, 0
        %v2649 = vsel %vm2062, %v2602, 0
        %v2651 = vsel %vm2062, %v2604, 0
        %v2653 = vsel %vm2062, %v2606, 0
        %2655 = vmatpush.msra.mxu0 0.0
        %2656 = vmatpush.msra.mxu0 0.0
        %2657 = vmatpush.msra.mxu0 0.0
        %2658 = vmatpush.msra.mxu0 0.0
        %2659 = vmatpush.msra.mxu0 0.0
        %2660 = vmatpush.msra.mxu0 0.0
        %2661 = vmatpush.msra.mxu0 0.0
        %2662 = vmatpush.msra.mxu0 0.0
        %2663 = vmatpush.msra.mxu0 0.0
        %2664 = vmatpush.msra.mxu0 0.0
        %2665 = vmatpush.msra.mxu0 0.0
        %2666 = vmatpush.msra.mxu0 %v2556
        %2667 = vmatpush.msra.mxu0 %v2555
        %2668 = vmatpush.msra.mxu0 %v2554
        %2669 = vmatpush.msra.mxu0 %v2553
        %2670 = vmatpush.msra.mxu0 %v2552
        %2671 = vmatmul.f32.gmra.mxu0 %v2607
        %v2672 = vpop.f32.mrf.mxu0
        %v2673 = vadd.f32 0.0, %v2672
        %2674 = vmatmul.f32.gmra.mxu0 %v2609
        %v2675 = vpop.f32.mrf.mxu0
        %v2676 = vadd.f32 0.0, %v2675
        %2677 = vmatmul.f32.gmra.mxu0 %v2611
        %v2678 = vpop.f32.mrf.mxu0
        %v2679 = vadd.f32 0.0, %v2678
        %2680 = vmatmul.f32.gmra.mxu0 %v2613
        %v2681 = vpop.f32.mrf.mxu0
        %v2682 = vadd.f32 0.0, %v2681
        %2683 = vmatmul.f32.gmra.mxu0 %v2615
        %v2684 = vpop.f32.mrf.mxu0
        %v2685 = vadd.f32 0.0, %v2684
        %2686 = vmatmul.f32.gmra.mxu0 %v2617
        %v2687 = vpop.f32.mrf.mxu0
        %v2688 = vadd.f32 0.0, %v2687
        %2689 = vmatmul.f32.gmra.mxu0 %v2619
        %v2690 = vpop.f32.mrf.mxu0
        %v2691 = vadd.f32 0.0, %v2690
        %2692 = vmatmul.f32.gmra.mxu0 %v2621
        %v2693 = vpop.f32.mrf.mxu0
        %v2694 = vadd.f32 0.0, %v2693
        %2695 = vmatmul.f32.gmra.mxu0 %v2623
        %v2696 = vpop.f32.mrf.mxu0
        %v2697 = vadd.f32 0.0, %v2696
        %2698 = vmatmul.f32.gmra.mxu0 %v2625
        %v2699 = vpop.f32.mrf.mxu0
        %v2700 = vadd.f32 0.0, %v2699
        %2701 = vmatmul.f32.gmra.mxu0 %v2627
        %v2702 = vpop.f32.mrf.mxu0
        %v2703 = vadd.f32 0.0, %v2702
        %2704 = vmatmul.f32.gmra.mxu0 %v2629
        %v2705 = vpop.f32.mrf.mxu0
        %v2706 = vadd.f32 0.0, %v2705
        %2707 = vmatmul.f32.gmra.mxu0 %v2631
        %v2708 = vpop.f32.mrf.mxu0
        %v2709 = vadd.f32 0.0, %v2708
        %2710 = vmatmul.f32.gmra.mxu0 %v2633
        %v2711 = vpop.f32.mrf.mxu0
        %v2712 = vadd.f32 0.0, %v2711
        %2713 = vmatmul.f32.gmra.mxu0 %v2635
        %v2714 = vpop.f32.mrf.mxu0
        %v2715 = vadd.f32 0.0, %v2714
        %2716 = vmatmul.f32.gmra.mxu0 %v2637
        %v2717 = vpop.f32.mrf.mxu0
        %v2718 = vadd.f32 0.0, %v2717
        %2719 = vmatmul.f32.gmra.mxu0 %v2639
        %v2720 = vpop.f32.mrf.mxu0
        %v2721 = vadd.f32 0.0, %v2720
        %2722 = vmatmul.f32.gmra.mxu0 %v2641
        %v2723 = vpop.f32.mrf.mxu0
        %v2724 = vadd.f32 0.0, %v2723
        %2725 = vmatmul.f32.gmra.mxu0 %v2643
        %v2726 = vpop.f32.mrf.mxu0
        %v2727 = vadd.f32 0.0, %v2726
        %2728 = vmatmul.f32.gmra.mxu0 %v2645
        %v2729 = vpop.f32.mrf.mxu0
        %v2730 = vadd.f32 0.0, %v2729
        %2731 = vmatmul.f32.gmra.mxu0 %v2647
        %v2732 = vpop.f32.mrf.mxu0
        %v2733 = vadd.f32 0.0, %v2732
        %2734 = vmatmul.f32.gmra.mxu0 %v2649
        %v2735 = vpop.f32.mrf.mxu0
        %v2736 = vadd.f32 0.0, %v2735
        %2737 = vmatmul.f32.gmra.mxu0 %v2651
        %v2738 = vpop.f32.mrf.mxu0
        %v2739 = vadd.f32 0.0, %v2738
        %2740 = vmatmul.f32.gmra.mxu0 %v2653
        %v2741 = vpop.f32.mrf.mxu0
        %v2742 = vadd.f32 0.0, %v2741
        %2743 = vdwg.mxu0
        %v2744 = vadd.f32 %v2527, %v2673
        %v2745 = vadd.f32 %v2528, %v2676
        %v2746 = vadd.f32 %v2529, %v2679
        %v2747 = vadd.f32 %v2530, %v2682
        %v2748 = vadd.f32 %v2531, %v2685
        %v2749 = vadd.f32 %v2532, %v2688
        %v2750 = vadd.f32 %v2533, %v2691
        %v2751 = vadd.f32 %v2534, %v2694
        %v2752 = vadd.f32 %v2535, %v2697
        %v2753 = vadd.f32 %v2536, %v2700
        %v2754 = vadd.f32 %v2537, %v2703
        %v2755 = vadd.f32 %v2538, %v2706
        %v2756 = vadd.f32 %v2539, %v2709
        %v2757 = vadd.f32 %v2540, %v2712
        %v2758 = vadd.f32 %v2541, %v2715
        %v2759 = vadd.f32 %v2542, %v2718
        %v2760 = vadd.f32 %v2543, %v2721
        %v2761 = vadd.f32 %v2544, %v2724
        %v2762 = vadd.f32 %v2545, %v2727
        %v2763 = vadd.f32 %v2546, %v2730
        %v2764 = vadd.f32 %v2547, %v2733
        %v2765 = vadd.f32 %v2548, %v2736
        %v2766 = vadd.f32 %v2549, %v2739
        %v2767 = vadd.f32 %v2550, %v2742
        %v2768 = vld [vmem:[%s4] sm:$0x1]
        %v2770 = vperm.slane %v2768, 0
        %v2772 = vmul.f32 %v2744, %v2770
        %v2773 = vmul.f32 %v2745, %v2770
        %v2774 = vmul.f32 %v2746, %v2770
        %v2775 = vmul.f32 %v2747, %v2770
        %v2776 = vmul.f32 %v2748, %v2770
        %v2777 = vmul.f32 %v2749, %v2770
        %v2778 = vmul.f32 %v2750, %v2770
        %v2779 = vmul.f32 %v2751, %v2770
        %v2780 = vmul.f32 %v2752, %v2770
        %v2781 = vmul.f32 %v2753, %v2770
        %v2782 = vmul.f32 %v2754, %v2770
        %v2783 = vmul.f32 %v2755, %v2770
        %v2784 = vmul.f32 %v2756, %v2770
        %v2785 = vmul.f32 %v2757, %v2770
        %v2786 = vmul.f32 %v2758, %v2770
        %v2787 = vmul.f32 %v2759, %v2770
        %v2788 = vmul.f32 %v2760, %v2770
        %v2789 = vmul.f32 %v2761, %v2770
        %v2790 = vmul.f32 %v2762, %v2770
        %v2791 = vmul.f32 %v2763, %v2770
        %v2792 = vmul.f32 %v2764, %v2770
        %v2793 = vmul.f32 %v2765, %v2770
        %v2794 = vmul.f32 %v2766, %v2770
        %v2795 = vmul.f32 %v2767, %v2770
        %v2796 = vld [vmem:[%s5] sm:$0x1]
        %v2798 = vperm.slane %v2796, 0
        %v2800 = vadd.f32 %v2772, %v2798
        %v2801 = vadd.f32 %v2773, %v2798
        %v2802 = vadd.f32 %v2774, %v2798
        %v2803 = vadd.f32 %v2775, %v2798
        %v2804 = vadd.f32 %v2776, %v2798
        %v2805 = vadd.f32 %v2777, %v2798
        %v2806 = vadd.f32 %v2778, %v2798
        %v2807 = vadd.f32 %v2779, %v2798
        %v2808 = vadd.f32 %v2780, %v2798
        %v2809 = vadd.f32 %v2781, %v2798
        %v2810 = vadd.f32 %v2782, %v2798
        %v2811 = vadd.f32 %v2783, %v2798
        %v2812 = vadd.f32 %v2784, %v2798
        %v2813 = vadd.f32 %v2785, %v2798
        %v2814 = vadd.f32 %v2786, %v2798
        %v2815 = vadd.f32 %v2787, %v2798
        %v2816 = vadd.f32 %v2788, %v2798
        %v2817 = vadd.f32 %v2789, %v2798
        %v2818 = vadd.f32 %v2790, %v2798
        %v2819 = vadd.f32 %v2791, %v2798
        %v2820 = vadd.f32 %v2792, %v2798
        %v2821 = vadd.f32 %v2793, %v2798
        %v2822 = vadd.f32 %v2794, %v2798
        %v2823 = vadd.f32 %v2795, %v2798
        %2824 = vst.msk [vmem:[%s266] sm:$0xff] %vm2062, %v2800
        %2825 = vst.msk [vmem:[%s266 + $0x8] sm:$0xff] %vm2062, %v2801
        %2826 = vst.msk [vmem:[%s266 + $0x10] sm:$0xff] %vm2062, %v2802
        %2827 = vst.msk [vmem:[%s266 + $0x18] sm:$0xff] %vm2062, %v2803
        %2828 = vst.msk [vmem:[%s266 + $0x20] sm:$0xff] %vm2062, %v2804
        %2829 = vst.msk [vmem:[%s266 + $0x28] sm:$0xff] %vm2062, %v2805
        %2830 = vst.msk [vmem:[%s266 + $0x30] sm:$0xff] %vm2062, %v2806
        %2831 = vst.msk [vmem:[%s266 + $0x38] sm:$0xff] %vm2062, %v2807
        %2832 = vst.msk [vmem:[%s266 + $0x40] sm:$0xff] %vm2062, %v2808
        %2833 = vst.msk [vmem:[%s266 + $0x48] sm:$0xff] %vm2062, %v2809
        %2834 = vst.msk [vmem:[%s266 + $0x50] sm:$0xff] %vm2062, %v2810
        %2835 = vst.msk [vmem:[%s266 + $0x58] sm:$0xff] %vm2062, %v2811
        %2836 = vst.msk [vmem:[%s266 + $0x60] sm:$0xff] %vm2062, %v2812
        %2837 = vst.msk [vmem:[%s266 + $0x68] sm:$0xff] %vm2062, %v2813
        %2838 = vst.msk [vmem:[%s266 + $0x70] sm:$0xff] %vm2062, %v2814
        %2839 = vst.msk [vmem:[%s266 + $0x78] sm:$0xff] %vm2062, %v2815
        %2840 = vst.msk [vmem:[%s266 + $0x80] sm:$0xff] %vm2062, %v2816
        %2841 = vst.msk [vmem:[%s266 + $0x88] sm:$0xff] %vm2062, %v2817
        %2842 = vst.msk [vmem:[%s266 + $0x90] sm:$0xff] %vm2062, %v2818
        %2843 = vst.msk [vmem:[%s266 + $0x98] sm:$0xff] %vm2062, %v2819
        %2844 = vst.msk [vmem:[%s266 + $0xa0] sm:$0xff] %vm2062, %v2820
        %2845 = vst.msk [vmem:[%s266 + $0xa8] sm:$0xff] %vm2062, %v2821
        %2846 = vst.msk [vmem:[%s266 + $0xb0] sm:$0xff] %vm2062, %v2822
        %vm2847 = vcmask 324608
        %2848 = vst.msk [vmem:[%s266 + $0xb8] sm:$0x3f] %vm2847, %v2823
        %p2849 = scmp.lt.s32.totalorder %s18, 1
        %s2850 = scalar_select %p2849, %s18, 1
        %s2851 = smul.addr %s2850, 24
        %s2852 = smul.addr %s2851, 8
        %s2853 = scalar_lea.vmem %s6, %s2852
        // Predicated region
        $region49: #{mnet_forward.6} parent=43 // pred_check
          %p2854 = pneg %p167
        $region50: #{mnet_forward.6} parent=43 // pred_check_branch
          %2856 = sbr.rel (%p2854) target = $region52
        $region51: #{mnet_forward.6} parent=43 // pred_region
          _
        $region52: #{mnet_forward.6} parent=43 // pred_fallthru
          _
      $region44: #{mnet_forward.6} parent=5 // pred_fallthru
        _
      %p2857 = scmp.le.s32.totalorder 2, %s13
      // Predicated region
      $region53: #{mnet_forward.6} parent=5 // pred_check
        %p2858 = pneg %p2857
      $region54: #{mnet_forward.6} parent=5 // pred_check_branch
        %2860 = sbr.rel (%p2858) target = $region56
      $region55: #{mnet_forward.6} parent=5 // pred_region
        %s2861 = ssub.s32 %s13, 2
        // Predicated region
        $region57: #{mnet_forward.6} parent=55 // pred_check
          %p2862 = pneg %p173
        $region58: #{mnet_forward.6} parent=55 // pred_check_branch
          %2864 = sbr.rel (%p2862) target = $region60
        $region59: #{mnet_forward.6} parent=55 // pred_region
          %p2865 = scmp.lt.s32.totalorder %s19, 1
          %s2866 = scalar_select %p2865, %s19, 1
          %s2867 = smul.addr %s2866, 24
          %s2868 = smul.addr %s2867, 8
          %s2869 = scalar_lea.vmem %s6, %s2868
        $region60: #{mnet_forward.6} parent=55 // pred_fallthru
          _
      $region56: #{mnet_forward.6} parent=5 // pred_fallthru
        _
    $region6: #{mnet_forward.6} parent=1 // loop_footer
      %s17 = sadd.s32 1, %s13
    $region7: #{mnet_forward.6} parent=1 // loop_footer_branch
      %12 = sbr.rel target = $region3
    $region8: #{mnet_forward.6} parent=1 // loop_exit
      _
    %2870 = vsyncpa [#allocation3], 1
    %s2871 = scalar_lea.sflag [#allocation3], 1
    %2872 = vsyncpa %s2871, 1

// kernel: mnet_forward.8
$region0: #{mnet_forward.8}
  #allocation0 [shape = 'u32[]', space=smem, size = 0x4, offset = 0x4, fixed_abs, tag = 'smem constant byte address 0x4 - core index']
  #allocation1 [shape = 'u32[72,128]{1,0:T(1,128)}', space=vmem, size = 0x9000, scoped, tag = 'internal scratch']
  %s0 = inlined_call_operand.vmem [shape: f32[1782,96], index: 0, kind: input, shape index: {}]
  %s1 = inlined_call_operand.vmem [shape: f32[96,50], index: 1, kind: input, shape index: {}]
  %s2 = inlined_call_operand.vmem [shape: f32[1,50], index: 2, kind: input, shape index: {}]
  %s3 = inlined_call_operand.vmem [shape: f32[1,50], index: 3, kind: input, shape index: {}]
  %s4 = inlined_call_operand.vmem [shape: f32[1782,50], index: 4, kind: output, shape index: {}]
  %s5 = sld [smem:[#allocation0]]
  $region97: #{mnet_forward.8} parent=0
    _
  %s7 = ssub.s32 1, %s5
  %s8 = scalar_select 0, %s7, %s5
  $region1: #{mnet_forward.8} parent=0
    #allocation2 [shape = 'u8[524288]{0}', space=vmem, size = 0x80000, scoped, tag = 'output window, operand 0']
    loop: start=0, step=1, limit=6
    $region2: #{mnet_forward.8} parent=1 // loop_pre_header
      _
    $region3: #{mnet_forward.8} parent=1 // loop_header
      %s10 = sphi 0, %s14
      %p11 = scmp.ge.s32.totalorder %s10, 6
      %s20 = sphi 0, %s22
      %s23 = sphi 0, %s20
      %s24 = sphi 0, %s23
      %s40 = sphi 0, %s24
      %s44 = sphi 0, %s44
      %s46 = sphi 0, %s44
      %s47 = sphi 0, %s46
      %s61 = sphi 0, %s47
      %s65 = sphi 0, %s65
      %s67 = sphi 0, %s65
      %s68 = sphi 0, %s67
      %s82 = sphi 0, %s68
      %s86 = sphi 0, %s86
      %s88 = sphi 0, %s86
      %s89 = sphi 0, %s88
      %s103 = sphi 0, %s89
      %s109 = sphi 0, %s111
      %s112 = sphi 0, %s109
      %s113 = sphi 0, %s112
      %s129 = sphi 0, %s113
    $region4: #{mnet_forward.8} parent=1 // loop_header_branch
      %13 = sbr.rel (%p11) target = $region8
    $region5: #{mnet_forward.8} parent=1 // loop_body
      %s15 = ssub.s32 %s10, 1
      %s16 = ssub.s32 %s10, 2
      %s17 = sadd.s32 %s10, 1
      %s18 = ssub.s32 %s10, %s17
      %p19 = scmp.eq.s32.totalorder %s18, 0
      %s21 = sadd.s32 %s20, 1
      %s22 = scalar_select %p19, %s20, %s21
      %p25 = pneg %p19
      %p26 = scmp.eq.s32.totalorder %s10, 3
      %p27 = por %p25, %p26
      %p28 = scmp.ne.s32.totalorder %s20, %s23
      %p29 = scmp.eq.s32.totalorder %s10, 0
      %p30 = por %p28, %p29
      %p31 = scmp.ne.s32.totalorder %s20, %s23
      %p32 = scmp.eq.s32.totalorder %s15, 3
      %p33 = por %p31, %p32
      %p34 = scmp.ne.s32.totalorder %s23, %s24
      %p35 = scmp.eq.s32.totalorder %s15, 0
      %p36 = por %p34, %p35
      %p37 = scmp.ne.s32.totalorder %s23, %s24
      %p38 = scmp.eq.s32.totalorder %s16, 3
      %p39 = por %p37, %p38
      %p41 = scmp.ne.s32.totalorder %s24, %s40
      %p42 = scmp.eq.s32.totalorder %s16, 0
      %p43 = por %p41, %p42
      %s45 = sadd.s32 %s44, 1
      %p48 = scmp.eq.s32.totalorder %s10, 3
      %p49 = scmp.ne.s32.totalorder %s44, %s46
      %p50 = scmp.eq.s32.totalorder %s10, 0
      %p51 = por %p49, %p50
      %p52 = scmp.ne.s32.totalorder %s44, %s46
      %p53 = scmp.eq.s32.totalorder %s15, 3
      %p54 = por %p52, %p53
      %p55 = scmp.ne.s32.totalorder %s46, %s47
      %p56 = scmp.eq.s32.totalorder %s15, 0
      %p57 = por %p55, %p56
      %p58 = scmp.ne.s32.totalorder %s46, %s47
      %p59 = scmp.eq.s32.totalorder %s16, 3
      %p60 = por %p58, %p59
      %p62 = scmp.ne.s32.totalorder %s47, %s61
      %p63 = scmp.eq.s32.totalorder %s16, 0
      %p64 = por %p62, %p63
      %s66 = sadd.s32 %s65, 1
      %p69 = scmp.eq.s32.totalorder %s10, 3
      %p70 = scmp.ne.s32.totalorder %s65, %s67
      %p71 = scmp.eq.s32.totalorder %s10, 0
      %p72 = por %p70, %p71
      %p73 = scmp.ne.s32.totalorder %s65, %s67
      %p74 = scmp.eq.s32.totalorder %s15, 3
      %p75 = por %p73, %p74
      %p76 = scmp.ne.s32.totalorder %s67, %s68
      %p77 = scmp.eq.s32.totalorder %s15, 0
      %p78 = por %p76, %p77
      %p79 = scmp.ne.s32.totalorder %s67, %s68
      %p80 = scmp.eq.s32.totalorder %s16, 3
      %p81 = por %p79, %p80
      %p83 = scmp.ne.s32.totalorder %s68, %s82
      %p84 = scmp.eq.s32.totalorder %s16, 0
      %p85 = por %p83, %p84
      %s87 = sadd.s32 %s86, 1
      %p90 = scmp.eq.s32.totalorder %s10, 3
      %p91 = scmp.ne.s32.totalorder %s86, %s88
      %p92 = scmp.eq.s32.totalorder %s10, 0
      %p93 = por %p91, %p92
      %p94 = scmp.ne.s32.totalorder %s86, %s88
      %p95 = scmp.eq.s32.totalorder %s15, 3
      %p96 = por %p94, %p95
      %p97 = scmp.ne.s32.totalorder %s88, %s89
      %p98 = scmp.eq.s32.totalorder %s15, 0
      %p99 = por %p97, %p98
      %p100 = scmp.ne.s32.totalorder %s88, %s89
      %p101 = scmp.eq.s32.totalorder %s16, 3
      %p102 = por %p100, %p101
      %p104 = scmp.ne.s32.totalorder %s89, %s103
      %p105 = scmp.eq.s32.totalorder %s16, 0
      %p106 = por %p104, %p105
      %s107 = ssub.s32 %s10, %s17
      %p108 = scmp.eq.s32.totalorder %s107, 0
      %s110 = sadd.s32 %s109, 1
      %s111 = scalar_select %p108, %s109, %s110
      %p114 = pneg %p108
      %p115 = scmp.eq.s32.totalorder %s10, 3
      %p116 = por %p114, %p115
      %p117 = scmp.ne.s32.totalorder %s109, %s112
      %p118 = scmp.eq.s32.totalorder %s10, 0
      %p119 = por %p117, %p118
      %p120 = scmp.ne.s32.totalorder %s109, %s112
      %p121 = scmp.eq.s32.totalorder %s15, 3
      %p122 = por %p120, %p121
      %p123 = scmp.ne.s32.totalorder %s112, %s113
      %p124 = scmp.eq.s32.totalorder %s15, 0
      %p125 = por %p123, %p124
      %p126 = scmp.ne.s32.totalorder %s112, %s113
      %p127 = scmp.eq.s32.totalorder %s16, 3
      %p128 = por %p126, %p127
      %p130 = scmp.ne.s32.totalorder %s113, %s129
      %p131 = scmp.eq.s32.totalorder %s16, 0
      %p132 = por %p130, %p131
      %p133 = scmp.le.s32.totalorder 1, %s10
      %p134 = scmp.lt.s32.totalorder %s10, 5
      %p135 = pnand %p133, %p134
      %p136 = pneg %p135
      // Predicated region
      $region9: #{mnet_forward.8} parent=5 // pred_check
        _
      $region10: #{mnet_forward.8} parent=5 // pred_check_branch
        %138 = sbr.rel (%p135) target = $region12
      $region11: #{mnet_forward.8} parent=5 // pred_region
        %s139 = ssub.s32 %s10, 1
        // Predicated region
        $region13: #{mnet_forward.8} parent=11 // pred_check
          %p140 = pneg %p57
        $region14: #{mnet_forward.8} parent=11 // pred_check_branch
          %142 = sbr.rel (%p140) target = $region16
        $region15: #{mnet_forward.8} parent=11 // pred_region
          _
        $region16: #{mnet_forward.8} parent=11 // pred_fallthru
          _
        // Predicated region
        $region17: #{mnet_forward.8} parent=11 // pred_check
          %p143 = pneg %p78
        $region18: #{mnet_forward.8} parent=11 // pred_check_branch
          %145 = sbr.rel (%p143) target = $region20
        $region19: #{mnet_forward.8} parent=11 // pred_region
          _
        $region20: #{mnet_forward.8} parent=11 // pred_fallthru
          _
        // Predicated region
        $region21: #{mnet_forward.8} parent=11 // pred_check
          %p146 = pneg %p99
        $region22: #{mnet_forward.8} parent=11 // pred_check_branch
          %148 = sbr.rel (%p146) target = $region24
        $region23: #{mnet_forward.8} parent=11 // pred_region
          _
        $region24: #{mnet_forward.8} parent=11 // pred_fallthru
          _
      $region12: #{mnet_forward.8} parent=5 // pred_fallthru
        _
      %p149 = scmp.lt.s32.totalorder %s10, 4
      // Predicated region
      $region25: #{mnet_forward.8} parent=5 // pred_check
        %p150 = pneg %p149
      $region26: #{mnet_forward.8} parent=5 // pred_check_branch
        %152 = sbr.rel (%p150) target = $region28
      $region27: #{mnet_forward.8} parent=5 // pred_region
        // Predicated region
        $region29: #{mnet_forward.8} parent=27 // pred_check
          %p153 = pneg %p30
        $region30: #{mnet_forward.8} parent=27 // pred_check_branch
          %155 = sbr.rel (%p153) target = $region32
        $region31: #{mnet_forward.8} parent=27 // pred_region
          %s156 = smul.u32 64, %s10
          %s157 = ssub.s32 223, %s156
          %p158 = scmp.lt.s32.totalorder %s157, 64
          %s159 = scalar_select %p158, %s157, 64
          %s160 = smul.u32 8, %s159
          %p161 = scmp.lt.s32.totalorder %s156, 222
          %s162 = scalar_select %p161, %s156, 222
          %s163 = smul.addr %s162, 8
          %s164 = scalar_lea.vmem %s0, %s163
          %s165 = smul.u32 64, %s10
          %s166 = ssub.s32 223, %s165
          %p167 = scmp.lt.s32.totalorder %s166, 64
          %s168 = scalar_select %p167, %s166, 64
          %s169 = smul.u32 8, %s168
        $region32: #{mnet_forward.8} parent=27 // pred_fallthru
          _
      $region28: #{mnet_forward.8} parent=5 // pred_fallthru
        _
      %p170 = scmp.le.s32.totalorder 1, %s10
      %p171 = scmp.lt.s32.totalorder %s10, 5
      %p172 = pnand %p170, %p171
      %p173 = pneg %p172
      // Predicated region
      $region33: #{mnet_forward.8} parent=5 // pred_check
        _
      $region34: #{mnet_forward.8} parent=5 // pred_check_branch
        %175 = sbr.rel (%p172) target = $region36
      $region35: #{mnet_forward.8} parent=5 // pred_region
        %s176 = ssub.s32 %s10, 1
        %s177 = smul.u32 64, %s15
        %s178 = ssub.s32 223, %s177
        %p179 = scmp.lt.s32.totalorder %s178, 64
        %s180 = scalar_select %p179, %s178, 64
        %s181 = smul.u32 8, %s180
        %p182 = scmp.lt.s32.totalorder %s177, 222
        %s183 = scalar_select %p182, %s177, 222
        %s184 = smul.addr %s183, 8
        %s185 = scalar_lea.vmem %s0, %s184
        %p186 = pneg %p36
        %p187 = pneg %p33
        %p188 = pneg %p57
        %p189 = pneg %p54
        %p190 = pneg %p78
        %p191 = pneg %p75
        %p192 = pneg %p99
        %p193 = pneg %p96
        %p194 = pneg %p125
        %p195 = pneg %p122
        %s196 = sand.u32 %s112, 1
        %s197 = sand.u32 %s112, 1
        %s198 = smul.addr %s197, 512
        %s199 = scalar_lea.vmem [#allocation2], %s198
        %s200 = smul.u32 64, %s15
        %s201 = ssub.s32 223, %s200
        %p202 = scmp.lt.s32.totalorder %s201, 64
        %s203 = scalar_select %p202, %s201, 64
        %s204 = smul.u32 8, %s203
        %p205 = scmp.lt.s32.totalorder %s200, 222
        %s206 = scalar_select %p205, %s200, 222
        %s207 = smul.addr %s206, 8
        %s208 = scalar_lea.vmem %s0, %s207
        %s209 = smul.u32 64, %s15
        %s210 = ssub.s32 223, %s209
        %p211 = scmp.lt.s32.totalorder %s210, 64
        %s212 = scalar_select %p211, %s210, 64
        %s213 = smul.u32 8, %s212
        %s214 = smul.u32 64, %s15
        %s215 = ssub.s32 223, %s214
        %p216 = scmp.lt.s32.totalorder %s215, 64
        %s217 = scalar_select %p216, %s215, 64
        %s218 = smul.u32 8, %s217
        %v219 = vld [vmem:[%s208] sm:$0xff]
        %v220 = vld [vmem:[%s208 + $0x8] sm:$0xff]
        %v221 = vld [vmem:[%s208 + $0x10] sm:$0xff]
        %v222 = vld [vmem:[%s208 + $0x18] sm:$0xff]
        %v223 = vld [vmem:[%s208 + $0x20] sm:$0xff]
        %v224 = vld [vmem:[%s208 + $0x28] sm:$0xff]
        %v225 = vld [vmem:[%s208 + $0x30] sm:$0xff]
        %v226 = vld [vmem:[%s208 + $0x38] sm:$0xff]
        %v227 = vld [vmem:[%s208 + $0x40] sm:$0xff]
        %v228 = vld [vmem:[%s208 + $0x48] sm:$0xff]
        %v229 = vld [vmem:[%s208 + $0x50] sm:$0xff]
        %v230 = vld [vmem:[%s208 + $0x58] sm:$0xff]
        %v231 = vld [vmem:[%s208 + $0x60] sm:$0xff]
        %v232 = vld [vmem:[%s208 + $0x68] sm:$0xff]
        %v233 = vld [vmem:[%s208 + $0x70] sm:$0xff]
        %v234 = vld [vmem:[%s208 + $0x78] sm:$0xff]
        %v235 = vld [vmem:[%s208 + $0x80] sm:$0xff]
        %v236 = vld [vmem:[%s208 + $0x88] sm:$0xff]
        %v237 = vld [vmem:[%s208 + $0x90] sm:$0xff]
        %v238 = vld [vmem:[%s208 + $0x98] sm:$0xff]
        %v239 = vld [vmem:[%s208 + $0xa0] sm:$0xff]
        %v240 = vld [vmem:[%s208 + $0xa8] sm:$0xff]
        %v241 = vld [vmem:[%s208 + $0xb0] sm:$0xff]
        %v242 = vld [vmem:[%s208 + $0xb8] sm:$0xff]
        %v243 = vld [vmem:[%s208 + $0xc0] sm:$0xff]
        %v244 = vld [vmem:[%s208 + $0xc8] sm:$0xff]
        %v245 = vld [vmem:[%s208 + $0xd0] sm:$0xff]
        %v246 = vld [vmem:[%s208 + $0xd8] sm:$0xff]
        %v247 = vld [vmem:[%s208 + $0xe0] sm:$0xff]
        %v248 = vld [vmem:[%s208 + $0xe8] sm:$0xff]
        %v249 = vld [vmem:[%s208 + $0xf0] sm:$0xff]
        %v250 = vld [vmem:[%s208 + $0xf8] sm:$0xff]
        %v251 = vld [vmem:[%s208 + $0x100] sm:$0xff]
        %v252 = vld [vmem:[%s208 + $0x108] sm:$0xff]
        %v253 = vld [vmem:[%s208 + $0x110] sm:$0xff]
        %v254 = vld [vmem:[%s208 + $0x118] sm:$0xff]
        %v255 = vld [vmem:[%s208 + $0x120] sm:$0xff]
        %v256 = vld [vmem:[%s208 + $0x128] sm:$0xff]
        %v257 = vld [vmem:[%s208 + $0x130] sm:$0xff]
        %v258 = vld [vmem:[%s208 + $0x138] sm:$0xff]
        %v259 = vld [vmem:[%s208 + $0x140] sm:$0xff]
        %v260 = vld [vmem:[%s208 + $0x148] sm:$0xff]
        %v261 = vld [vmem:[%s208 + $0x150] sm:$0xff]
        %v262 = vld [vmem:[%s208 + $0x158] sm:$0xff]
        %v263 = vld [vmem:[%s208 + $0x160] sm:$0xff]
        %v264 = vld [vmem:[%s208 + $0x168] sm:$0xff]
        %v265 = vld [vmem:[%s208 + $0x170] sm:$0xff]
        %v266 = vld [vmem:[%s208 + $0x178] sm:$0xff]
        %v267 = vld [vmem:[%s208 + $0x180] sm:$0xff]
        %v268 = vld [vmem:[%s208 + $0x188] sm:$0xff]
        %v269 = vld [vmem:[%s208 + $0x190] sm:$0xff]
        %v270 = vld [vmem:[%s208 + $0x198] sm:$0xff]
        %v271 = vld [vmem:[%s208 + $0x1a0] sm:$0xff]
        %v272 = vld [vmem:[%s208 + $0x1a8] sm:$0xff]
        %v273 = vld [vmem:[%s208 + $0x1b0] sm:$0xff]
        %v274 = vld [vmem:[%s208 + $0x1b8] sm:$0xff]
        %v275 = vld [vmem:[%s208 + $0x1c0] sm:$0xff]
        %v276 = vld [vmem:[%s208 + $0x1c8] sm:$0xff]
        %v277 = vld [vmem:[%s208 + $0x1d0] sm:$0xff]
        %v278 = vld [vmem:[%s208 + $0x1d8] sm:$0xff]
        %v279 = vld [vmem:[%s208 + $0x1e0] sm:$0xff]
        %v280 = vld [vmem:[%s208 + $0x1e8] sm:$0xff]
        %v281 = vld [vmem:[%s208 + $0x1f0] sm:$0xff]
        %v282 = vld [vmem:[%s208 + $0x1f8] sm:$0xff]
        %v283 = vld [vmem:[%s1] sm:$0xff]
        %v284 = vld [vmem:[%s1 + $0x8] sm:$0xff]
        %v285 = vld [vmem:[%s1 + $0x10] sm:$0xff]
        %v286 = vld [vmem:[%s1 + $0x18] sm:$0xff]
        %v287 = vld [vmem:[%s1 + $0x20] sm:$0xff]
        %v288 = vld [vmem:[%s1 + $0x28] sm:$0xff]
        %v289 = vld [vmem:[%s1 + $0x30] sm:$0xff]
        %v290 = vld [vmem:[%s1 + $0x38] sm:$0xff]
        %v291 = vld [vmem:[%s1 + $0x40] sm:$0xff]
        %v292 = vld [vmem:[%s1 + $0x48] sm:$0xff]
        %v293 = vld [vmem:[%s1 + $0x50] sm:$0xff]
        %v294 = vld [vmem:[%s1 + $0x58] sm:$0xff]
        %vm295 = vcmask 785408
        %v297 = vsel %vm295, %v219, 0
        %v300 = vsel %vm295, %v220, 0
        %v303 = vsel %vm295, %v221, 0
        %v306 = vsel %vm295, %v222, 0
        %v309 = vsel %vm295, %v223, 0
        %v312 = vsel %vm295, %v224, 0
        %v315 = vsel %vm295, %v225, 0
        %v318 = vsel %vm295, %v226, 0
        %v321 = vsel %vm295, %v227, 0
        %v324 = vsel %vm295, %v228, 0
        %v327 = vsel %vm295, %v229, 0
        %v330 = vsel %vm295, %v230, 0
        %v333 = vsel %vm295, %v231, 0
        %v336 = vsel %vm295, %v232, 0
        %v339 = vsel %vm295, %v233, 0
        %v342 = vsel %vm295, %v234, 0
        %v345 = vsel %vm295, %v235, 0
        %v348 = vsel %vm295, %v236, 0
        %v351 = vsel %vm295, %v237, 0
        %v354 = vsel %vm295, %v238, 0
        %v357 = vsel %vm295, %v239, 0
        %v360 = vsel %vm295, %v240, 0
        %v363 = vsel %vm295, %v241, 0
        %v366 = vsel %vm295, %v242, 0
        %v369 = vsel %vm295, %v243, 0
        %v372 = vsel %vm295, %v244, 0
        %v375 = vsel %vm295, %v245, 0
        %v378 = vsel %vm295, %v246, 0
        %v381 = vsel %vm295, %v247, 0
        %v384 = vsel %vm295, %v248, 0
        %v387 = vsel %vm295, %v249, 0
        %v390 = vsel %vm295, %v250, 0
        %v393 = vsel %vm295, %v251, 0
        %v396 = vsel %vm295, %v252, 0
        %v399 = vsel %vm295, %v253, 0
        %v402 = vsel %vm295, %v254, 0
        %v405 = vsel %vm295, %v255, 0
        %v408 = vsel %vm295, %v256, 0
        %v411 = vsel %vm295, %v257, 0
        %v414 = vsel %vm295, %v258, 0
        %v417 = vsel %vm295, %v259, 0
        %v420 = vsel %vm295, %v260, 0
        %v423 = vsel %vm295, %v261, 0
        %v426 = vsel %vm295, %v262, 0
        %v429 = vsel %vm295, %v263, 0
        %v432 = vsel %vm295, %v264, 0
        %v435 = vsel %vm295, %v265, 0
        %v438 = vsel %vm295, %v266, 0
        %v441 = vsel %vm295, %v267, 0
        %v444 = vsel %vm295, %v268, 0
        %v447 = vsel %vm295, %v269, 0
        %v450 = vsel %vm295, %v270, 0
        %v453 = vsel %vm295, %v271, 0
        %v456 = vsel %vm295, %v272, 0
        %v459 = vsel %vm295, %v273, 0
        %v462 = vsel %vm295, %v274, 0
        %v465 = vsel %vm295, %v275, 0
        %v468 = vsel %vm295, %v276, 0
        %v471 = vsel %vm295, %v277, 0
        %v474 = vsel %vm295, %v278, 0
        %v477 = vsel %vm295, %v279, 0
        %v480 = vsel %vm295, %v280, 0
        %v483 = vsel %vm295, %v281, 0
        %v486 = vsel %vm295, %v282, 0
        %488 = vmatpush.msra.mxu0 0.0
        %489 = vmatpush.msra.mxu0 0.0
        %490 = vmatpush.msra.mxu0 0.0
        %491 = vmatpush.msra.mxu0 0.0
        %492 = vmatpush.msra.mxu0 %v294
        %493 = vmatpush.msra.mxu0 %v293
        %494 = vmatpush.msra.mxu0 %v292
        %495 = vmatpush.msra.mxu0 %v291
        %496 = vmatpush.msra.mxu0 %v290
        %497 = vmatpush.msra.mxu0 %v289
        %498 = vmatpush.msra.mxu0 %v288
        %499 = vmatpush.msra.mxu0 %v287
        %500 = vmatpush.msra.mxu0 %v286
        %501 = vmatpush.msra.mxu0 %v285
        %502 = vmatpush.msra.mxu0 %v284
        %503 = vmatpush.msra.mxu0 %v283
        %504 = vmatmul.f32.gmra.mxu0 %v297
        %v505 = vpop.f32.mrf.mxu0
        %v506 = vadd.f32 0.0, %v505
        %507 = vmatmul.f32.gmra.mxu0 %v300
        %v508 = vpop.f32.mrf.mxu0
        %v509 = vadd.f32 0.0, %v508
        %510 = vmatmul.f32.gmra.mxu0 %v303
        %v511 = vpop.f32.mrf.mxu0
        %v512 = vadd.f32 0.0, %v511
        %513 = vmatmul.f32.gmra.mxu0 %v306
        %v514 = vpop.f32.mrf.mxu0
        %v515 = vadd.f32 0.0, %v514
        %516 = vmatmul.f32.gmra.mxu0 %v309
        %v517 = vpop.f32.mrf.mxu0
        %v518 = vadd.f32 0.0, %v517
        %519 = vmatmul.f32.gmra.mxu0 %v312
        %v520 = vpop.f32.mrf.mxu0
        %v521 = vadd.f32 0.0, %v520
        %522 = vmatmul.f32.gmra.mxu0 %v315
        %v523 = vpop.f32.mrf.mxu0
        %v524 = vadd.f32 0.0, %v523
        %525 = vmatmul.f32.gmra.mxu0 %v318
        %v526 = vpop.f32.mrf.mxu0
        %v527 = vadd.f32 0.0, %v526
        %528 = vmatmul.f32.gmra.mxu0 %v321
        %v529 = vpop.f32.mrf.mxu0
        %v530 = vadd.f32 0.0, %v529
        %531 = vmatmul.f32.gmra.mxu0 %v324
        %v532 = vpop.f32.mrf.mxu0
        %v533 = vadd.f32 0.0, %v532
        %534 = vmatmul.f32.gmra.mxu0 %v327
        %v535 = vpop.f32.mrf.mxu0
        %v536 = vadd.f32 0.0, %v535
        %537 = vmatmul.f32.gmra.mxu0 %v330
        %v538 = vpop.f32.mrf.mxu0
        %v539 = vadd.f32 0.0, %v538
        %540 = vmatmul.f32.gmra.mxu0 %v333
        %v541 = vpop.f32.mrf.mxu0
        %v542 = vadd.f32 0.0, %v541
        %543 = vmatmul.f32.gmra.mxu0 %v336
        %v544 = vpop.f32.mrf.mxu0
        %v545 = vadd.f32 0.0, %v544
        %546 = vmatmul.f32.gmra.mxu0 %v339
        %v547 = vpop.f32.mrf.mxu0
        %v548 = vadd.f32 0.0, %v547
        %549 = vmatmul.f32.gmra.mxu0 %v342
        %v550 = vpop.f32.mrf.mxu0
        %v551 = vadd.f32 0.0, %v550
        %552 = vmatmul.f32.gmra.mxu0 %v345
        %v553 = vpop.f32.mrf.mxu0
        %v554 = vadd.f32 0.0, %v553
        %555 = vmatmul.f32.gmra.mxu0 %v348
        %v556 = vpop.f32.mrf.mxu0
        %v557 = vadd.f32 0.0, %v556
        %558 = vmatmul.f32.gmra.mxu0 %v351
        %v559 = vpop.f32.mrf.mxu0
        %v560 = vadd.f32 0.0, %v559
        %561 = vmatmul.f32.gmra.mxu0 %v354
        %v562 = vpop.f32.mrf.mxu0
        %v563 = vadd.f32 0.0, %v562
        %564 = vmatmul.f32.gmra.mxu0 %v357
        %v565 = vpop.f32.mrf.mxu0
        %v566 = vadd.f32 0.0, %v565
        %567 = vmatmul.f32.gmra.mxu0 %v360
        %v568 = vpop.f32.mrf.mxu0
        %v569 = vadd.f32 0.0, %v568
        %570 = vmatmul.f32.gmra.mxu0 %v363
        %v571 = vpop.f32.mrf.mxu0
        %v572 = vadd.f32 0.0, %v571
        %573 = vmatmul.f32.gmra.mxu0 %v366
        %v574 = vpop.f32.mrf.mxu0
        %v575 = vadd.f32 0.0, %v574
        %576 = vmatmul.f32.gmra.mxu0 %v369
        %v577 = vpop.f32.mrf.mxu0
        %v578 = vadd.f32 0.0, %v577
        %579 = vmatmul.f32.gmra.mxu0 %v372
        %v580 = vpop.f32.mrf.mxu0
        %v581 = vadd.f32 0.0, %v580
        %582 = vmatmul.f32.gmra.mxu0 %v375
        %v583 = vpop.f32.mrf.mxu0
        %v584 = vadd.f32 0.0, %v583
        %585 = vmatmul.f32.gmra.mxu0 %v378
        %v586 = vpop.f32.mrf.mxu0
        %v587 = vadd.f32 0.0, %v586
        %588 = vmatmul.f32.gmra.mxu0 %v381
        %v589 = vpop.f32.mrf.mxu0
        %v590 = vadd.f32 0.0, %v589
        %591 = vmatmul.f32.gmra.mxu0 %v384
        %v592 = vpop.f32.mrf.mxu0
        %v593 = vadd.f32 0.0, %v592
        %594 = vmatmul.f32.gmra.mxu0 %v387
        %v595 = vpop.f32.mrf.mxu0
        %v596 = vadd.f32 0.0, %v595
        %597 = vmatmul.f32.gmra.mxu0 %v390
        %v598 = vpop.f32.mrf.mxu0
        %v599 = vadd.f32 0.0, %v598
        %600 = vmatmul.f32.gmra.mxu0 %v393
        %v601 = vpop.f32.mrf.mxu0
        %v602 = vadd.f32 0.0, %v601
        %603 = vmatmul.f32.gmra.mxu0 %v396
        %v604 = vpop.f32.mrf.mxu0
        %v605 = vadd.f32 0.0, %v604
        %606 = vmatmul.f32.gmra.mxu0 %v399
        %v607 = vpop.f32.mrf.mxu0
        %v608 = vadd.f32 0.0, %v607
        %609 = vmatmul.f32.gmra.mxu0 %v402
        %v610 = vpop.f32.mrf.mxu0
        %v611 = vadd.f32 0.0, %v610
        %612 = vmatmul.f32.gmra.mxu0 %v405
        %v613 = vpop.f32.mrf.mxu0
        %v614 = vadd.f32 0.0, %v613
        %615 = vmatmul.f32.gmra.mxu0 %v408
        %v616 = vpop.f32.mrf.mxu0
        %v617 = vadd.f32 0.0, %v616
        %618 = vmatmul.f32.gmra.mxu0 %v411
        %v619 = vpop.f32.mrf.mxu0
        %v620 = vadd.f32 0.0, %v619
        %621 = vmatmul.f32.gmra.mxu0 %v414
        %v622 = vpop.f32.mrf.mxu0
        %v623 = vadd.f32 0.0, %v622
        %624 = vmatmul.f32.gmra.mxu0 %v417
        %v625 = vpop.f32.mrf.mxu0
        %v626 = vadd.f32 0.0, %v625
        %627 = vmatmul.f32.gmra.mxu0 %v420
        %v628 = vpop.f32.mrf.mxu0
        %v629 = vadd.f32 0.0, %v628
        %630 = vmatmul.f32.gmra.mxu0 %v423
        %v631 = vpop.f32.mrf.mxu0
        %v632 = vadd.f32 0.0, %v631
        %633 = vmatmul.f32.gmra.mxu0 %v426
        %v634 = vpop.f32.mrf.mxu0
        %v635 = vadd.f32 0.0, %v634
        %636 = vmatmul.f32.gmra.mxu0 %v429
        %v637 = vpop.f32.mrf.mxu0
        %v638 = vadd.f32 0.0, %v637
        %639 = vmatmul.f32.gmra.mxu0 %v432
        %v640 = vpop.f32.mrf.mxu0
        %v641 = vadd.f32 0.0, %v640
        %642 = vmatmul.f32.gmra.mxu0 %v435
        %v643 = vpop.f32.mrf.mxu0
        %v644 = vadd.f32 0.0, %v643
        %645 = vmatmul.f32.gmra.mxu0 %v438
        %v646 = vpop.f32.mrf.mxu0
        %v647 = vadd.f32 0.0, %v646
        %648 = vmatmul.f32.gmra.mxu0 %v441
        %v649 = vpop.f32.mrf.mxu0
        %v650 = vadd.f32 0.0, %v649
        %651 = vmatmul.f32.gmra.mxu0 %v444
        %v652 = vpop.f32.mrf.mxu0
        %v653 = vadd.f32 0.0, %v652
        %654 = vmatmul.f32.gmra.mxu0 %v447
        %v655 = vpop.f32.mrf.mxu0
        %v656 = vadd.f32 0.0, %v655
        %657 = vmatmul.f32.gmra.mxu0 %v450
        %v658 = vpop.f32.mrf.mxu0
        %v659 = vadd.f32 0.0, %v658
        %660 = vmatmul.f32.gmra.mxu0 %v453
        %v661 = vpop.f32.mrf.mxu0
        %v662 = vadd.f32 0.0, %v661
        %663 = vmatmul.f32.gmra.mxu0 %v456
        %v664 = vpop.f32.mrf.mxu0
        %v665 = vadd.f32 0.0, %v664
        %666 = vmatmul.f32.gmra.mxu0 %v459
        %v667 = vpop.f32.mrf.mxu0
        %v668 = vadd.f32 0.0, %v667
        %669 = vmatmul.f32.gmra.mxu0 %v462
        %v670 = vpop.f32.mrf.mxu0
        %v671 = vadd.f32 0.0, %v670
        %672 = vmatmul.f32.gmra.mxu0 %v465
        %v673 = vpop.f32.mrf.mxu0
        %v674 = vadd.f32 0.0, %v673
        %675 = vmatmul.f32.gmra.mxu0 %v468
        %v676 = vpop.f32.mrf.mxu0
        %v677 = vadd.f32 0.0, %v676
        %678 = vmatmul.f32.gmra.mxu0 %v471
        %v679 = vpop.f32.mrf.mxu0
        %v680 = vadd.f32 0.0, %v679
        %681 = vmatmul.f32.gmra.mxu0 %v474
        %v682 = vpop.f32.mrf.mxu0
        %v683 = vadd.f32 0.0, %v682
        %684 = vmatmul.f32.gmra.mxu0 %v477
        %v685 = vpop.f32.mrf.mxu0
        %v686 = vadd.f32 0.0, %v685
        %687 = vmatmul.f32.gmra.mxu0 %v480
        %v688 = vpop.f32.mrf.mxu0
        %v689 = vadd.f32 0.0, %v688
        %690 = vmatmul.f32.gmra.mxu0 %v483
        %v691 = vpop.f32.mrf.mxu0
        %v692 = vadd.f32 0.0, %v691
        %693 = vmatmul.f32.gmra.mxu0 %v486
        %v694 = vpop.f32.mrf.mxu0
        %v695 = vadd.f32 0.0, %v694
        %696 = vdwg.mxu0
        %v697 = vld [vmem:[%s2] sm:$0x1]
        %v699 = vperm.slane %v697, 0
        %v701 = vmul.f32 %v506, %v699
        %v702 = vmul.f32 %v509, %v699
        %v703 = vmul.f32 %v512, %v699
        %v704 = vmul.f32 %v515, %v699
        %v705 = vmul.f32 %v518, %v699
        %v706 = vmul.f32 %v521, %v699
        %v707 = vmul.f32 %v524, %v699
        %v708 = vmul.f32 %v527, %v699
        %v709 = vmul.f32 %v530, %v699
        %v710 = vmul.f32 %v533, %v699
        %v711 = vmul.f32 %v536, %v699
        %v712 = vmul.f32 %v539, %v699
        %v713 = vmul.f32 %v542, %v699
        %v714 = vmul.f32 %v545, %v699
        %v715 = vmul.f32 %v548, %v699
        %v716 = vmul.f32 %v551, %v699
        %v717 = vmul.f32 %v554, %v699
        %v718 = vmul.f32 %v557, %v699
        %v719 = vmul.f32 %v560, %v699
        %v720 = vmul.f32 %v563, %v699
        %v721 = vmul.f32 %v566, %v699
        %v722 = vmul.f32 %v569, %v699
        %v723 = vmul.f32 %v572, %v699
        %v724 = vmul.f32 %v575, %v699
        %v725 = vmul.f32 %v578, %v699
        %v726 = vmul.f32 %v581, %v699
        %v727 = vmul.f32 %v584, %v699
        %v728 = vmul.f32 %v587, %v699
        %v729 = vmul.f32 %v590, %v699
        %v730 = vmul.f32 %v593, %v699
        %v731 = vmul.f32 %v596, %v699
        %v732 = vmul.f32 %v599, %v699
        %v733 = vmul.f32 %v602, %v699
        %v734 = vmul.f32 %v605, %v699
        %v735 = vmul.f32 %v608, %v699
        %v736 = vmul.f32 %v611, %v699
        %v737 = vmul.f32 %v614, %v699
        %v738 = vmul.f32 %v617, %v699
        %v739 = vmul.f32 %v620, %v699
        %v740 = vmul.f32 %v623, %v699
        %v741 = vmul.f32 %v626, %v699
        %v742 = vmul.f32 %v629, %v699
        %v743 = vmul.f32 %v632, %v699
        %v744 = vmul.f32 %v635, %v699
        %v745 = vmul.f32 %v638, %v699
        %v746 = vmul.f32 %v641, %v699
        %v747 = vmul.f32 %v644, %v699
        %v748 = vmul.f32 %v647, %v699
        %v749 = vmul.f32 %v650, %v699
        %v750 = vmul.f32 %v653, %v699
        %v751 = vmul.f32 %v656, %v699
        %v752 = vmul.f32 %v659, %v699
        %v753 = vmul.f32 %v662, %v699
        %v754 = vmul.f32 %v665, %v699
        %v755 = vmul.f32 %v668, %v699
        %v756 = vmul.f32 %v671, %v699
        %v757 = vmul.f32 %v674, %v699
        %v758 = vmul.f32 %v677, %v699
        %v759 = vmul.f32 %v680, %v699
        %v760 = vmul.f32 %v683, %v699
        %v761 = vmul.f32 %v686, %v699
        %v762 = vmul.f32 %v689, %v699
        %v763 = vmul.f32 %v692, %v699
        %v764 = vmul.f32 %v695, %v699
        %v765 = vld [vmem:[%s3] sm:$0x1]
        %v767 = vperm.slane %v765, 0
        %v769 = vadd.f32 %v701, %v767
        %v770 = vadd.f32 %v702, %v767
        %v771 = vadd.f32 %v703, %v767
        %v772 = vadd.f32 %v704, %v767
        %v773 = vadd.f32 %v705, %v767
        %v774 = vadd.f32 %v706, %v767
        %v775 = vadd.f32 %v707, %v767
        %v776 = vadd.f32 %v708, %v767
        %v777 = vadd.f32 %v709, %v767
        %v778 = vadd.f32 %v710, %v767
        %v779 = vadd.f32 %v711, %v767
        %v780 = vadd.f32 %v712, %v767
        %v781 = vadd.f32 %v713, %v767
        %v782 = vadd.f32 %v714, %v767
        %v783 = vadd.f32 %v715, %v767
        %v784 = vadd.f32 %v716, %v767
        %v785 = vadd.f32 %v717, %v767
        %v786 = vadd.f32 %v718, %v767
        %v787 = vadd.f32 %v719, %v767
        %v788 = vadd.f32 %v720, %v767
        %v789 = vadd.f32 %v721, %v767
        %v790 = vadd.f32 %v722, %v767
        %v791 = vadd.f32 %v723, %v767
        %v792 = vadd.f32 %v724, %v767
        %v793 = vadd.f32 %v725, %v767
        %v794 = vadd.f32 %v726, %v767
        %v795 = vadd.f32 %v727, %v767
        %v796 = vadd.f32 %v728, %v767
        %v797 = vadd.f32 %v729, %v767
        %v798 = vadd.f32 %v730, %v767
        %v799 = vadd.f32 %v731, %v767
        %v800 = vadd.f32 %v732, %v767
        %v801 = vadd.f32 %v733, %v767
        %v802 = vadd.f32 %v734, %v767
        %v803 = vadd.f32 %v735, %v767
        %v804 = vadd.f32 %v736, %v767
        %v805 = vadd.f32 %v737, %v767
        %v806 = vadd.f32 %v738, %v767
        %v807 = vadd.f32 %v739, %v767
        %v808 = vadd.f32 %v740, %v767
        %v809 = vadd.f32 %v741, %v767
        %v810 = vadd.f32 %v742, %v767
        %v811 = vadd.f32 %v743, %v767
        %v812 = vadd.f32 %v744, %v767
        %v813 = vadd.f32 %v745, %v767
        %v814 = vadd.f32 %v746, %v767
        %v815 = vadd.f32 %v747, %v767
        %v816 = vadd.f32 %v748, %v767
        %v817 = vadd.f32 %v749, %v767
        %v818 = vadd.f32 %v750, %v767
        %v819 = vadd.f32 %v751, %v767
        %v820 = vadd.f32 %v752, %v767
        %v821 = vadd.f32 %v753, %v767
        %v822 = vadd.f32 %v754, %v767
        %v823 = vadd.f32 %v755, %v767
        %v824 = vadd.f32 %v756, %v767
        %v825 = vadd.f32 %v757, %v767
        %v826 = vadd.f32 %v758, %v767
        %v827 = vadd.f32 %v759, %v767
        %v828 = vadd.f32 %v760, %v767
        %v829 = vadd.f32 %v761, %v767
        %v830 = vadd.f32 %v762, %v767
        %v831 = vadd.f32 %v763, %v767
        %v832 = vadd.f32 %v764, %v767
        %vm833 = vcmask 408576
        %834 = vst.msk [vmem:[%s199] sm:$0xff] %vm833, %v769
        %835 = vst.msk [vmem:[%s199 + $0x8] sm:$0xff] %vm833, %v770
        %836 = vst.msk [vmem:[%s199 + $0x10] sm:$0xff] %vm833, %v771
        %837 = vst.msk [vmem:[%s199 + $0x18] sm:$0xff] %vm833, %v772
        %838 = vst.msk [vmem:[%s199 + $0x20] sm:$0xff] %vm833, %v773
        %839 = vst.msk [vmem:[%s199 + $0x28] sm:$0xff] %vm833, %v774
        %840 = vst.msk [vmem:[%s199 + $0x30] sm:$0xff] %vm833, %v775
        %841 = vst.msk [vmem:[%s199 + $0x38] sm:$0xff] %vm833, %v776
        %842 = vst.msk [vmem:[%s199 + $0x40] sm:$0xff] %vm833, %v777
        %843 = vst.msk [vmem:[%s199 + $0x48] sm:$0xff] %vm833, %v778
        %844 = vst.msk [vmem:[%s199 + $0x50] sm:$0xff] %vm833, %v779
        %845 = vst.msk [vmem:[%s199 + $0x58] sm:$0xff] %vm833, %v780
        %846 = vst.msk [vmem:[%s199 + $0x60] sm:$0xff] %vm833, %v781
        %847 = vst.msk [vmem:[%s199 + $0x68] sm:$0xff] %vm833, %v782
        %848 = vst.msk [vmem:[%s199 + $0x70] sm:$0xff] %vm833, %v783
        %849 = vst.msk [vmem:[%s199 + $0x78] sm:$0xff] %vm833, %v784
        %850 = vst.msk [vmem:[%s199 + $0x80] sm:$0xff] %vm833, %v785
        %851 = vst.msk [vmem:[%s199 + $0x88] sm:$0xff] %vm833, %v786
        %852 = vst.msk [vmem:[%s199 + $0x90] sm:$0xff] %vm833, %v787
        %853 = vst.msk [vmem:[%s199 + $0x98] sm:$0xff] %vm833, %v788
        %854 = vst.msk [vmem:[%s199 + $0xa0] sm:$0xff] %vm833, %v789
        %855 = vst.msk [vmem:[%s199 + $0xa8] sm:$0xff] %vm833, %v790
        %856 = vst.msk [vmem:[%s199 + $0xb0] sm:$0xff] %vm833, %v791
        %857 = vst.msk [vmem:[%s199 + $0xb8] sm:$0xff] %vm833, %v792
        %858 = vst.msk [vmem:[%s199 + $0xc0] sm:$0xff] %vm833, %v793
        %859 = vst.msk [vmem:[%s199 + $0xc8] sm:$0xff] %vm833, %v794
        %860 = vst.msk [vmem:[%s199 + $0xd0] sm:$0xff] %vm833, %v795
        %861 = vst.msk [vmem:[%s199 + $0xd8] sm:$0xff] %vm833, %v796
        %862 = vst.msk [vmem:[%s199 + $0xe0] sm:$0xff] %vm833, %v797
        %863 = vst.msk [vmem:[%s199 + $0xe8] sm:$0xff] %vm833, %v798
        %864 = vst.msk [vmem:[%s199 + $0xf0] sm:$0xff] %vm833, %v799
        %865 = vst.msk [vmem:[%s199 + $0xf8] sm:$0xff] %vm833, %v800
        %866 = vst.msk [vmem:[%s199 + $0x100] sm:$0xff] %vm833, %v801
        %867 = vst.msk [vmem:[%s199 + $0x108] sm:$0xff] %vm833, %v802
        %868 = vst.msk [vmem:[%s199 + $0x110] sm:$0xff] %vm833, %v803
        %869 = vst.msk [vmem:[%s199 + $0x118] sm:$0xff] %vm833, %v804
        %870 = vst.msk [vmem:[%s199 + $0x120] sm:$0xff] %vm833, %v805
        %871 = vst.msk [vmem:[%s199 + $0x128] sm:$0xff] %vm833, %v806
        %872 = vst.msk [vmem:[%s199 + $0x130] sm:$0xff] %vm833, %v807
        %873 = vst.msk [vmem:[%s199 + $0x138] sm:$0xff] %vm833, %v808
        %874 = vst.msk [vmem:[%s199 + $0x140] sm:$0xff] %vm833, %v809
        %875 = vst.msk [vmem:[%s199 + $0x148] sm:$0xff] %vm833, %v810
        %876 = vst.msk [vmem:[%s199 + $0x150] sm:$0xff] %vm833, %v811
        %877 = vst.msk [vmem:[%s199 + $0x158] sm:$0xff] %vm833, %v812
        %878 = vst.msk [vmem:[%s199 + $0x160] sm:$0xff] %vm833, %v813
        %879 = vst.msk [vmem:[%s199 + $0x168] sm:$0xff] %vm833, %v814
        %880 = vst.msk [vmem:[%s199 + $0x170] sm:$0xff] %vm833, %v815
        %881 = vst.msk [vmem:[%s199 + $0x178] sm:$0xff] %vm833, %v816
        %882 = vst.msk [vmem:[%s199 + $0x180] sm:$0xff] %vm833, %v817
        %883 = vst.msk [vmem:[%s199 + $0x188] sm:$0xff] %vm833, %v818
        %884 = vst.msk [vmem:[%s199 + $0x190] sm:$0xff] %vm833, %v819
        %885 = vst.msk [vmem:[%s199 + $0x198] sm:$0xff] %vm833, %v820
        %886 = vst.msk [vmem:[%s199 + $0x1a0] sm:$0xff] %vm833, %v821
        %887 = vst.msk [vmem:[%s199 + $0x1a8] sm:$0xff] %vm833, %v822
        %888 = vst.msk [vmem:[%s199 + $0x1b0] sm:$0xff] %vm833, %v823
        %889 = vst.msk [vmem:[%s199 + $0x1b8] sm:$0xff] %vm833, %v824
        %890 = vst.msk [vmem:[%s199 + $0x1c0] sm:$0xff] %vm833, %v825
        %891 = vst.msk [vmem:[%s199 + $0x1c8] sm:$0xff] %vm833, %v826
        %892 = vst.msk [vmem:[%s199 + $0x1d0] sm:$0xff] %vm833, %v827
        %893 = vst.msk [vmem:[%s199 + $0x1d8] sm:$0xff] %vm833, %v828
        %894 = vst.msk [vmem:[%s199 + $0x1e0] sm:$0xff] %vm833, %v829
        %895 = vst.msk [vmem:[%s199 + $0x1e8] sm:$0xff] %vm833, %v830
        %896 = vst.msk [vmem:[%s199 + $0x1f0] sm:$0xff] %vm833, %v831
        %897 = vst.msk [vmem:[%s199 + $0x1f8] sm:$0xff] %vm833, %v832
        %s898 = sand.u32 %s112, 1
        %s899 = sand.u32 %s112, 1
        %s900 = smul.addr %s899, 512
        %s901 = scalar_lea.vmem [#allocation2], %s900
        // Predicated region
        $region37: #{mnet_forward.8} parent=35 // pred_check
          %p902 = pneg %p122
        $region38: #{mnet_forward.8} parent=35 // pred_check_branch
          %904 = sbr.rel (%p902) target = $region40
        $region39: #{mnet_forward.8} parent=35 // pred_region
          %s905 = smul.u32 64, %s15
          %s906 = ssub.s32 223, %s905
          %p907 = scmp.lt.s32.totalorder %s906, 64
          %s908 = scalar_select %p907, %s906, 64
          %s909 = smul.u32 8, %s908
          %p910 = scmp.ne.s32.totalorder 0, %s909
          %s911 = smul.addr %s905, 8
          %s912 = scalar_lea.vmem %s4, %s911
          // Predicated region
          $region41: #{mnet_forward.8} parent=39 // pred_check
            %p913 = pneg %p910
          $region42: #{mnet_forward.8} parent=39 // pred_check_branch
            %915 = sbr.rel (%p913) target = $region44
          $region43: #{mnet_forward.8} parent=39 // pred_region
            // Predicated region
            $region45: #{mnet_forward.8} parent=43 // pred_check
              _
            $region46: #{mnet_forward.8} parent=43 // pred_check_branch
              %917 = sbr.rel (0) target = $region48
            $region47: #{mnet_forward.8} parent=43 // pred_region
              // Predicated region
              $region67: #{mnet_forward.8} parent=47 // pred_check
                _
              $region68: #{mnet_forward.8} parent=47 // pred_check_branch
                %1029 = sbr.rel (0) target = $region70
              $region69: #{mnet_forward.8} parent=47 // pred_region
                %s1030 = sshrl.u32 %s908, 5
                // While loop
                $region71: #{mnet_forward.8} parent=69 // loop_pre_header
                  _
                $region72: #{mnet_forward.8} parent=69 // loop_header
                  %s1032 = sphi 0, %s1034
                  %p1033 = scmp.ge.s32.totalorder %s1032, %s1030
                  %s1037 = sphi 0, %s1106
                  %s1038 = sphi %s901, %s1109
                  %s1039 = sphi %s912, %s1110
                $region73: #{mnet_forward.8} parent=69 // loop_header_branch
                  %1036 = sbr.rel (%p1033) target = $region77
                $region74: #{mnet_forward.8} parent=69 // loop_body
                  %v1040 = vld [vmem:[%s1038] sm:$0xff]
                  %1041 = vst [vmem:[%s1039] sm:$0xff] %v1040
                  %v1042 = vld [vmem:[%s1038 + $0x8] sm:$0xff]
                  %1043 = vst [vmem:[%s1039 + $0x8] sm:$0xff] %v1042
                  %v1044 = vld [vmem:[%s1038 + $0x10] sm:$0xff]
                  %1045 = vst [vmem:[%s1039 + $0x10] sm:$0xff] %v1044
                  %v1046 = vld [vmem:[%s1038 + $0x18] sm:$0xff]
                  %1047 = vst [vmem:[%s1039 + $0x18] sm:$0xff] %v1046
                  %v1048 = vld [vmem:[%s1038 + $0x20] sm:$0xff]
                  %1049 = vst [vmem:[%s1039 + $0x20] sm:$0xff] %v1048
                  %v1050 = vld [vmem:[%s1038 + $0x28] sm:$0xff]
                  %1051 = vst [vmem:[%s1039 + $0x28] sm:$0xff] %v1050
                  %v1052 = vld [vmem:[%s1038 + $0x30] sm:$0xff]
                  %1053 = vst [vmem:[%s1039 + $0x30] sm:$0xff] %v1052
                  %v1054 = vld [vmem:[%s1038 + $0x38] sm:$0xff]
                  %1055 = vst [vmem:[%s1039 + $0x38] sm:$0xff] %v1054
                  %v1056 = vld [vmem:[%s1038 + $0x40] sm:$0xff]
                  %1057 = vst [vmem:[%s1039 + $0x40] sm:$0xff] %v1056
                  %v1058 = vld [vmem:[%s1038 + $0x48] sm:$0xff]
                  %1059 = vst [vmem:[%s1039 + $0x48] sm:$0xff] %v1058
                  %v1060 = vld [vmem:[%s1038 + $0x50] sm:$0xff]
                  %1061 = vst [vmem:[%s1039 + $0x50] sm:$0xff] %v1060
                  %v1062 = vld [vmem:[%s1038 + $0x58] sm:$0xff]
                  %1063 = vst [vmem:[%s1039 + $0x58] sm:$0xff] %v1062
                  %v1064 = vld [vmem:[%s1038 + $0x60] sm:$0xff]
                  %1065 = vst [vmem:[%s1039 + $0x60] sm:$0xff] %v1064
                  %v1066 = vld [vmem:[%s1038 + $0x68] sm:$0xff]
                  %1067 = vst [vmem:[%s1039 + $0x68] sm:$0xff] %v1066
                  %v1068 = vld [vmem:[%s1038 + $0x70] sm:$0xff]
                  %1069 = vst [vmem:[%s1039 + $0x70] sm:$0xff] %v1068
                  %v1070 = vld [vmem:[%s1038 + $0x78] sm:$0xff]
                  %1071 = vst [vmem:[%s1039 + $0x78] sm:$0xff] %v1070
                  %v1072 = vld [vmem:[%s1038 + $0x80] sm:$0xff]
                  %1073 = vst [vmem:[%s1039 + $0x80] sm:$0xff] %v1072
                  %v1074 = vld [vmem:[%s1038 + $0x88] sm:$0xff]
                  %1075 = vst [vmem:[%s1039 + $0x88] sm:$0xff] %v1074
                  %v1076 = vld [vmem:[%s1038 + $0x90] sm:$0xff]
                  %1077 = vst [vmem:[%s1039 + $0x90] sm:$0xff] %v1076
                  %v1078 = vld [vmem:[%s1038 + $0x98] sm:$0xff]
                  %1079 = vst [vmem:[%s1039 + $0x98] sm:$0xff] %v1078
                  %v1080 = vld [vmem:[%s1038 + $0xa0] sm:$0xff]
                  %1081 = vst [vmem:[%s1039 + $0xa0] sm:$0xff] %v1080
                  %v1082 = vld [vmem:[%s1038 + $0xa8] sm:$0xff]
                  %1083 = vst [vmem:[%s1039 + $0xa8] sm:$0xff] %v1082
                  %v1084 = vld [vmem:[%s1038 + $0xb0] sm:$0xff]
                  %1085 = vst [vmem:[%s1039 + $0xb0] sm:$0xff] %v1084
                  %v1086 = vld [vmem:[%s1038 + $0xb8] sm:$0xff]
                  %1087 = vst [vmem:[%s1039 + $0xb8] sm:$0xff] %v1086
                  %v1088 = vld [vmem:[%s1038 + $0xc0] sm:$0xff]
                  %1089 = vst [vmem:[%s1039 + $0xc0] sm:$0xff] %v1088
                  %v1090 = vld [vmem:[%s1038 + $0xc8] sm:$0xff]
                  %1091 = vst [vmem:[%s1039 + $0xc8] sm:$0xff] %v1090
                  %v1092 = vld [vmem:[%s1038 + $0xd0] sm:$0xff]
                  %1093 = vst [vmem:[%s1039 + $0xd0] sm:$0xff] %v1092
                  %v1094 = vld [vmem:[%s1038 + $0xd8] sm:$0xff]
                  %1095 = vst [vmem:[%s1039 + $0xd8] sm:$0xff] %v1094
                  %v1096 = vld [vmem:[%s1038 + $0xe0] sm:$0xff]
                  %1097 = vst [vmem:[%s1039 + $0xe0] sm:$0xff] %v1096
                  %v1098 = vld [vmem:[%s1038 + $0xe8] sm:$0xff]
                  %1099 = vst [vmem:[%s1039 + $0xe8] sm:$0xff] %v1098
                  %v1100 = vld [vmem:[%s1038 + $0xf0] sm:$0xff]
                  %1101 = vst [vmem:[%s1039 + $0xf0] sm:$0xff] %v1100
                  %v1102 = vld [vmem:[%s1038 + $0xf8] sm:$0xff]
                  %1103 = vst [vmem:[%s1039 + $0xf8] sm:$0xff] %v1102
                  %s1104 = sadd.s32 1, %s1037
                  %p1105 = scmp.ge.s32.totalorder %s1104, %s1030
                  %s1106 = scalar_select %p1105, 0, %s1104
                  %s1107 = smul.u32 %s1106, 256
                  %s1108 = smul.u32 %s1106, 256
                  %s1109 = scalar_lea.vmem %s901, %s1107 [#allocation2]
                  %s1110 = scalar_lea.vmem %s912, %s1108
                $region75: #{mnet_forward.8} parent=69 // loop_footer
                  %s1034 = sadd.s32 %s1032, 1
                $region76: #{mnet_forward.8} parent=69 // loop_footer_branch
                  %1031 = sbr.rel target = $region72
                $region77: #{mnet_forward.8} parent=69 // loop_exit
                  _
                %s1111 = sshrl.u32 %s908, 5
                %s1112 = sand.u32 %s908, 31
                %s1113 = smul.u32 %s1111, 32
                %s1114 = smul.u32 8, %s1113
                %s1115 = scalar_lea.vmem %s901, %s1114 [#allocation2]
                %s1116 = smul.u32 8, %s1113
                %s1117 = scalar_lea.vmem %s912, %s1116
                // While loop
                $region78: #{mnet_forward.8} parent=69 // loop_pre_header
                  _
                $region79: #{mnet_forward.8} parent=69 // loop_header
                  %s1119 = sphi 0, %s1121
                  %p1120 = scmp.ge.s32.totalorder %s1119, %s1112
                  %s1124 = sphi 0, %s1131
                  %s1125 = sphi %s1115, %s1134
                  %s1126 = sphi %s1117, %s1135
                $region80: #{mnet_forward.8} parent=69 // loop_header_branch
                  %1123 = sbr.rel (%p1120) target = $region84
                $region81: #{mnet_forward.8} parent=69 // loop_body
                  %v1127 = vld [vmem:[%s1125] sm:$0xff]
                  %1128 = vst [vmem:[%s1126] sm:$0xff] %v1127
                  %s1129 = sadd.s32 1, %s1124
                  %p1130 = scmp.ge.s32.totalorder %s1129, %s1112
                  %s1131 = scalar_select %p1130, 0, %s1129
                  %s1132 = smul.u32 %s1131, 8
                  %s1133 = smul.u32 %s1131, 8
                  %s1134 = scalar_lea.vmem %s1115, %s1132 [#allocation2]
                  %s1135 = scalar_lea.vmem %s1117, %s1133
                $region82: #{mnet_forward.8} parent=69 // loop_footer
                  %s1121 = sadd.s32 %s1119, 1
                $region83: #{mnet_forward.8} parent=69 // loop_footer_branch
                  %1118 = sbr.rel target = $region79
                $region84: #{mnet_forward.8} parent=69 // loop_exit
                  _
              $region70: #{mnet_forward.8} parent=47 // pred_fallthru
                _
              // Predicated region
              $region85: #{mnet_forward.8} parent=47 // pred_check
                _
              $region86: #{mnet_forward.8} parent=47 // pred_check_branch
                %1137 = sbr.rel target = $region88
              $region87: #{mnet_forward.8} parent=47 // pred_region
                _
              $region88: #{mnet_forward.8} parent=47 // pred_fallthru
                _
            $region48: #{mnet_forward.8} parent=43 // pred_fallthru
              _
            // Predicated region
            $region49: #{mnet_forward.8} parent=43 // pred_check
              _
            $region50: #{mnet_forward.8} parent=43 // pred_check_branch
              %919 = sbr.rel target = $region52
            $region51: #{mnet_forward.8} parent=43 // pred_region
              %s921 = ssub.s32 256, 1
              %s922 = sshrl.u32 %s908, 5
              // While loop
              $region53: #{mnet_forward.8} parent=51 // loop_pre_header
                _
              $region54: #{mnet_forward.8} parent=51 // loop_header
                %s924 = sphi 0, %s926
                %p925 = scmp.ge.s32.totalorder %s924, %s922
                %s929 = sphi 0, %s998
                %s930 = sphi %s901, %s1001
                %s931 = sphi %s912, %s1002
              $region55: #{mnet_forward.8} parent=51 // loop_header_branch
                %928 = sbr.rel (%p925) target = $region59
              $region56: #{mnet_forward.8} parent=51 // loop_body
                %v932 = vld [vmem:[%s930] sm:%s921]
                %933 = vst [vmem:[%s931] sm:%s921] %v932
                %v934 = vld [vmem:[%s930 + $0x8] sm:%s921]
                %935 = vst [vmem:[%s931 + $0x8] sm:%s921] %v934
                %v936 = vld [vmem:[%s930 + $0x10] sm:%s921]
                %937 = vst [vmem:[%s931 + $0x10] sm:%s921] %v936
                %v938 = vld [vmem:[%s930 + $0x18] sm:%s921]
                %939 = vst [vmem:[%s931 + $0x18] sm:%s921] %v938
                %v940 = vld [vmem:[%s930 + $0x20] sm:%s921]
                %941 = vst [vmem:[%s931 + $0x20] sm:%s921] %v940
                %v942 = vld [vmem:[%s930 + $0x28] sm:%s921]
                %943 = vst [vmem:[%s931 + $0x28] sm:%s921] %v942
                %v944 = vld [vmem:[%s930 + $0x30] sm:%s921]
                %945 = vst [vmem:[%s931 + $0x30] sm:%s921] %v944
                %v946 = vld [vmem:[%s930 + $0x38] sm:%s921]
                %947 = vst [vmem:[%s931 + $0x38] sm:%s921] %v946
                %v948 = vld [vmem:[%s930 + $0x40] sm:%s921]
                %949 = vst [vmem:[%s931 + $0x40] sm:%s921] %v948
                %v950 = vld [vmem:[%s930 + $0x48] sm:%s921]
                %951 = vst [vmem:[%s931 + $0x48] sm:%s921] %v950
                %v952 = vld [vmem:[%s930 + $0x50] sm:%s921]
                %953 = vst [vmem:[%s931 + $0x50] sm:%s921] %v952
                %v954 = vld [vmem:[%s930 + $0x58] sm:%s921]
                %955 = vst [vmem:[%s931 + $0x58] sm:%s921] %v954
                %v956 = vld [vmem:[%s930 + $0x60] sm:%s921]
                %957 = vst [vmem:[%s931 + $0x60] sm:%s921] %v956
                %v958 = vld [vmem:[%s930 + $0x68] sm:%s921]
                %959 = vst [vmem:[%s931 + $0x68] sm:%s921] %v958
                %v960 = vld [vmem:[%s930 + $0x70] sm:%s921]
                %961 = vst [vmem:[%s931 + $0x70] sm:%s921] %v960
                %v962 = vld [vmem:[%s930 + $0x78] sm:%s921]
                %963 = vst [vmem:[%s931 + $0x78] sm:%s921] %v962
                %v964 = vld [vmem:[%s930 + $0x80] sm:%s921]
                %965 = vst [vmem:[%s931 + $0x80] sm:%s921] %v964
                %v966 = vld [vmem:[%s930 + $0x88] sm:%s921]
                %967 = vst [vmem:[%s931 + $0x88] sm:%s921] %v966
                %v968 = vld [vmem:[%s930 + $0x90] sm:%s921]
                %969 = vst [vmem:[%s931 + $0x90] sm:%s921] %v968
                %v970 = vld [vmem:[%s930 + $0x98] sm:%s921]
                %971 = vst [vmem:[%s931 + $0x98] sm:%s921] %v970
                %v972 = vld [vmem:[%s930 + $0xa0] sm:%s921]
                %973 = vst [vmem:[%s931 + $0xa0] sm:%s921] %v972
                %v974 = vld [vmem:[%s930 + $0xa8] sm:%s921]
                %975 = vst [vmem:[%s931 + $0xa8] sm:%s921] %v974
                %v976 = vld [vmem:[%s930 + $0xb0] sm:%s921]
                %977 = vst [vmem:[%s931 + $0xb0] sm:%s921] %v976
                %v978 = vld [vmem:[%s930 + $0xb8] sm:%s921]
                %979 = vst [vmem:[%s931 + $0xb8] sm:%s921] %v978
                %v980 = vld [vmem:[%s930 + $0xc0] sm:%s921]
                %981 = vst [vmem:[%s931 + $0xc0] sm:%s921] %v980
                %v982 = vld [vmem:[%s930 + $0xc8] sm:%s921]
                %983 = vst [vmem:[%s931 + $0xc8] sm:%s921] %v982
                %v984 = vld [vmem:[%s930 + $0xd0] sm:%s921]
                %985 = vst [vmem:[%s931 + $0xd0] sm:%s921] %v984
                %v986 = vld [vmem:[%s930 + $0xd8] sm:%s921]
                %987 = vst [vmem:[%s931 + $0xd8] sm:%s921] %v986
                %v988 = vld [vmem:[%s930 + $0xe0] sm:%s921]
                %989 = vst [vmem:[%s931 + $0xe0] sm:%s921] %v988
                %v990 = vld [vmem:[%s930 + $0xe8] sm:%s921]
                %991 = vst [vmem:[%s931 + $0xe8] sm:%s921] %v990
                %v992 = vld [vmem:[%s930 + $0xf0] sm:%s921]
                %993 = vst [vmem:[%s931 + $0xf0] sm:%s921] %v992
                %v994 = vld [vmem:[%s930 + $0xf8] sm:%s921]
                %995 = vst [vmem:[%s931 + $0xf8] sm:%s921] %v994
                %s996 = sadd.s32 1, %s929
                %p997 = scmp.ge.s32.totalorder %s996, %s922
                %s998 = scalar_select %p997, 0, %s996
                %s999 = smul.u32 %s998, 256
                %s1000 = smul.u32 %s998, 256
                %s1001 = scalar_lea.vmem %s901, %s999 [#allocation2]
                %s1002 = scalar_lea.vmem %s912, %s1000
              $region57: #{mnet_forward.8} parent=51 // loop_footer
                %s926 = sadd.s32 %s924, 1
              $region58: #{mnet_forward.8} parent=51 // loop_footer_branch
                %923 = sbr.rel target = $region54
              $region59: #{mnet_forward.8} parent=51 // loop_exit
                _
              %s1003 = sshrl.u32 %s908, 5
              %s1004 = sand.u32 %s908, 31
              %s1005 = smul.u32 %s1003, 32
              %s1006 = smul.u32 8, %s1005
              %s1007 = scalar_lea.vmem %s901, %s1006 [#allocation2]
              %s1008 = smul.u32 8, %s1005
              %s1009 = scalar_lea.vmem %s912, %s1008
              // While loop
              $region60: #{mnet_forward.8} parent=51 // loop_pre_header
                _
              $region61: #{mnet_forward.8} parent=51 // loop_header
                %s1011 = sphi 0, %s1013
                %p1012 = scmp.ge.s32.totalorder %s1011, %s1004
                %s1016 = sphi 0, %s1023
                %s1017 = sphi %s1007, %s1026
                %s1018 = sphi %s1009, %s1027
              $region62: #{mnet_forward.8} parent=51 // loop_header_branch
                %1015 = sbr.rel (%p1012) target = $region66
              $region63: #{mnet_forward.8} parent=51 // loop_body
                %v1019 = vld [vmem:[%s1017] sm:%s921]
                %1020 = vst [vmem:[%s1018] sm:%s921] %v1019
                %s1021 = sadd.s32 1, %s1016
                %p1022 = scmp.ge.s32.totalorder %s1021, %s1004
                %s1023 = scalar_select %p1022, 0, %s1021
                %s1024 = smul.u32 %s1023, 8
                %s1025 = smul.u32 %s1023, 8
                %s1026 = scalar_lea.vmem %s1007, %s1024 [#allocation2]
                %s1027 = scalar_lea.vmem %s1009, %s1025
              $region64: #{mnet_forward.8} parent=51 // loop_footer
                %s1013 = sadd.s32 %s1011, 1
              $region65: #{mnet_forward.8} parent=51 // loop_footer_branch
                %1010 = sbr.rel target = $region61
              $region66: #{mnet_forward.8} parent=51 // loop_exit
                _
            $region52: #{mnet_forward.8} parent=43 // pred_fallthru
              _
          $region44: #{mnet_forward.8} parent=39 // pred_fallthru
            _
          %1138 = vnop
        $region40: #{mnet_forward.8} parent=35 // pred_fallthru
          _
      $region36: #{mnet_forward.8} parent=5 // pred_fallthru
        _
      %p1139 = scmp.le.s32.totalorder 2, %s10
      // Predicated region
      $region89: #{mnet_forward.8} parent=5 // pred_check
        %p1140 = pneg %p1139
      $region90: #{mnet_forward.8} parent=5 // pred_check_branch
        %1142 = sbr.rel (%p1140) target = $region92
      $region91: #{mnet_forward.8} parent=5 // pred_region
        %s1143 = ssub.s32 %s10, 2
        // Predicated region
        $region93: #{mnet_forward.8} parent=91 // pred_check
          %p1144 = pneg %p128
        $region94: #{mnet_forward.8} parent=91 // pred_check_branch
          %1146 = sbr.rel (%p1144) target = $region96
        $region95: #{mnet_forward.8} parent=91 // pred_region
          %s1147 = sand.u32 %s113, 1
          %s1148 = sand.u32 %s113, 1
          %s1149 = smul.addr %s1148, 512
          %s1150 = scalar_lea.vmem [#allocation2], %s1149
        $region96: #{mnet_forward.8} parent=91 // pred_fallthru
          _
      $region92: #{mnet_forward.8} parent=5 // pred_fallthru
        _
    $region6: #{mnet_forward.8} parent=1 // loop_footer
      %s14 = sadd.s32 1, %s10
    $region7: #{mnet_forward.8} parent=1 // loop_footer_branch
      %9 = sbr.rel target = $region3
    $region8: #{mnet_forward.8} parent=1 // loop_exit
      _

// kernel: mnet_forward.9
$region0: #{mnet_forward.9}
  #allocation0 [shape = 'u32[]', space=smem, size = 0x4, offset = 0x4, fixed_abs, tag = 'smem constant byte address 0x4 - core index']
  #allocation1 [shape = 'u32[72,128]{1,0:T(1,128)}', space=vmem, size = 0x9000, scoped, tag = 'internal scratch']
  %s0 = inlined_call_operand.vmem [shape: f32[22,3,9,3,50], index: 0, kind: input, shape index: {}]
  %s1 = inlined_call_operand.vmem [shape: f32[5,50,50], index: 1, kind: input, shape index: {}]
  %s2 = inlined_call_operand.vmem [shape: f32[1,50], index: 2, kind: input, shape index: {}]
  %s3 = inlined_call_operand.vmem [shape: f32[1,50], index: 3, kind: input, shape index: {}]
  %s4 = inlined_call_operand.vmem [shape: f32[22,4,50], index: 4, kind: output, shape index: {}]
  %s5 = sld [smem:[#allocation0]]
  $region49: #{mnet_forward.9} parent=0
    _
  %s7 = ssub.s32 1, %s5
  %s8 = scalar_select 0, %s7, %s5
  loop: start=0, step=1, limit=24
  $region2: #{mnet_forward.9} parent=0 // loop_pre_header
    _
  $region3: #{mnet_forward.9} parent=0 // loop_header
    %s10 = sphi 0, %s14
    %p11 = scmp.ge.s32.totalorder %s10, 24
    %s20 = sphi 0, %s22
    %s23 = sphi 0, %s20
    %s24 = sphi 0, %s23
    %s40 = sphi 0, %s24
    %s44 = sphi 0, %s44
    %s46 = sphi 0, %s44
    %s47 = sphi 0, %s46
    %s61 = sphi 0, %s47
    %s65 = sphi 0, %s65
    %s67 = sphi 0, %s65
    %s68 = sphi 0, %s67
    %s82 = sphi 0, %s68
    %s86 = sphi 0, %s86
    %s88 = sphi 0, %s86
    %s89 = sphi 0, %s88
    %s103 = sphi 0, %s89
    %s109 = sphi 0, %s111
    %s112 = sphi 0, %s109
    %s113 = sphi 0, %s112
    %s129 = sphi 0, %s113
  $region4: #{mnet_forward.9} parent=0 // loop_header_branch
    %13 = sbr.rel (%p11) target = $region8
  $region5: #{mnet_forward.9} parent=0 // loop_body
    %s15 = ssub.s32 %s10, 1
    %s16 = ssub.s32 %s10, 2
    %s17 = sadd.s32 %s10, 1
    %s18 = ssub.s32 %s10, %s17
    %p19 = scmp.eq.s32.totalorder %s18, 0
    %s21 = sadd.s32 %s20, 1
    %s22 = scalar_select %p19, %s20, %s21
    %p25 = pneg %p19
    %p26 = scmp.eq.s32.totalorder %s10, 21
    %p27 = por %p25, %p26
    %p28 = scmp.ne.s32.totalorder %s20, %s23
    %p29 = scmp.eq.s32.totalorder %s10, 0
    %p30 = por %p28, %p29
    %p31 = scmp.ne.s32.totalorder %s20, %s23
    %p32 = scmp.eq.s32.totalorder %s15, 21
    %p33 = por %p31, %p32
    %p34 = scmp.ne.s32.totalorder %s23, %s24
    %p35 = scmp.eq.s32.totalorder %s15, 0
    %p36 = por %p34, %p35
    %p37 = scmp.ne.s32.totalorder %s23, %s24
    %p38 = scmp.eq.s32.totalorder %s16, 21
    %p39 = por %p37, %p38
    %p41 = scmp.ne.s32.totalorder %s24, %s40
    %p42 = scmp.eq.s32.totalorder %s16, 0
    %p43 = por %p41, %p42
    %s45 = sadd.s32 %s44, 1
    %p48 = scmp.eq.s32.totalorder %s10, 21
    %p49 = scmp.ne.s32.totalorder %s44, %s46
    %p50 = scmp.eq.s32.totalorder %s10, 0
    %p51 = por %p49, %p50
    %p52 = scmp.ne.s32.totalorder %s44, %s46
    %p53 = scmp.eq.s32.totalorder %s15, 21
    %p54 = por %p52, %p53
    %p55 = scmp.ne.s32.totalorder %s46, %s47
    %p56 = scmp.eq.s32.totalorder %s15, 0
    %p57 = por %p55, %p56
    %p58 = scmp.ne.s32.totalorder %s46, %s47
    %p59 = scmp.eq.s32.totalorder %s16, 21
    %p60 = por %p58, %p59
    %p62 = scmp.ne.s32.totalorder %s47, %s61
    %p63 = scmp.eq.s32.totalorder %s16, 0
    %p64 = por %p62, %p63
    %s66 = sadd.s32 %s65, 1
    %p69 = scmp.eq.s32.totalorder %s10, 21
    %p70 = scmp.ne.s32.totalorder %s65, %s67
    %p71 = scmp.eq.s32.totalorder %s10, 0
    %p72 = por %p70, %p71
    %p73 = scmp.ne.s32.totalorder %s65, %s67
    %p74 = scmp.eq.s32.totalorder %s15, 21
    %p75 = por %p73, %p74
    %p76 = scmp.ne.s32.totalorder %s67, %s68
    %p77 = scmp.eq.s32.totalorder %s15, 0
    %p78 = por %p76, %p77
    %p79 = scmp.ne.s32.totalorder %s67, %s68
    %p80 = scmp.eq.s32.totalorder %s16, 21
    %p81 = por %p79, %p80
    %p83 = scmp.ne.s32.totalorder %s68, %s82
    %p84 = scmp.eq.s32.totalorder %s16, 0
    %p85 = por %p83, %p84
    %s87 = sadd.s32 %s86, 1
    %p90 = scmp.eq.s32.totalorder %s10, 21
    %p91 = scmp.ne.s32.totalorder %s86, %s88
    %p92 = scmp.eq.s32.totalorder %s10, 0
    %p93 = por %p91, %p92
    %p94 = scmp.ne.s32.totalorder %s86, %s88
    %p95 = scmp.eq.s32.totalorder %s15, 21
    %p96 = por %p94, %p95
    %p97 = scmp.ne.s32.totalorder %s88, %s89
    %p98 = scmp.eq.s32.totalorder %s15, 0
    %p99 = por %p97, %p98
    %p100 = scmp.ne.s32.totalorder %s88, %s89
    %p101 = scmp.eq.s32.totalorder %s16, 21
    %p102 = por %p100, %p101
    %p104 = scmp.ne.s32.totalorder %s89, %s103
    %p105 = scmp.eq.s32.totalorder %s16, 0
    %p106 = por %p104, %p105
    %s107 = ssub.s32 %s10, %s17
    %p108 = scmp.eq.s32.totalorder %s107, 0
    %s110 = sadd.s32 %s109, 1
    %s111 = scalar_select %p108, %s109, %s110
    %p114 = pneg %p108
    %p115 = scmp.eq.s32.totalorder %s10, 21
    %p116 = por %p114, %p115
    %p117 = scmp.ne.s32.totalorder %s109, %s112
    %p118 = scmp.eq.s32.totalorder %s10, 0
    %p119 = por %p117, %p118
    %p120 = scmp.ne.s32.totalorder %s109, %s112
    %p121 = scmp.eq.s32.totalorder %s15, 21
    %p122 = por %p120, %p121
    %p123 = scmp.ne.s32.totalorder %s112, %s113
    %p124 = scmp.eq.s32.totalorder %s15, 0
    %p125 = por %p123, %p124
    %p126 = scmp.ne.s32.totalorder %s112, %s113
    %p127 = scmp.eq.s32.totalorder %s16, 21
    %p128 = por %p126, %p127
    %p130 = scmp.ne.s32.totalorder %s113, %s129
    %p131 = scmp.eq.s32.totalorder %s16, 0
    %p132 = por %p130, %p131
    %p133 = scmp.le.s32.totalorder 1, %s10
    %p134 = scmp.lt.s32.totalorder %s10, 23
    %p135 = pnand %p133, %p134
    %p136 = pneg %p135
    // Predicated region
    $region9: #{mnet_forward.9} parent=5 // pred_check
      _
    $region10: #{mnet_forward.9} parent=5 // pred_check_branch
      %138 = sbr.rel (%p135) target = $region12
    $region11: #{mnet_forward.9} parent=5 // pred_region
      %s139 = ssub.s32 %s10, 1
      // Predicated region
      $region13: #{mnet_forward.9} parent=11 // pred_check
        %p140 = pneg %p57
      $region14: #{mnet_forward.9} parent=11 // pred_check_branch
        %142 = sbr.rel (%p140) target = $region16
      $region15: #{mnet_forward.9} parent=11 // pred_region
        _
      $region16: #{mnet_forward.9} parent=11 // pred_fallthru
        _
      // Predicated region
      $region17: #{mnet_forward.9} parent=11 // pred_check
        %p143 = pneg %p78
      $region18: #{mnet_forward.9} parent=11 // pred_check_branch
        %145 = sbr.rel (%p143) target = $region20
      $region19: #{mnet_forward.9} parent=11 // pred_region
        _
      $region20: #{mnet_forward.9} parent=11 // pred_fallthru
        _
      // Predicated region
      $region21: #{mnet_forward.9} parent=11 // pred_check
        %p146 = pneg %p99
      $region22: #{mnet_forward.9} parent=11 // pred_check_branch
        %148 = sbr.rel (%p146) target = $region24
      $region23: #{mnet_forward.9} parent=11 // pred_region
        _
      $region24: #{mnet_forward.9} parent=11 // pred_fallthru
        _
    $region12: #{mnet_forward.9} parent=5 // pred_fallthru
      _
    %p149 = scmp.lt.s32.totalorder %s10, 22
    // Predicated region
    $region25: #{mnet_forward.9} parent=5 // pred_check
      %p150 = pneg %p149
    $region26: #{mnet_forward.9} parent=5 // pred_check_branch
      %152 = sbr.rel (%p150) target = $region28
    $region27: #{mnet_forward.9} parent=5 // pred_region
      // Predicated region
      $region29: #{mnet_forward.9} parent=27 // pred_check
        %p153 = pneg %p30
      $region30: #{mnet_forward.9} parent=27 // pred_check_branch
        %155 = sbr.rel (%p153) target = $region32
      $region31: #{mnet_forward.9} parent=27 // pred_region
        %p156 = scmp.lt.s32.totalorder %s10, 21
        %s157 = scalar_select %p156, %s10, 21
        %s158 = smul.addr %s157, 27
        %s159 = smul.addr %s158, 4
        %s160 = scalar_lea.vmem %s0, %s159
      $region32: #{mnet_forward.9} parent=27 // pred_fallthru
        _
    $region28: #{mnet_forward.9} parent=5 // pred_fallthru
      _
    %p161 = scmp.le.s32.totalorder 1, %s10
    %p162 = scmp.lt.s32.totalorder %s10, 23
    %p163 = pnand %p161, %p162
    %p164 = pneg %p163
    // Predicated region
    $region33: #{mnet_forward.9} parent=5 // pred_check
      _
    $region34: #{mnet_forward.9} parent=5 // pred_check_branch
      %166 = sbr.rel (%p163) target = $region36
    $region35: #{mnet_forward.9} parent=5 // pred_region
      %s167 = ssub.s32 %s10, 1
      %p168 = scmp.lt.s32.totalorder %s15, 21
      %s169 = scalar_select %p168, %s15, 21
      %s170 = smul.addr %s169, 27
      %s171 = smul.addr %s170, 4
      %s172 = scalar_lea.vmem %s0, %s171
      %p173 = pneg %p36
      %p174 = pneg %p33
      %p175 = pneg %p57
      %p176 = pneg %p54
      %p177 = pneg %p78
      %p178 = pneg %p75
      %p179 = pneg %p99
      %p180 = pneg %p96
      %p181 = pneg %p125
      %p182 = pneg %p122
      %p183 = scmp.lt.s32.totalorder %s15, 21
      %s184 = scalar_select %p183, %s15, 21
      %s185 = smul.addr %s184, 4
      %s186 = scalar_lea.vmem %s4, %s185
      %p187 = scmp.lt.s32.totalorder %s15, 21
      %s188 = scalar_select %p187, %s15, 21
      %s189 = smul.addr %s188, 27
      %s190 = smul.addr %s189, 4
      %s191 = scalar_lea.vmem %s0, %s190
      %p192 = scmp.lt.s32.totalorder %s15, 21
      %s193 = scalar_select %p192, %s15, 21
      %s194 = smul.addr %s193, 4
      %s195 = scalar_lea.vmem %s4, %s194
      %v196 = vld [vmem:[%s191] sm:$0x7]
      %v197 = vld [vmem:[%s191 + $0x4] sm:$0x7]
      %v198 = vld [vmem:[%s191 + $0x8] sm:$0x7]
      %v199 = vld [vmem:[%s191 + $0xc] sm:$0x7]
      %v200 = vld [vmem:[%s191 + $0x10] sm:$0x7]
      %v201 = vld [vmem:[%s191 + $0x14] sm:$0x7]
      %v202 = vld [vmem:[%s191 + $0x18] sm:$0x7]
      %v203 = vld [vmem:[%s191 + $0x1c] sm:$0x7]
      %v204 = vld [vmem:[%s191 + $0x24] sm:$0x7]
      %v205 = vld [vmem:[%s191 + $0x28] sm:$0x7]
      %v206 = vld [vmem:[%s191 + $0x2c] sm:$0x7]
      %v207 = vld [vmem:[%s191 + $0x30] sm:$0x7]
      %v208 = vld [vmem:[%s191 + $0x34] sm:$0x7]
      %v209 = vld [vmem:[%s191 + $0x38] sm:$0x7]
      %v210 = vld [vmem:[%s191 + $0x3c] sm:$0x7]
      %v211 = vld [vmem:[%s191 + $0x40] sm:$0x7]
      %v212 = vld [vmem:[%s191 + $0x48] sm:$0x7]
      %v213 = vld [vmem:[%s191 + $0x4c] sm:$0x7]
      %v214 = vld [vmem:[%s191 + $0x50] sm:$0x7]
      %v215 = vld [vmem:[%s191 + $0x54] sm:$0x7]
      %v216 = vld [vmem:[%s191 + $0x58] sm:$0x7]
      %v217 = vld [vmem:[%s191 + $0x5c] sm:$0x7]
      %v218 = vld [vmem:[%s191 + $0x60] sm:$0x7]
      %v219 = vld [vmem:[%s191 + $0x64] sm:$0x7]
      %v220 = vmax.f32 %v196, %v204
      %v221 = vmax.f32 %v197, %v205
      %v222 = vmax.f32 %v198, %v206
      %v223 = vmax.f32 %v199, %v207
      %v224 = vmax.f32 %v200, %v208
      %v225 = vmax.f32 %v201, %v209
      %v226 = vmax.f32 %v202, %v210
      %v227 = vmax.f32 %v203, %v211
      %v228 = vmax.f32 %v220, %v212
      %v229 = vmax.f32 %v221, %v213
      %v230 = vmax.f32 %v222, %v214
      %v231 = vmax.f32 %v223, %v215
      %v232 = vmax.f32 %v224, %v216
      %v233 = vmax.f32 %v225, %v217
      %v234 = vmax.f32 %v226, %v218
      %v235 = vmax.f32 %v227, %v219
      %v244 = vrot.slane %v228, 1
      %v245 = vrot.slane %v229, 1
      %v246 = vrot.slane %v230, 1
      %v247 = vrot.slane %v231, 1
      %v248 = vrot.slane %v232, 1
      %v249 = vrot.slane %v233, 1
      %v250 = vrot.slane %v234, 1
      %v251 = vrot.slane %v235, 1
      %v260 = vmax.f32 %v228, %v244
      %v261 = vmax.f32 %v229, %v245
      %v262 = vmax.f32 %v230, %v246
      %v263 = vmax.f32 %v231, %v247
      %v264 = vmax.f32 %v232, %v248
      %v265 = vmax.f32 %v233, %v249
      %v266 = vmax.f32 %v234, %v250
      %v267 = vmax.f32 %v235, %v251
      %v268 = vrot.slane %v228, 2
      %v269 = vrot.slane %v229, 2
      %v270 = vrot.slane %v230, 2
      %v271 = vrot.slane %v231, 2
      %v272 = vrot.slane %v232, 2
      %v273 = vrot.slane %v233, 2
      %v274 = vrot.slane %v234, 2
      %v275 = vrot.slane %v235, 2
      %v284 = vmax.f32 %v260, %v268
      %v285 = vmax.f32 %v261, %v269
      %v286 = vmax.f32 %v262, %v270
      %v287 = vmax.f32 %v263, %v271
      %v288 = vmax.f32 %v264, %v272
      %v289 = vmax.f32 %v265, %v273
      %v290 = vmax.f32 %v266, %v274
      %v291 = vmax.f32 %v267, %v275
      %v292 = vmul.f32 %v284, 1.442695
      %v293 = vpow.pop %v292
      %v294 = vmul.f32 %v285, 1.442695
      %v295 = vpow.pop %v294
      %v296 = vmul.f32 %v286, 1.442695
      %v297 = vpow.pop %v296
      %v298 = vmul.f32 %v287, 1.442695
      %v299 = vpow.pop %v298
      %v300 = vmul.f32 %v288, 1.442695
      %v301 = vpow.pop %v300
      %v302 = vmul.f32 %v289, 1.442695
      %v303 = vpow.pop %v302
      %v304 = vmul.f32 %v290, 1.442695
      %v305 = vpow.pop %v304
      %v306 = vmul.f32 %v291, 1.442695
      %v307 = vpow.pop %v306
      %v308 = vadd.f32 %v293, 1.0
      %v309 = vadd.f32 %v295, 1.0
      %v310 = vadd.f32 %v297, 1.0
      %v311 = vadd.f32 %v299, 1.0
      %v312 = vadd.f32 %v301, 1.0
      %v313 = vadd.f32 %v303, 1.0
      %v314 = vadd.f32 %v305, 1.0
      %v315 = vadd.f32 %v307, 1.0
      %v316 = vmul.f32 %v308, %v308
      %v317 = vmul.f32 %v309, %v309
      %v318 = vmul.f32 %v310, %v310
      %v319 = vmul.f32 %v311, %v311
      %v320 = vmul.f32 %v312, %v312
      %v321 = vmul.f32 %v313, %v313
      %v322 = vmul.f32 %v314, %v314
      %v323 = vmul.f32 %v315, %v315
      %vm324 = vcmp.gt.f32.partialorder %v284, 20.0
      %vm325 = vcmp.gt.f32.partialorder %v285, 20.0
      %vm326 = vcmp.gt.f32.partialorder %v286, 20.0
      %vm327 = vcmp.gt.f32.partialorder %v287, 20.0
      %vm328 = vcmp.gt.f32.partialorder %v288, 20.0
      %vm329 = vcmp.gt.f32.partialorder %v289, 20.0
      %vm330 = vcmp.gt.f32.partialorder %v290, 20.0
      %vm331 = vcmp.gt.f32.partialorder %v291, 20.0
      %v332 = vsub.f32 %v316, 1.0
      %v333 = vsub.f32 %v317, 1.0
      %v334 = vsub.f32 %v318, 1.0
      %v335 = vsub.f32 %v319, 1.0
      %v336 = vsub.f32 %v320, 1.0
      %v337 = vsub.f32 %v321, 1.0
      %v338 = vsub.f32 %v322, 1.0
      %v339 = vsub.f32 %v323, 1.0
      %v340 = vadd.f32 %v316, 1.0
      %v341 = vadd.f32 %v317, 1.0
      %v342 = vadd.f32 %v318, 1.0
      %v343 = vadd.f32 %v319, 1.0
      %v344 = vadd.f32 %v320, 1.0
      %v345 = vadd.f32 %v321, 1.0
      %v346 = vadd.f32 %v322, 1.0
      %v347 = vadd.f32 %v323, 1.0
      %v348 = vrcp.pop %v340
      %v349 = vmul.f32 %v340, %v348
      %v350 = vsub.f32 1.0, %v349
      %v351 = vmul.f32 %v348, %v350
      %v352 = vadd.f32 %v348, %v351
      %vm353 = vweird.f32 %v340
      %vm354 = vweird.f32 %v348
      %vm355 = vmor %vm353, %vm354
      %v356 = vsel %vm355, %v348, %v352
      %v357 = vand.u32 2147483647, %v340
      %vm358 = vcmp.eq.f32.partialorder %v357, 8.507059e+37
      %v359 = vand.u32 %v340, 2147483648
      %v360 = vor.u32 1.1754944e-38, %v359
      %v361 = vsel %vm358, %v360, %v356
      %v362 = vmul.f32 %v332, %v361
      %v363 = vrcp.pop %v341
      %v364 = vmul.f32 %v341, %v363
      %v365 = vsub.f32 1.0, %v364
      %v366 = vmul.f32 %v363, %v365
      %v367 = vadd.f32 %v363, %v366
      %vm368 = vweird.f32 %v341
      %vm369 = vweird.f32 %v363
      %vm370 = vmor %vm368, %vm369
      %v371 = vsel %vm370, %v363, %v367
      %v372 = vand.u32 2147483647, %v341
      %vm373 = vcmp.eq.f32.partialorder %v372, 8.507059e+37
      %v374 = vand.u32 %v341, 2147483648
      %v375 = vor.u32 1.1754944e-38, %v374
      %v376 = vsel %vm373, %v375, %v371
      %v377 = vmul.f32 %v333, %v376
      %v378 = vrcp.pop %v342
      %v379 = vmul.f32 %v342, %v378
      %v380 = vsub.f32 1.0, %v379
      %v381 = vmul.f32 %v378, %v380
      %v382 = vadd.f32 %v378, %v381
      %vm383 = vweird.f32 %v342
      %vm384 = vweird.f32 %v378
      %vm385 = vmor %vm383, %vm384
      %v386 = vsel %vm385, %v378, %v382
      %v387 = vand.u32 2147483647, %v342
      %vm388 = vcmp.eq.f32.partialorder %v387, 8.507059e+37
      %v389 = vand.u32 %v342, 2147483648
      %v390 = vor.u32 1.1754944e-38, %v389
      %v391 = vsel %vm388, %v390, %v386
      %v392 = vmul.f32 %v334, %v391
      %v393 = vrcp.pop %v343
      %v394 = vmul.f32 %v343, %v393
      %v395 = vsub.f32 1.0, %v394
      %v396 = vmul.f32 %v393, %v395
      %v397 = vadd.f32 %v393, %v396
      %vm398 = vweird.f32 %v343
      %vm399 = vweird.f32 %v393
      %vm400 = vmor %vm398, %vm399
      %v401 = vsel %vm400, %v393, %v397
      %v402 = vand.u32 2147483647, %v343
      %vm403 = vcmp.eq.f32.partialorder %v402, 8.507059e+37
      %v404 = vand.u32 %v343, 2147483648
      %v405 = vor.u32 1.1754944e-38, %v404
      %v406 = vsel %vm403, %v405, %v401
      %v407 = vmul.f32 %v335, %v406
      %v408 = vrcp.pop %v344
      %v409 = vmul.f32 %v344, %v408
      %v410 = vsub.f32 1.0, %v409
      %v411 = vmul.f32 %v408, %v410
      %v412 = vadd.f32 %v408, %v411
      %vm413 = vweird.f32 %v344
      %vm414 = vweird.f32 %v408
      %vm415 = vmor %vm413, %vm414
      %v416 = vsel %vm415, %v408, %v412
      %v417 = vand.u32 2147483647, %v344
      %vm418 = vcmp.eq.f32.partialorder %v417, 8.507059e+37
      %v419 = vand.u32 %v344, 2147483648
      %v420 = vor.u32 1.1754944e-38, %v419
      %v421 = vsel %vm418, %v420, %v416
      %v422 = vmul.f32 %v336, %v421
      %v423 = vrcp.pop %v345
      %v424 = vmul.f32 %v345, %v423
      %v425 = vsub.f32 1.0, %v424
      %v426 = vmul.f32 %v423, %v425
      %v427 = vadd.f32 %v423, %v426
      %vm428 = vweird.f32 %v345
      %vm429 = vweird.f32 %v423
      %vm430 = vmor %vm428, %vm429
      %v431 = vsel %vm430, %v423, %v427
      %v432 = vand.u32 2147483647, %v345
      %vm433 = vcmp.eq.f32.partialorder %v432, 8.507059e+37
      %v434 = vand.u32 %v345, 2147483648
      %v435 = vor.u32 1.1754944e-38, %v434
      %v436 = vsel %vm433, %v435, %v431
      %v437 = vmul.f32 %v337, %v436
      %v438 = vrcp.pop %v346
      %v439 = vmul.f32 %v346, %v438
      %v440 = vsub.f32 1.0, %v439
      %v441 = vmul.f32 %v438, %v440
      %v442 = vadd.f32 %v438, %v441
      %vm443 = vweird.f32 %v346
      %vm444 = vweird.f32 %v438
      %vm445 = vmor %vm443, %vm444
      %v446 = vsel %vm445, %v438, %v442
      %v447 = vand.u32 2147483647, %v346
      %vm448 = vcmp.eq.f32.partialorder %v447, 8.507059e+37
      %v449 = vand.u32 %v346, 2147483648
      %v450 = vor.u32 1.1754944e-38, %v449
      %v451 = vsel %vm448, %v450, %v446
      %v452 = vmul.f32 %v338, %v451
      %v453 = vrcp.pop %v347
      %v454 = vmul.f32 %v347, %v453
      %v455 = vsub.f32 1.0, %v454
      %v456 = vmul.f32 %v453, %v455
      %v457 = vadd.f32 %v453, %v456
      %vm458 = vweird.f32 %v347
      %vm459 = vweird.f32 %v453
      %vm460 = vmor %vm458, %vm459
      %v461 = vsel %vm460, %v453, %v457
      %v462 = vand.u32 2147483647, %v347
      %vm463 = vcmp.eq.f32.partialorder %v462, 8.507059e+37
      %v464 = vand.u32 %v347, 2147483648
      %v465 = vor.u32 1.1754944e-38, %v464
      %v466 = vsel %vm463, %v465, %v461
      %v467 = vmul.f32 %v339, %v466
      %v468 = vmul.f32 %v284, %v362
      %v469 = vmul.f32 %v285, %v377
      %v470 = vmul.f32 %v286, %v392
      %v471 = vmul.f32 %v287, %v407
      %v472 = vmul.f32 %v288, %v422
      %v473 = vmul.f32 %v289, %v437
      %v474 = vmul.f32 %v290, %v452
      %v475 = vmul.f32 %v291, %v467
      %v476 = vsel %vm324, %v284, %v468
      %v477 = vsel %vm325, %v285, %v469
      %v478 = vsel %vm326, %v286, %v470
      %v479 = vsel %vm327, %v287, %v471
      %v480 = vsel %vm328, %v288, %v472
      %v481 = vsel %vm329, %v289, %v473
      %v482 = vsel %vm330, %v290, %v474
      %v483 = vsel %vm331, %v291, %v475
      %v484 = vld [vmem:[%s1] sm:$0xff]
      %v485 = vld [vmem:[%s1 + $0x8] sm:$0xff]
      %v486 = vld [vmem:[%s1 + $0x10] sm:$0xff]
      %v487 = vld [vmem:[%s1 + $0x18] sm:$0xff]
      %v488 = vld [vmem:[%s1 + $0x20] sm:$0xff]
      %v489 = vld [vmem:[%s1 + $0x28] sm:$0xff]
      %v490 = vld [vmem:[%s1 + $0x30] sm:$0x3]
      %s491 = scalar_lea.vmem %s1, 56
      %v492 = vld [vmem:[%s491] sm:$0xff]
      %v493 = vld [vmem:[%s491 + $0x8] sm:$0xff]
      %v494 = vld [vmem:[%s491 + $0x10] sm:$0xff]
      %v495 = vld [vmem:[%s491 + $0x18] sm:$0xff]
      %v496 = vld [vmem:[%s491 + $0x20] sm:$0xff]
      %v497 = vld [vmem:[%s491 + $0x28] sm:$0xff]
      %v498 = vld [vmem:[%s491 + $0x30] sm:$0x3]
      %v503 = vrot.slane %v478, 7
      %vm504 = vcmask 1041409
      %v505 = vsel %vm504, %v503, %v477
      %v506 = vrot.slane %v479, 6
      %vm507 = vcmask 1042434
      %v508 = vsel %vm507, %v506, %v505
      %v509 = vrot.slane %v480, 5
      %vm510 = vcmask 1043459
      %v511 = vsel %vm510, %v509, %v508
      %vm512 = vcmask 408576
      %v513 = vsel %vm512, %v511, 0
      %vm515 = vcmask 1041408
      %v517 = vsel %vm515, %v498, 0
      %519 = vmatpush.msra.mxu0 0.0
      %520 = vmatpush.msra.mxu0 0.0
      %521 = vmatpush.msra.mxu0 0.0
      %522 = vmatpush.msra.mxu0 0.0
      %523 = vmatpush.msra.mxu0 0.0
      %524 = vmatpush.msra.mxu0 0.0
      %525 = vmatpush.msra.mxu0 0.0
      %526 = vmatpush.msra.mxu0 0.0
      %527 = vmatpush.msra.mxu0 0.0
      %528 = vmatpush.msra.mxu0 %v517
      %529 = vmatpush.msra.mxu0 %v497
      %530 = vmatpush.msra.mxu0 %v496
      %531 = vmatpush.msra.mxu0 %v495
      %532 = vmatpush.msra.mxu0 %v494
      %533 = vmatpush.msra.mxu0 %v493
      %534 = vmatpush.msra.mxu0 %v492
      %535 = vmatmul.f32.gmra.mxu0 %v513
      %v536 = vpop.f32.mrf.mxu0
      %v537 = vadd.f32 0.0, %v536
      %538 = vdwg.mxu0
      %v540 = vrot.slane %v477, 7
      %v541 = vsel %vm504, %v540, %v476
      %v542 = vrot.slane %v478, 6
      %v543 = vsel %vm507, %v542, %v541
      %v544 = vrot.slane %v479, 5
      %v545 = vsel %vm510, %v544, %v543
      %v546 = vsel %vm512, %v545, 0
      %v549 = vsel %vm515, %v490, 0
      %551 = vmatpush.msra.mxu0 0.0
      %552 = vmatpush.msra.mxu0 0.0
      %553 = vmatpush.msra.mxu0 0.0
      %554 = vmatpush.msra.mxu0 0.0
      %555 = vmatpush.msra.mxu0 0.0
      %556 = vmatpush.msra.mxu0 0.0
      %557 = vmatpush.msra.mxu0 0.0
      %558 = vmatpush.msra.mxu0 0.0
      %559 = vmatpush.msra.mxu0 0.0
      %560 = vmatpush.msra.mxu0 %v549
      %561 = vmatpush.msra.mxu0 %v489
      %562 = vmatpush.msra.mxu0 %v488
      %563 = vmatpush.msra.mxu0 %v487
      %564 = vmatpush.msra.mxu0 %v486
      %565 = vmatpush.msra.mxu0 %v485
      %566 = vmatpush.msra.mxu0 %v484
      %567 = vmatmul.f32.gmra.mxu0 %v546
      %v568 = vpop.f32.mrf.mxu0
      %v569 = vadd.f32 %v537, %v568
      %570 = vdwg.mxu0
      %s571 = scalar_lea.vmem %s1, 112
      %v572 = vld [vmem:[%s571] sm:$0xff]
      %v573 = vld [vmem:[%s571 + $0x8] sm:$0xff]
      %v574 = vld [vmem:[%s571 + $0x10] sm:$0xff]
      %v575 = vld [vmem:[%s571 + $0x18] sm:$0xff]
      %v576 = vld [vmem:[%s571 + $0x20] sm:$0xff]
      %v577 = vld [vmem:[%s571 + $0x28] sm:$0xff]
      %v578 = vld [vmem:[%s571 + $0x30] sm:$0x3]
      %v580 = vrot.slane %v479, 7
      %v581 = vsel %vm504, %v580, %v478
      %v582 = vrot.slane %v480, 6
      %v583 = vsel %vm507, %v582, %v581
      %v584 = vrot.slane %v481, 5
      %v585 = vsel %vm510, %v584, %v583
      %v586 = vsel %vm512, %v585, 0
      %v589 = vsel %vm515, %v578, 0
      %591 = vmatpush.msra.mxu0 0.0
      %592 = vmatpush.msra.mxu0 0.0
      %593 = vmatpush.msra.mxu0 0.0
      %594 = vmatpush.msra.mxu0 0.0
      %595 = vmatpush.msra.mxu0 0.0
      %596 = vmatpush.msra.mxu0 0.0
      %597 = vmatpush.msra.mxu0 0.0
      %598 = vmatpush.msra.mxu0 0.0
      %599 = vmatpush.msra.mxu0 0.0
      %600 = vmatpush.msra.mxu0 %v589
      %601 = vmatpush.msra.mxu0 %v577
      %602 = vmatpush.msra.mxu0 %v576
      %603 = vmatpush.msra.mxu0 %v575
      %604 = vmatpush.msra.mxu0 %v574
      %605 = vmatpush.msra.mxu0 %v573
      %606 = vmatpush.msra.mxu0 %v572
      %607 = vmatmul.f32.gmra.mxu0 %v586
      %v608 = vpop.f32.mrf.mxu0
      %v609 = vadd.f32 0.0, %v608
      %610 = vdwg.mxu0
      %v611 = vadd.f32 %v569, %v609
      %s612 = scalar_lea.vmem %s1, 168
      %v613 = vld [vmem:[%s612] sm:$0xff]
      %v614 = vld [vmem:[%s612 + $0x8] sm:$0xff]
      %v615 = vld [vmem:[%s612 + $0x10] sm:$0xff]
      %v616 = vld [vmem:[%s612 + $0x18] sm:$0xff]
      %v617 = vld [vmem:[%s612 + $0x20] sm:$0xff]
      %v618 = vld [vmem:[%s612 + $0x28] sm:$0xff]
      %v619 = vld [vmem:[%s612 + $0x30] sm:$0x3]
      %v621 = vrot.slane %v480, 7
      %v622 = vsel %vm504, %v621, %v479
      %v623 = vrot.slane %v481, 6
      %v624 = vsel %vm507, %v623, %v622
      %v625 = vrot.slane %v482, 5
      %v626 = vsel %vm510, %v625, %v624
      %v627 = vsel %vm512, %v626, 0
      %v630 = vsel %vm515, %v619, 0
      %632 = vmatpush.msra.mxu0 0.0
      %633 = vmatpush.msra.mxu0 0.0
      %634 = vmatpush.msra.mxu0 0.0
      %635 = vmatpush.msra.mxu0 0.0
      %636 = vmatpush.msra.mxu0 0.0
      %637 = vmatpush.msra.mxu0 0.0
      %638 = vmatpush.msra.mxu0 0.0
      %639 = vmatpush.msra.mxu0 0.0
      %640 = vmatpush.msra.mxu0 0.0
      %641 = vmatpush.msra.mxu0 %v630
      %642 = vmatpush.msra.mxu0 %v618
      %643 = vmatpush.msra.mxu0 %v617
      %644 = vmatpush.msra.mxu0 %v616
      %645 = vmatpush.msra.mxu0 %v615
      %646 = vmatpush.msra.mxu0 %v614
      %647 = vmatpush.msra.mxu0 %v613
      %648 = vmatmul.f32.gmra.mxu0 %v627
      %v649 = vpop.f32.mrf.mxu0
      %v650 = vadd.f32 0.0, %v649
      %651 = vdwg.mxu0
      %v652 = vadd.f32 %v611, %v650
      %s653 = scalar_lea.vmem %s1, 224
      %v654 = vld [vmem:[%s653] sm:$0xff]
      %v655 = vld [vmem:[%s653 + $0x8] sm:$0xff]
      %v656 = vld [vmem:[%s653 + $0x10] sm:$0xff]
      %v657 = vld [vmem:[%s653 + $0x18] sm:$0xff]
      %v658 = vld [vmem:[%s653 + $0x20] sm:$0xff]
      %v659 = vld [vmem:[%s653 + $0x28] sm:$0xff]
      %v660 = vld [vmem:[%s653 + $0x30] sm:$0x3]
      %v662 = vrot.slane %v481, 7
      %v663 = vsel %vm504, %v662, %v480
      %v664 = vrot.slane %v482, 6
      %v665 = vsel %vm507, %v664, %v663
      %v666 = vrot.slane %v483, 5
      %v667 = vsel %vm510, %v666, %v665
      %v668 = vsel %vm512, %v667, 0
      %v671 = vsel %vm515, %v660, 0
      %673 = vmatpush.msra.mxu0 0.0
      %674 = vmatpush.msra.mxu0 0.0
      %675 = vmatpush.msra.mxu0 0.0
      %676 = vmatpush.msra.mxu0 0.0
      %677 = vmatpush.msra.mxu0 0.0
      %678 = vmatpush.msra.mxu0 0.0
      %679 = vmatpush.msra.mxu0 0.0
      %680 = vmatpush.msra.mxu0 0.0
      %681 = vmatpush.msra.mxu0 0.0
      %682 = vmatpush.msra.mxu0 %v671
      %683 = vmatpush.msra.mxu0 %v659
      %684 = vmatpush.msra.mxu0 %v658
      %685 = vmatpush.msra.mxu0 %v657
      %686 = vmatpush.msra.mxu0 %v656
      %687 = vmatpush.msra.mxu0 %v655
      %688 = vmatpush.msra.mxu0 %v654
      %689 = vmatmul.f32.gmra.mxu0 %v668
      %v690 = vpop.f32.mrf.mxu0
      %v691 = vadd.f32 0.0, %v690
      %692 = vdwg.mxu0
      %v693 = vadd.f32 %v652, %v691
      %v694 = vld [vmem:[%s2] sm:$0x1]
      %v696 = vperm.slane %v694, 0
      %v698 = vmul.f32 %v693, %v696
      %v699 = vld [vmem:[%s3] sm:$0x1]
      %v701 = vperm.slane %v699, 0
      %v703 = vadd.f32 %v698, %v701
      %vm704 = vcmask 404480
      %705 = vst.msk [vmem:[%s195] sm:$0xf] %vm704, %v703
      %p706 = scmp.lt.s32.totalorder %s15, 21
      %s707 = scalar_select %p706, %s15, 21
      %s708 = smul.addr %s707, 4
      %s709 = scalar_lea.vmem %s4, %s708
      // Predicated region
      $region37: #{mnet_forward.9} parent=35 // pred_check
        %p710 = pneg %p122
      $region38: #{mnet_forward.9} parent=35 // pred_check_branch
        %712 = sbr.rel (%p710) target = $region40
      $region39: #{mnet_forward.9} parent=35 // pred_region
        _
      $region40: #{mnet_forward.9} parent=35 // pred_fallthru
        _
    $region36: #{mnet_forward.9} parent=5 // pred_fallthru
      _
    %p713 = scmp.le.s32.totalorder 2, %s10
    // Predicated region
    $region41: #{mnet_forward.9} parent=5 // pred_check
      %p714 = pneg %p713
    $region42: #{mnet_forward.9} parent=5 // pred_check_branch
      %716 = sbr.rel (%p714) target = $region44
    $region43: #{mnet_forward.9} parent=5 // pred_region
      %s717 = ssub.s32 %s10, 2
      // Predicated region
      $region45: #{mnet_forward.9} parent=43 // pred_check
        %p718 = pneg %p128
      $region46: #{mnet_forward.9} parent=43 // pred_check_branch
        %720 = sbr.rel (%p718) target = $region48
      $region47: #{mnet_forward.9} parent=43 // pred_region
        %p721 = scmp.lt.s32.totalorder %s16, 21
        %s722 = scalar_select %p721, %s16, 21
        %s723 = smul.addr %s722, 4
        %s724 = scalar_lea.vmem %s4, %s723
      $region48: #{mnet_forward.9} parent=43 // pred_fallthru
        _
    $region44: #{mnet_forward.9} parent=5 // pred_fallthru
      _
  $region6: #{mnet_forward.9} parent=0 // loop_footer
    %s14 = sadd.s32 1, %s10
  $region7: #{mnet_forward.9} parent=0 // loop_footer_branch
    %9 = sbr.rel target = $region3
  $region8: #{mnet_forward.9} parent=0 // loop_exit
    _

// kernel: mnet_forward.10
$region0: #{mnet_forward.10}
  #allocation0 [shape = 'u32[]', space=smem, size = 0x4, offset = 0x4, fixed_abs, tag = 'smem constant byte address 0x4 - core index']
  #allocation1 [shape = 'u32[72,128]{1,0:T(1,128)}', space=vmem, size = 0x9000, scoped, tag = 'internal scratch']
  %s0 = inlined_call_operand.vmem [shape: f32[22,2,2,50], index: 0, kind: input, shape index: {}]
  %s1 = inlined_call_operand.vmem [shape: f32[22,2,50], index: 1, kind: output, shape index: {}]
  %s2 = sld [smem:[#allocation0]]
  $region37: #{mnet_forward.10} parent=0
    _
  %s4 = ssub.s32 1, %s2
  %s5 = scalar_select 0, %s4, %s2
  loop: start=0, step=1, limit=24
  $region2: #{mnet_forward.10} parent=0 // loop_pre_header
    _
  $region3: #{mnet_forward.10} parent=0 // loop_header
    %s7 = sphi 0, %s11
    %p8 = scmp.ge.s32.totalorder %s7, 24
    %s17 = sphi 0, %s19
    %s20 = sphi 0, %s17
    %s21 = sphi 0, %s20
    %s37 = sphi 0, %s21
    %s43 = sphi 0, %s45
    %s46 = sphi 0, %s43
    %s47 = sphi 0, %s46
    %s63 = sphi 0, %s47
  $region4: #{mnet_forward.10} parent=0 // loop_header_branch
    %10 = sbr.rel (%p8) target = $region8
  $region5: #{mnet_forward.10} parent=0 // loop_body
    %s12 = ssub.s32 %s7, 1
    %s13 = ssub.s32 %s7, 2
    %s14 = sadd.s32 %s7, 1
    %s15 = ssub.s32 %s7, %s14
    %p16 = scmp.eq.s32.totalorder %s15, 0
    %s18 = sadd.s32 %s17, 1
    %s19 = scalar_select %p16, %s17, %s18
    %p22 = pneg %p16
    %p23 = scmp.eq.s32.totalorder %s7, 21
    %p24 = por %p22, %p23
    %p25 = scmp.ne.s32.totalorder %s17, %s20
    %p26 = scmp.eq.s32.totalorder %s7, 0
    %p27 = por %p25, %p26
    %p28 = scmp.ne.s32.totalorder %s17, %s20
    %p29 = scmp.eq.s32.totalorder %s12, 21
    %p30 = por %p28, %p29
    %p31 = scmp.ne.s32.totalorder %s20, %s21
    %p32 = scmp.eq.s32.totalorder %s12, 0
    %p33 = por %p31, %p32
    %p34 = scmp.ne.s32.totalorder %s20, %s21
    %p35 = scmp.eq.s32.totalorder %s13, 21
    %p36 = por %p34, %p35
    %p38 = scmp.ne.s32.totalorder %s21, %s37
    %p39 = scmp.eq.s32.totalorder %s13, 0
    %p40 = por %p38, %p39
    %s41 = ssub.s32 %s7, %s14
    %p42 = scmp.eq.s32.totalorder %s41, 0
    %s44 = sadd.s32 %s43, 1
    %s45 = scalar_select %p42, %s43, %s44
    %p48 = pneg %p42
    %p49 = scmp.eq.s32.totalorder %s7, 21
    %p50 = por %p48, %p49
    %p51 = scmp.ne.s32.totalorder %s43, %s46
    %p52 = scmp.eq.s32.totalorder %s7, 0
    %p53 = por %p51, %p52
    %p54 = scmp.ne.s32.totalorder %s43, %s46
    %p55 = scmp.eq.s32.totalorder %s12, 21
    %p56 = por %p54, %p55
    %p57 = scmp.ne.s32.totalorder %s46, %s47
    %p58 = scmp.eq.s32.totalorder %s12, 0
    %p59 = por %p57, %p58
    %p60 = scmp.ne.s32.totalorder %s46, %s47
    %p61 = scmp.eq.s32.totalorder %s13, 21
    %p62 = por %p60, %p61
    %p64 = scmp.ne.s32.totalorder %s47, %s63
    %p65 = scmp.eq.s32.totalorder %s13, 0
    %p66 = por %p64, %p65
    %p67 = scmp.le.s32.totalorder 1, %s7
    %p68 = scmp.lt.s32.totalorder %s7, 23
    %p69 = pnand %p67, %p68
    %p70 = pneg %p69
    // Predicated region
    $region9: #{mnet_forward.10} parent=5 // pred_check
      _
    $region10: #{mnet_forward.10} parent=5 // pred_check_branch
      %72 = sbr.rel (%p69) target = $region12
    $region11: #{mnet_forward.10} parent=5 // pred_region
      %s73 = ssub.s32 %s7, 1
    $region12: #{mnet_forward.10} parent=5 // pred_fallthru
      _
    %p74 = scmp.lt.s32.totalorder %s7, 22
    // Predicated region
    $region13: #{mnet_forward.10} parent=5 // pred_check
      %p75 = pneg %p74
    $region14: #{mnet_forward.10} parent=5 // pred_check_branch
      %77 = sbr.rel (%p75) target = $region16
    $region15: #{mnet_forward.10} parent=5 // pred_region
      // Predicated region
      $region17: #{mnet_forward.10} parent=15 // pred_check
        %p78 = pneg %p27
      $region18: #{mnet_forward.10} parent=15 // pred_check_branch
        %80 = sbr.rel (%p78) target = $region20
      $region19: #{mnet_forward.10} parent=15 // pred_region
        %p81 = scmp.lt.s32.totalorder %s7, 21
        %s82 = scalar_select %p81, %s7, 21
        %s83 = smul.addr %s82, 2
        %s84 = smul.addr %s83, 2
        %s85 = scalar_lea.vmem %s0, %s84
      $region20: #{mnet_forward.10} parent=15 // pred_fallthru
        _
    $region16: #{mnet_forward.10} parent=5 // pred_fallthru
      _
    %p86 = scmp.le.s32.totalorder 1, %s7
    %p87 = scmp.lt.s32.totalorder %s7, 23
    %p88 = pnand %p86, %p87
    %p89 = pneg %p88
    // Predicated region
    $region21: #{mnet_forward.10} parent=5 // pred_check
      _
    $region22: #{mnet_forward.10} parent=5 // pred_check_branch
      %91 = sbr.rel (%p88) target = $region24
    $region23: #{mnet_forward.10} parent=5 // pred_region
      %s92 = ssub.s32 %s7, 1
      %p93 = scmp.lt.s32.totalorder %s12, 21
      %s94 = scalar_select %p93, %s12, 21
      %s95 = smul.addr %s94, 2
      %s96 = smul.addr %s95, 2
      %s97 = scalar_lea.vmem %s0, %s96
      %p98 = pneg %p33
      %p99 = pneg %p30
      %p100 = pneg %p59
      %p101 = pneg %p56
      %p102 = scmp.lt.s32.totalorder %s12, 21
      %s103 = scalar_select %p102, %s12, 21
      %s104 = smul.addr %s103, 2
      %s105 = scalar_lea.vmem %s1, %s104
      %p106 = scmp.lt.s32.totalorder %s12, 21
      %s107 = scalar_select %p106, %s12, 21
      %s108 = smul.addr %s107, 2
      %s109 = smul.addr %s108, 2
      %s110 = scalar_lea.vmem %s0, %s109
      %p111 = scmp.lt.s32.totalorder %s12, 21
      %s112 = scalar_select %p111, %s12, 21
      %s113 = smul.addr %s112, 2
      %s114 = scalar_lea.vmem %s1, %s113
      %v115 = vld [vmem:[%s110] sm:$0x3]
      %v116 = vld [vmem:[%s110 + $0x2] sm:$0x3]
      %v119 = vrot.slane %v115, 1
      %v120 = vrot.slane %v116, 1
      %v123 = vmax.f32 %v115, %v119
      %v124 = vmax.f32 %v116, %v120
      %v125 = vmul.f32 %v123, 1.442695
      %v126 = vpow.pop %v125
      %v127 = vmul.f32 %v124, 1.442695
      %v128 = vpow.pop %v127
      %v129 = vadd.f32 %v126, 1.0
      %v130 = vadd.f32 %v128, 1.0
      %v131 = vmul.f32 %v129, %v129
      %v132 = vmul.f32 %v130, %v130
      %vm133 = vcmp.gt.f32.partialorder %v123, 20.0
      %vm134 = vcmp.gt.f32.partialorder %v124, 20.0
      %v135 = vsub.f32 %v131, 1.0
      %v136 = vsub.f32 %v132, 1.0
      %v137 = vadd.f32 %v131, 1.0
      %v138 = vadd.f32 %v132, 1.0
      %v139 = vrcp.pop %v137
      %v140 = vmul.f32 %v137, %v139
      %v141 = vsub.f32 1.0, %v140
      %v142 = vmul.f32 %v139, %v141
      %v143 = vadd.f32 %v139, %v142
      %vm144 = vweird.f32 %v137
      %vm145 = vweird.f32 %v139
      %vm146 = vmor %vm144, %vm145
      %v147 = vsel %vm146, %v139, %v143
      %v148 = vand.u32 2147483647, %v137
      %vm149 = vcmp.eq.f32.partialorder %v148, 8.507059e+37
      %v150 = vand.u32 %v137, 2147483648
      %v151 = vor.u32 1.1754944e-38, %v150
      %v152 = vsel %vm149, %v151, %v147
      %v153 = vmul.f32 %v135, %v152
      %v154 = vrcp.pop %v138
      %v155 = vmul.f32 %v138, %v154
      %v156 = vsub.f32 1.0, %v155
      %v157 = vmul.f32 %v154, %v156
      %v158 = vadd.f32 %v154, %v157
      %vm159 = vweird.f32 %v138
      %vm160 = vweird.f32 %v154
      %vm161 = vmor %vm159, %vm160
      %v162 = vsel %vm161, %v154, %v158
      %v163 = vand.u32 2147483647, %v138
      %vm164 = vcmp.eq.f32.partialorder %v163, 8.507059e+37
      %v165 = vand.u32 %v138, 2147483648
      %v166 = vor.u32 1.1754944e-38, %v165
      %v167 = vsel %vm164, %v166, %v162
      %v168 = vmul.f32 %v136, %v167
      %v169 = vmul.f32 %v123, %v153
      %v170 = vmul.f32 %v124, %v168
      %v171 = vsel %vm133, %v123, %v169
      %v172 = vsel %vm134, %v124, %v170
      %v175 = vrot.slane %v172, 7
      %vm176 = vcmask 1041409
      %v177 = vsel %vm176, %v175, %v171
      %vm179 = vcmask 402432
      %180 = vst.msk [vmem:[%s114] sm:$0x3] %vm179, %v177
      %p181 = scmp.lt.s32.totalorder %s12, 21
      %s182 = scalar_select %p181, %s12, 21
      %s183 = smul.addr %s182, 2
      %s184 = scalar_lea.vmem %s1, %s183
      // Predicated region
      $region25: #{mnet_forward.10} parent=23 // pred_check
        %p185 = pneg %p56
      $region26: #{mnet_forward.10} parent=23 // pred_check_branch
        %187 = sbr.rel (%p185) target = $region28
      $region27: #{mnet_forward.10} parent=23 // pred_region
        _
      $region28: #{mnet_forward.10} parent=23 // pred_fallthru
        _
    $region24: #{mnet_forward.10} parent=5 // pred_fallthru
      _
    %p188 = scmp.le.s32.totalorder 2, %s7
    // Predicated region
    $region29: #{mnet_forward.10} parent=5 // pred_check
      %p189 = pneg %p188
    $region30: #{mnet_forward.10} parent=5 // pred_check_branch
      %191 = sbr.rel (%p189) target = $region32
    $region31: #{mnet_forward.10} parent=5 // pred_region
      %s192 = ssub.s32 %s7, 2
      // Predicated region
      $region33: #{mnet_forward.10} parent=31 // pred_check
        %p193 = pneg %p62
      $region34: #{mnet_forward.10} parent=31 // pred_check_branch
        %195 = sbr.rel (%p193) target = $region36
      $region35: #{mnet_forward.10} parent=31 // pred_region
        %p196 = scmp.lt.s32.totalorder %s13, 21
        %s197 = scalar_select %p196, %s13, 21
        %s198 = smul.addr %s197, 2
        %s199 = scalar_lea.vmem %s1, %s198
      $region36: #{mnet_forward.10} parent=31 // pred_fallthru
        _
    $region32: #{mnet_forward.10} parent=5 // pred_fallthru
      _
  $region6: #{mnet_forward.10} parent=0 // loop_footer
    %s11 = sadd.s32 1, %s7
  $region7: #{mnet_forward.10} parent=0 // loop_footer_branch
    %6 = sbr.rel target = $region3
  $region8: #{mnet_forward.10} parent=0 // loop_exit
    _

// kernel: mnet_forward.11
$region0: #{mnet_forward.11}
  #allocation0 [shape = 'u32[]', space=smem, size = 0x4, offset = 0x4, fixed_abs, tag = 'smem constant byte address 0x4 - core index']
  #allocation1 [shape = 'u32[72,128]{1,0:T(1,128)}', space=vmem, size = 0x9000, scoped, tag = 'internal scratch']
  %s0 = inlined_call_operand.vmem [shape: f32[2,1100], index: 0, kind: input, shape index: {}]
  %s1 = inlined_call_operand.vmem [shape: f32[1100,64], index: 1, kind: input, shape index: {}]
  %s2 = inlined_call_operand.vmem [shape: f32[1,64], index: 2, kind: input, shape index: {}]
  %s3 = inlined_call_operand.vmem [shape: f32[64,32], index: 3, kind: input, shape index: {}]
  %s4 = inlined_call_operand.vmem [shape: f32[1,32], index: 4, kind: input, shape index: {}]
  %s5 = inlined_call_operand.vmem [shape: f32[32,4], index: 5, kind: input, shape index: {}]
  %s6 = inlined_call_operand.vmem [shape: f32[1,4], index: 6, kind: input, shape index: {}]
  %s7 = inlined_call_operand.hbm [shape: f32[2,4], index: 7, kind: output, shape index: {}]
  %s8 = sld [smem:[#allocation0]]
  $region38: #{mnet_forward.11} parent=0
    _
  %s10 = ssub.s32 1, %s8
  %s11 = scalar_select 0, %s10, %s8
  $region1: #{mnet_forward.11} parent=0
    #allocation2 [shape = 'u8[1024]{0}', space=vmem, size = 0x400, scoped, tag = 'output window, operand 0, single buffered']
    #allocation3 [shape = 's32[1]{0}', space=sflag, size = 0x4, scoped, tag = 'scoped memory for mnet_forward.11']
    %12 = vsyncpa [#allocation3], 0
    // Predicated region
    $region2: #{mnet_forward.11} parent=1 // pred_check
      _
    $region3: #{mnet_forward.11} parent=1 // pred_check_branch
      %14 = sbr.rel (0) target = $region5
    $region4: #{mnet_forward.11} parent=1 // pred_region
      _
    $region5: #{mnet_forward.11} parent=1 // pred_fallthru
      _
    // Predicated region
    $region6: #{mnet_forward.11} parent=1 // pred_check
      _
    $region7: #{mnet_forward.11} parent=1 // pred_check_branch
      %16 = sbr.rel (0) target = $region9
    $region8: #{mnet_forward.11} parent=1 // pred_region
      _
    $region9: #{mnet_forward.11} parent=1 // pred_fallthru
      _
    // Predicated region
    $region10: #{mnet_forward.11} parent=1 // pred_check
      _
    $region11: #{mnet_forward.11} parent=1 // pred_check_branch
      %18 = sbr.rel (0) target = $region13
    $region12: #{mnet_forward.11} parent=1 // pred_region
      _
    $region13: #{mnet_forward.11} parent=1 // pred_fallthru
      _
    // Predicated region
    $region14: #{mnet_forward.11} parent=1 // pred_check
      _
    $region15: #{mnet_forward.11} parent=1 // pred_check_branch
      %20 = sbr.rel (0) target = $region17
    $region16: #{mnet_forward.11} parent=1 // pred_region
      _
    $region17: #{mnet_forward.11} parent=1 // pred_fallthru
      _
    // Predicated region
    $region18: #{mnet_forward.11} parent=1 // pred_check
      _
    $region19: #{mnet_forward.11} parent=1 // pred_check_branch
      %22 = sbr.rel (0) target = $region21
    $region20: #{mnet_forward.11} parent=1 // pred_region
      _
    $region21: #{mnet_forward.11} parent=1 // pred_fallthru
      _
    // Predicated region
    $region22: #{mnet_forward.11} parent=1 // pred_check
      _
    $region23: #{mnet_forward.11} parent=1 // pred_check_branch
      %24 = sbr.rel (0) target = $region25
    $region24: #{mnet_forward.11} parent=1 // pred_region
      _
    $region25: #{mnet_forward.11} parent=1 // pred_fallthru
      _
    // Predicated region
    $region26: #{mnet_forward.11} parent=1 // pred_check
      _
    $region27: #{mnet_forward.11} parent=1 // pred_check_branch
      %26 = sbr.rel (0) target = $region29
    $region28: #{mnet_forward.11} parent=1 // pred_region
      _
    $region29: #{mnet_forward.11} parent=1 // pred_fallthru
      _
    %v27 = vld [vmem:[%s0] sm:$0xff]
    %v28 = vld [vmem:[%s0 + $0x8] sm:$0xff]
    %v29 = vld [vmem:[%s0 + $0x10] sm:$0x3]
    %v30 = vld [vmem:[%s1] sm:$0xff]
    %v31 = vld [vmem:[%s1 + $0x8] sm:$0xff]
    %v32 = vld [vmem:[%s1 + $0x10] sm:$0xff]
    %v33 = vld [vmem:[%s1 + $0x18] sm:$0xff]
    %v34 = vld [vmem:[%s1 + $0x20] sm:$0xff]
    %v35 = vld [vmem:[%s1 + $0x28] sm:$0xff]
    %v36 = vld [vmem:[%s1 + $0x30] sm:$0xff]
    %v37 = vld [vmem:[%s1 + $0x38] sm:$0xff]
    %v38 = vld [vmem:[%s1 + $0x40] sm:$0xff]
    %v39 = vld [vmem:[%s1 + $0x48] sm:$0xff]
    %v40 = vld [vmem:[%s1 + $0x50] sm:$0xff]
    %v41 = vld [vmem:[%s1 + $0x58] sm:$0xff]
    %v42 = vld [vmem:[%s1 + $0x60] sm:$0xff]
    %v43 = vld [vmem:[%s1 + $0x68] sm:$0xff]
    %v44 = vld [vmem:[%s1 + $0x70] sm:$0xff]
    %v45 = vld [vmem:[%s1 + $0x78] sm:$0xff]
    %v46 = vld [vmem:[%s1 + $0x80] sm:$0xff]
    %v47 = vld [vmem:[%s1 + $0x88] sm:$0xff]
    %v48 = vld [vmem:[%s1 + $0x90] sm:$0xff]
    %v49 = vld [vmem:[%s1 + $0x98] sm:$0xff]
    %v50 = vld [vmem:[%s1 + $0xa0] sm:$0xff]
    %v51 = vld [vmem:[%s1 + $0xa8] sm:$0xff]
    %v52 = vld [vmem:[%s1 + $0xb0] sm:$0xff]
    %v53 = vld [vmem:[%s1 + $0xb8] sm:$0xff]
    %v54 = vld [vmem:[%s1 + $0xc0] sm:$0xff]
    %v55 = vld [vmem:[%s1 + $0xc8] sm:$0xff]
    %v56 = vld [vmem:[%s1 + $0xd0] sm:$0xff]
    %v57 = vld [vmem:[%s1 + $0xd8] sm:$0xff]
    %v58 = vld [vmem:[%s1 + $0xe0] sm:$0xff]
    %v59 = vld [vmem:[%s1 + $0xe8] sm:$0xff]
    %v60 = vld [vmem:[%s1 + $0xf0] sm:$0xff]
    %v61 = vld [vmem:[%s1 + $0xf8] sm:$0xff]
    %v62 = vld [vmem:[%s1 + $0x100] sm:$0xff]
    %v63 = vld [vmem:[%s1 + $0x108] sm:$0xff]
    %v64 = vld [vmem:[%s1 + $0x110] sm:$0xff]
    %v65 = vld [vmem:[%s1 + $0x118] sm:$0xff]
    %v66 = vld [vmem:[%s1 + $0x120] sm:$0xff]
    %v67 = vld [vmem:[%s1 + $0x128] sm:$0xff]
    %v68 = vld [vmem:[%s1 + $0x130] sm:$0xff]
    %v69 = vld [vmem:[%s1 + $0x138] sm:$0xff]
    %v70 = vld [vmem:[%s1 + $0x140] sm:$0xff]
    %v71 = vld [vmem:[%s1 + $0x148] sm:$0xff]
    %v72 = vld [vmem:[%s1 + $0x150] sm:$0xff]
    %v73 = vld [vmem:[%s1 + $0x158] sm:$0xff]
    %v74 = vld [vmem:[%s1 + $0x160] sm:$0xff]
    %v75 = vld [vmem:[%s1 + $0x168] sm:$0xff]
    %v76 = vld [vmem:[%s1 + $0x170] sm:$0xff]
    %v77 = vld [vmem:[%s1 + $0x178] sm:$0xff]
    %v78 = vld [vmem:[%s1 + $0x180] sm:$0xff]
    %v79 = vld [vmem:[%s1 + $0x188] sm:$0xff]
    %v80 = vld [vmem:[%s1 + $0x190] sm:$0xff]
    %v81 = vld [vmem:[%s1 + $0x198] sm:$0xff]
    %v82 = vld [vmem:[%s1 + $0x1a0] sm:$0xff]
    %v83 = vld [vmem:[%s1 + $0x1a8] sm:$0xff]
    %v84 = vld [vmem:[%s1 + $0x1b0] sm:$0xff]
    %v85 = vld [vmem:[%s1 + $0x1b8] sm:$0xff]
    %v86 = vld [vmem:[%s1 + $0x1c0] sm:$0xff]
    %v87 = vld [vmem:[%s1 + $0x1c8] sm:$0xff]
    %v88 = vld [vmem:[%s1 + $0x1d0] sm:$0xff]
    %v89 = vld [vmem:[%s1 + $0x1d8] sm:$0xff]
    %v90 = vld [vmem:[%s1 + $0x1e0] sm:$0xff]
    %v91 = vld [vmem:[%s1 + $0x1e8] sm:$0xff]
    %v92 = vld [vmem:[%s1 + $0x1f0] sm:$0xff]
    %v93 = vld [vmem:[%s1 + $0x1f8] sm:$0xff]
    %v94 = vld [vmem:[%s1 + $0x200] sm:$0xff]
    %v95 = vld [vmem:[%s1 + $0x208] sm:$0xff]
    %v96 = vld [vmem:[%s1 + $0x210] sm:$0xff]
    %v97 = vld [vmem:[%s1 + $0x218] sm:$0xff]
    %v98 = vld [vmem:[%s1 + $0x220] sm:$0xff]
    %v99 = vld [vmem:[%s1 + $0x228] sm:$0xff]
    %v100 = vld [vmem:[%s1 + $0x230] sm:$0xff]
    %v101 = vld [vmem:[%s1 + $0x238] sm:$0xff]
    %v102 = vld [vmem:[%s1 + $0x240] sm:$0xff]
    %v103 = vld [vmem:[%s1 + $0x248] sm:$0xff]
    %v104 = vld [vmem:[%s1 + $0x250] sm:$0xff]
    %v105 = vld [vmem:[%s1 + $0x258] sm:$0xff]
    %v106 = vld [vmem:[%s1 + $0x260] sm:$0xff]
    %v107 = vld [vmem:[%s1 + $0x268] sm:$0xff]
    %v108 = vld [vmem:[%s1 + $0x270] sm:$0xff]
    %v109 = vld [vmem:[%s1 + $0x278] sm:$0xff]
    %v110 = vld [vmem:[%s1 + $0x280] sm:$0xff]
    %v111 = vld [vmem:[%s1 + $0x288] sm:$0xff]
    %v112 = vld [vmem:[%s1 + $0x290] sm:$0xff]
    %v113 = vld [vmem:[%s1 + $0x298] sm:$0xff]
    %v114 = vld [vmem:[%s1 + $0x2a0] sm:$0xff]
    %v115 = vld [vmem:[%s1 + $0x2a8] sm:$0xff]
    %v116 = vld [vmem:[%s1 + $0x2b0] sm:$0xff]
    %v117 = vld [vmem:[%s1 + $0x2b8] sm:$0xff]
    %v118 = vld [vmem:[%s1 + $0x2c0] sm:$0xff]
    %v119 = vld [vmem:[%s1 + $0x2c8] sm:$0xff]
    %v120 = vld [vmem:[%s1 + $0x2d0] sm:$0xff]
    %v121 = vld [vmem:[%s1 + $0x2d8] sm:$0xff]
    %v122 = vld [vmem:[%s1 + $0x2e0] sm:$0xff]
    %v123 = vld [vmem:[%s1 + $0x2e8] sm:$0xff]
    %v124 = vld [vmem:[%s1 + $0x2f0] sm:$0xff]
    %v125 = vld [vmem:[%s1 + $0x2f8] sm:$0xff]
    %v126 = vld [vmem:[%s1 + $0x300] sm:$0xff]
    %v127 = vld [vmem:[%s1 + $0x308] sm:$0xff]
    %v128 = vld [vmem:[%s1 + $0x310] sm:$0xff]
    %v129 = vld [vmem:[%s1 + $0x318] sm:$0xff]
    %v130 = vld [vmem:[%s1 + $0x320] sm:$0xff]
    %v131 = vld [vmem:[%s1 + $0x328] sm:$0xff]
    %v132 = vld [vmem:[%s1 + $0x330] sm:$0xff]
    %v133 = vld [vmem:[%s1 + $0x338] sm:$0xff]
    %v134 = vld [vmem:[%s1 + $0x340] sm:$0xff]
    %v135 = vld [vmem:[%s1 + $0x348] sm:$0xff]
    %v136 = vld [vmem:[%s1 + $0x350] sm:$0xff]
    %v137 = vld [vmem:[%s1 + $0x358] sm:$0xff]
    %v138 = vld [vmem:[%s1 + $0x360] sm:$0xff]
    %v139 = vld [vmem:[%s1 + $0x368] sm:$0xff]
    %v140 = vld [vmem:[%s1 + $0x370] sm:$0xff]
    %v141 = vld [vmem:[%s1 + $0x378] sm:$0xff]
    %v142 = vld [vmem:[%s1 + $0x380] sm:$0xff]
    %v143 = vld [vmem:[%s1 + $0x388] sm:$0xff]
    %v144 = vld [vmem:[%s1 + $0x390] sm:$0xff]
    %v145 = vld [vmem:[%s1 + $0x398] sm:$0xff]
    %v146 = vld [vmem:[%s1 + $0x3a0] sm:$0xff]
    %v147 = vld [vmem:[%s1 + $0x3a8] sm:$0xff]
    %v148 = vld [vmem:[%s1 + $0x3b0] sm:$0xff]
    %v149 = vld [vmem:[%s1 + $0x3b8] sm:$0xff]
    %v150 = vld [vmem:[%s1 + $0x3c0] sm:$0xff]
    %v151 = vld [vmem:[%s1 + $0x3c8] sm:$0xff]
    %v152 = vld [vmem:[%s1 + $0x3d0] sm:$0xff]
    %v153 = vld [vmem:[%s1 + $0x3d8] sm:$0xff]
    %v154 = vld [vmem:[%s1 + $0x3e0] sm:$0xff]
    %v155 = vld [vmem:[%s1 + $0x3e8] sm:$0xff]
    %v156 = vld [vmem:[%s1 + $0x3f0] sm:$0xff]
    %v157 = vld [vmem:[%s1 + $0x3f8] sm:$0xff]
    %v158 = vld [vmem:[%s1 + $0x400] sm:$0xff]
    %v159 = vld [vmem:[%s1 + $0x408] sm:$0xff]
    %v160 = vld [vmem:[%s1 + $0x410] sm:$0xff]
    %v161 = vld [vmem:[%s1 + $0x418] sm:$0xff]
    %v162 = vld [vmem:[%s1 + $0x420] sm:$0xff]
    %v163 = vld [vmem:[%s1 + $0x428] sm:$0xff]
    %v164 = vld [vmem:[%s1 + $0x430] sm:$0xff]
    %v165 = vld [vmem:[%s1 + $0x438] sm:$0xff]
    %v166 = vld [vmem:[%s1 + $0x440] sm:$0xff]
    %v167 = vld [vmem:[%s1 + $0x448] sm:$0xf]
    %v168 = vld [vmem:[%s2] sm:$0x1]
    %v170 = vperm.slane %v168, 0
    %175 = vst [vmem:[#allocation1] ss:$4 sm:$0xff] %v27
    %s176 = scalar_lea.vmem [#allocation1], 32
    %177 = vst [vmem:[%s176] ss:$4 sm:$0xff] %v28
    %v178 = vld.sshfl [vmem:[#allocation1] sm:$0xff pattern:$0x73625140]
    %v179 = vld.sshfl [vmem:[#allocation1 + $0x8] sm:$0xff pattern:$0x73625140]
    %v180 = vld.sshfl [vmem:[#allocation1 + $0x10] sm:$0xff pattern:$0x73625140]
    %v181 = vld.sshfl [vmem:[#allocation1 + $0x18] sm:$0xff pattern:$0x73625140]
    %v182 = vld.sshfl [vmem:[#allocation1 + $0x20] sm:$0xff pattern:$0x73625140]
    %v183 = vld.sshfl [vmem:[#allocation1 + $0x28] sm:$0xff pattern:$0x73625140]
    %v184 = vld.sshfl [vmem:[#allocation1 + $0x30] sm:$0xff pattern:$0x73625140]
    %v185 = vld.sshfl [vmem:[#allocation1 + $0x38] sm:$0xff pattern:$0x73625140]
    %186 = vst [vmem:[#allocation1] ss:$4 sm:$0xff] %v29
    %v187 = vld.sshfl [vmem:[#allocation1] sm:$0xff pattern:$0x73625140]
    %vm196 = vcmask 621568
    %v197 = vsel %vm196, %v187, 0
    %vm199 = vcmask 1043456
    %v201 = vsel %vm199, %v167, 0
    %203 = vmatpush.msra.mxu0 %v45
    %204 = vmatpush.msra.mxu0 %v44
    %205 = vmatpush.msra.mxu0 %v43
    %206 = vmatpush.msra.mxu0 %v42
    %207 = vmatpush.msra.mxu0 %v41
    %208 = vmatpush.msra.mxu0 %v40
    %209 = vmatpush.msra.mxu0 %v39
    %210 = vmatpush.msra.mxu0 %v38
    %211 = vmatpush.msra.mxu0 %v37
    %212 = vmatpush.msra.mxu0 %v36
    %213 = vmatpush.msra.mxu0 %v35
    %214 = vmatpush.msra.mxu0 %v34
    %215 = vmatpush.msra.mxu0 %v33
    %216 = vmatpush.msra.mxu0 %v32
    %217 = vmatpush.msra.mxu0 %v31
    %218 = vmatpush.msra.mxu0 %v30
    %219 = vmatmul.f32.gmra.mxu0 %v178
    %v220 = vpop.f32.mrf.mxu0
    %v221 = vadd.f32 %v170, %v220
    %222 = vdwg.mxu0
    %223 = vmatpush.msra.mxu0 %v61
    %224 = vmatpush.msra.mxu0 %v60
    %225 = vmatpush.msra.mxu0 %v59
    %226 = vmatpush.msra.mxu0 %v58
    %227 = vmatpush.msra.mxu0 %v57
    %228 = vmatpush.msra.mxu0 %v56
    %229 = vmatpush.msra.mxu0 %v55
    %230 = vmatpush.msra.mxu0 %v54
    %231 = vmatpush.msra.mxu0 %v53
    %232 = vmatpush.msra.mxu0 %v52
    %233 = vmatpush.msra.mxu0 %v51
    %234 = vmatpush.msra.mxu0 %v50
    %235 = vmatpush.msra.mxu0 %v49
    %236 = vmatpush.msra.mxu0 %v48
    %237 = vmatpush.msra.mxu0 %v47
    %238 = vmatpush.msra.mxu0 %v46
    %239 = vmatmul.f32.gmra.mxu0 %v179
    %v240 = vpop.f32.mrf.mxu0
    %v241 = vadd.f32 %v221, %v240
    %242 = vdwg.mxu0
    %243 = vmatpush.msra.mxu0 %v77
    %244 = vmatpush.msra.mxu0 %v76
    %245 = vmatpush.msra.mxu0 %v75
    %246 = vmatpush.msra.mxu0 %v74
    %247 = vmatpush.msra.mxu0 %v73
    %248 = vmatpush.msra.mxu0 %v72
    %249 = vmatpush.msra.mxu0 %v71
    %250 = vmatpush.msra.mxu0 %v70
    %251 = vmatpush.msra.mxu0 %v69
    %252 = vmatpush.msra.mxu0 %v68
    %253 = vmatpush.msra.mxu0 %v67
    %254 = vmatpush.msra.mxu0 %v66
    %255 = vmatpush.msra.mxu0 %v65
    %256 = vmatpush.msra.mxu0 %v64
    %257 = vmatpush.msra.mxu0 %v63
    %258 = vmatpush.msra.mxu0 %v62
    %259 = vmatmul.f32.gmra.mxu0 %v180
    %v260 = vpop.f32.mrf.mxu0
    %v261 = vadd.f32 %v241, %v260
    %262 = vdwg.mxu0
    %263 = vmatpush.msra.mxu0 %v93
    %264 = vmatpush.msra.mxu0 %v92
    %265 = vmatpush.msra.mxu0 %v91
    %266 = vmatpush.msra.mxu0 %v90
    %267 = vmatpush.msra.mxu0 %v89
    %268 = vmatpush.msra.mxu0 %v88
    %269 = vmatpush.msra.mxu0 %v87
    %270 = vmatpush.msra.mxu0 %v86
    %271 = vmatpush.msra.mxu0 %v85
    %272 = vmatpush.msra.mxu0 %v84
    %273 = vmatpush.msra.mxu0 %v83
    %274 = vmatpush.msra.mxu0 %v82
    %275 = vmatpush.msra.mxu0 %v81
    %276 = vmatpush.msra.mxu0 %v80
    %277 = vmatpush.msra.mxu0 %v79
    %278 = vmatpush.msra.mxu0 %v78
    %279 = vmatmul.f32.gmra.mxu0 %v181
    %v280 = vpop.f32.mrf.mxu0
    %v281 = vadd.f32 %v261, %v280
    %282 = vdwg.mxu0
    %283 = vmatpush.msra.mxu0 %v109
    %284 = vmatpush.msra.mxu0 %v108
    %285 = vmatpush.msra.mxu0 %v107
    %286 = vmatpush.msra.mxu0 %v106
    %287 = vmatpush.msra.mxu0 %v105
    %288 = vmatpush.msra.mxu0 %v104
    %289 = vmatpush.msra.mxu0 %v103
    %290 = vmatpush.msra.mxu0 %v102
    %291 = vmatpush.msra.mxu0 %v101
    %292 = vmatpush.msra.mxu0 %v100
    %293 = vmatpush.msra.mxu0 %v99
    %294 = vmatpush.msra.mxu0 %v98
    %295 = vmatpush.msra.mxu0 %v97
    %296 = vmatpush.msra.mxu0 %v96
    %297 = vmatpush.msra.mxu0 %v95
    %298 = vmatpush.msra.mxu0 %v94
    %299 = vmatmul.f32.gmra.mxu0 %v182
    %v300 = vpop.f32.mrf.mxu0
    %v301 = vadd.f32 %v281, %v300
    %302 = vdwg.mxu0
    %303 = vmatpush.msra.mxu0 %v125
    %304 = vmatpush.msra.mxu0 %v124
    %305 = vmatpush.msra.mxu0 %v123
    %306 = vmatpush.msra.mxu0 %v122
    %307 = vmatpush.msra.mxu0 %v121
    %308 = vmatpush.msra.mxu0 %v120
    %309 = vmatpush.msra.mxu0 %v119
    %310 = vmatpush.msra.mxu0 %v118
    %311 = vmatpush.msra.mxu0 %v117
    %312 = vmatpush.msra.mxu0 %v116
    %313 = vmatpush.msra.mxu0 %v115
    %314 = vmatpush.msra.mxu0 %v114
    %315 = vmatpush.msra.mxu0 %v113
    %316 = vmatpush.msra.mxu0 %v112
    %317 = vmatpush.msra.mxu0 %v111
    %318 = vmatpush.msra.mxu0 %v110
    %319 = vmatmul.f32.gmra.mxu0 %v183
    %v320 = vpop.f32.mrf.mxu0
    %v321 = vadd.f32 %v301, %v320
    %322 = vdwg.mxu0
    %323 = vmatpush.msra.mxu0 %v141
    %324 = vmatpush.msra.mxu0 %v140
    %325 = vmatpush.msra.mxu0 %v139
    %326 = vmatpush.msra.mxu0 %v138
    %327 = vmatpush.msra.mxu0 %v137
    %328 = vmatpush.msra.mxu0 %v136
    %329 = vmatpush.msra.mxu0 %v135
    %330 = vmatpush.msra.mxu0 %v134
    %331 = vmatpush.msra.mxu0 %v133
    %332 = vmatpush.msra.mxu0 %v132
    %333 = vmatpush.msra.mxu0 %v131
    %334 = vmatpush.msra.mxu0 %v130
    %335 = vmatpush.msra.mxu0 %v129
    %336 = vmatpush.msra.mxu0 %v128
    %337 = vmatpush.msra.mxu0 %v127
    %338 = vmatpush.msra.mxu0 %v126
    %339 = vmatmul.f32.gmra.mxu0 %v184
    %v340 = vpop.f32.mrf.mxu0
    %v341 = vadd.f32 %v321, %v340
    %342 = vdwg.mxu0
    %343 = vmatpush.msra.mxu0 %v157
    %344 = vmatpush.msra.mxu0 %v156
    %345 = vmatpush.msra.mxu0 %v155
    %346 = vmatpush.msra.mxu0 %v154
    %347 = vmatpush.msra.mxu0 %v153
    %348 = vmatpush.msra.mxu0 %v152
    %349 = vmatpush.msra.mxu0 %v151
    %350 = vmatpush.msra.mxu0 %v150
    %351 = vmatpush.msra.mxu0 %v149
    %352 = vmatpush.msra.mxu0 %v148
    %353 = vmatpush.msra.mxu0 %v147
    %354 = vmatpush.msra.mxu0 %v146
    %355 = vmatpush.msra.mxu0 %v145
    %356 = vmatpush.msra.mxu0 %v144
    %357 = vmatpush.msra.mxu0 %v143
    %358 = vmatpush.msra.mxu0 %v142
    %359 = vmatmul.f32.gmra.mxu0 %v185
    %v360 = vpop.f32.mrf.mxu0
    %v361 = vadd.f32 %v341, %v360
    %362 = vdwg.mxu0
    %363 = vmatpush.msra.mxu0 0.0
    %364 = vmatpush.msra.mxu0 0.0
    %365 = vmatpush.msra.mxu0 0.0
    %366 = vmatpush.msra.mxu0 0.0
    %367 = vmatpush.msra.mxu0 0.0
    %368 = vmatpush.msra.mxu0 0.0
    %369 = vmatpush.msra.mxu0 %v201
    %370 = vmatpush.msra.mxu0 %v166
    %371 = vmatpush.msra.mxu0 %v165
    %372 = vmatpush.msra.mxu0 %v164
    %373 = vmatpush.msra.mxu0 %v163
    %374 = vmatpush.msra.mxu0 %v162
    %375 = vmatpush.msra.mxu0 %v161
    %376 = vmatpush.msra.mxu0 %v160
    %377 = vmatpush.msra.mxu0 %v159
    %378 = vmatpush.msra.mxu0 %v158
    %379 = vmatmul.f32.gmra.mxu0 %v197
    %v380 = vpop.f32.mrf.mxu0
    %v381 = vadd.f32 %v361, %v380
    %382 = vdwg.mxu0
    %v383 = vmul.f32 %v381, 1.442695
    %v384 = vpow.pop %v383
    %v385 = vadd.f32 %v384, 1.0
    %v386 = vmul.f32 %v385, %v385
    %vm387 = vcmp.gt.f32.partialorder %v381, 20.0
    %v388 = vsub.f32 %v386, 1.0
    %v389 = vadd.f32 %v386, 1.0
    %v390 = vrcp.pop %v389
    %v391 = vmul.f32 %v389, %v390
    %v392 = vsub.f32 1.0, %v391
    %v393 = vmul.f32 %v390, %v392
    %v394 = vadd.f32 %v390, %v393
    %vm395 = vweird.f32 %v389
    %vm396 = vweird.f32 %v390
    %vm397 = vmor %vm395, %vm396
    %v398 = vsel %vm397, %v390, %v394
    %v399 = vand.u32 2147483647, %v389
    %vm400 = vcmp.eq.f32.partialorder %v399, 8.507059e+37
    %v401 = vand.u32 %v389, 2147483648
    %v402 = vor.u32 1.1754944e-38, %v401
    %v403 = vsel %vm400, %v402, %v398
    %v404 = vmul.f32 %v388, %v403
    %v405 = vmul.f32 %v381, %v404
    %v406 = vsel %vm387, %v381, %v405
    %v407 = vld [vmem:[%s3] sm:$0xff]
    %v408 = vld [vmem:[%s3 + $0x8] sm:$0xff]
    %v409 = vld [vmem:[%s3 + $0x10] sm:$0xff]
    %v410 = vld [vmem:[%s3 + $0x18] sm:$0xff]
    %v411 = vld [vmem:[%s3 + $0x20] sm:$0xff]
    %v412 = vld [vmem:[%s3 + $0x28] sm:$0xff]
    %v413 = vld [vmem:[%s3 + $0x30] sm:$0xff]
    %v414 = vld [vmem:[%s3 + $0x38] sm:$0xff]
    %v415 = vld [vmem:[%s4] sm:$0x1]
    %v417 = vperm.slane %v415, 0
    %vm419 = vcmask 523264
    %v421 = vsel %vm419, %v406, 0
    %423 = vmatpush.msra.mxu0 0.0
    %424 = vmatpush.msra.mxu0 0.0
    %425 = vmatpush.msra.mxu0 0.0
    %426 = vmatpush.msra.mxu0 0.0
    %427 = vmatpush.msra.mxu0 0.0
    %428 = vmatpush.msra.mxu0 0.0
    %429 = vmatpush.msra.mxu0 0.0
    %430 = vmatpush.msra.mxu0 0.0
    %431 = vmatpush.msra.mxu0 %v414
    %432 = vmatpush.msra.mxu0 %v413
    %433 = vmatpush.msra.mxu0 %v412
    %434 = vmatpush.msra.mxu0 %v411
    %435 = vmatpush.msra.mxu0 %v410
    %436 = vmatpush.msra.mxu0 %v409
    %437 = vmatpush.msra.mxu0 %v408
    %438 = vmatpush.msra.mxu0 %v407
    %439 = vmatmul.f32.gmra.mxu0 %v421
    %v440 = vpop.f32.mrf.mxu0
    %v441 = vadd.f32 %v417, %v440
    %442 = vdwg.mxu0
    %v443 = vmul.f32 %v441, 1.442695
    %v444 = vpow.pop %v443
    %v445 = vadd.f32 %v444, 1.0
    %v446 = vmul.f32 %v445, %v445
    %vm447 = vcmp.gt.f32.partialorder %v441, 20.0
    %v448 = vsub.f32 %v446, 1.0
    %v449 = vadd.f32 %v446, 1.0
    %v450 = vrcp.pop %v449
    %v451 = vmul.f32 %v449, %v450
    %v452 = vsub.f32 1.0, %v451
    %v453 = vmul.f32 %v450, %v452
    %v454 = vadd.f32 %v450, %v453
    %vm455 = vweird.f32 %v449
    %vm456 = vweird.f32 %v450
    %vm457 = vmor %vm455, %vm456
    %v458 = vsel %vm457, %v450, %v454
    %v459 = vand.u32 2147483647, %v449
    %vm460 = vcmp.eq.f32.partialorder %v459, 8.507059e+37
    %v461 = vand.u32 %v449, 2147483648
    %v462 = vor.u32 1.1754944e-38, %v461
    %v463 = vsel %vm460, %v462, %v458
    %v464 = vmul.f32 %v448, %v463
    %v465 = vmul.f32 %v441, %v464
    %v466 = vsel %vm447, %v441, %v465
    %v467 = vld [vmem:[%s5] sm:$0xff]
    %v468 = vld [vmem:[%s5 + $0x8] sm:$0xff]
    %v469 = vld [vmem:[%s5 + $0x10] sm:$0xff]
    %v470 = vld [vmem:[%s5 + $0x18] sm:$0xff]
    %v471 = vld [vmem:[%s6] sm:$0x1]
    %v473 = vperm.slane %v471, 0
    %vm475 = vcmask 261120
    %v477 = vsel %vm475, %v466, 0
    %479 = vmatpush.msra.mxu0 0.0
    %480 = vmatpush.msra.mxu0 0.0
    %481 = vmatpush.msra.mxu0 0.0
    %482 = vmatpush.msra.mxu0 0.0
    %483 = vmatpush.msra.mxu0 0.0
    %484 = vmatpush.msra.mxu0 0.0
    %485 = vmatpush.msra.mxu0 0.0
    %486 = vmatpush.msra.mxu0 0.0
    %487 = vmatpush.msra.mxu0 0.0
    %488 = vmatpush.msra.mxu0 0.0
    %489 = vmatpush.msra.mxu0 0.0
    %490 = vmatpush.msra.mxu0 0.0
    %491 = vmatpush.msra.mxu0 %v470
    %492 = vmatpush.msra.mxu0 %v469
    %493 = vmatpush.msra.mxu0 %v468
    %494 = vmatpush.msra.mxu0 %v467
    %495 = vmatmul.f32.gmra.mxu0 %v477
    %v496 = vpop.f32.mrf.mxu0
    %v497 = vadd.f32 %v473, %v496
    %498 = vdwg.mxu0
    %vm499 = vcmask 25600
    %500 = vst.msk [vmem:[#allocation2] sm:$0x3] %vm499, %v497
    // Predicated region
    $region30: #{mnet_forward.11} parent=1 // pred_check
      _
    $region31: #{mnet_forward.11} parent=1 // pred_check_branch
      %502 = sbr.rel (0) target = $region33
    $region32: #{mnet_forward.11} parent=1 // pred_region
      %504 = vsyncadd [#allocation3], 0
      %s506 = sshll.u32 [#allocation2], 4
      %s507 = int_to_ptr.vmem [resolvable:$true] %s506
      %s508 = sshll.u32 %s7, 4
      %s509 = int_to_ptr.hbm [resolvable:$true] %s508
      %511 = dma.vmem_to_hbm [thread:$0]  %s507, 32, %s509, [#allocation3]
    $region33: #{mnet_forward.11} parent=1 // pred_fallthru
      _
    // Predicated region
    $region34: #{mnet_forward.11} parent=1 // pred_check
      _
    $region35: #{mnet_forward.11} parent=1 // pred_check_branch
      %513 = sbr.rel (0) target = $region37
    $region36: #{mnet_forward.11} parent=1 // pred_region
      %515 = dma.done [#allocation3], 32
    $region37: #{mnet_forward.11} parent=1 // pred_fallthru
      _
    %516 = vsyncpa [#allocation3], 1

</llo_original>
